<compile_context>
chip_gen: v7x
topology: tpu7x:2x2x1
jax: 0.10.0
libtpu: 0.0.40
codegen_flags: <defaults>
</compile_context>

<pallas_src>
import jax
import jax.numpy as jnp
from jax import lax
from jax.experimental import pallas as pl
from jax.experimental.pallas import tpu as pltpu


# ----------------------------- geometry constants ---------------------------
_BT = 128                      # images per grid step (batch occupies lanes)
_PX = 30                       # row pitch of the zero-padded 30x30 input
_XROWS = 904                   # 900 input rows padded up to a multiple of 8
_L1 = 27 * _PX + 27 + 1        # 838 : conv1 rows (valid at 30i+j, i,j<28)
_P1 = 16                       # pool1 row pitch after compaction (a,b < 14)
_CH1 = 14 * _P1                # 224 : pool1 rows per channel (>= 13*16+13+1)
_L2 = 11 * _P1 + 11 + 1        # 188 : conv2 rows (valid at 16i+j, i,j<12)


# ------------------------------- fused kernel -------------------------------

def _lenet_fused_kernel(
        x_ref, w1_ref, b1_ref, w2_ref, b2_ref,
        wf1_ref, bf1_ref, wf2_ref, bf2_ref, wf3_ref, bf3_ref,
        out_ref,
        c1_ref, p1_ref, c2_ref, pblk_ref, h1_ref):
    """Full forward pass for a tile of _BT images; batch is the lane axis.

    x_ref  : (904, _BT) f32   zero-padded 30x30 images, flattened rows (pitch 30)
    w1_ref : (8, 9)    f32 SMEM   conv1 taps   (out, ky*3+kx)
    b1_ref : (8,)      f32 SMEM
    w2_ref : (16, 72)  f32 SMEM   conv2 taps   (out, ci*9 + ky*3+kx)
    b2_ref : (16,)     f32 SMEM
    wf1_ref: (16, 256, 36) bf16   fc1 weight, pre-sliced per conv2 out channel
    wf2_ref: (64, 256) bf16,  wf3_ref: (16, 64) bf16 (rows 10..15 zero)
    out_ref: (16, _BT) f32    rows 0..9 are the logits (batch in lanes)
    """
    # Deterministic scratch contents (pitch-16 pool1 grid has unused rows).
    p1_ref[...] = jnp.zeros_like(p1_ref)
    h1_ref[...] = jnp.zeros_like(h1_ref)

    # ---------------- conv1 (1->8, 3x3, pad=1) + maxpool 2x2/2 ----------------
    # Per output channel: 9 scalar-weight FMAs over full-lane-width slices,
    # then pool; bias + ReLU applied AFTER the pool (max is monotone).
    def conv1_body(c, carry):
        acc = w1_ref[c, 0] * x_ref[pl.ds(0, _L1), :]
        for t in range(1, 9):
            off = (t // 3) * _PX + (t % 3)
            acc = acc + w1_ref[c, t] * x_ref[pl.ds(off, _L1), :]
        c1_ref[...] = acc
        bias = b1_ref[c]
        for a in range(14):                      # compact to pitch-16 rows
            src = 60 * a                         # c1 rows 60a + 2b + {0,1,30,31}
            m = jnp.maximum(
                jnp.maximum(c1_ref[pl.ds(src, 14, 2), :],
                            c1_ref[pl.ds(src + 1, 14, 2), :]),
                jnp.maximum(c1_ref[pl.ds(src + _PX, 14, 2), :],
                            c1_ref[pl.ds(src + _PX + 1, 14, 2), :]))
            p1_ref[c, pl.ds(_P1 * a, 14), :] = jnp.maximum(m + bias, 0.0)
        return carry

    lax.fori_loop(0, 8, conv1_body, 0)

    # -------- conv2 (8->16, 3x3 valid) + maxpool 2x2/2 + fused fc1 ------------
    def conv2_body(o, carry):
        c2_ref[...] = jnp.zeros_like(c2_ref)

        def ci_body(ci, inner):
            acc = w2_ref[o, ci * 9] * p1_ref[ci, pl.ds(0, _L2), :]
            for t in range(1, 9):
                off = (t // 3) * _P1 + (t % 3)
                acc = acc + w2_ref[o, ci * 9 + t] * p1_ref[ci, pl.ds(off, _L2), :]
            c2_ref[...] += acc
            return inner

        lax.fori_loop(0, 8, ci_body, 0)

        bias = b2_ref[o]
        for a in range(6):                       # pool2 + bias + ReLU -> (36, B)
            src = 2 * _P1 * a                    # c2 rows 32a + 2b + {0,1,16,17}
            m = jnp.maximum(
                jnp.maximum(c2_ref[pl.ds(src, 6, 2), :],
                            c2_ref[pl.ds(src + 1, 6, 2), :]),
                jnp.maximum(c2_ref[pl.ds(src + _P1, 6, 2), :],
                            c2_ref[pl.ds(src + _P1 + 1, 6, 2), :]))
            pblk_ref[pl.ds(6 * a, 6), :] = jnp.maximum(m + bias, 0.0)

        # fc1 partial sum for this conv2 channel (MXU overlaps the VPU conv work).
        h1_ref[...] += jnp.dot(wf1_ref[o],
                               pblk_ref[...].astype(jnp.bfloat16),
                               preferred_element_type=jnp.float32)
        return carry

    lax.fori_loop(0, 16, conv2_body, 0)

    # -------------------- FC head (batch stays in lanes) ----------------------
    h = jnp.maximum(h1_ref[...] + bf1_ref[...], 0.0).astype(jnp.bfloat16)
    h = jnp.dot(wf2_ref[...], h, preferred_element_type=jnp.float32)
    h = jnp.maximum(h + bf2_ref[...], 0.0).astype(jnp.bfloat16)
    out_ref[...] = jnp.dot(wf3_ref[...], h,
                           preferred_element_type=jnp.float32) + bf3_ref[...]


# ------------------------------ kernel wrapper -------------------------------

def _lenet_pallas(xflat, p):
    n_lanes = xflat.shape[1]
    assert n_lanes % _BT == 0
    smem = pl.BlockSpec(memory_space=pltpu.MemorySpace.SMEM)
    return pl.pallas_call(
        _lenet_fused_kernel,
        out_shape=jax.ShapeDtypeStruct((16, n_lanes), jnp.float32),
        grid=(n_lanes // _BT,),
        in_specs=[
            pl.BlockSpec((_XROWS, _BT), lambda i: (0, i)),   # images (batch in lanes)
            smem, smem, smem, smem,                          # conv weights/biases
            pl.BlockSpec((16, 256, 36), lambda i: (0, 0, 0)),  # wf1 (per-channel slices)
            pl.BlockSpec((256, 1), lambda i: (0, 0)),          # bf1
            pl.BlockSpec((64, 256), lambda i: (0, 0)),         # wf2
            pl.BlockSpec((64, 1), lambda i: (0, 0)),           # bf2
            pl.BlockSpec((16, 64), lambda i: (0, 0)),          # wf3 (row-padded 10->16)
            pl.BlockSpec((16, 1), lambda i: (0, 0)),           # bf3 (row-padded)
        ],
        out_specs=pl.BlockSpec((16, _BT), lambda i: (0, i)),
        scratch_shapes=[
            pltpu.VMEM((_L1, _BT), jnp.float32),       # conv1 rows, pitch 30
            pltpu.VMEM((8, _CH1, _BT), jnp.float32),   # pool1, 8 ch, pitch 16
            pltpu.VMEM((_L2, _BT), jnp.float32),       # conv2 rows, pitch 16
            pltpu.VMEM((36, _BT), jnp.float32),        # pooled (6x6) block, one channel
            pltpu.VMEM((256, _BT), jnp.float32),       # fc1 accumulator
        ],
        compiler_params=pltpu.CompilerParams(
            dimension_semantics=("parallel",)),
    )(xflat, p["w1"], p["b1"], p["w2"], p["b2"],
      p["wf1"], p["bf1"], p["wf2"], p["bf2"], p["wf3"], p["bf3"])


# --------------------------- params / forward -------------------------------

def prepare_params(params):
    """One-time re-layout of the PyTorch-convention weights for the kernel."""
    f32, bf16 = jnp.float32, jnp.bfloat16
    # fc1 weight (256, 576), torch flatten order col = c*36 + i*6 + j, re-laid as
    # (16, 256, 36) so the kernel grabs the per-conv2-channel slice by one index.
    wf1_r = params["wf1"].reshape(256, 16, 36).transpose(1, 0, 2).astype(bf16)
    wf3 = jnp.zeros((16, 64), f32).at[:10].set(params["wf3"]).astype(bf16)
    bf3 = jnp.zeros((16, 1), f32).at[:10, 0].set(params["bf3"])
    return {
        "w1": params["w1"].reshape(8, 9).astype(f32),      # (out, ky*3+kx)
        "b1": params["b1"].astype(f32),
        "w2": params["w2"].reshape(16, 72).astype(f32),    # (out, ci*9+ky*3+kx)
        "b2": params["b2"].astype(f32),
        "wf1": wf1_r,
        "bf1": params["bf1"].reshape(256, 1).astype(f32),
        "wf2": params["wf2"].astype(bf16),
        "bf2": params["bf2"].reshape(64, 1).astype(f32),
        "wf3": wf3,
        "bf3": bf3,
    }


@jax.jit
def network_forward(prepped, x_nchw):
    n, c, h, w = x_nchw.shape
    assert (c, h, w) == (1, 28, 28), (c, h, w)
    x = x_nchw.astype(jnp.float32).reshape(n, 28, 28)
    xpad = jnp.pad(x, ((0, 0), (1, 1), (1, 1)))              # (n, 30, 30)
    xflat = xpad.reshape(n, 900)
    n_pad = -(-n // _BT) * _BT
    xflat = jnp.pad(xflat, ((0, n_pad - n), (0, _XROWS - 900)))
    xflat = xflat.T                                          # (904, n_pad): batch -> lanes
    out_t = _lenet_pallas(xflat, prepped)                    # (16, n_pad)
    return out_t[:10, :n].T                                  # (n, 10)


def init_params(key):
    ks = jax.random.split(key, 10)

    def u(k, shape, fan_in):
        bound = 1.0 / (fan_in ** 0.5)
        return jax.random.uniform(k, shape, jnp.float32, -bound, bound)

    return {
        "w1": u(ks[0], (8, 1, 3, 3), 1 * 3 * 3),
        "b1": u(ks[1], (8,), 1 * 3 * 3),
        "w2": u(ks[2], (16, 8, 3, 3), 8 * 3 * 3),
        "b2": u(ks[3], (16,), 8 * 3 * 3),
        "wf1": u(ks[4], (256, 16 * 6 * 6), 16 * 6 * 6),
        "bf1": u(ks[5], (256,), 16 * 6 * 6),
        "wf2": u(ks[6], (64, 256), 256),
        "bf2": u(ks[7], (64,), 256),
        "wf3": u(ks[8], (10, 64), 64),
        "bf3": u(ks[9], (10,), 64),
    }


def reference_forward(params, x_nchw):
    """Pure-JAX NCHW reference reproducing the PyTorch forward exactly."""
    dn = ("NCHW", "OIHW", "NCHW")
    y = jax.lax.conv_general_dilated(
        x_nchw, params["w1"], (1, 1), ((1, 1), (1, 1)), dimension_numbers=dn)
    y = jax.nn.relu(y + params["b1"][None, :, None, None])
    y = jax.lax.reduce_window(y, -jnp.inf, jax.lax.max,
                              (1, 1, 2, 2), (1, 1, 2, 2), "VALID")
    y = jax.lax.conv_general_dilated(
        y, params["w2"], (1, 1), ((0, 0), (0, 0)), dimension_numbers=dn)
    y = jax.nn.relu(y + params["b2"][None, :, None, None])
    y = jax.lax.reduce_window(y, -jnp.inf, jax.lax.max,
                              (1, 1, 2, 2), (1, 1, 2, 2), "VALID")
    y = y.reshape(y.shape[0], -1)
    y = jax.nn.relu(y @ params["wf1"].T + params["bf1"])
    y = jax.nn.relu(y @ params["wf2"].T + params["bf2"])
    return y @ params["wf3"].T + params["bf3"]


# --------------------------------- main -------------------------------------

if __name__ == "__main__":
    key = jax.random.PRNGKey(0)
    k_params, k_x = jax.random.split(key)
    params = init_params(k_params)
    prepped = prepare_params(params)          # one-time weight re-layout

    # Input implied by Linear(16*6*6, 256): NCHW, 1 channel, 28x28.
    x = jax.random.normal(k_x, (2, 1, 28, 28), dtype=jnp.float32)

    out = jax.block_until_ready(network_forward(prepped, x))
    ref = jax.block_until_ready(reference_forward(params, x))

    assert out.shape == (2, 10), out.shape
    # Convs run in exact f32 on the VPU; the FC head uses bf16 MXU weights
    # (f32 accumulate), so 1e-2 is a comfortable (and 2x tighter) bound.
    assert jnp.allclose(out, ref, rtol=1e-2, atol=1e-2), (
        float(jnp.max(jnp.abs(out - ref))))

    print("KERNEL_OK")
</pallas_src>

<mosaic_0001>
module attributes {stable_mosaic.version = 11 : i64} {
  func.func @_lenet_fused_kernel(%arg0: i32, %arg1: memref<904x128xf32, #tpu.memory_space<vmem>>, %arg2: memref<8x9xf32, #tpu.memory_space<smem>>, %arg3: memref<8xf32, #tpu.memory_space<smem>>, %arg4: memref<16x72xf32, #tpu.memory_space<smem>>, %arg5: memref<16xf32, #tpu.memory_space<smem>>, %arg6: memref<16x256x36xbf16, #tpu.memory_space<vmem>>, %arg7: memref<256x1xf32, #tpu.memory_space<vmem>>, %arg8: memref<64x256xbf16, #tpu.memory_space<vmem>>, %arg9: memref<64x1xf32, #tpu.memory_space<vmem>>, %arg10: memref<16x64xbf16, #tpu.memory_space<vmem>>, %arg11: memref<16x1xf32, #tpu.memory_space<vmem>>, %arg12: memref<16x128xf32, #tpu.memory_space<vmem>>, %arg13: memref<838x128xf32, #tpu.memory_space<vmem>>, %arg14: memref<8x224x128xf32, #tpu.memory_space<vmem>>, %arg15: memref<188x128xf32, #tpu.memory_space<vmem>>, %arg16: memref<36x128xf32, #tpu.memory_space<vmem>>, %arg17: memref<256x128xf32, #tpu.memory_space<vmem>>) attributes {dimension_semantics = [#tpu.dimension_semantics<parallel>], iteration_bounds = array<i64: 1>, scalar_prefetch = 0 : i64, scratch_operands = 5 : i64, tpu.core_type = #tpu.core_type<tc>, window_params = [{transform_indices = @transform_0, window_bounds = array<i64: 904, 128>}, {transform_indices = @transform_1, window_bounds = array<i64: 8, 9>}, {transform_indices = @transform_2, window_bounds = array<i64: 8>}, {transform_indices = @transform_3, window_bounds = array<i64: 16, 72>}, {transform_indices = @transform_4, window_bounds = array<i64: 16>}, {pipeline_mode = #tpu.pipeline_mode<synchronous>, transform_indices = @transform_5, window_bounds = array<i64: 16, 256, 36>}, {pipeline_mode = #tpu.pipeline_mode<synchronous>, transform_indices = @transform_6, window_bounds = array<i64: 256, 1>}, {pipeline_mode = #tpu.pipeline_mode<synchronous>, transform_indices = @transform_7, window_bounds = array<i64: 64, 256>}, {pipeline_mode = #tpu.pipeline_mode<synchronous>, transform_indices = @transform_8, window_bounds = array<i64: 64, 1>}, {pipeline_mode = #tpu.pipeline_mode<synchronous>, transform_indices = @transform_9, window_bounds = array<i64: 16, 64>}, {pipeline_mode = #tpu.pipeline_mode<synchronous>, transform_indices = @transform_10, window_bounds = array<i64: 16, 1>}, {transform_indices = @transform_11, window_bounds = array<i64: 16, 128>}]} {
    %cst = arith.constant 0.000000e+00 : f32
    %0 = vector.broadcast %cst : f32 to vector<8x224x128xf32>
    %c0 = arith.constant 0 : index
    %c0_0 = arith.constant 0 : index
    %c0_1 = arith.constant 0 : index
    %1 = vector.load %arg14[%c0, %c0_0, %c0_1] : memref<8x224x128xf32, #tpu.memory_space<vmem>>, vector<8x224x128xf32>
    tpu.vector_store %arg14[%c0, %c0_0, %c0_1], %0 {strides = array<i32>} : memref<8x224x128xf32, #tpu.memory_space<vmem>>, vector<8x224x128xf32>,
    %cst_2 = arith.constant 0.000000e+00 : f32
    %2 = vector.broadcast %cst_2 : f32 to vector<256x128xf32>
    %c0_3 = arith.constant 0 : index
    %c0_4 = arith.constant 0 : index
    %3 = vector.load %arg17[%c0_3, %c0_4] : memref<256x128xf32, #tpu.memory_space<vmem>>, vector<256x128xf32>
    tpu.vector_store %arg17[%c0_3, %c0_4], %2 {strides = array<i32>} : memref<256x128xf32, #tpu.memory_space<vmem>>, vector<256x128xf32>,
    %c0_i32 = arith.constant 0 : i32
    %c8_i32 = arith.constant 8 : i32
    %4 = arith.addi %c0_i32, %c8_i32 : i32
    %c1_i32 = arith.constant 1 : i32
    scf.for %arg18 = %c0_i32 to %4 step %c1_i32  : i32 {
      %27 = arith.index_cast %arg18 : i32 to index
      %c0_27 = arith.constant 0 : index
      %28 = memref.load %arg2[%27, %c0_27] : memref<8x9xf32, #tpu.memory_space<smem>>
      %c0_28 = arith.constant 0 : index
      %c0_29 = arith.constant 0 : index
      %29 = vector.load %arg1[%c0_28, %c0_29] : memref<904x128xf32, #tpu.memory_space<vmem>>, vector<838x128xf32>
      %30 = vector.broadcast %28 : f32 to vector<838x128xf32>
      %31 = arith.mulf %30, %29 : vector<838x128xf32>
      %32 = arith.index_cast %arg18 : i32 to index
      %c1 = arith.constant 1 : index
      %33 = memref.load %arg2[%32, %c1] : memref<8x9xf32, #tpu.memory_space<smem>>
      %c1_30 = arith.constant 1 : index
      %c0_31 = arith.constant 0 : index
      %34 = vector.load %arg1[%c1_30, %c0_31] : memref<904x128xf32, #tpu.memory_space<vmem>>, vector<838x128xf32>
      %35 = vector.broadcast %33 : f32 to vector<838x128xf32>
      %36 = arith.mulf %35, %34 : vector<838x128xf32>
      %37 = arith.addf %31, %36 : vector<838x128xf32>
      %38 = arith.index_cast %arg18 : i32 to index
      %c2 = arith.constant 2 : index
      %39 = memref.load %arg2[%38, %c2] : memref<8x9xf32, #tpu.memory_space<smem>>
      %c2_32 = arith.constant 2 : index
      %c0_33 = arith.constant 0 : index
      %40 = vector.load %arg1[%c2_32, %c0_33] : memref<904x128xf32, #tpu.memory_space<vmem>>, vector<838x128xf32>
      %41 = vector.broadcast %39 : f32 to vector<838x128xf32>
      %42 = arith.mulf %41, %40 : vector<838x128xf32>
      %43 = arith.addf %37, %42 : vector<838x128xf32>
      %44 = arith.index_cast %arg18 : i32 to index
      %c3 = arith.constant 3 : index
      %45 = memref.load %arg2[%44, %c3] : memref<8x9xf32, #tpu.memory_space<smem>>
      %c30 = arith.constant 30 : index
      %c0_34 = arith.constant 0 : index
      %46 = vector.load %arg1[%c30, %c0_34] : memref<904x128xf32, #tpu.memory_space<vmem>>, vector<838x128xf32>
      %47 = vector.broadcast %45 : f32 to vector<838x128xf32>
      %48 = arith.mulf %47, %46 : vector<838x128xf32>
      %49 = arith.addf %43, %48 : vector<838x128xf32>
      %50 = arith.index_cast %arg18 : i32 to index
      %c4 = arith.constant 4 : index
      %51 = memref.load %arg2[%50, %c4] : memref<8x9xf32, #tpu.memory_space<smem>>
      %c31 = arith.constant 31 : index
      %c0_35 = arith.constant 0 : index
      %52 = vector.load %arg1[%c31, %c0_35] : memref<904x128xf32, #tpu.memory_space<vmem>>, vector<838x128xf32>
      %53 = vector.broadcast %51 : f32 to vector<838x128xf32>
      %54 = arith.mulf %53, %52 : vector<838x128xf32>
      %55 = arith.addf %49, %54 : vector<838x128xf32>
      %56 = arith.index_cast %arg18 : i32 to index
      %c5 = arith.constant 5 : index
      %57 = memref.load %arg2[%56, %c5] : memref<8x9xf32, #tpu.memory_space<smem>>
      %c32 = arith.constant 32 : index
      %c0_36 = arith.constant 0 : index
      %58 = vector.load %arg1[%c32, %c0_36] : memref<904x128xf32, #tpu.memory_space<vmem>>, vector<838x128xf32>
      %59 = vector.broadcast %57 : f32 to vector<838x128xf32>
      %60 = arith.mulf %59, %58 : vector<838x128xf32>
      %61 = arith.addf %55, %60 : vector<838x128xf32>
      %62 = arith.index_cast %arg18 : i32 to index
      %c6 = arith.constant 6 : index
      %63 = memref.load %arg2[%62, %c6] : memref<8x9xf32, #tpu.memory_space<smem>>
      %c60 = arith.constant 60 : index
      %c0_37 = arith.constant 0 : index
      %64 = vector.load %arg1[%c60, %c0_37] : memref<904x128xf32, #tpu.memory_space<vmem>>, vector<838x128xf32>
      %65 = vector.broadcast %63 : f32 to vector<838x128xf32>
      %66 = arith.mulf %65, %64 : vector<838x128xf32>
      %67 = arith.addf %61, %66 : vector<838x128xf32>
      %68 = arith.index_cast %arg18 : i32 to index
      %c7 = arith.constant 7 : index
      %69 = memref.load %arg2[%68, %c7] : memref<8x9xf32, #tpu.memory_space<smem>>
      %c61 = arith.constant 61 : index
      %c0_38 = arith.constant 0 : index
      %70 = vector.load %arg1[%c61, %c0_38] : memref<904x128xf32, #tpu.memory_space<vmem>>, vector<838x128xf32>
      %71 = vector.broadcast %69 : f32 to vector<838x128xf32>
      %72 = arith.mulf %71, %70 : vector<838x128xf32>
      %73 = arith.addf %67, %72 : vector<838x128xf32>
      %74 = arith.index_cast %arg18 : i32 to index
      %c8 = arith.constant 8 : index
      %75 = memref.load %arg2[%74, %c8] : memref<8x9xf32, #tpu.memory_space<smem>>
      %c62 = arith.constant 62 : index
      %c0_39 = arith.constant 0 : index
      %76 = vector.load %arg1[%c62, %c0_39] : memref<904x128xf32, #tpu.memory_space<vmem>>, vector<838x128xf32>
      %77 = vector.broadcast %75 : f32 to vector<838x128xf32>
      %78 = arith.mulf %77, %76 : vector<838x128xf32>
      %79 = arith.addf %73, %78 : vector<838x128xf32>
      %c0_40 = arith.constant 0 : index
      %c0_41 = arith.constant 0 : index
      %80 = vector.load %arg13[%c0_40, %c0_41] : memref<838x128xf32, #tpu.memory_space<vmem>>, vector<838x128xf32>
      tpu.vector_store %arg13[%c0_40, %c0_41], %79 {strides = array<i32>} : memref<838x128xf32, #tpu.memory_space<vmem>>, vector<838x128xf32>,
      %81 = arith.index_cast %arg18 : i32 to index
      %82 = memref.load %arg3[%81] : memref<8xf32, #tpu.memory_space<smem>>
      %c0_42 = arith.constant 0 : index
      %c0_43 = arith.constant 0 : index
      %83 = tpu.strided_load %arg13[%c0_42, %c0_43] {strides = array<i32: 2, 1>} : memref<838x128xf32, #tpu.memory_space<vmem>>, vector<14x128xf32>
      %c1_44 = arith.constant 1 : index
      %c0_45 = arith.constant 0 : index
      %84 = tpu.strided_load %arg13[%c1_44, %c0_45] {strides = array<i32: 2, 1>} : memref<838x128xf32, #tpu.memory_space<vmem>>, vector<14x128xf32>
      %85 = arith.maximumf %83, %84 : vector<14x128xf32>
      %c30_46 = arith.constant 30 : index
      %c0_47 = arith.constant 0 : index
      %86 = tpu.strided_load %arg13[%c30_46, %c0_47] {strides = array<i32: 2, 1>} : memref<838x128xf32, #tpu.memory_space<vmem>>, vector<14x128xf32>
      %c31_48 = arith.constant 31 : index
      %c0_49 = arith.constant 0 : index
      %87 = tpu.strided_load %arg13[%c31_48, %c0_49] {strides = array<i32: 2, 1>} : memref<838x128xf32, #tpu.memory_space<vmem>>, vector<14x128xf32>
      %88 = arith.maximumf %86, %87 : vector<14x128xf32>
      %89 = arith.maximumf %85, %88 : vector<14x128xf32>
      %90 = vector.broadcast %82 : f32 to vector<14x128xf32>
      %91 = arith.addf %89, %90 : vector<14x128xf32>
      %cst_50 = arith.constant 0.000000e+00 : f32
      %92 = vector.broadcast %cst_50 : f32 to vector<14x128xf32>
      %93 = arith.maximumf %91, %92 : vector<14x128xf32>
      %94 = arith.index_cast %arg18 : i32 to index
      %c0_51 = arith.constant 0 : index
      %c0_52 = arith.constant 0 : index
      %95 = vector.load %arg14[%94, %c0_51, %c0_52] : memref<8x224x128xf32, #tpu.memory_space<vmem>>, vector<1x14x128xf32>
      %96 = vector.shape_cast %95 : vector<1x14x128xf32> to vector<14x128xf32>
      %97 = vector.shape_cast %93 : vector<14x128xf32> to vector<1x14x128xf32>
      tpu.vector_store %arg14[%94, %c0_51, %c0_52], %97 {strides = array<i32>} : memref<8x224x128xf32, #tpu.memory_space<vmem>>, vector<1x14x128xf32>,
      %c60_53 = arith.constant 60 : index
      %c0_54 = arith.constant 0 : index
      %98 = tpu.strided_load %arg13[%c60_53, %c0_54] {strides = array<i32: 2, 1>} : memref<838x128xf32, #tpu.memory_space<vmem>>, vector<14x128xf32>
      %c61_55 = arith.constant 61 : index
      %c0_56 = arith.constant 0 : index
      %99 = tpu.strided_load %arg13[%c61_55, %c0_56] {strides = array<i32: 2, 1>} : memref<838x128xf32, #tpu.memory_space<vmem>>, vector<14x128xf32>
      %100 = arith.maximumf %98, %99 : vector<14x128xf32>
      %c90 = arith.constant 90 : index
      %c0_57 = arith.constant 0 : index
      %101 = tpu.strided_load %arg13[%c90, %c0_57] {strides = array<i32: 2, 1>} : memref<838x128xf32, #tpu.memory_space<vmem>>, vector<14x128xf32>
      %c91 = arith.constant 91 : index
      %c0_58 = arith.constant 0 : index
      %102 = tpu.strided_load %arg13[%c91, %c0_58] {strides = array<i32: 2, 1>} : memref<838x128xf32, #tpu.memory_space<vmem>>, vector<14x128xf32>
      %103 = arith.maximumf %101, %102 : vector<14x128xf32>
      %104 = arith.maximumf %100, %103 : vector<14x128xf32>
      %105 = vector.broadcast %82 : f32 to vector<14x128xf32>
      %106 = arith.addf %104, %105 : vector<14x128xf32>
      %cst_59 = arith.constant 0.000000e+00 : f32
      %107 = vector.broadcast %cst_59 : f32 to vector<14x128xf32>
      %108 = arith.maximumf %106, %107 : vector<14x128xf32>
      %109 = arith.index_cast %arg18 : i32 to index
      %c16 = arith.constant 16 : index
      %c0_60 = arith.constant 0 : index
      %110 = vector.load %arg14[%109, %c16, %c0_60] : memref<8x224x128xf32, #tpu.memory_space<vmem>>, vector<1x14x128xf32>
      %111 = vector.shape_cast %110 : vector<1x14x128xf32> to vector<14x128xf32>
      %112 = vector.shape_cast %108 : vector<14x128xf32> to vector<1x14x128xf32>
      tpu.vector_store %arg14[%109, %c16, %c0_60], %112 {strides = array<i32>} : memref<8x224x128xf32, #tpu.memory_space<vmem>>, vector<1x14x128xf32>,
      %c120 = arith.constant 120 : index
      %c0_61 = arith.constant 0 : index
      %113 = tpu.strided_load %arg13[%c120, %c0_61] {strides = array<i32: 2, 1>} : memref<838x128xf32, #tpu.memory_space<vmem>>, vector<14x128xf32>
      %c121 = arith.constant 121 : index
      %c0_62 = arith.constant 0 : index
      %114 = tpu.strided_load %arg13[%c121, %c0_62] {strides = array<i32: 2, 1>} : memref<838x128xf32, #tpu.memory_space<vmem>>, vector<14x128xf32>
      %115 = arith.maximumf %113, %114 : vector<14x128xf32>
      %c150 = arith.constant 150 : index
      %c0_63 = arith.constant 0 : index
      %116 = tpu.strided_load %arg13[%c150, %c0_63] {strides = array<i32: 2, 1>} : memref<838x128xf32, #tpu.memory_space<vmem>>, vector<14x128xf32>
      %c151 = arith.constant 151 : index
      %c0_64 = arith.constant 0 : index
      %117 = tpu.strided_load %arg13[%c151, %c0_64] {strides = array<i32: 2, 1>} : memref<838x128xf32, #tpu.memory_space<vmem>>, vector<14x128xf32>
      %118 = arith.maximumf %116, %117 : vector<14x128xf32>
      %119 = arith.maximumf %115, %118 : vector<14x128xf32>
      %120 = vector.broadcast %82 : f32 to vector<14x128xf32>
      %121 = arith.addf %119, %120 : vector<14x128xf32>
      %cst_65 = arith.constant 0.000000e+00 : f32
      %122 = vector.broadcast %cst_65 : f32 to vector<14x128xf32>
      %123 = arith.maximumf %121, %122 : vector<14x128xf32>
      %124 = arith.index_cast %arg18 : i32 to index
      %c32_66 = arith.constant 32 : index
      %c0_67 = arith.constant 0 : index
      %125 = vector.load %arg14[%124, %c32_66, %c0_67] : memref<8x224x128xf32, #tpu.memory_space<vmem>>, vector<1x14x128xf32>
      %126 = vector.shape_cast %125 : vector<1x14x128xf32> to vector<14x128xf32>
      %127 = vector.shape_cast %123 : vector<14x128xf32> to vector<1x14x128xf32>
      tpu.vector_store %arg14[%124, %c32_66, %c0_67], %127 {strides = array<i32>} : memref<8x224x128xf32, #tpu.memory_space<vmem>>, vector<1x14x128xf32>,
      %c180 = arith.constant 180 : index
      %c0_68 = arith.constant 0 : index
      %128 = tpu.strided_load %arg13[%c180, %c0_68] {strides = array<i32: 2, 1>} : memref<838x128xf32, #tpu.memory_space<vmem>>, vector<14x128xf32>
      %c181 = arith.constant 181 : index
      %c0_69 = arith.constant 0 : index
      %129 = tpu.strided_load %arg13[%c181, %c0_69] {strides = array<i32: 2, 1>} : memref<838x128xf32, #tpu.memory_space<vmem>>, vector<14x128xf32>
      %130 = arith.maximumf %128, %129 : vector<14x128xf32>
      %c210 = arith.constant 210 : index
      %c0_70 = arith.constant 0 : index
      %131 = tpu.strided_load %arg13[%c210, %c0_70] {strides = array<i32: 2, 1>} : memref<838x128xf32, #tpu.memory_space<vmem>>, vector<14x128xf32>
      %c211 = arith.constant 211 : index
      %c0_71 = arith.constant 0 : index
      %132 = tpu.strided_load %arg13[%c211, %c0_71] {strides = array<i32: 2, 1>} : memref<838x128xf32, #tpu.memory_space<vmem>>, vector<14x128xf32>
      %133 = arith.maximumf %131, %132 : vector<14x128xf32>
      %134 = arith.maximumf %130, %133 : vector<14x128xf32>
      %135 = vector.broadcast %82 : f32 to vector<14x128xf32>
      %136 = arith.addf %134, %135 : vector<14x128xf32>
      %cst_72 = arith.constant 0.000000e+00 : f32
      %137 = vector.broadcast %cst_72 : f32 to vector<14x128xf32>
      %138 = arith.maximumf %136, %137 : vector<14x128xf32>
      %139 = arith.index_cast %arg18 : i32 to index
      %c48 = arith.constant 48 : index
      %c0_73 = arith.constant 0 : index
      %140 = vector.load %arg14[%139, %c48, %c0_73] : memref<8x224x128xf32, #tpu.memory_space<vmem>>, vector<1x14x128xf32>
      %141 = vector.shape_cast %140 : vector<1x14x128xf32> to vector<14x128xf32>
      %142 = vector.shape_cast %138 : vector<14x128xf32> to vector<1x14x128xf32>
      tpu.vector_store %arg14[%139, %c48, %c0_73], %142 {strides = array<i32>} : memref<8x224x128xf32, #tpu.memory_space<vmem>>, vector<1x14x128xf32>,
      %c240 = arith.constant 240 : index
      %c0_74 = arith.constant 0 : index
      %143 = tpu.strided_load %arg13[%c240, %c0_74] {strides = array<i32: 2, 1>} : memref<838x128xf32, #tpu.memory_space<vmem>>, vector<14x128xf32>
      %c241 = arith.constant 241 : index
      %c0_75 = arith.constant 0 : index
      %144 = tpu.strided_load %arg13[%c241, %c0_75] {strides = array<i32: 2, 1>} : memref<838x128xf32, #tpu.memory_space<vmem>>, vector<14x128xf32>
      %145 = arith.maximumf %143, %144 : vector<14x128xf32>
      %c270 = arith.constant 270 : index
      %c0_76 = arith.constant 0 : index
      %146 = tpu.strided_load %arg13[%c270, %c0_76] {strides = array<i32: 2, 1>} : memref<838x128xf32, #tpu.memory_space<vmem>>, vector<14x128xf32>
      %c271 = arith.constant 271 : index
      %c0_77 = arith.constant 0 : index
      %147 = tpu.strided_load %arg13[%c271, %c0_77] {strides = array<i32: 2, 1>} : memref<838x128xf32, #tpu.memory_space<vmem>>, vector<14x128xf32>
      %148 = arith.maximumf %146, %147 : vector<14x128xf32>
      %149 = arith.maximumf %145, %148 : vector<14x128xf32>
      %150 = vector.broadcast %82 : f32 to vector<14x128xf32>
      %151 = arith.addf %149, %150 : vector<14x128xf32>
      %cst_78 = arith.constant 0.000000e+00 : f32
      %152 = vector.broadcast %cst_78 : f32 to vector<14x128xf32>
      %153 = arith.maximumf %151, %152 : vector<14x128xf32>
      %154 = arith.index_cast %arg18 : i32 to index
      %c64 = arith.constant 64 : index
      %c0_79 = arith.constant 0 : index
      %155 = vector.load %arg14[%154, %c64, %c0_79] : memref<8x224x128xf32, #tpu.memory_space<vmem>>, vector<1x14x128xf32>
      %156 = vector.shape_cast %155 : vector<1x14x128xf32> to vector<14x128xf32>
      %157 = vector.shape_cast %153 : vector<14x128xf32> to vector<1x14x128xf32>
      tpu.vector_store %arg14[%154, %c64, %c0_79], %157 {strides = array<i32>} : memref<8x224x128xf32, #tpu.memory_space<vmem>>, vector<1x14x128xf32>,
      %c300 = arith.constant 300 : index
      %c0_80 = arith.constant 0 : index
      %158 = tpu.strided_load %arg13[%c300, %c0_80] {strides = array<i32: 2, 1>} : memref<838x128xf32, #tpu.memory_space<vmem>>, vector<14x128xf32>
      %c301 = arith.constant 301 : index
      %c0_81 = arith.constant 0 : index
      %159 = tpu.strided_load %arg13[%c301, %c0_81] {strides = array<i32: 2, 1>} : memref<838x128xf32, #tpu.memory_space<vmem>>, vector<14x128xf32>
      %160 = arith.maximumf %158, %159 : vector<14x128xf32>
      %c330 = arith.constant 330 : index
      %c0_82 = arith.constant 0 : index
      %161 = tpu.strided_load %arg13[%c330, %c0_82] {strides = array<i32: 2, 1>} : memref<838x128xf32, #tpu.memory_space<vmem>>, vector<14x128xf32>
      %c331 = arith.constant 331 : index
      %c0_83 = arith.constant 0 : index
      %162 = tpu.strided_load %arg13[%c331, %c0_83] {strides = array<i32: 2, 1>} : memref<838x128xf32, #tpu.memory_space<vmem>>, vector<14x128xf32>
      %163 = arith.maximumf %161, %162 : vector<14x128xf32>
      %164 = arith.maximumf %160, %163 : vector<14x128xf32>
      %165 = vector.broadcast %82 : f32 to vector<14x128xf32>
      %166 = arith.addf %164, %165 : vector<14x128xf32>
      %cst_84 = arith.constant 0.000000e+00 : f32
      %167 = vector.broadcast %cst_84 : f32 to vector<14x128xf32>
      %168 = arith.maximumf %166, %167 : vector<14x128xf32>
      %169 = arith.index_cast %arg18 : i32 to index
      %c80 = arith.constant 80 : index
      %c0_85 = arith.constant 0 : index
      %170 = vector.load %arg14[%169, %c80, %c0_85] : memref<8x224x128xf32, #tpu.memory_space<vmem>>, vector<1x14x128xf32>
      %171 = vector.shape_cast %170 : vector<1x14x128xf32> to vector<14x128xf32>
      %172 = vector.shape_cast %168 : vector<14x128xf32> to vector<1x14x128xf32>
      tpu.vector_store %arg14[%169, %c80, %c0_85], %172 {strides = array<i32>} : memref<8x224x128xf32, #tpu.memory_space<vmem>>, vector<1x14x128xf32>,
      %c360 = arith.constant 360 : index
      %c0_86 = arith.constant 0 : index
      %173 = tpu.strided_load %arg13[%c360, %c0_86] {strides = array<i32: 2, 1>} : memref<838x128xf32, #tpu.memory_space<vmem>>, vector<14x128xf32>
      %c361 = arith.constant 361 : index
      %c0_87 = arith.constant 0 : index
      %174 = tpu.strided_load %arg13[%c361, %c0_87] {strides = array<i32: 2, 1>} : memref<838x128xf32, #tpu.memory_space<vmem>>, vector<14x128xf32>
      %175 = arith.maximumf %173, %174 : vector<14x128xf32>
      %c390 = arith.constant 390 : index
      %c0_88 = arith.constant 0 : index
      %176 = tpu.strided_load %arg13[%c390, %c0_88] {strides = array<i32: 2, 1>} : memref<838x128xf32, #tpu.memory_space<vmem>>, vector<14x128xf32>
      %c391 = arith.constant 391 : index
      %c0_89 = arith.constant 0 : index
      %177 = tpu.strided_load %arg13[%c391, %c0_89] {strides = array<i32: 2, 1>} : memref<838x128xf32, #tpu.memory_space<vmem>>, vector<14x128xf32>
      %178 = arith.maximumf %176, %177 : vector<14x128xf32>
      %179 = arith.maximumf %175, %178 : vector<14x128xf32>
      %180 = vector.broadcast %82 : f32 to vector<14x128xf32>
      %181 = arith.addf %179, %180 : vector<14x128xf32>
      %cst_90 = arith.constant 0.000000e+00 : f32
      %182 = vector.broadcast %cst_90 : f32 to vector<14x128xf32>
      %183 = arith.maximumf %181, %182 : vector<14x128xf32>
      %184 = arith.index_cast %arg18 : i32 to index
      %c96 = arith.constant 96 : index
      %c0_91 = arith.constant 0 : index
      %185 = vector.load %arg14[%184, %c96, %c0_91] : memref<8x224x128xf32, #tpu.memory_space<vmem>>, vector<1x14x128xf32>
      %186 = vector.shape_cast %185 : vector<1x14x128xf32> to vector<14x128xf32>
      %187 = vector.shape_cast %183 : vector<14x128xf32> to vector<1x14x128xf32>
      tpu.vector_store %arg14[%184, %c96, %c0_91], %187 {strides = array<i32>} : memref<8x224x128xf32, #tpu.memory_space<vmem>>, vector<1x14x128xf32>,
      %c420 = arith.constant 420 : index
      %c0_92 = arith.constant 0 : index
      %188 = tpu.strided_load %arg13[%c420, %c0_92] {strides = array<i32: 2, 1>} : memref<838x128xf32, #tpu.memory_space<vmem>>, vector<14x128xf32>
      %c421 = arith.constant 421 : index
      %c0_93 = arith.constant 0 : index
      %189 = tpu.strided_load %arg13[%c421, %c0_93] {strides = array<i32: 2, 1>} : memref<838x128xf32, #tpu.memory_space<vmem>>, vector<14x128xf32>
      %190 = arith.maximumf %188, %189 : vector<14x128xf32>
      %c450 = arith.constant 450 : index
      %c0_94 = arith.constant 0 : index
      %191 = tpu.strided_load %arg13[%c450, %c0_94] {strides = array<i32: 2, 1>} : memref<838x128xf32, #tpu.memory_space<vmem>>, vector<14x128xf32>
      %c451 = arith.constant 451 : index
      %c0_95 = arith.constant 0 : index
      %192 = tpu.strided_load %arg13[%c451, %c0_95] {strides = array<i32: 2, 1>} : memref<838x128xf32, #tpu.memory_space<vmem>>, vector<14x128xf32>
      %193 = arith.maximumf %191, %192 : vector<14x128xf32>
      %194 = arith.maximumf %190, %193 : vector<14x128xf32>
      %195 = vector.broadcast %82 : f32 to vector<14x128xf32>
      %196 = arith.addf %194, %195 : vector<14x128xf32>
      %cst_96 = arith.constant 0.000000e+00 : f32
      %197 = vector.broadcast %cst_96 : f32 to vector<14x128xf32>
      %198 = arith.maximumf %196, %197 : vector<14x128xf32>
      %199 = arith.index_cast %arg18 : i32 to index
      %c112 = arith.constant 112 : index
      %c0_97 = arith.constant 0 : index
      %200 = vector.load %arg14[%199, %c112, %c0_97] : memref<8x224x128xf32, #tpu.memory_space<vmem>>, vector<1x14x128xf32>
      %201 = vector.shape_cast %200 : vector<1x14x128xf32> to vector<14x128xf32>
      %202 = vector.shape_cast %198 : vector<14x128xf32> to vector<1x14x128xf32>
      tpu.vector_store %arg14[%199, %c112, %c0_97], %202 {strides = array<i32>} : memref<8x224x128xf32, #tpu.memory_space<vmem>>, vector<1x14x128xf32>,
      %c480 = arith.constant 480 : index
      %c0_98 = arith.constant 0 : index
      %203 = tpu.strided_load %arg13[%c480, %c0_98] {strides = array<i32: 2, 1>} : memref<838x128xf32, #tpu.memory_space<vmem>>, vector<14x128xf32>
      %c481 = arith.constant 481 : index
      %c0_99 = arith.constant 0 : index
      %204 = tpu.strided_load %arg13[%c481, %c0_99] {strides = array<i32: 2, 1>} : memref<838x128xf32, #tpu.memory_space<vmem>>, vector<14x128xf32>
      %205 = arith.maximumf %203, %204 : vector<14x128xf32>
      %c510 = arith.constant 510 : index
      %c0_100 = arith.constant 0 : index
      %206 = tpu.strided_load %arg13[%c510, %c0_100] {strides = array<i32: 2, 1>} : memref<838x128xf32, #tpu.memory_space<vmem>>, vector<14x128xf32>
      %c511 = arith.constant 511 : index
      %c0_101 = arith.constant 0 : index
      %207 = tpu.strided_load %arg13[%c511, %c0_101] {strides = array<i32: 2, 1>} : memref<838x128xf32, #tpu.memory_space<vmem>>, vector<14x128xf32>
      %208 = arith.maximumf %206, %207 : vector<14x128xf32>
      %209 = arith.maximumf %205, %208 : vector<14x128xf32>
      %210 = vector.broadcast %82 : f32 to vector<14x128xf32>
      %211 = arith.addf %209, %210 : vector<14x128xf32>
      %cst_102 = arith.constant 0.000000e+00 : f32
      %212 = vector.broadcast %cst_102 : f32 to vector<14x128xf32>
      %213 = arith.maximumf %211, %212 : vector<14x128xf32>
      %214 = arith.index_cast %arg18 : i32 to index
      %c128 = arith.constant 128 : index
      %c0_103 = arith.constant 0 : index
      %215 = vector.load %arg14[%214, %c128, %c0_103] : memref<8x224x128xf32, #tpu.memory_space<vmem>>, vector<1x14x128xf32>
      %216 = vector.shape_cast %215 : vector<1x14x128xf32> to vector<14x128xf32>
      %217 = vector.shape_cast %213 : vector<14x128xf32> to vector<1x14x128xf32>
      tpu.vector_store %arg14[%214, %c128, %c0_103], %217 {strides = array<i32>} : memref<8x224x128xf32, #tpu.memory_space<vmem>>, vector<1x14x128xf32>,
      %c540 = arith.constant 540 : index
      %c0_104 = arith.constant 0 : index
      %218 = tpu.strided_load %arg13[%c540, %c0_104] {strides = array<i32: 2, 1>} : memref<838x128xf32, #tpu.memory_space<vmem>>, vector<14x128xf32>
      %c541 = arith.constant 541 : index
      %c0_105 = arith.constant 0 : index
      %219 = tpu.strided_load %arg13[%c541, %c0_105] {strides = array<i32: 2, 1>} : memref<838x128xf32, #tpu.memory_space<vmem>>, vector<14x128xf32>
      %220 = arith.maximumf %218, %219 : vector<14x128xf32>
      %c570 = arith.constant 570 : index
      %c0_106 = arith.constant 0 : index
      %221 = tpu.strided_load %arg13[%c570, %c0_106] {strides = array<i32: 2, 1>} : memref<838x128xf32, #tpu.memory_space<vmem>>, vector<14x128xf32>
      %c571 = arith.constant 571 : index
      %c0_107 = arith.constant 0 : index
      %222 = tpu.strided_load %arg13[%c571, %c0_107] {strides = array<i32: 2, 1>} : memref<838x128xf32, #tpu.memory_space<vmem>>, vector<14x128xf32>
      %223 = arith.maximumf %221, %222 : vector<14x128xf32>
      %224 = arith.maximumf %220, %223 : vector<14x128xf32>
      %225 = vector.broadcast %82 : f32 to vector<14x128xf32>
      %226 = arith.addf %224, %225 : vector<14x128xf32>
      %cst_108 = arith.constant 0.000000e+00 : f32
      %227 = vector.broadcast %cst_108 : f32 to vector<14x128xf32>
      %228 = arith.maximumf %226, %227 : vector<14x128xf32>
      %229 = arith.index_cast %arg18 : i32 to index
      %c144 = arith.constant 144 : index
      %c0_109 = arith.constant 0 : index
      %230 = vector.load %arg14[%229, %c144, %c0_109] : memref<8x224x128xf32, #tpu.memory_space<vmem>>, vector<1x14x128xf32>
      %231 = vector.shape_cast %230 : vector<1x14x128xf32> to vector<14x128xf32>
      %232 = vector.shape_cast %228 : vector<14x128xf32> to vector<1x14x128xf32>
      tpu.vector_store %arg14[%229, %c144, %c0_109], %232 {strides = array<i32>} : memref<8x224x128xf32, #tpu.memory_space<vmem>>, vector<1x14x128xf32>,
      %c600 = arith.constant 600 : index
      %c0_110 = arith.constant 0 : index
      %233 = tpu.strided_load %arg13[%c600, %c0_110] {strides = array<i32: 2, 1>} : memref<838x128xf32, #tpu.memory_space<vmem>>, vector<14x128xf32>
      %c601 = arith.constant 601 : index
      %c0_111 = arith.constant 0 : index
      %234 = tpu.strided_load %arg13[%c601, %c0_111] {strides = array<i32: 2, 1>} : memref<838x128xf32, #tpu.memory_space<vmem>>, vector<14x128xf32>
      %235 = arith.maximumf %233, %234 : vector<14x128xf32>
      %c630 = arith.constant 630 : index
      %c0_112 = arith.constant 0 : index
      %236 = tpu.strided_load %arg13[%c630, %c0_112] {strides = array<i32: 2, 1>} : memref<838x128xf32, #tpu.memory_space<vmem>>, vector<14x128xf32>
      %c631 = arith.constant 631 : index
      %c0_113 = arith.constant 0 : index
      %237 = tpu.strided_load %arg13[%c631, %c0_113] {strides = array<i32: 2, 1>} : memref<838x128xf32, #tpu.memory_space<vmem>>, vector<14x128xf32>
      %238 = arith.maximumf %236, %237 : vector<14x128xf32>
      %239 = arith.maximumf %235, %238 : vector<14x128xf32>
      %240 = vector.broadcast %82 : f32 to vector<14x128xf32>
      %241 = arith.addf %239, %240 : vector<14x128xf32>
      %cst_114 = arith.constant 0.000000e+00 : f32
      %242 = vector.broadcast %cst_114 : f32 to vector<14x128xf32>
      %243 = arith.maximumf %241, %242 : vector<14x128xf32>
      %244 = arith.index_cast %arg18 : i32 to index
      %c160 = arith.constant 160 : index
      %c0_115 = arith.constant 0 : index
      %245 = vector.load %arg14[%244, %c160, %c0_115] : memref<8x224x128xf32, #tpu.memory_space<vmem>>, vector<1x14x128xf32>
      %246 = vector.shape_cast %245 : vector<1x14x128xf32> to vector<14x128xf32>
      %247 = vector.shape_cast %243 : vector<14x128xf32> to vector<1x14x128xf32>
      tpu.vector_store %arg14[%244, %c160, %c0_115], %247 {strides = array<i32>} : memref<8x224x128xf32, #tpu.memory_space<vmem>>, vector<1x14x128xf32>,
      %c660 = arith.constant 660 : index
      %c0_116 = arith.constant 0 : index
      %248 = tpu.strided_load %arg13[%c660, %c0_116] {strides = array<i32: 2, 1>} : memref<838x128xf32, #tpu.memory_space<vmem>>, vector<14x128xf32>
      %c661 = arith.constant 661 : index
      %c0_117 = arith.constant 0 : index
      %249 = tpu.strided_load %arg13[%c661, %c0_117] {strides = array<i32: 2, 1>} : memref<838x128xf32, #tpu.memory_space<vmem>>, vector<14x128xf32>
      %250 = arith.maximumf %248, %249 : vector<14x128xf32>
      %c690 = arith.constant 690 : index
      %c0_118 = arith.constant 0 : index
      %251 = tpu.strided_load %arg13[%c690, %c0_118] {strides = array<i32: 2, 1>} : memref<838x128xf32, #tpu.memory_space<vmem>>, vector<14x128xf32>
      %c691 = arith.constant 691 : index
      %c0_119 = arith.constant 0 : index
      %252 = tpu.strided_load %arg13[%c691, %c0_119] {strides = array<i32: 2, 1>} : memref<838x128xf32, #tpu.memory_space<vmem>>, vector<14x128xf32>
      %253 = arith.maximumf %251, %252 : vector<14x128xf32>
      %254 = arith.maximumf %250, %253 : vector<14x128xf32>
      %255 = vector.broadcast %82 : f32 to vector<14x128xf32>
      %256 = arith.addf %254, %255 : vector<14x128xf32>
      %cst_120 = arith.constant 0.000000e+00 : f32
      %257 = vector.broadcast %cst_120 : f32 to vector<14x128xf32>
      %258 = arith.maximumf %256, %257 : vector<14x128xf32>
      %259 = arith.index_cast %arg18 : i32 to index
      %c176 = arith.constant 176 : index
      %c0_121 = arith.constant 0 : index
      %260 = vector.load %arg14[%259, %c176, %c0_121] : memref<8x224x128xf32, #tpu.memory_space<vmem>>, vector<1x14x128xf32>
      %261 = vector.shape_cast %260 : vector<1x14x128xf32> to vector<14x128xf32>
      %262 = vector.shape_cast %258 : vector<14x128xf32> to vector<1x14x128xf32>
      tpu.vector_store %arg14[%259, %c176, %c0_121], %262 {strides = array<i32>} : memref<8x224x128xf32, #tpu.memory_space<vmem>>, vector<1x14x128xf32>,
      %c720 = arith.constant 720 : index
      %c0_122 = arith.constant 0 : index
      %263 = tpu.strided_load %arg13[%c720, %c0_122] {strides = array<i32: 2, 1>} : memref<838x128xf32, #tpu.memory_space<vmem>>, vector<14x128xf32>
      %c721 = arith.constant 721 : index
      %c0_123 = arith.constant 0 : index
      %264 = tpu.strided_load %arg13[%c721, %c0_123] {strides = array<i32: 2, 1>} : memref<838x128xf32, #tpu.memory_space<vmem>>, vector<14x128xf32>
      %265 = arith.maximumf %263, %264 : vector<14x128xf32>
      %c750 = arith.constant 750 : index
      %c0_124 = arith.constant 0 : index
      %266 = tpu.strided_load %arg13[%c750, %c0_124] {strides = array<i32: 2, 1>} : memref<838x128xf32, #tpu.memory_space<vmem>>, vector<14x128xf32>
      %c751 = arith.constant 751 : index
      %c0_125 = arith.constant 0 : index
      %267 = tpu.strided_load %arg13[%c751, %c0_125] {strides = array<i32: 2, 1>} : memref<838x128xf32, #tpu.memory_space<vmem>>, vector<14x128xf32>
      %268 = arith.maximumf %266, %267 : vector<14x128xf32>
      %269 = arith.maximumf %265, %268 : vector<14x128xf32>
      %270 = vector.broadcast %82 : f32 to vector<14x128xf32>
      %271 = arith.addf %269, %270 : vector<14x128xf32>
      %cst_126 = arith.constant 0.000000e+00 : f32
      %272 = vector.broadcast %cst_126 : f32 to vector<14x128xf32>
      %273 = arith.maximumf %271, %272 : vector<14x128xf32>
      %274 = arith.index_cast %arg18 : i32 to index
      %c192 = arith.constant 192 : index
      %c0_127 = arith.constant 0 : index
      %275 = vector.load %arg14[%274, %c192, %c0_127] : memref<8x224x128xf32, #tpu.memory_space<vmem>>, vector<1x14x128xf32>
      %276 = vector.shape_cast %275 : vector<1x14x128xf32> to vector<14x128xf32>
      %277 = vector.shape_cast %273 : vector<14x128xf32> to vector<1x14x128xf32>
      tpu.vector_store %arg14[%274, %c192, %c0_127], %277 {strides = array<i32>} : memref<8x224x128xf32, #tpu.memory_space<vmem>>, vector<1x14x128xf32>,
      %c780 = arith.constant 780 : index
      %c0_128 = arith.constant 0 : index
      %278 = tpu.strided_load %arg13[%c780, %c0_128] {strides = array<i32: 2, 1>} : memref<838x128xf32, #tpu.memory_space<vmem>>, vector<14x128xf32>
      %c781 = arith.constant 781 : index
      %c0_129 = arith.constant 0 : index
      %279 = tpu.strided_load %arg13[%c781, %c0_129] {strides = array<i32: 2, 1>} : memref<838x128xf32, #tpu.memory_space<vmem>>, vector<14x128xf32>
      %280 = arith.maximumf %278, %279 : vector<14x128xf32>
      %c810 = arith.constant 810 : index
      %c0_130 = arith.constant 0 : index
      %281 = tpu.strided_load %arg13[%c810, %c0_130] {strides = array<i32: 2, 1>} : memref<838x128xf32, #tpu.memory_space<vmem>>, vector<14x128xf32>
      %c811 = arith.constant 811 : index
      %c0_131 = arith.constant 0 : index
      %282 = tpu.strided_load %arg13[%c811, %c0_131] {strides = array<i32: 2, 1>} : memref<838x128xf32, #tpu.memory_space<vmem>>, vector<14x128xf32>
      %283 = arith.maximumf %281, %282 : vector<14x128xf32>
      %284 = arith.maximumf %280, %283 : vector<14x128xf32>
      %285 = vector.broadcast %82 : f32 to vector<14x128xf32>
      %286 = arith.addf %284, %285 : vector<14x128xf32>
      %cst_132 = arith.constant 0.000000e+00 : f32
      %287 = vector.broadcast %cst_132 : f32 to vector<14x128xf32>
      %288 = arith.maximumf %286, %287 : vector<14x128xf32>
      %289 = arith.index_cast %arg18 : i32 to index
      %c208 = arith.constant 208 : index
      %c0_133 = arith.constant 0 : index
      %290 = vector.load %arg14[%289, %c208, %c0_133] : memref<8x224x128xf32, #tpu.memory_space<vmem>>, vector<1x14x128xf32>
      %291 = vector.shape_cast %290 : vector<1x14x128xf32> to vector<14x128xf32>
      %292 = vector.shape_cast %288 : vector<14x128xf32> to vector<1x14x128xf32>
      tpu.vector_store %arg14[%289, %c208, %c0_133], %292 {strides = array<i32>} : memref<8x224x128xf32, #tpu.memory_space<vmem>>, vector<1x14x128xf32>,
    }
    %c8_i32_5 = arith.constant 8 : i32
    %c0_i32_6 = arith.constant 0 : i32
    %c16_i32 = arith.constant 16 : i32
    %5 = arith.addi %c0_i32_6, %c16_i32 : i32
    %c1_i32_7 = arith.constant 1 : i32
    scf.for %arg18 = %c0_i32_6 to %5 step %c1_i32_7  : i32 {
      %cst_27 = arith.constant 0.000000e+00 : f32
      %27 = vector.broadcast %cst_27 : f32 to vector<188x128xf32>
      %c0_28 = arith.constant 0 : index
      %c0_29 = arith.constant 0 : index
      %28 = vector.load %arg15[%c0_28, %c0_29] : memref<188x128xf32, #tpu.memory_space<vmem>>, vector<188x128xf32>
      tpu.vector_store %arg15[%c0_28, %c0_29], %27 {strides = array<i32>} : memref<188x128xf32, #tpu.memory_space<vmem>>, vector<188x128xf32>,
      %c0_i32_30 = arith.constant 0 : i32
      %c8_i32_31 = arith.constant 8 : i32
      %29 = arith.addi %c0_i32_30, %c8_i32_31 : i32
      %c1_i32_32 = arith.constant 1 : i32
      scf.for %arg19 = %c0_i32_30 to %29 step %c1_i32_32  : i32 {
        %c9_i32 = arith.constant 9 : i32
        %113 = arith.muli %arg19, %c9_i32 : i32
        %114 = arith.index_cast %arg18 : i32 to index
        %115 = arith.index_cast %113 : i32 to index
        %116 = memref.load %arg4[%114, %115] : memref<16x72xf32, #tpu.memory_space<smem>>
        %117 = arith.index_cast %arg19 : i32 to index
        %c0_81 = arith.constant 0 : index
        %c0_82 = arith.constant 0 : index
        %118 = vector.load %arg14[%117, %c0_81, %c0_82] : memref<8x224x128xf32, #tpu.memory_space<vmem>>, vector<1x188x128xf32>
        %119 = vector.shape_cast %118 : vector<1x188x128xf32> to vector<188x128xf32>
        %120 = vector.broadcast %116 : f32 to vector<188x128xf32>
        %121 = arith.mulf %120, %119 : vector<188x128xf32>
        %c9_i32_83 = arith.constant 9 : i32
        %122 = arith.muli %arg19, %c9_i32_83 : i32
        %c1_i32_84 = arith.constant 1 : i32
        %123 = arith.addi %122, %c1_i32_84 : i32
        %124 = arith.index_cast %arg18 : i32 to index
        %125 = arith.index_cast %123 : i32 to index
        %126 = memref.load %arg4[%124, %125] : memref<16x72xf32, #tpu.memory_space<smem>>
        %127 = arith.index_cast %arg19 : i32 to index
        %c1_85 = arith.constant 1 : index
        %c0_86 = arith.constant 0 : index
        %128 = vector.load %arg14[%127, %c1_85, %c0_86] : memref<8x224x128xf32, #tpu.memory_space<vmem>>, vector<1x188x128xf32>
        %129 = vector.shape_cast %128 : vector<1x188x128xf32> to vector<188x128xf32>
        %130 = vector.broadcast %126 : f32 to vector<188x128xf32>
        %131 = arith.mulf %130, %129 : vector<188x128xf32>
        %132 = arith.addf %121, %131 : vector<188x128xf32>
        %c9_i32_87 = arith.constant 9 : i32
        %133 = arith.muli %arg19, %c9_i32_87 : i32
        %c2_i32 = arith.constant 2 : i32
        %134 = arith.addi %133, %c2_i32 : i32
        %135 = arith.index_cast %arg18 : i32 to index
        %136 = arith.index_cast %134 : i32 to index
        %137 = memref.load %arg4[%135, %136] : memref<16x72xf32, #tpu.memory_space<smem>>
        %138 = arith.index_cast %arg19 : i32 to index
        %c2 = arith.constant 2 : index
        %c0_88 = arith.constant 0 : index
        %139 = vector.load %arg14[%138, %c2, %c0_88] : memref<8x224x128xf32, #tpu.memory_space<vmem>>, vector<1x188x128xf32>
        %140 = vector.shape_cast %139 : vector<1x188x128xf32> to vector<188x128xf32>
        %141 = vector.broadcast %137 : f32 to vector<188x128xf32>
        %142 = arith.mulf %141, %140 : vector<188x128xf32>
        %143 = arith.addf %132, %142 : vector<188x128xf32>
        %c9_i32_89 = arith.constant 9 : i32
        %144 = arith.muli %arg19, %c9_i32_89 : i32
        %c3_i32 = arith.constant 3 : i32
        %145 = arith.addi %144, %c3_i32 : i32
        %146 = arith.index_cast %arg18 : i32 to index
        %147 = arith.index_cast %145 : i32 to index
        %148 = memref.load %arg4[%146, %147] : memref<16x72xf32, #tpu.memory_space<smem>>
        %149 = arith.index_cast %arg19 : i32 to index
        %c16_90 = arith.constant 16 : index
        %c0_91 = arith.constant 0 : index
        %150 = vector.load %arg14[%149, %c16_90, %c0_91] : memref<8x224x128xf32, #tpu.memory_space<vmem>>, vector<1x188x128xf32>
        %151 = vector.shape_cast %150 : vector<1x188x128xf32> to vector<188x128xf32>
        %152 = vector.broadcast %148 : f32 to vector<188x128xf32>
        %153 = arith.mulf %152, %151 : vector<188x128xf32>
        %154 = arith.addf %143, %153 : vector<188x128xf32>
        %c9_i32_92 = arith.constant 9 : i32
        %155 = arith.muli %arg19, %c9_i32_92 : i32
        %c4_i32 = arith.constant 4 : i32
        %156 = arith.addi %155, %c4_i32 : i32
        %157 = arith.index_cast %arg18 : i32 to index
        %158 = arith.index_cast %156 : i32 to index
        %159 = memref.load %arg4[%157, %158] : memref<16x72xf32, #tpu.memory_space<smem>>
        %160 = arith.index_cast %arg19 : i32 to index
        %c17_93 = arith.constant 17 : index
        %c0_94 = arith.constant 0 : index
        %161 = vector.load %arg14[%160, %c17_93, %c0_94] : memref<8x224x128xf32, #tpu.memory_space<vmem>>, vector<1x188x128xf32>
        %162 = vector.shape_cast %161 : vector<1x188x128xf32> to vector<188x128xf32>
        %163 = vector.broadcast %159 : f32 to vector<188x128xf32>
        %164 = arith.mulf %163, %162 : vector<188x128xf32>
        %165 = arith.addf %154, %164 : vector<188x128xf32>
        %c9_i32_95 = arith.constant 9 : i32
        %166 = arith.muli %arg19, %c9_i32_95 : i32
        %c5_i32 = arith.constant 5 : i32
        %167 = arith.addi %166, %c5_i32 : i32
        %168 = arith.index_cast %arg18 : i32 to index
        %169 = arith.index_cast %167 : i32 to index
        %170 = memref.load %arg4[%168, %169] : memref<16x72xf32, #tpu.memory_space<smem>>
        %171 = arith.index_cast %arg19 : i32 to index
        %c18_96 = arith.constant 18 : index
        %c0_97 = arith.constant 0 : index
        %172 = vector.load %arg14[%171, %c18_96, %c0_97] : memref<8x224x128xf32, #tpu.memory_space<vmem>>, vector<1x188x128xf32>
        %173 = vector.shape_cast %172 : vector<1x188x128xf32> to vector<188x128xf32>
        %174 = vector.broadcast %170 : f32 to vector<188x128xf32>
        %175 = arith.mulf %174, %173 : vector<188x128xf32>
        %176 = arith.addf %165, %175 : vector<188x128xf32>
        %c9_i32_98 = arith.constant 9 : i32
        %177 = arith.muli %arg19, %c9_i32_98 : i32
        %c6_i32 = arith.constant 6 : i32
        %178 = arith.addi %177, %c6_i32 : i32
        %179 = arith.index_cast %arg18 : i32 to index
        %180 = arith.index_cast %178 : i32 to index
        %181 = memref.load %arg4[%179, %180] : memref<16x72xf32, #tpu.memory_space<smem>>
        %182 = arith.index_cast %arg19 : i32 to index
        %c32_99 = arith.constant 32 : index
        %c0_100 = arith.constant 0 : index
        %183 = vector.load %arg14[%182, %c32_99, %c0_100] : memref<8x224x128xf32, #tpu.memory_space<vmem>>, vector<1x188x128xf32>
        %184 = vector.shape_cast %183 : vector<1x188x128xf32> to vector<188x128xf32>
        %185 = vector.broadcast %181 : f32 to vector<188x128xf32>
        %186 = arith.mulf %185, %184 : vector<188x128xf32>
        %187 = arith.addf %176, %186 : vector<188x128xf32>
        %c9_i32_101 = arith.constant 9 : i32
        %188 = arith.muli %arg19, %c9_i32_101 : i32
        %c7_i32 = arith.constant 7 : i32
        %189 = arith.addi %188, %c7_i32 : i32
        %190 = arith.index_cast %arg18 : i32 to index
        %191 = arith.index_cast %189 : i32 to index
        %192 = memref.load %arg4[%190, %191] : memref<16x72xf32, #tpu.memory_space<smem>>
        %193 = arith.index_cast %arg19 : i32 to index
        %c33_102 = arith.constant 33 : index
        %c0_103 = arith.constant 0 : index
        %194 = vector.load %arg14[%193, %c33_102, %c0_103] : memref<8x224x128xf32, #tpu.memory_space<vmem>>, vector<1x188x128xf32>
        %195 = vector.shape_cast %194 : vector<1x188x128xf32> to vector<188x128xf32>
        %196 = vector.broadcast %192 : f32 to vector<188x128xf32>
        %197 = arith.mulf %196, %195 : vector<188x128xf32>
        %198 = arith.addf %187, %197 : vector<188x128xf32>
        %c9_i32_104 = arith.constant 9 : i32
        %199 = arith.muli %arg19, %c9_i32_104 : i32
        %c8_i32_105 = arith.constant 8 : i32
        %200 = arith.addi %199, %c8_i32_105 : i32
        %201 = arith.index_cast %arg18 : i32 to index
        %202 = arith.index_cast %200 : i32 to index
        %203 = memref.load %arg4[%201, %202] : memref<16x72xf32, #tpu.memory_space<smem>>
        %204 = arith.index_cast %arg19 : i32 to index
        %c34 = arith.constant 34 : index
        %c0_106 = arith.constant 0 : index
        %205 = vector.load %arg14[%204, %c34, %c0_106] : memref<8x224x128xf32, #tpu.memory_space<vmem>>, vector<1x188x128xf32>
        %206 = vector.shape_cast %205 : vector<1x188x128xf32> to vector<188x128xf32>
        %207 = vector.broadcast %203 : f32 to vector<188x128xf32>
        %208 = arith.mulf %207, %206 : vector<188x128xf32>
        %209 = arith.addf %198, %208 : vector<188x128xf32>
        %c0_107 = arith.constant 0 : index
        %c0_108 = arith.constant 0 : index
        %210 = vector.load %arg15[%c0_107, %c0_108] : memref<188x128xf32, #tpu.memory_space<vmem>>, vector<188x128xf32>
        %211 = arith.addf %210, %209 : vector<188x128xf32>
        %c0_109 = arith.constant 0 : index
        %c0_110 = arith.constant 0 : index
        %212 = vector.load %arg15[%c0_109, %c0_110] : memref<188x128xf32, #tpu.memory_space<vmem>>, vector<188x128xf32>
        tpu.vector_store %arg15[%c0_109, %c0_110], %211 {strides = array<i32>} : memref<188x128xf32, #tpu.memory_space<vmem>>, vector<188x128xf32>,
      }
      %c8_i32_33 = arith.constant 8 : i32
      %30 = arith.index_cast %arg18 : i32 to index
      %31 = memref.load %arg5[%30] : memref<16xf32, #tpu.memory_space<smem>>
      %c0_34 = arith.constant 0 : index
      %c0_35 = arith.constant 0 : index
      %32 = tpu.strided_load %arg15[%c0_34, %c0_35] {strides = array<i32: 2, 1>} : memref<188x128xf32, #tpu.memory_space<vmem>>, vector<6x128xf32>
      %c1 = arith.constant 1 : index
      %c0_36 = arith.constant 0 : index
      %33 = tpu.strided_load %arg15[%c1, %c0_36] {strides = array<i32: 2, 1>} : memref<188x128xf32, #tpu.memory_space<vmem>>, vector<6x128xf32>
      %34 = arith.maximumf %32, %33 : vector<6x128xf32>
      %c16 = arith.constant 16 : index
      %c0_37 = arith.constant 0 : index
      %35 = tpu.strided_load %arg15[%c16, %c0_37] {strides = array<i32: 2, 1>} : memref<188x128xf32, #tpu.memory_space<vmem>>, vector<6x128xf32>
      %c17 = arith.constant 17 : index
      %c0_38 = arith.constant 0 : index
      %36 = tpu.strided_load %arg15[%c17, %c0_38] {strides = array<i32: 2, 1>} : memref<188x128xf32, #tpu.memory_space<vmem>>, vector<6x128xf32>
      %37 = arith.maximumf %35, %36 : vector<6x128xf32>
      %38 = arith.maximumf %34, %37 : vector<6x128xf32>
      %39 = vector.broadcast %31 : f32 to vector<6x128xf32>
      %40 = arith.addf %38, %39 : vector<6x128xf32>
      %cst_39 = arith.constant 0.000000e+00 : f32
      %41 = vector.broadcast %cst_39 : f32 to vector<6x128xf32>
      %42 = arith.maximumf %40, %41 : vector<6x128xf32>
      %c0_40 = arith.constant 0 : index
      %c0_41 = arith.constant 0 : index
      %43 = vector.load %arg16[%c0_40, %c0_41] : memref<36x128xf32, #tpu.memory_space<vmem>>, vector<6x128xf32>
      tpu.vector_store %arg16[%c0_40, %c0_41], %42 {strides = array<i32>} : memref<36x128xf32, #tpu.memory_space<vmem>>, vector<6x128xf32>,
      %c32 = arith.constant 32 : index
      %c0_42 = arith.constant 0 : index
      %44 = tpu.strided_load %arg15[%c32, %c0_42] {strides = array<i32: 2, 1>} : memref<188x128xf32, #tpu.memory_space<vmem>>, vector<6x128xf32>
      %c33 = arith.constant 33 : index
      %c0_43 = arith.constant 0 : index
      %45 = tpu.strided_load %arg15[%c33, %c0_43] {strides = array<i32: 2, 1>} : memref<188x128xf32, #tpu.memory_space<vmem>>, vector<6x128xf32>
      %46 = arith.maximumf %44, %45 : vector<6x128xf32>
      %c48 = arith.constant 48 : index
      %c0_44 = arith.constant 0 : index
      %47 = tpu.strided_load %arg15[%c48, %c0_44] {strides = array<i32: 2, 1>} : memref<188x128xf32, #tpu.memory_space<vmem>>, vector<6x128xf32>
      %c49 = arith.constant 49 : index
      %c0_45 = arith.constant 0 : index
      %48 = tpu.strided_load %arg15[%c49, %c0_45] {strides = array<i32: 2, 1>} : memref<188x128xf32, #tpu.memory_space<vmem>>, vector<6x128xf32>
      %49 = arith.maximumf %47, %48 : vector<6x128xf32>
      %50 = arith.maximumf %46, %49 : vector<6x128xf32>
      %51 = vector.broadcast %31 : f32 to vector<6x128xf32>
      %52 = arith.addf %50, %51 : vector<6x128xf32>
      %cst_46 = arith.constant 0.000000e+00 : f32
      %53 = vector.broadcast %cst_46 : f32 to vector<6x128xf32>
      %54 = arith.maximumf %52, %53 : vector<6x128xf32>
      %c6 = arith.constant 6 : index
      %c0_47 = arith.constant 0 : index
      %55 = vector.load %arg16[%c6, %c0_47] : memref<36x128xf32, #tpu.memory_space<vmem>>, vector<6x128xf32>
      tpu.vector_store %arg16[%c6, %c0_47], %54 {strides = array<i32>} : memref<36x128xf32, #tpu.memory_space<vmem>>, vector<6x128xf32>,
      %c64 = arith.constant 64 : index
      %c0_48 = arith.constant 0 : index
      %56 = tpu.strided_load %arg15[%c64, %c0_48] {strides = array<i32: 2, 1>} : memref<188x128xf32, #tpu.memory_space<vmem>>, vector<6x128xf32>
      %c65 = arith.constant 65 : index
      %c0_49 = arith.constant 0 : index
      %57 = tpu.strided_load %arg15[%c65, %c0_49] {strides = array<i32: 2, 1>} : memref<188x128xf32, #tpu.memory_space<vmem>>, vector<6x128xf32>
      %58 = arith.maximumf %56, %57 : vector<6x128xf32>
      %c80 = arith.constant 80 : index
      %c0_50 = arith.constant 0 : index
      %59 = tpu.strided_load %arg15[%c80, %c0_50] {strides = array<i32: 2, 1>} : memref<188x128xf32, #tpu.memory_space<vmem>>, vector<6x128xf32>
      %c81 = arith.constant 81 : index
      %c0_51 = arith.constant 0 : index
      %60 = tpu.strided_load %arg15[%c81, %c0_51] {strides = array<i32: 2, 1>} : memref<188x128xf32, #tpu.memory_space<vmem>>, vector<6x128xf32>
      %61 = arith.maximumf %59, %60 : vector<6x128xf32>
      %62 = arith.maximumf %58, %61 : vector<6x128xf32>
      %63 = vector.broadcast %31 : f32 to vector<6x128xf32>
      %64 = arith.addf %62, %63 : vector<6x128xf32>
      %cst_52 = arith.constant 0.000000e+00 : f32
      %65 = vector.broadcast %cst_52 : f32 to vector<6x128xf32>
      %66 = arith.maximumf %64, %65 : vector<6x128xf32>
      %c12 = arith.constant 12 : index
      %c0_53 = arith.constant 0 : index
      %67 = vector.load %arg16[%c12, %c0_53] : memref<36x128xf32, #tpu.memory_space<vmem>>, vector<6x128xf32>
      tpu.vector_store %arg16[%c12, %c0_53], %66 {strides = array<i32>} : memref<36x128xf32, #tpu.memory_space<vmem>>, vector<6x128xf32>,
      %c96 = arith.constant 96 : index
      %c0_54 = arith.constant 0 : index
      %68 = tpu.strided_load %arg15[%c96, %c0_54] {strides = array<i32: 2, 1>} : memref<188x128xf32, #tpu.memory_space<vmem>>, vector<6x128xf32>
      %c97 = arith.constant 97 : index
      %c0_55 = arith.constant 0 : index
      %69 = tpu.strided_load %arg15[%c97, %c0_55] {strides = array<i32: 2, 1>} : memref<188x128xf32, #tpu.memory_space<vmem>>, vector<6x128xf32>
      %70 = arith.maximumf %68, %69 : vector<6x128xf32>
      %c112 = arith.constant 112 : index
      %c0_56 = arith.constant 0 : index
      %71 = tpu.strided_load %arg15[%c112, %c0_56] {strides = array<i32: 2, 1>} : memref<188x128xf32, #tpu.memory_space<vmem>>, vector<6x128xf32>
      %c113 = arith.constant 113 : index
      %c0_57 = arith.constant 0 : index
      %72 = tpu.strided_load %arg15[%c113, %c0_57] {strides = array<i32: 2, 1>} : memref<188x128xf32, #tpu.memory_space<vmem>>, vector<6x128xf32>
      %73 = arith.maximumf %71, %72 : vector<6x128xf32>
      %74 = arith.maximumf %70, %73 : vector<6x128xf32>
      %75 = vector.broadcast %31 : f32 to vector<6x128xf32>
      %76 = arith.addf %74, %75 : vector<6x128xf32>
      %cst_58 = arith.constant 0.000000e+00 : f32
      %77 = vector.broadcast %cst_58 : f32 to vector<6x128xf32>
      %78 = arith.maximumf %76, %77 : vector<6x128xf32>
      %c18 = arith.constant 18 : index
      %c0_59 = arith.constant 0 : index
      %79 = vector.load %arg16[%c18, %c0_59] : memref<36x128xf32, #tpu.memory_space<vmem>>, vector<6x128xf32>
      tpu.vector_store %arg16[%c18, %c0_59], %78 {strides = array<i32>} : memref<36x128xf32, #tpu.memory_space<vmem>>, vector<6x128xf32>,
      %c128 = arith.constant 128 : index
      %c0_60 = arith.constant 0 : index
      %80 = tpu.strided_load %arg15[%c128, %c0_60] {strides = array<i32: 2, 1>} : memref<188x128xf32, #tpu.memory_space<vmem>>, vector<6x128xf32>
      %c129 = arith.constant 129 : index
      %c0_61 = arith.constant 0 : index
      %81 = tpu.strided_load %arg15[%c129, %c0_61] {strides = array<i32: 2, 1>} : memref<188x128xf32, #tpu.memory_space<vmem>>, vector<6x128xf32>
      %82 = arith.maximumf %80, %81 : vector<6x128xf32>
      %c144 = arith.constant 144 : index
      %c0_62 = arith.constant 0 : index
      %83 = tpu.strided_load %arg15[%c144, %c0_62] {strides = array<i32: 2, 1>} : memref<188x128xf32, #tpu.memory_space<vmem>>, vector<6x128xf32>
      %c145 = arith.constant 145 : index
      %c0_63 = arith.constant 0 : index
      %84 = tpu.strided_load %arg15[%c145, %c0_63] {strides = array<i32: 2, 1>} : memref<188x128xf32, #tpu.memory_space<vmem>>, vector<6x128xf32>
      %85 = arith.maximumf %83, %84 : vector<6x128xf32>
      %86 = arith.maximumf %82, %85 : vector<6x128xf32>
      %87 = vector.broadcast %31 : f32 to vector<6x128xf32>
      %88 = arith.addf %86, %87 : vector<6x128xf32>
      %cst_64 = arith.constant 0.000000e+00 : f32
      %89 = vector.broadcast %cst_64 : f32 to vector<6x128xf32>
      %90 = arith.maximumf %88, %89 : vector<6x128xf32>
      %c24 = arith.constant 24 : index
      %c0_65 = arith.constant 0 : index
      %91 = vector.load %arg16[%c24, %c0_65] : memref<36x128xf32, #tpu.memory_space<vmem>>, vector<6x128xf32>
      tpu.vector_store %arg16[%c24, %c0_65], %90 {strides = array<i32>} : memref<36x128xf32, #tpu.memory_space<vmem>>, vector<6x128xf32>,
      %c160 = arith.constant 160 : index
      %c0_66 = arith.constant 0 : index
      %92 = tpu.strided_load %arg15[%c160, %c0_66] {strides = array<i32: 2, 1>} : memref<188x128xf32, #tpu.memory_space<vmem>>, vector<6x128xf32>
      %c161 = arith.constant 161 : index
      %c0_67 = arith.constant 0 : index
      %93 = tpu.strided_load %arg15[%c161, %c0_67] {strides = array<i32: 2, 1>} : memref<188x128xf32, #tpu.memory_space<vmem>>, vector<6x128xf32>
      %94 = arith.maximumf %92, %93 : vector<6x128xf32>
      %c176 = arith.constant 176 : index
      %c0_68 = arith.constant 0 : index
      %95 = tpu.strided_load %arg15[%c176, %c0_68] {strides = array<i32: 2, 1>} : memref<188x128xf32, #tpu.memory_space<vmem>>, vector<6x128xf32>
      %c177 = arith.constant 177 : index
      %c0_69 = arith.constant 0 : index
      %96 = tpu.strided_load %arg15[%c177, %c0_69] {strides = array<i32: 2, 1>} : memref<188x128xf32, #tpu.memory_space<vmem>>, vector<6x128xf32>
      %97 = arith.maximumf %95, %96 : vector<6x128xf32>
      %98 = arith.maximumf %94, %97 : vector<6x128xf32>
      %99 = vector.broadcast %31 : f32 to vector<6x128xf32>
      %100 = arith.addf %98, %99 : vector<6x128xf32>
      %cst_70 = arith.constant 0.000000e+00 : f32
      %101 = vector.broadcast %cst_70 : f32 to vector<6x128xf32>
      %102 = arith.maximumf %100, %101 : vector<6x128xf32>
      %c30 = arith.constant 30 : index
      %c0_71 = arith.constant 0 : index
      %103 = vector.load %arg16[%c30, %c0_71] : memref<36x128xf32, #tpu.memory_space<vmem>>, vector<6x128xf32>
      tpu.vector_store %arg16[%c30, %c0_71], %102 {strides = array<i32>} : memref<36x128xf32, #tpu.memory_space<vmem>>, vector<6x128xf32>,
      %c0_72 = arith.constant 0 : index
      %c0_73 = arith.constant 0 : index
      %104 = vector.load %arg17[%c0_72, %c0_73] : memref<256x128xf32, #tpu.memory_space<vmem>>, vector<256x128xf32>
      %105 = arith.index_cast %arg18 : i32 to index
      %c0_74 = arith.constant 0 : index
      %c0_75 = arith.constant 0 : index
      %106 = vector.load %arg6[%105, %c0_74, %c0_75] : memref<16x256x36xbf16, #tpu.memory_space<vmem>>, vector<1x256x36xbf16>
      %107 = vector.shape_cast %106 : vector<1x256x36xbf16> to vector<256x36xbf16>
      %c0_76 = arith.constant 0 : index
      %c0_77 = arith.constant 0 : index
      %108 = vector.load %arg16[%c0_76, %c0_77] : memref<36x128xf32, #tpu.memory_space<vmem>>, vector<36x128xf32>
      %109 = arith.truncf %108 : vector<36x128xf32> to vector<36x128xbf16>
      %cst_78 = arith.constant dense<0.000000e+00> : vector<256x128xf32>
      %110 = tpu.matmul %107, %109, %cst_78 {dimension_numbers = #tpu.dot_dimension_numbers<[1], [0], [0], [1], [0, 0, 1, 1], [], []>} : vector<256x36xbf16>, vector<36x128xbf16>, vector<256x128xf32> -> vector<256x128xf32>
      %111 = arith.addf %104, %110 : vector<256x128xf32>
      %c0_79 = arith.constant 0 : index
      %c0_80 = arith.constant 0 : index
      %112 = vector.load %arg17[%c0_79, %c0_80] : memref<256x128xf32, #tpu.memory_space<vmem>>, vector<256x128xf32>
      tpu.vector_store %arg17[%c0_79, %c0_80], %111 {strides = array<i32>} : memref<256x128xf32, #tpu.memory_space<vmem>>, vector<256x128xf32>,
    }
    %c16_i32_8 = arith.constant 16 : i32
    %c0_9 = arith.constant 0 : index
    %c0_10 = arith.constant 0 : index
    %6 = vector.load %arg17[%c0_9, %c0_10] : memref<256x128xf32, #tpu.memory_space<vmem>>, vector<256x128xf32>
    %c0_11 = arith.constant 0 : index
    %c0_12 = arith.constant 0 : index
    %7 = vector.load %arg7[%c0_11, %c0_12] : memref<256x1xf32, #tpu.memory_space<vmem>>, vector<256x1xf32>
    %8 = vector.broadcast %7 : vector<256x1xf32> to vector<256x128xf32>
    %9 = arith.addf %6, %8 : vector<256x128xf32>
    %cst_13 = arith.constant 0.000000e+00 : f32
    %10 = vector.broadcast %cst_13 : f32 to vector<256x128xf32>
    %11 = arith.maximumf %9, %10 : vector<256x128xf32>
    %12 = arith.truncf %11 : vector<256x128xf32> to vector<256x128xbf16>
    %c0_14 = arith.constant 0 : index
    %c0_15 = arith.constant 0 : index
    %13 = vector.load %arg8[%c0_14, %c0_15] : memref<64x256xbf16, #tpu.memory_space<vmem>>, vector<64x256xbf16>
    %cst_16 = arith.constant dense<0.000000e+00> : vector<64x128xf32>
    %14 = tpu.matmul %13, %12, %cst_16 {dimension_numbers = #tpu.dot_dimension_numbers<[1], [0], [0], [1], [0, 0, 1, 1], [], []>} : vector<64x256xbf16>, vector<256x128xbf16>, vector<64x128xf32> -> vector<64x128xf32>
    %c0_17 = arith.constant 0 : index
    %c0_18 = arith.constant 0 : index
    %15 = vector.load %arg9[%c0_17, %c0_18] : memref<64x1xf32, #tpu.memory_space<vmem>>, vector<64x1xf32>
    %16 = vector.broadcast %15 : vector<64x1xf32> to vector<64x128xf32>
    %17 = arith.addf %14, %16 : vector<64x128xf32>
    %cst_19 = arith.constant 0.000000e+00 : f32
    %18 = vector.broadcast %cst_19 : f32 to vector<64x128xf32>
    %19 = arith.maximumf %17, %18 : vector<64x128xf32>
    %20 = arith.truncf %19 : vector<64x128xf32> to vector<64x128xbf16>
    %c0_20 = arith.constant 0 : index
    %c0_21 = arith.constant 0 : index
    %21 = vector.load %arg10[%c0_20, %c0_21] : memref<16x64xbf16, #tpu.memory_space<vmem>>, vector<16x64xbf16>
    %cst_22 = arith.constant dense<0.000000e+00> : vector<16x128xf32>
    %22 = tpu.matmul %21, %20, %cst_22 {dimension_numbers = #tpu.dot_dimension_numbers<[1], [0], [0], [1], [0, 0, 1, 1], [], []>} : vector<16x64xbf16>, vector<64x128xbf16>, vector<16x128xf32> -> vector<16x128xf32>
    %c0_23 = arith.constant 0 : index
    %c0_24 = arith.constant 0 : index
    %23 = vector.load %arg11[%c0_23, %c0_24] : memref<16x1xf32, #tpu.memory_space<vmem>>, vector<16x1xf32>
    %24 = vector.broadcast %23 : vector<16x1xf32> to vector<16x128xf32>
    %25 = arith.addf %22, %24 : vector<16x128xf32>
    %c0_25 = arith.constant 0 : index
    %c0_26 = arith.constant 0 : index
    %26 = vector.load %arg12[%c0_25, %c0_26] : memref<16x128xf32, #tpu.memory_space<vmem>>, vector<16x128xf32>
    tpu.vector_store %arg12[%c0_25, %c0_26], %25 {strides = array<i32>} : memref<16x128xf32, #tpu.memory_space<vmem>>, vector<16x128xf32>,
    return
  }
  func.func @transform_0(%arg0: i32) -> (i32, i32) {
    %c0_i32 = arith.constant 0 : i32
    %c0_i32_0 = arith.constant 0 : i32
    return %c0_i32, %arg0 : i32, i32
  }
  func.func @transform_1(%arg0: i32) -> (i32, i32) {
    %c0_i32 = arith.constant 0 : i32
    %c0_i32_0 = arith.constant 0 : i32
    %c0_i32_1 = arith.constant 0 : i32
    return %c0_i32, %c0_i32_0 : i32, i32
  }
  func.func @transform_2(%arg0: i32) -> i32 {
    %c0_i32 = arith.constant 0 : i32
    %c0_i32_0 = arith.constant 0 : i32
    return %c0_i32 : i32
  }
  func.func @transform_3(%arg0: i32) -> (i32, i32) {
    %c0_i32 = arith.constant 0 : i32
    %c0_i32_0 = arith.constant 0 : i32
    %c0_i32_1 = arith.constant 0 : i32
    return %c0_i32, %c0_i32_0 : i32, i32
  }
  func.func @transform_4(%arg0: i32) -> i32 {
    %c0_i32 = arith.constant 0 : i32
    %c0_i32_0 = arith.constant 0 : i32
    return %c0_i32 : i32
  }
  func.func @transform_5(%arg0: i32) -> (i32, i32, i32) {
    %c0_i32 = arith.constant 0 : i32
    %c0_i32_0 = arith.constant 0 : i32
    %c0_i32_1 = arith.constant 0 : i32
    %c0_i32_2 = arith.constant 0 : i32
    return %c0_i32, %c0_i32_0, %c0_i32_1 : i32, i32, i32
  }
  func.func @transform_6(%arg0: i32) -> (i32, i32) {
    %c0_i32 = arith.constant 0 : i32
    %c0_i32_0 = arith.constant 0 : i32
    %c0_i32_1 = arith.constant 0 : i32
    return %c0_i32, %c0_i32_0 : i32, i32
  }
  func.func @transform_7(%arg0: i32) -> (i32, i32) {
    %c0_i32 = arith.constant 0 : i32
    %c0_i32_0 = arith.constant 0 : i32
    %c0_i32_1 = arith.constant 0 : i32
    return %c0_i32, %c0_i32_0 : i32, i32
  }
  func.func @transform_8(%arg0: i32) -> (i32, i32) {
    %c0_i32 = arith.constant 0 : i32
    %c0_i32_0 = arith.constant 0 : i32
    %c0_i32_1 = arith.constant 0 : i32
    return %c0_i32, %c0_i32_0 : i32, i32
  }
  func.func @transform_9(%arg0: i32) -> (i32, i32) {
    %c0_i32 = arith.constant 0 : i32
    %c0_i32_0 = arith.constant 0 : i32
    %c0_i32_1 = arith.constant 0 : i32
    return %c0_i32, %c0_i32_0 : i32, i32
  }
  func.func @transform_10(%arg0: i32) -> (i32, i32) {
    %c0_i32 = arith.constant 0 : i32
    %c0_i32_0 = arith.constant 0 : i32
    %c0_i32_1 = arith.constant 0 : i32
    return %c0_i32, %c0_i32_0 : i32, i32
  }
  func.func @transform_11(%arg0: i32) -> (i32, i32) {
    %c0_i32 = arith.constant 0 : i32
    %c0_i32_0 = arith.constant 0 : i32
    return %c0_i32, %arg0 : i32, i32
  }
}

</mosaic_0001>

<llo_original>
// kernel: network_forward.1
$region0: #{network_forward.1}
  #allocation0 [shape = 'u32[]', space=smem, size = 0x4, offset = 0x4, fixed_abs, tag = 'smem constant byte address 0x4 - core index']
  #allocation1 [shape = 'u32[144,128]{1,0:T(1,128)}', space=vmem, size = 0x12000, scoped, tag = 'internal scratch']
  #allocation2 [shape = 'f32[838,128]{1,0:T(8,128)}', space=vmem, size = 0x69000, scoped, tag = 'scratch operand']
  #allocation3 [shape = 'f32[8,224,128]{2,1,0:T(8,128)}', space=vmem, size = 0xe0000, scoped, tag = 'scratch operand']
  #allocation4 [shape = 'f32[188,128]{1,0:T(8,128)}', space=vmem, size = 0x18000, scoped, tag = 'scratch operand']
  #allocation5 [shape = 'f32[36,128]{1,0:T(8,128)}', space=vmem, size = 0x5000, scoped, tag = 'scratch operand']
  #allocation6 [shape = 'f32[256,128]{1,0:T(8,128)}', space=vmem, size = 0x20000, scoped, tag = 'scratch operand']
  %s0 = inlined_call_operand.vmem [shape: f32[904,128], index: 0, kind: input, shape index: {}]
  %s1 = inlined_call_operand.vmem [shape: f32[8,9], index: 1, kind: input, shape index: {}]
  %s2 = inlined_call_operand.vmem [shape: f32[8], index: 2, kind: input, shape index: {}]
  %s3 = inlined_call_operand.vmem [shape: f32[16,72], index: 3, kind: input, shape index: {}]
  %s4 = inlined_call_operand.vmem [shape: f32[16], index: 4, kind: input, shape index: {}]
  %s5 = inlined_call_operand.vmem [shape: bf16[16,256,36], index: 5, kind: input, shape index: {}]
  %s6 = inlined_call_operand.vmem [shape: f32[256,1], index: 6, kind: input, shape index: {}]
  %s7 = inlined_call_operand.vmem [shape: bf16[64,256], index: 7, kind: input, shape index: {}]
  %s8 = inlined_call_operand.vmem [shape: f32[64,1], index: 8, kind: input, shape index: {}]
  %s9 = inlined_call_operand.vmem [shape: bf16[16,64], index: 9, kind: input, shape index: {}]
  %s10 = inlined_call_operand.vmem [shape: f32[16,1], index: 10, kind: input, shape index: {}]
  %s11 = inlined_call_operand.vmem [shape: f32[16,128], index: 11, kind: output, shape index: {}]
  %s12 = sld [smem:[#allocation0]]
  $region91: #{network_forward.1} parent=0
    _
  %s14 = ssub.s32 1, %s12
  %s15 = scalar_select 0, %s14, %s12
  $region1: #{network_forward.1} parent=0
    #allocation7 [shape = 'u8[4096]{0}', space=smem, size = 0x1000, scoped, tag = 'input window, operand 1, single buffered']
    #allocation8 [shape = 's32[1]{0}', space=sflag, size = 0x4, scoped, tag = 'scoped memory for network_forward.1']
    #allocation9 [shape = 'u8[512]{0}', space=smem, size = 0x200, scoped, tag = 'input window, operand 2, single buffered']
    #allocation10 [shape = 's32[1]{0}', space=sflag, size = 0x4, scoped, tag = 'scoped memory for network_forward.1']
    #allocation11 [shape = 'u8[8192]{0}', space=smem, size = 0x2000, scoped, tag = 'input window, operand 3, single buffered']
    #allocation12 [shape = 'u8[512]{0}', space=smem, size = 0x200, scoped, tag = 'input window, operand 4, single buffered']
    #allocation13 [shape = 's32[1]{0}', space=sflag, size = 0x4, scoped, tag = 'scoped memory for network_forward.1']
    %16 = vsyncpa [#allocation8], 0
    %17 = vsyncpa [#allocation10], 0
    %18 = vsyncpa [#allocation13], 0
    // Predicated region
    $region2: #{network_forward.1} parent=1 // pred_check
      _
    $region3: #{network_forward.1} parent=1 // pred_check_branch
      %20 = sbr.rel (0) target = $region5
    $region4: #{network_forward.1} parent=1 // pred_region
      _
    $region5: #{network_forward.1} parent=1 // pred_fallthru
      _
    // Predicated region
    $region6: #{network_forward.1} parent=1 // pred_check
      _
    $region7: #{network_forward.1} parent=1 // pred_check_branch
      %22 = sbr.rel (0) target = $region9
    $region8: #{network_forward.1} parent=1 // pred_region
      %s24 = ssub.s32 128, 128
      %25 = vsyncadd [#allocation8], %s24
      %s27 = sshll.u32 %s1, 4
      %s28 = int_to_ptr.vmem [resolvable:$true] %s27
      %30 = dma.vmem_to_smem %s28, 128, [#allocation7], [#allocation8]
    $region9: #{network_forward.1} parent=1 // pred_fallthru
      _
    // Predicated region
    $region10: #{network_forward.1} parent=1 // pred_check
      _
    $region11: #{network_forward.1} parent=1 // pred_check_branch
      %32 = sbr.rel (0) target = $region13
    $region12: #{network_forward.1} parent=1 // pred_region
      %s34 = ssub.s32 16, 16
      %35 = vsyncadd [#allocation10], %s34
      %s37 = sshll.u32 %s2, 4
      %s38 = int_to_ptr.vmem [resolvable:$true] %s37
      %40 = dma.vmem_to_smem %s38, 16, [#allocation9], [#allocation10]
    $region13: #{network_forward.1} parent=1 // pred_fallthru
      _
    // Predicated region
    $region14: #{network_forward.1} parent=1 // pred_check
      _
    $region15: #{network_forward.1} parent=1 // pred_check_branch
      %42 = sbr.rel (0) target = $region17
    $region16: #{network_forward.1} parent=1 // pred_region
      %s44 = ssub.s32 256, 256
      %45 = vsyncadd [#allocation10], %s44
      %s46 = sshll.u32 %s3, 4
      %s47 = int_to_ptr.vmem [resolvable:$true] %s46
      %52 = dma.vmem_to_smem %s47, 256, [#allocation11], [#allocation10], 128, 128, 8
    $region17: #{network_forward.1} parent=1 // pred_fallthru
      _
    // Predicated region
    $region18: #{network_forward.1} parent=1 // pred_check
      _
    $region19: #{network_forward.1} parent=1 // pred_check_branch
      %54 = sbr.rel (0) target = $region21
    $region20: #{network_forward.1} parent=1 // pred_region
      %s56 = ssub.s32 16, 16
      %57 = vsyncadd [#allocation13], %s56
      %s59 = sshll.u32 %s4, 4
      %s60 = int_to_ptr.vmem [resolvable:$true] %s59
      %62 = dma.vmem_to_smem %s60, 16, [#allocation12], [#allocation13]
    $region21: #{network_forward.1} parent=1 // pred_fallthru
      _
    // Predicated region
    $region22: #{network_forward.1} parent=1 // pred_check
      _
    $region23: #{network_forward.1} parent=1 // pred_check_branch
      %64 = sbr.rel (0) target = $region25
    $region24: #{network_forward.1} parent=1 // pred_region
      _
    $region25: #{network_forward.1} parent=1 // pred_fallthru
      _
    // Predicated region
    $region26: #{network_forward.1} parent=1 // pred_check
      _
    $region27: #{network_forward.1} parent=1 // pred_check_branch
      %66 = sbr.rel (0) target = $region29
    $region28: #{network_forward.1} parent=1 // pred_region
      _
    $region29: #{network_forward.1} parent=1 // pred_fallthru
      _
    // Predicated region
    $region30: #{network_forward.1} parent=1 // pred_check
      _
    $region31: #{network_forward.1} parent=1 // pred_check_branch
      %68 = sbr.rel (0) target = $region33
    $region32: #{network_forward.1} parent=1 // pred_region
      _
    $region33: #{network_forward.1} parent=1 // pred_fallthru
      _
    // Predicated region
    $region34: #{network_forward.1} parent=1 // pred_check
      _
    $region35: #{network_forward.1} parent=1 // pred_check_branch
      %70 = sbr.rel (0) target = $region37
    $region36: #{network_forward.1} parent=1 // pred_region
      _
    $region37: #{network_forward.1} parent=1 // pred_fallthru
      _
    // Predicated region
    $region38: #{network_forward.1} parent=1 // pred_check
      _
    $region39: #{network_forward.1} parent=1 // pred_check_branch
      %72 = sbr.rel (0) target = $region41
    $region40: #{network_forward.1} parent=1 // pred_region
      _
    $region41: #{network_forward.1} parent=1 // pred_fallthru
      _
    // Predicated region
    $region42: #{network_forward.1} parent=1 // pred_check
      _
    $region43: #{network_forward.1} parent=1 // pred_check_branch
      %74 = sbr.rel (0) target = $region45
    $region44: #{network_forward.1} parent=1 // pred_region
      _
    $region45: #{network_forward.1} parent=1 // pred_fallthru
      _
    // Predicated region
    $region46: #{network_forward.1} parent=1 // pred_check
      _
    $region47: #{network_forward.1} parent=1 // pred_check_branch
      %76 = sbr.rel (0) target = $region49
    $region48: #{network_forward.1} parent=1 // pred_region
      %77 = dma.done [#allocation8], 128
    $region49: #{network_forward.1} parent=1 // pred_fallthru
      _
    // Predicated region
    $region50: #{network_forward.1} parent=1 // pred_check
      _
    $region51: #{network_forward.1} parent=1 // pred_check_branch
      %79 = sbr.rel (0) target = $region53
    $region52: #{network_forward.1} parent=1 // pred_region
      %80 = dma.done [#allocation10], 16
    $region53: #{network_forward.1} parent=1 // pred_fallthru
      _
    // Predicated region
    $region54: #{network_forward.1} parent=1 // pred_check
      _
    $region55: #{network_forward.1} parent=1 // pred_check_branch
      %82 = sbr.rel (0) target = $region57
    $region56: #{network_forward.1} parent=1 // pred_region
      %83 = dma.done [#allocation10], 256
    $region57: #{network_forward.1} parent=1 // pred_fallthru
      _
    // Predicated region
    $region58: #{network_forward.1} parent=1 // pred_check
      _
    $region59: #{network_forward.1} parent=1 // pred_check_branch
      %85 = sbr.rel (0) target = $region61
    $region60: #{network_forward.1} parent=1 // pred_region
      %86 = dma.done [#allocation13], 16
    $region61: #{network_forward.1} parent=1 // pred_fallthru
      _
    %87 = sfence
    %89 = vst [vmem:[#allocation3] sm:$0xff] 0.0
    %90 = vst [vmem:[#allocation3 + $0x8] sm:$0xff] 0.0
    %91 = vst [vmem:[#allocation3 + $0x10] sm:$0xff] 0.0
    %92 = vst [vmem:[#allocation3 + $0x18] sm:$0xff] 0.0
    %93 = vst [vmem:[#allocation3 + $0x20] sm:$0xff] 0.0
    %94 = vst [vmem:[#allocation3 + $0x28] sm:$0xff] 0.0
    %95 = vst [vmem:[#allocation3 + $0x30] sm:$0xff] 0.0
    %96 = vst [vmem:[#allocation3 + $0x38] sm:$0xff] 0.0
    %97 = vst [vmem:[#allocation3 + $0x40] sm:$0xff] 0.0
    %98 = vst [vmem:[#allocation3 + $0x48] sm:$0xff] 0.0
    %99 = vst [vmem:[#allocation3 + $0x50] sm:$0xff] 0.0
    %100 = vst [vmem:[#allocation3 + $0x58] sm:$0xff] 0.0
    %101 = vst [vmem:[#allocation3 + $0x60] sm:$0xff] 0.0
    %102 = vst [vmem:[#allocation3 + $0x68] sm:$0xff] 0.0
    %103 = vst [vmem:[#allocation3 + $0x70] sm:$0xff] 0.0
    %104 = vst [vmem:[#allocation3 + $0x78] sm:$0xff] 0.0
    %105 = vst [vmem:[#allocation3 + $0x80] sm:$0xff] 0.0
    %106 = vst [vmem:[#allocation3 + $0x88] sm:$0xff] 0.0
    %107 = vst [vmem:[#allocation3 + $0x90] sm:$0xff] 0.0
    %108 = vst [vmem:[#allocation3 + $0x98] sm:$0xff] 0.0
    %109 = vst [vmem:[#allocation3 + $0xa0] sm:$0xff] 0.0
    %110 = vst [vmem:[#allocation3 + $0xa8] sm:$0xff] 0.0
    %111 = vst [vmem:[#allocation3 + $0xb0] sm:$0xff] 0.0
    %112 = vst [vmem:[#allocation3 + $0xb8] sm:$0xff] 0.0
    %113 = vst [vmem:[#allocation3 + $0xc0] sm:$0xff] 0.0
    %114 = vst [vmem:[#allocation3 + $0xc8] sm:$0xff] 0.0
    %115 = vst [vmem:[#allocation3 + $0xd0] sm:$0xff] 0.0
    %116 = vst [vmem:[#allocation3 + $0xd8] sm:$0xff] 0.0
    %117 = vst [vmem:[#allocation3 + $0xe0] sm:$0xff] 0.0
    %118 = vst [vmem:[#allocation3 + $0xe8] sm:$0xff] 0.0
    %119 = vst [vmem:[#allocation3 + $0xf0] sm:$0xff] 0.0
    %120 = vst [vmem:[#allocation3 + $0xf8] sm:$0xff] 0.0
    %121 = vst [vmem:[#allocation3 + $0x100] sm:$0xff] 0.0
    %122 = vst [vmem:[#allocation3 + $0x108] sm:$0xff] 0.0
    %123 = vst [vmem:[#allocation3 + $0x110] sm:$0xff] 0.0
    %124 = vst [vmem:[#allocation3 + $0x118] sm:$0xff] 0.0
    %125 = vst [vmem:[#allocation3 + $0x120] sm:$0xff] 0.0
    %126 = vst [vmem:[#allocation3 + $0x128] sm:$0xff] 0.0
    %127 = vst [vmem:[#allocation3 + $0x130] sm:$0xff] 0.0
    %128 = vst [vmem:[#allocation3 + $0x138] sm:$0xff] 0.0
    %129 = vst [vmem:[#allocation3 + $0x140] sm:$0xff] 0.0
    %130 = vst [vmem:[#allocation3 + $0x148] sm:$0xff] 0.0
    %131 = vst [vmem:[#allocation3 + $0x150] sm:$0xff] 0.0
    %132 = vst [vmem:[#allocation3 + $0x158] sm:$0xff] 0.0
    %133 = vst [vmem:[#allocation3 + $0x160] sm:$0xff] 0.0
    %134 = vst [vmem:[#allocation3 + $0x168] sm:$0xff] 0.0
    %135 = vst [vmem:[#allocation3 + $0x170] sm:$0xff] 0.0
    %136 = vst [vmem:[#allocation3 + $0x178] sm:$0xff] 0.0
    %137 = vst [vmem:[#allocation3 + $0x180] sm:$0xff] 0.0
    %138 = vst [vmem:[#allocation3 + $0x188] sm:$0xff] 0.0
    %139 = vst [vmem:[#allocation3 + $0x190] sm:$0xff] 0.0
    %140 = vst [vmem:[#allocation3 + $0x198] sm:$0xff] 0.0
    %141 = vst [vmem:[#allocation3 + $0x1a0] sm:$0xff] 0.0
    %142 = vst [vmem:[#allocation3 + $0x1a8] sm:$0xff] 0.0
    %143 = vst [vmem:[#allocation3 + $0x1b0] sm:$0xff] 0.0
    %144 = vst [vmem:[#allocation3 + $0x1b8] sm:$0xff] 0.0
    %145 = vst [vmem:[#allocation3 + $0x1c0] sm:$0xff] 0.0
    %146 = vst [vmem:[#allocation3 + $0x1c8] sm:$0xff] 0.0
    %147 = vst [vmem:[#allocation3 + $0x1d0] sm:$0xff] 0.0
    %148 = vst [vmem:[#allocation3 + $0x1d8] sm:$0xff] 0.0
    %149 = vst [vmem:[#allocation3 + $0x1e0] sm:$0xff] 0.0
    %150 = vst [vmem:[#allocation3 + $0x1e8] sm:$0xff] 0.0
    %151 = vst [vmem:[#allocation3 + $0x1f0] sm:$0xff] 0.0
    %152 = vst [vmem:[#allocation3 + $0x1f8] sm:$0xff] 0.0
    %153 = vst [vmem:[#allocation3 + $0x200] sm:$0xff] 0.0
    %154 = vst [vmem:[#allocation3 + $0x208] sm:$0xff] 0.0
    %155 = vst [vmem:[#allocation3 + $0x210] sm:$0xff] 0.0
    %156 = vst [vmem:[#allocation3 + $0x218] sm:$0xff] 0.0
    %157 = vst [vmem:[#allocation3 + $0x220] sm:$0xff] 0.0
    %158 = vst [vmem:[#allocation3 + $0x228] sm:$0xff] 0.0
    %159 = vst [vmem:[#allocation3 + $0x230] sm:$0xff] 0.0
    %160 = vst [vmem:[#allocation3 + $0x238] sm:$0xff] 0.0
    %161 = vst [vmem:[#allocation3 + $0x240] sm:$0xff] 0.0
    %162 = vst [vmem:[#allocation3 + $0x248] sm:$0xff] 0.0
    %163 = vst [vmem:[#allocation3 + $0x250] sm:$0xff] 0.0
    %164 = vst [vmem:[#allocation3 + $0x258] sm:$0xff] 0.0
    %165 = vst [vmem:[#allocation3 + $0x260] sm:$0xff] 0.0
    %166 = vst [vmem:[#allocation3 + $0x268] sm:$0xff] 0.0
    %167 = vst [vmem:[#allocation3 + $0x270] sm:$0xff] 0.0
    %168 = vst [vmem:[#allocation3 + $0x278] sm:$0xff] 0.0
    %169 = vst [vmem:[#allocation3 + $0x280] sm:$0xff] 0.0
    %170 = vst [vmem:[#allocation3 + $0x288] sm:$0xff] 0.0
    %171 = vst [vmem:[#allocation3 + $0x290] sm:$0xff] 0.0
    %172 = vst [vmem:[#allocation3 + $0x298] sm:$0xff] 0.0
    %173 = vst [vmem:[#allocation3 + $0x2a0] sm:$0xff] 0.0
    %174 = vst [vmem:[#allocation3 + $0x2a8] sm:$0xff] 0.0
    %175 = vst [vmem:[#allocation3 + $0x2b0] sm:$0xff] 0.0
    %176 = vst [vmem:[#allocation3 + $0x2b8] sm:$0xff] 0.0
    %177 = vst [vmem:[#allocation3 + $0x2c0] sm:$0xff] 0.0
    %178 = vst [vmem:[#allocation3 + $0x2c8] sm:$0xff] 0.0
    %179 = vst [vmem:[#allocation3 + $0x2d0] sm:$0xff] 0.0
    %180 = vst [vmem:[#allocation3 + $0x2d8] sm:$0xff] 0.0
    %181 = vst [vmem:[#allocation3 + $0x2e0] sm:$0xff] 0.0
    %182 = vst [vmem:[#allocation3 + $0x2e8] sm:$0xff] 0.0
    %183 = vst [vmem:[#allocation3 + $0x2f0] sm:$0xff] 0.0
    %184 = vst [vmem:[#allocation3 + $0x2f8] sm:$0xff] 0.0
    %185 = vst [vmem:[#allocation3 + $0x300] sm:$0xff] 0.0
    %186 = vst [vmem:[#allocation3 + $0x308] sm:$0xff] 0.0
    %187 = vst [vmem:[#allocation3 + $0x310] sm:$0xff] 0.0
    %188 = vst [vmem:[#allocation3 + $0x318] sm:$0xff] 0.0
    %189 = vst [vmem:[#allocation3 + $0x320] sm:$0xff] 0.0
    %190 = vst [vmem:[#allocation3 + $0x328] sm:$0xff] 0.0
    %191 = vst [vmem:[#allocation3 + $0x330] sm:$0xff] 0.0
    %192 = vst [vmem:[#allocation3 + $0x338] sm:$0xff] 0.0
    %193 = vst [vmem:[#allocation3 + $0x340] sm:$0xff] 0.0
    %194 = vst [vmem:[#allocation3 + $0x348] sm:$0xff] 0.0
    %195 = vst [vmem:[#allocation3 + $0x350] sm:$0xff] 0.0
    %196 = vst [vmem:[#allocation3 + $0x358] sm:$0xff] 0.0
    %197 = vst [vmem:[#allocation3 + $0x360] sm:$0xff] 0.0
    %198 = vst [vmem:[#allocation3 + $0x368] sm:$0xff] 0.0
    %199 = vst [vmem:[#allocation3 + $0x370] sm:$0xff] 0.0
    %200 = vst [vmem:[#allocation3 + $0x378] sm:$0xff] 0.0
    %201 = vst [vmem:[#allocation3 + $0x380] sm:$0xff] 0.0
    %202 = vst [vmem:[#allocation3 + $0x388] sm:$0xff] 0.0
    %203 = vst [vmem:[#allocation3 + $0x390] sm:$0xff] 0.0
    %204 = vst [vmem:[#allocation3 + $0x398] sm:$0xff] 0.0
    %205 = vst [vmem:[#allocation3 + $0x3a0] sm:$0xff] 0.0
    %206 = vst [vmem:[#allocation3 + $0x3a8] sm:$0xff] 0.0
    %207 = vst [vmem:[#allocation3 + $0x3b0] sm:$0xff] 0.0
    %208 = vst [vmem:[#allocation3 + $0x3b8] sm:$0xff] 0.0
    %209 = vst [vmem:[#allocation3 + $0x3c0] sm:$0xff] 0.0
    %210 = vst [vmem:[#allocation3 + $0x3c8] sm:$0xff] 0.0
    %211 = vst [vmem:[#allocation3 + $0x3d0] sm:$0xff] 0.0
    %212 = vst [vmem:[#allocation3 + $0x3d8] sm:$0xff] 0.0
    %213 = vst [vmem:[#allocation3 + $0x3e0] sm:$0xff] 0.0
    %214 = vst [vmem:[#allocation3 + $0x3e8] sm:$0xff] 0.0
    %215 = vst [vmem:[#allocation3 + $0x3f0] sm:$0xff] 0.0
    %216 = vst [vmem:[#allocation3 + $0x3f8] sm:$0xff] 0.0
    %217 = vst [vmem:[#allocation3 + $0x400] sm:$0xff] 0.0
    %218 = vst [vmem:[#allocation3 + $0x408] sm:$0xff] 0.0
    %219 = vst [vmem:[#allocation3 + $0x410] sm:$0xff] 0.0
    %220 = vst [vmem:[#allocation3 + $0x418] sm:$0xff] 0.0
    %221 = vst [vmem:[#allocation3 + $0x420] sm:$0xff] 0.0
    %222 = vst [vmem:[#allocation3 + $0x428] sm:$0xff] 0.0
    %223 = vst [vmem:[#allocation3 + $0x430] sm:$0xff] 0.0
    %224 = vst [vmem:[#allocation3 + $0x438] sm:$0xff] 0.0
    %225 = vst [vmem:[#allocation3 + $0x440] sm:$0xff] 0.0
    %226 = vst [vmem:[#allocation3 + $0x448] sm:$0xff] 0.0
    %227 = vst [vmem:[#allocation3 + $0x450] sm:$0xff] 0.0
    %228 = vst [vmem:[#allocation3 + $0x458] sm:$0xff] 0.0
    %229 = vst [vmem:[#allocation3 + $0x460] sm:$0xff] 0.0
    %230 = vst [vmem:[#allocation3 + $0x468] sm:$0xff] 0.0
    %231 = vst [vmem:[#allocation3 + $0x470] sm:$0xff] 0.0
    %232 = vst [vmem:[#allocation3 + $0x478] sm:$0xff] 0.0
    %233 = vst [vmem:[#allocation3 + $0x480] sm:$0xff] 0.0
    %234 = vst [vmem:[#allocation3 + $0x488] sm:$0xff] 0.0
    %235 = vst [vmem:[#allocation3 + $0x490] sm:$0xff] 0.0
    %236 = vst [vmem:[#allocation3 + $0x498] sm:$0xff] 0.0
    %237 = vst [vmem:[#allocation3 + $0x4a0] sm:$0xff] 0.0
    %238 = vst [vmem:[#allocation3 + $0x4a8] sm:$0xff] 0.0
    %239 = vst [vmem:[#allocation3 + $0x4b0] sm:$0xff] 0.0
    %240 = vst [vmem:[#allocation3 + $0x4b8] sm:$0xff] 0.0
    %241 = vst [vmem:[#allocation3 + $0x4c0] sm:$0xff] 0.0
    %242 = vst [vmem:[#allocation3 + $0x4c8] sm:$0xff] 0.0
    %243 = vst [vmem:[#allocation3 + $0x4d0] sm:$0xff] 0.0
    %244 = vst [vmem:[#allocation3 + $0x4d8] sm:$0xff] 0.0
    %245 = vst [vmem:[#allocation3 + $0x4e0] sm:$0xff] 0.0
    %246 = vst [vmem:[#allocation3 + $0x4e8] sm:$0xff] 0.0
    %247 = vst [vmem:[#allocation3 + $0x4f0] sm:$0xff] 0.0
    %248 = vst [vmem:[#allocation3 + $0x4f8] sm:$0xff] 0.0
    %249 = vst [vmem:[#allocation3 + $0x500] sm:$0xff] 0.0
    %250 = vst [vmem:[#allocation3 + $0x508] sm:$0xff] 0.0
    %251 = vst [vmem:[#allocation3 + $0x510] sm:$0xff] 0.0
    %252 = vst [vmem:[#allocation3 + $0x518] sm:$0xff] 0.0
    %253 = vst [vmem:[#allocation3 + $0x520] sm:$0xff] 0.0
    %254 = vst [vmem:[#allocation3 + $0x528] sm:$0xff] 0.0
    %255 = vst [vmem:[#allocation3 + $0x530] sm:$0xff] 0.0
    %256 = vst [vmem:[#allocation3 + $0x538] sm:$0xff] 0.0
    %257 = vst [vmem:[#allocation3 + $0x540] sm:$0xff] 0.0
    %258 = vst [vmem:[#allocation3 + $0x548] sm:$0xff] 0.0
    %259 = vst [vmem:[#allocation3 + $0x550] sm:$0xff] 0.0
    %260 = vst [vmem:[#allocation3 + $0x558] sm:$0xff] 0.0
    %261 = vst [vmem:[#allocation3 + $0x560] sm:$0xff] 0.0
    %262 = vst [vmem:[#allocation3 + $0x568] sm:$0xff] 0.0
    %263 = vst [vmem:[#allocation3 + $0x570] sm:$0xff] 0.0
    %264 = vst [vmem:[#allocation3 + $0x578] sm:$0xff] 0.0
    %265 = vst [vmem:[#allocation3 + $0x580] sm:$0xff] 0.0
    %266 = vst [vmem:[#allocation3 + $0x588] sm:$0xff] 0.0
    %267 = vst [vmem:[#allocation3 + $0x590] sm:$0xff] 0.0
    %268 = vst [vmem:[#allocation3 + $0x598] sm:$0xff] 0.0
    %269 = vst [vmem:[#allocation3 + $0x5a0] sm:$0xff] 0.0
    %270 = vst [vmem:[#allocation3 + $0x5a8] sm:$0xff] 0.0
    %271 = vst [vmem:[#allocation3 + $0x5b0] sm:$0xff] 0.0
    %272 = vst [vmem:[#allocation3 + $0x5b8] sm:$0xff] 0.0
    %273 = vst [vmem:[#allocation3 + $0x5c0] sm:$0xff] 0.0
    %274 = vst [vmem:[#allocation3 + $0x5c8] sm:$0xff] 0.0
    %275 = vst [vmem:[#allocation3 + $0x5d0] sm:$0xff] 0.0
    %276 = vst [vmem:[#allocation3 + $0x5d8] sm:$0xff] 0.0
    %277 = vst [vmem:[#allocation3 + $0x5e0] sm:$0xff] 0.0
    %278 = vst [vmem:[#allocation3 + $0x5e8] sm:$0xff] 0.0
    %279 = vst [vmem:[#allocation3 + $0x5f0] sm:$0xff] 0.0
    %280 = vst [vmem:[#allocation3 + $0x5f8] sm:$0xff] 0.0
    %281 = vst [vmem:[#allocation3 + $0x600] sm:$0xff] 0.0
    %282 = vst [vmem:[#allocation3 + $0x608] sm:$0xff] 0.0
    %283 = vst [vmem:[#allocation3 + $0x610] sm:$0xff] 0.0
    %284 = vst [vmem:[#allocation3 + $0x618] sm:$0xff] 0.0
    %285 = vst [vmem:[#allocation3 + $0x620] sm:$0xff] 0.0
    %286 = vst [vmem:[#allocation3 + $0x628] sm:$0xff] 0.0
    %287 = vst [vmem:[#allocation3 + $0x630] sm:$0xff] 0.0
    %288 = vst [vmem:[#allocation3 + $0x638] sm:$0xff] 0.0
    %289 = vst [vmem:[#allocation3 + $0x640] sm:$0xff] 0.0
    %290 = vst [vmem:[#allocation3 + $0x648] sm:$0xff] 0.0
    %291 = vst [vmem:[#allocation3 + $0x650] sm:$0xff] 0.0
    %292 = vst [vmem:[#allocation3 + $0x658] sm:$0xff] 0.0
    %293 = vst [vmem:[#allocation3 + $0x660] sm:$0xff] 0.0
    %294 = vst [vmem:[#allocation3 + $0x668] sm:$0xff] 0.0
    %295 = vst [vmem:[#allocation3 + $0x670] sm:$0xff] 0.0
    %296 = vst [vmem:[#allocation3 + $0x678] sm:$0xff] 0.0
    %297 = vst [vmem:[#allocation3 + $0x680] sm:$0xff] 0.0
    %298 = vst [vmem:[#allocation3 + $0x688] sm:$0xff] 0.0
    %299 = vst [vmem:[#allocation3 + $0x690] sm:$0xff] 0.0
    %300 = vst [vmem:[#allocation3 + $0x698] sm:$0xff] 0.0
    %301 = vst [vmem:[#allocation3 + $0x6a0] sm:$0xff] 0.0
    %302 = vst [vmem:[#allocation3 + $0x6a8] sm:$0xff] 0.0
    %303 = vst [vmem:[#allocation3 + $0x6b0] sm:$0xff] 0.0
    %304 = vst [vmem:[#allocation3 + $0x6b8] sm:$0xff] 0.0
    %305 = vst [vmem:[#allocation3 + $0x6c0] sm:$0xff] 0.0
    %306 = vst [vmem:[#allocation3 + $0x6c8] sm:$0xff] 0.0
    %307 = vst [vmem:[#allocation3 + $0x6d0] sm:$0xff] 0.0
    %308 = vst [vmem:[#allocation3 + $0x6d8] sm:$0xff] 0.0
    %309 = vst [vmem:[#allocation3 + $0x6e0] sm:$0xff] 0.0
    %310 = vst [vmem:[#allocation3 + $0x6e8] sm:$0xff] 0.0
    %311 = vst [vmem:[#allocation3 + $0x6f0] sm:$0xff] 0.0
    %312 = vst [vmem:[#allocation3 + $0x6f8] sm:$0xff] 0.0
    %313 = vst [vmem:[#allocation6] sm:$0xff] 0.0
    %314 = vst [vmem:[#allocation6 + $0x8] sm:$0xff] 0.0
    %315 = vst [vmem:[#allocation6 + $0x10] sm:$0xff] 0.0
    %316 = vst [vmem:[#allocation6 + $0x18] sm:$0xff] 0.0
    %317 = vst [vmem:[#allocation6 + $0x20] sm:$0xff] 0.0
    %318 = vst [vmem:[#allocation6 + $0x28] sm:$0xff] 0.0
    %319 = vst [vmem:[#allocation6 + $0x30] sm:$0xff] 0.0
    %320 = vst [vmem:[#allocation6 + $0x38] sm:$0xff] 0.0
    %321 = vst [vmem:[#allocation6 + $0x40] sm:$0xff] 0.0
    %322 = vst [vmem:[#allocation6 + $0x48] sm:$0xff] 0.0
    %323 = vst [vmem:[#allocation6 + $0x50] sm:$0xff] 0.0
    %324 = vst [vmem:[#allocation6 + $0x58] sm:$0xff] 0.0
    %325 = vst [vmem:[#allocation6 + $0x60] sm:$0xff] 0.0
    %326 = vst [vmem:[#allocation6 + $0x68] sm:$0xff] 0.0
    %327 = vst [vmem:[#allocation6 + $0x70] sm:$0xff] 0.0
    %328 = vst [vmem:[#allocation6 + $0x78] sm:$0xff] 0.0
    %329 = vst [vmem:[#allocation6 + $0x80] sm:$0xff] 0.0
    %330 = vst [vmem:[#allocation6 + $0x88] sm:$0xff] 0.0
    %331 = vst [vmem:[#allocation6 + $0x90] sm:$0xff] 0.0
    %332 = vst [vmem:[#allocation6 + $0x98] sm:$0xff] 0.0
    %333 = vst [vmem:[#allocation6 + $0xa0] sm:$0xff] 0.0
    %334 = vst [vmem:[#allocation6 + $0xa8] sm:$0xff] 0.0
    %335 = vst [vmem:[#allocation6 + $0xb0] sm:$0xff] 0.0
    %336 = vst [vmem:[#allocation6 + $0xb8] sm:$0xff] 0.0
    %337 = vst [vmem:[#allocation6 + $0xc0] sm:$0xff] 0.0
    %338 = vst [vmem:[#allocation6 + $0xc8] sm:$0xff] 0.0
    %339 = vst [vmem:[#allocation6 + $0xd0] sm:$0xff] 0.0
    %340 = vst [vmem:[#allocation6 + $0xd8] sm:$0xff] 0.0
    %341 = vst [vmem:[#allocation6 + $0xe0] sm:$0xff] 0.0
    %342 = vst [vmem:[#allocation6 + $0xe8] sm:$0xff] 0.0
    %343 = vst [vmem:[#allocation6 + $0xf0] sm:$0xff] 0.0
    %344 = vst [vmem:[#allocation6 + $0xf8] sm:$0xff] 0.0
    loop: start=0, step=1, limit=8
    $region62: #{network_forward.1} parent=1 // loop_pre_header
      _
    $region63: #{network_forward.1} parent=1 // loop_header
      %s346 = sphi 0, %s350
      %p347 = scmp.ge.s32.totalorder %s346, 8
    $region64: #{network_forward.1} parent=1 // loop_header_branch
      %349 = sbr.rel (%p347) target = $region68
    $region65: #{network_forward.1} parent=1 // loop_body
      %s351 = smul.u32 %s346, 128
      %s352 = sld [smem:[#allocation7 + %s351]]
      %v353 = vld [vmem:[%s0] sm:$0xff]
      %v354 = vld [vmem:[%s0 + $0x8] sm:$0xff]
      %v355 = vld [vmem:[%s0 + $0x10] sm:$0xff]
      %v356 = vld [vmem:[%s0 + $0x18] sm:$0xff]
      %v357 = vld [vmem:[%s0 + $0x20] sm:$0xff]
      %v358 = vld [vmem:[%s0 + $0x28] sm:$0xff]
      %v359 = vld [vmem:[%s0 + $0x30] sm:$0xff]
      %v360 = vld [vmem:[%s0 + $0x38] sm:$0xff]
      %v361 = vld [vmem:[%s0 + $0x40] sm:$0xff]
      %v362 = vld [vmem:[%s0 + $0x48] sm:$0xff]
      %v363 = vld [vmem:[%s0 + $0x50] sm:$0xff]
      %v364 = vld [vmem:[%s0 + $0x58] sm:$0xff]
      %v365 = vld [vmem:[%s0 + $0x60] sm:$0xff]
      %v366 = vld [vmem:[%s0 + $0x68] sm:$0xff]
      %v367 = vld [vmem:[%s0 + $0x70] sm:$0xff]
      %v368 = vld [vmem:[%s0 + $0x78] sm:$0xff]
      %v369 = vld [vmem:[%s0 + $0x80] sm:$0xff]
      %v370 = vld [vmem:[%s0 + $0x88] sm:$0xff]
      %v371 = vld [vmem:[%s0 + $0x90] sm:$0xff]
      %v372 = vld [vmem:[%s0 + $0x98] sm:$0xff]
      %v373 = vld [vmem:[%s0 + $0xa0] sm:$0xff]
      %v374 = vld [vmem:[%s0 + $0xa8] sm:$0xff]
      %v375 = vld [vmem:[%s0 + $0xb0] sm:$0xff]
      %v376 = vld [vmem:[%s0 + $0xb8] sm:$0xff]
      %v377 = vld [vmem:[%s0 + $0xc0] sm:$0xff]
      %v378 = vld [vmem:[%s0 + $0xc8] sm:$0xff]
      %v379 = vld [vmem:[%s0 + $0xd0] sm:$0xff]
      %v380 = vld [vmem:[%s0 + $0xd8] sm:$0xff]
      %v381 = vld [vmem:[%s0 + $0xe0] sm:$0xff]
      %v382 = vld [vmem:[%s0 + $0xe8] sm:$0xff]
      %v383 = vld [vmem:[%s0 + $0xf0] sm:$0xff]
      %v384 = vld [vmem:[%s0 + $0xf8] sm:$0xff]
      %v385 = vld [vmem:[%s0 + $0x100] sm:$0xff]
      %v386 = vld [vmem:[%s0 + $0x108] sm:$0xff]
      %v387 = vld [vmem:[%s0 + $0x110] sm:$0xff]
      %v388 = vld [vmem:[%s0 + $0x118] sm:$0xff]
      %v389 = vld [vmem:[%s0 + $0x120] sm:$0xff]
      %v390 = vld [vmem:[%s0 + $0x128] sm:$0xff]
      %v391 = vld [vmem:[%s0 + $0x130] sm:$0xff]
      %v392 = vld [vmem:[%s0 + $0x138] sm:$0xff]
      %v393 = vld [vmem:[%s0 + $0x140] sm:$0xff]
      %v394 = vld [vmem:[%s0 + $0x148] sm:$0xff]
      %v395 = vld [vmem:[%s0 + $0x150] sm:$0xff]
      %v396 = vld [vmem:[%s0 + $0x158] sm:$0xff]
      %v397 = vld [vmem:[%s0 + $0x160] sm:$0xff]
      %v398 = vld [vmem:[%s0 + $0x168] sm:$0xff]
      %v399 = vld [vmem:[%s0 + $0x170] sm:$0xff]
      %v400 = vld [vmem:[%s0 + $0x178] sm:$0xff]
      %v401 = vld [vmem:[%s0 + $0x180] sm:$0xff]
      %v402 = vld [vmem:[%s0 + $0x188] sm:$0xff]
      %v403 = vld [vmem:[%s0 + $0x190] sm:$0xff]
      %v404 = vld [vmem:[%s0 + $0x198] sm:$0xff]
      %v405 = vld [vmem:[%s0 + $0x1a0] sm:$0xff]
      %v406 = vld [vmem:[%s0 + $0x1a8] sm:$0xff]
      %v407 = vld [vmem:[%s0 + $0x1b0] sm:$0xff]
      %v408 = vld [vmem:[%s0 + $0x1b8] sm:$0xff]
      %v409 = vld [vmem:[%s0 + $0x1c0] sm:$0xff]
      %v410 = vld [vmem:[%s0 + $0x1c8] sm:$0xff]
      %v411 = vld [vmem:[%s0 + $0x1d0] sm:$0xff]
      %v412 = vld [vmem:[%s0 + $0x1d8] sm:$0xff]
      %v413 = vld [vmem:[%s0 + $0x1e0] sm:$0xff]
      %v414 = vld [vmem:[%s0 + $0x1e8] sm:$0xff]
      %v415 = vld [vmem:[%s0 + $0x1f0] sm:$0xff]
      %v416 = vld [vmem:[%s0 + $0x1f8] sm:$0xff]
      %v417 = vld [vmem:[%s0 + $0x200] sm:$0xff]
      %v418 = vld [vmem:[%s0 + $0x208] sm:$0xff]
      %v419 = vld [vmem:[%s0 + $0x210] sm:$0xff]
      %v420 = vld [vmem:[%s0 + $0x218] sm:$0xff]
      %v421 = vld [vmem:[%s0 + $0x220] sm:$0xff]
      %v422 = vld [vmem:[%s0 + $0x228] sm:$0xff]
      %v423 = vld [vmem:[%s0 + $0x230] sm:$0xff]
      %v424 = vld [vmem:[%s0 + $0x238] sm:$0xff]
      %v425 = vld [vmem:[%s0 + $0x240] sm:$0xff]
      %v426 = vld [vmem:[%s0 + $0x248] sm:$0xff]
      %v427 = vld [vmem:[%s0 + $0x250] sm:$0xff]
      %v428 = vld [vmem:[%s0 + $0x258] sm:$0xff]
      %v429 = vld [vmem:[%s0 + $0x260] sm:$0xff]
      %v430 = vld [vmem:[%s0 + $0x268] sm:$0xff]
      %v431 = vld [vmem:[%s0 + $0x270] sm:$0xff]
      %v432 = vld [vmem:[%s0 + $0x278] sm:$0xff]
      %v433 = vld [vmem:[%s0 + $0x280] sm:$0xff]
      %v434 = vld [vmem:[%s0 + $0x288] sm:$0xff]
      %v435 = vld [vmem:[%s0 + $0x290] sm:$0xff]
      %v436 = vld [vmem:[%s0 + $0x298] sm:$0xff]
      %v437 = vld [vmem:[%s0 + $0x2a0] sm:$0xff]
      %v438 = vld [vmem:[%s0 + $0x2a8] sm:$0xff]
      %v439 = vld [vmem:[%s0 + $0x2b0] sm:$0xff]
      %v440 = vld [vmem:[%s0 + $0x2b8] sm:$0xff]
      %v441 = vld [vmem:[%s0 + $0x2c0] sm:$0xff]
      %v442 = vld [vmem:[%s0 + $0x2c8] sm:$0xff]
      %v443 = vld [vmem:[%s0 + $0x2d0] sm:$0xff]
      %v444 = vld [vmem:[%s0 + $0x2d8] sm:$0xff]
      %v445 = vld [vmem:[%s0 + $0x2e0] sm:$0xff]
      %v446 = vld [vmem:[%s0 + $0x2e8] sm:$0xff]
      %v447 = vld [vmem:[%s0 + $0x2f0] sm:$0xff]
      %v448 = vld [vmem:[%s0 + $0x2f8] sm:$0xff]
      %v449 = vld [vmem:[%s0 + $0x300] sm:$0xff]
      %v450 = vld [vmem:[%s0 + $0x308] sm:$0xff]
      %v451 = vld [vmem:[%s0 + $0x310] sm:$0xff]
      %v452 = vld [vmem:[%s0 + $0x318] sm:$0xff]
      %v453 = vld [vmem:[%s0 + $0x320] sm:$0xff]
      %v454 = vld [vmem:[%s0 + $0x328] sm:$0xff]
      %v455 = vld [vmem:[%s0 + $0x330] sm:$0xff]
      %v456 = vld [vmem:[%s0 + $0x338] sm:$0xff]
      %v457 = vld [vmem:[%s0 + $0x340] sm:$0x3f]
      %v458 = vstv %s352
      %v459 = vmul.f32 %v458, %v353
      %v460 = vmul.f32 %v458, %v354
      %v461 = vmul.f32 %v458, %v355
      %v462 = vmul.f32 %v458, %v356
      %v463 = vmul.f32 %v458, %v357
      %v464 = vmul.f32 %v458, %v358
      %v465 = vmul.f32 %v458, %v359
      %v466 = vmul.f32 %v458, %v360
      %v467 = vmul.f32 %v458, %v361
      %v468 = vmul.f32 %v458, %v362
      %v469 = vmul.f32 %v458, %v363
      %v470 = vmul.f32 %v458, %v364
      %v471 = vmul.f32 %v458, %v365
      %v472 = vmul.f32 %v458, %v366
      %v473 = vmul.f32 %v458, %v367
      %v474 = vmul.f32 %v458, %v368
      %v475 = vmul.f32 %v458, %v369
      %v476 = vmul.f32 %v458, %v370
      %v477 = vmul.f32 %v458, %v371
      %v478 = vmul.f32 %v458, %v372
      %v479 = vmul.f32 %v458, %v373
      %v480 = vmul.f32 %v458, %v374
      %v481 = vmul.f32 %v458, %v375
      %v482 = vmul.f32 %v458, %v376
      %v483 = vmul.f32 %v458, %v377
      %v484 = vmul.f32 %v458, %v378
      %v485 = vmul.f32 %v458, %v379
      %v486 = vmul.f32 %v458, %v380
      %v487 = vmul.f32 %v458, %v381
      %v488 = vmul.f32 %v458, %v382
      %v489 = vmul.f32 %v458, %v383
      %v490 = vmul.f32 %v458, %v384
      %v491 = vmul.f32 %v458, %v385
      %v492 = vmul.f32 %v458, %v386
      %v493 = vmul.f32 %v458, %v387
      %v494 = vmul.f32 %v458, %v388
      %v495 = vmul.f32 %v458, %v389
      %v496 = vmul.f32 %v458, %v390
      %v497 = vmul.f32 %v458, %v391
      %v498 = vmul.f32 %v458, %v392
      %v499 = vmul.f32 %v458, %v393
      %v500 = vmul.f32 %v458, %v394
      %v501 = vmul.f32 %v458, %v395
      %v502 = vmul.f32 %v458, %v396
      %v503 = vmul.f32 %v458, %v397
      %v504 = vmul.f32 %v458, %v398
      %v505 = vmul.f32 %v458, %v399
      %v506 = vmul.f32 %v458, %v400
      %v507 = vmul.f32 %v458, %v401
      %v508 = vmul.f32 %v458, %v402
      %v509 = vmul.f32 %v458, %v403
      %v510 = vmul.f32 %v458, %v404
      %v511 = vmul.f32 %v458, %v405
      %v512 = vmul.f32 %v458, %v406
      %v513 = vmul.f32 %v458, %v407
      %v514 = vmul.f32 %v458, %v408
      %v515 = vmul.f32 %v458, %v409
      %v516 = vmul.f32 %v458, %v410
      %v517 = vmul.f32 %v458, %v411
      %v518 = vmul.f32 %v458, %v412
      %v519 = vmul.f32 %v458, %v413
      %v520 = vmul.f32 %v458, %v414
      %v521 = vmul.f32 %v458, %v415
      %v522 = vmul.f32 %v458, %v416
      %v523 = vmul.f32 %v458, %v417
      %v524 = vmul.f32 %v458, %v418
      %v525 = vmul.f32 %v458, %v419
      %v526 = vmul.f32 %v458, %v420
      %v527 = vmul.f32 %v458, %v421
      %v528 = vmul.f32 %v458, %v422
      %v529 = vmul.f32 %v458, %v423
      %v530 = vmul.f32 %v458, %v424
      %v531 = vmul.f32 %v458, %v425
      %v532 = vmul.f32 %v458, %v426
      %v533 = vmul.f32 %v458, %v427
      %v534 = vmul.f32 %v458, %v428
      %v535 = vmul.f32 %v458, %v429
      %v536 = vmul.f32 %v458, %v430
      %v537 = vmul.f32 %v458, %v431
      %v538 = vmul.f32 %v458, %v432
      %v539 = vmul.f32 %v458, %v433
      %v540 = vmul.f32 %v458, %v434
      %v541 = vmul.f32 %v458, %v435
      %v542 = vmul.f32 %v458, %v436
      %v543 = vmul.f32 %v458, %v437
      %v544 = vmul.f32 %v458, %v438
      %v545 = vmul.f32 %v458, %v439
      %v546 = vmul.f32 %v458, %v440
      %v547 = vmul.f32 %v458, %v441
      %v548 = vmul.f32 %v458, %v442
      %v549 = vmul.f32 %v458, %v443
      %v550 = vmul.f32 %v458, %v444
      %v551 = vmul.f32 %v458, %v445
      %v552 = vmul.f32 %v458, %v446
      %v553 = vmul.f32 %v458, %v447
      %v554 = vmul.f32 %v458, %v448
      %v555 = vmul.f32 %v458, %v449
      %v556 = vmul.f32 %v458, %v450
      %v557 = vmul.f32 %v458, %v451
      %v558 = vmul.f32 %v458, %v452
      %v559 = vmul.f32 %v458, %v453
      %v560 = vmul.f32 %v458, %v454
      %v561 = vmul.f32 %v458, %v455
      %v562 = vmul.f32 %v458, %v456
      %v563 = vmul.f32 %v458, %v457
      %s564 = sadd.s32 %s351, 1
      %s565 = sld [smem:[#allocation7 + %s564]]
      %v566 = vld [vmem:[%s0 + $0x1] sm:$0xff]
      %v567 = vld [vmem:[%s0 + $0x9] sm:$0xff]
      %v568 = vld [vmem:[%s0 + $0x11] sm:$0xff]
      %v569 = vld [vmem:[%s0 + $0x19] sm:$0xff]
      %v570 = vld [vmem:[%s0 + $0x21] sm:$0xff]
      %v571 = vld [vmem:[%s0 + $0x29] sm:$0xff]
      %v572 = vld [vmem:[%s0 + $0x31] sm:$0xff]
      %v573 = vld [vmem:[%s0 + $0x39] sm:$0xff]
      %v574 = vld [vmem:[%s0 + $0x41] sm:$0xff]
      %v575 = vld [vmem:[%s0 + $0x49] sm:$0xff]
      %v576 = vld [vmem:[%s0 + $0x51] sm:$0xff]
      %v577 = vld [vmem:[%s0 + $0x59] sm:$0xff]
      %v578 = vld [vmem:[%s0 + $0x61] sm:$0xff]
      %v579 = vld [vmem:[%s0 + $0x69] sm:$0xff]
      %v580 = vld [vmem:[%s0 + $0x71] sm:$0xff]
      %v581 = vld [vmem:[%s0 + $0x79] sm:$0xff]
      %v582 = vld [vmem:[%s0 + $0x81] sm:$0xff]
      %v583 = vld [vmem:[%s0 + $0x89] sm:$0xff]
      %v584 = vld [vmem:[%s0 + $0x91] sm:$0xff]
      %v585 = vld [vmem:[%s0 + $0x99] sm:$0xff]
      %v586 = vld [vmem:[%s0 + $0xa1] sm:$0xff]
      %v587 = vld [vmem:[%s0 + $0xa9] sm:$0xff]
      %v588 = vld [vmem:[%s0 + $0xb1] sm:$0xff]
      %v589 = vld [vmem:[%s0 + $0xb9] sm:$0xff]
      %v590 = vld [vmem:[%s0 + $0xc1] sm:$0xff]
      %v591 = vld [vmem:[%s0 + $0xc9] sm:$0xff]
      %v592 = vld [vmem:[%s0 + $0xd1] sm:$0xff]
      %v593 = vld [vmem:[%s0 + $0xd9] sm:$0xff]
      %v594 = vld [vmem:[%s0 + $0xe1] sm:$0xff]
      %v595 = vld [vmem:[%s0 + $0xe9] sm:$0xff]
      %v596 = vld [vmem:[%s0 + $0xf1] sm:$0xff]
      %v597 = vld [vmem:[%s0 + $0xf9] sm:$0xff]
      %v598 = vld [vmem:[%s0 + $0x101] sm:$0xff]
      %v599 = vld [vmem:[%s0 + $0x109] sm:$0xff]
      %v600 = vld [vmem:[%s0 + $0x111] sm:$0xff]
      %v601 = vld [vmem:[%s0 + $0x119] sm:$0xff]
      %v602 = vld [vmem:[%s0 + $0x121] sm:$0xff]
      %v603 = vld [vmem:[%s0 + $0x129] sm:$0xff]
      %v604 = vld [vmem:[%s0 + $0x131] sm:$0xff]
      %v605 = vld [vmem:[%s0 + $0x139] sm:$0xff]
      %v606 = vld [vmem:[%s0 + $0x141] sm:$0xff]
      %v607 = vld [vmem:[%s0 + $0x149] sm:$0xff]
      %v608 = vld [vmem:[%s0 + $0x151] sm:$0xff]
      %v609 = vld [vmem:[%s0 + $0x159] sm:$0xff]
      %v610 = vld [vmem:[%s0 + $0x161] sm:$0xff]
      %v611 = vld [vmem:[%s0 + $0x169] sm:$0xff]
      %v612 = vld [vmem:[%s0 + $0x171] sm:$0xff]
      %v613 = vld [vmem:[%s0 + $0x179] sm:$0xff]
      %v614 = vld [vmem:[%s0 + $0x181] sm:$0xff]
      %v615 = vld [vmem:[%s0 + $0x189] sm:$0xff]
      %v616 = vld [vmem:[%s0 + $0x191] sm:$0xff]
      %v617 = vld [vmem:[%s0 + $0x199] sm:$0xff]
      %v618 = vld [vmem:[%s0 + $0x1a1] sm:$0xff]
      %v619 = vld [vmem:[%s0 + $0x1a9] sm:$0xff]
      %v620 = vld [vmem:[%s0 + $0x1b1] sm:$0xff]
      %v621 = vld [vmem:[%s0 + $0x1b9] sm:$0xff]
      %v622 = vld [vmem:[%s0 + $0x1c1] sm:$0xff]
      %v623 = vld [vmem:[%s0 + $0x1c9] sm:$0xff]
      %v624 = vld [vmem:[%s0 + $0x1d1] sm:$0xff]
      %v625 = vld [vmem:[%s0 + $0x1d9] sm:$0xff]
      %v626 = vld [vmem:[%s0 + $0x1e1] sm:$0xff]
      %v627 = vld [vmem:[%s0 + $0x1e9] sm:$0xff]
      %v628 = vld [vmem:[%s0 + $0x1f1] sm:$0xff]
      %v629 = vld [vmem:[%s0 + $0x1f9] sm:$0xff]
      %v630 = vld [vmem:[%s0 + $0x201] sm:$0xff]
      %v631 = vld [vmem:[%s0 + $0x209] sm:$0xff]
      %v632 = vld [vmem:[%s0 + $0x211] sm:$0xff]
      %v633 = vld [vmem:[%s0 + $0x219] sm:$0xff]
      %v634 = vld [vmem:[%s0 + $0x221] sm:$0xff]
      %v635 = vld [vmem:[%s0 + $0x229] sm:$0xff]
      %v636 = vld [vmem:[%s0 + $0x231] sm:$0xff]
      %v637 = vld [vmem:[%s0 + $0x239] sm:$0xff]
      %v638 = vld [vmem:[%s0 + $0x241] sm:$0xff]
      %v639 = vld [vmem:[%s0 + $0x249] sm:$0xff]
      %v640 = vld [vmem:[%s0 + $0x251] sm:$0xff]
      %v641 = vld [vmem:[%s0 + $0x259] sm:$0xff]
      %v642 = vld [vmem:[%s0 + $0x261] sm:$0xff]
      %v643 = vld [vmem:[%s0 + $0x269] sm:$0xff]
      %v644 = vld [vmem:[%s0 + $0x271] sm:$0xff]
      %v645 = vld [vmem:[%s0 + $0x279] sm:$0xff]
      %v646 = vld [vmem:[%s0 + $0x281] sm:$0xff]
      %v647 = vld [vmem:[%s0 + $0x289] sm:$0xff]
      %v648 = vld [vmem:[%s0 + $0x291] sm:$0xff]
      %v649 = vld [vmem:[%s0 + $0x299] sm:$0xff]
      %v650 = vld [vmem:[%s0 + $0x2a1] sm:$0xff]
      %v651 = vld [vmem:[%s0 + $0x2a9] sm:$0xff]
      %v652 = vld [vmem:[%s0 + $0x2b1] sm:$0xff]
      %v653 = vld [vmem:[%s0 + $0x2b9] sm:$0xff]
      %v654 = vld [vmem:[%s0 + $0x2c1] sm:$0xff]
      %v655 = vld [vmem:[%s0 + $0x2c9] sm:$0xff]
      %v656 = vld [vmem:[%s0 + $0x2d1] sm:$0xff]
      %v657 = vld [vmem:[%s0 + $0x2d9] sm:$0xff]
      %v658 = vld [vmem:[%s0 + $0x2e1] sm:$0xff]
      %v659 = vld [vmem:[%s0 + $0x2e9] sm:$0xff]
      %v660 = vld [vmem:[%s0 + $0x2f1] sm:$0xff]
      %v661 = vld [vmem:[%s0 + $0x2f9] sm:$0xff]
      %v662 = vld [vmem:[%s0 + $0x301] sm:$0xff]
      %v663 = vld [vmem:[%s0 + $0x309] sm:$0xff]
      %v664 = vld [vmem:[%s0 + $0x311] sm:$0xff]
      %v665 = vld [vmem:[%s0 + $0x319] sm:$0xff]
      %v666 = vld [vmem:[%s0 + $0x321] sm:$0xff]
      %v667 = vld [vmem:[%s0 + $0x329] sm:$0xff]
      %v668 = vld [vmem:[%s0 + $0x331] sm:$0xff]
      %v669 = vld [vmem:[%s0 + $0x339] sm:$0xff]
      %v670 = vld [vmem:[%s0 + $0x341] sm:$0x3f]
      %v671 = vstv %s565
      %v672 = vmul.f32 %v671, %v566
      %v673 = vmul.f32 %v671, %v567
      %v674 = vmul.f32 %v671, %v568
      %v675 = vmul.f32 %v671, %v569
      %v676 = vmul.f32 %v671, %v570
      %v677 = vmul.f32 %v671, %v571
      %v678 = vmul.f32 %v671, %v572
      %v679 = vmul.f32 %v671, %v573
      %v680 = vmul.f32 %v671, %v574
      %v681 = vmul.f32 %v671, %v575
      %v682 = vmul.f32 %v671, %v576
      %v683 = vmul.f32 %v671, %v577
      %v684 = vmul.f32 %v671, %v578
      %v685 = vmul.f32 %v671, %v579
      %v686 = vmul.f32 %v671, %v580
      %v687 = vmul.f32 %v671, %v581
      %v688 = vmul.f32 %v671, %v582
      %v689 = vmul.f32 %v671, %v583
      %v690 = vmul.f32 %v671, %v584
      %v691 = vmul.f32 %v671, %v585
      %v692 = vmul.f32 %v671, %v586
      %v693 = vmul.f32 %v671, %v587
      %v694 = vmul.f32 %v671, %v588
      %v695 = vmul.f32 %v671, %v589
      %v696 = vmul.f32 %v671, %v590
      %v697 = vmul.f32 %v671, %v591
      %v698 = vmul.f32 %v671, %v592
      %v699 = vmul.f32 %v671, %v593
      %v700 = vmul.f32 %v671, %v594
      %v701 = vmul.f32 %v671, %v595
      %v702 = vmul.f32 %v671, %v596
      %v703 = vmul.f32 %v671, %v597
      %v704 = vmul.f32 %v671, %v598
      %v705 = vmul.f32 %v671, %v599
      %v706 = vmul.f32 %v671, %v600
      %v707 = vmul.f32 %v671, %v601
      %v708 = vmul.f32 %v671, %v602
      %v709 = vmul.f32 %v671, %v603
      %v710 = vmul.f32 %v671, %v604
      %v711 = vmul.f32 %v671, %v605
      %v712 = vmul.f32 %v671, %v606
      %v713 = vmul.f32 %v671, %v607
      %v714 = vmul.f32 %v671, %v608
      %v715 = vmul.f32 %v671, %v609
      %v716 = vmul.f32 %v671, %v610
      %v717 = vmul.f32 %v671, %v611
      %v718 = vmul.f32 %v671, %v612
      %v719 = vmul.f32 %v671, %v613
      %v720 = vmul.f32 %v671, %v614
      %v721 = vmul.f32 %v671, %v615
      %v722 = vmul.f32 %v671, %v616
      %v723 = vmul.f32 %v671, %v617
      %v724 = vmul.f32 %v671, %v618
      %v725 = vmul.f32 %v671, %v619
      %v726 = vmul.f32 %v671, %v620
      %v727 = vmul.f32 %v671, %v621
      %v728 = vmul.f32 %v671, %v622
      %v729 = vmul.f32 %v671, %v623
      %v730 = vmul.f32 %v671, %v624
      %v731 = vmul.f32 %v671, %v625
      %v732 = vmul.f32 %v671, %v626
      %v733 = vmul.f32 %v671, %v627
      %v734 = vmul.f32 %v671, %v628
      %v735 = vmul.f32 %v671, %v629
      %v736 = vmul.f32 %v671, %v630
      %v737 = vmul.f32 %v671, %v631
      %v738 = vmul.f32 %v671, %v632
      %v739 = vmul.f32 %v671, %v633
      %v740 = vmul.f32 %v671, %v634
      %v741 = vmul.f32 %v671, %v635
      %v742 = vmul.f32 %v671, %v636
      %v743 = vmul.f32 %v671, %v637
      %v744 = vmul.f32 %v671, %v638
      %v745 = vmul.f32 %v671, %v639
      %v746 = vmul.f32 %v671, %v640
      %v747 = vmul.f32 %v671, %v641
      %v748 = vmul.f32 %v671, %v642
      %v749 = vmul.f32 %v671, %v643
      %v750 = vmul.f32 %v671, %v644
      %v751 = vmul.f32 %v671, %v645
      %v752 = vmul.f32 %v671, %v646
      %v753 = vmul.f32 %v671, %v647
      %v754 = vmul.f32 %v671, %v648
      %v755 = vmul.f32 %v671, %v649
      %v756 = vmul.f32 %v671, %v650
      %v757 = vmul.f32 %v671, %v651
      %v758 = vmul.f32 %v671, %v652
      %v759 = vmul.f32 %v671, %v653
      %v760 = vmul.f32 %v671, %v654
      %v761 = vmul.f32 %v671, %v655
      %v762 = vmul.f32 %v671, %v656
      %v763 = vmul.f32 %v671, %v657
      %v764 = vmul.f32 %v671, %v658
      %v765 = vmul.f32 %v671, %v659
      %v766 = vmul.f32 %v671, %v660
      %v767 = vmul.f32 %v671, %v661
      %v768 = vmul.f32 %v671, %v662
      %v769 = vmul.f32 %v671, %v663
      %v770 = vmul.f32 %v671, %v664
      %v771 = vmul.f32 %v671, %v665
      %v772 = vmul.f32 %v671, %v666
      %v773 = vmul.f32 %v671, %v667
      %v774 = vmul.f32 %v671, %v668
      %v775 = vmul.f32 %v671, %v669
      %v776 = vmul.f32 %v671, %v670
      %v777 = vadd.f32 %v459, %v672
      %v778 = vadd.f32 %v460, %v673
      %v779 = vadd.f32 %v461, %v674
      %v780 = vadd.f32 %v462, %v675
      %v781 = vadd.f32 %v463, %v676
      %v782 = vadd.f32 %v464, %v677
      %v783 = vadd.f32 %v465, %v678
      %v784 = vadd.f32 %v466, %v679
      %v785 = vadd.f32 %v467, %v680
      %v786 = vadd.f32 %v468, %v681
      %v787 = vadd.f32 %v469, %v682
      %v788 = vadd.f32 %v470, %v683
      %v789 = vadd.f32 %v471, %v684
      %v790 = vadd.f32 %v472, %v685
      %v791 = vadd.f32 %v473, %v686
      %v792 = vadd.f32 %v474, %v687
      %v793 = vadd.f32 %v475, %v688
      %v794 = vadd.f32 %v476, %v689
      %v795 = vadd.f32 %v477, %v690
      %v796 = vadd.f32 %v478, %v691
      %v797 = vadd.f32 %v479, %v692
      %v798 = vadd.f32 %v480, %v693
      %v799 = vadd.f32 %v481, %v694
      %v800 = vadd.f32 %v482, %v695
      %v801 = vadd.f32 %v483, %v696
      %v802 = vadd.f32 %v484, %v697
      %v803 = vadd.f32 %v485, %v698
      %v804 = vadd.f32 %v486, %v699
      %v805 = vadd.f32 %v487, %v700
      %v806 = vadd.f32 %v488, %v701
      %v807 = vadd.f32 %v489, %v702
      %v808 = vadd.f32 %v490, %v703
      %v809 = vadd.f32 %v491, %v704
      %v810 = vadd.f32 %v492, %v705
      %v811 = vadd.f32 %v493, %v706
      %v812 = vadd.f32 %v494, %v707
      %v813 = vadd.f32 %v495, %v708
      %v814 = vadd.f32 %v496, %v709
      %v815 = vadd.f32 %v497, %v710
      %v816 = vadd.f32 %v498, %v711
      %v817 = vadd.f32 %v499, %v712
      %v818 = vadd.f32 %v500, %v713
      %v819 = vadd.f32 %v501, %v714
      %v820 = vadd.f32 %v502, %v715
      %v821 = vadd.f32 %v503, %v716
      %v822 = vadd.f32 %v504, %v717
      %v823 = vadd.f32 %v505, %v718
      %v824 = vadd.f32 %v506, %v719
      %v825 = vadd.f32 %v507, %v720
      %v826 = vadd.f32 %v508, %v721
      %v827 = vadd.f32 %v509, %v722
      %v828 = vadd.f32 %v510, %v723
      %v829 = vadd.f32 %v511, %v724
      %v830 = vadd.f32 %v512, %v725
      %v831 = vadd.f32 %v513, %v726
      %v832 = vadd.f32 %v514, %v727
      %v833 = vadd.f32 %v515, %v728
      %v834 = vadd.f32 %v516, %v729
      %v835 = vadd.f32 %v517, %v730
      %v836 = vadd.f32 %v518, %v731
      %v837 = vadd.f32 %v519, %v732
      %v838 = vadd.f32 %v520, %v733
      %v839 = vadd.f32 %v521, %v734
      %v840 = vadd.f32 %v522, %v735
      %v841 = vadd.f32 %v523, %v736
      %v842 = vadd.f32 %v524, %v737
      %v843 = vadd.f32 %v525, %v738
      %v844 = vadd.f32 %v526, %v739
      %v845 = vadd.f32 %v527, %v740
      %v846 = vadd.f32 %v528, %v741
      %v847 = vadd.f32 %v529, %v742
      %v848 = vadd.f32 %v530, %v743
      %v849 = vadd.f32 %v531, %v744
      %v850 = vadd.f32 %v532, %v745
      %v851 = vadd.f32 %v533, %v746
      %v852 = vadd.f32 %v534, %v747
      %v853 = vadd.f32 %v535, %v748
      %v854 = vadd.f32 %v536, %v749
      %v855 = vadd.f32 %v537, %v750
      %v856 = vadd.f32 %v538, %v751
      %v857 = vadd.f32 %v539, %v752
      %v858 = vadd.f32 %v540, %v753
      %v859 = vadd.f32 %v541, %v754
      %v860 = vadd.f32 %v542, %v755
      %v861 = vadd.f32 %v543, %v756
      %v862 = vadd.f32 %v544, %v757
      %v863 = vadd.f32 %v545, %v758
      %v864 = vadd.f32 %v546, %v759
      %v865 = vadd.f32 %v547, %v760
      %v866 = vadd.f32 %v548, %v761
      %v867 = vadd.f32 %v549, %v762
      %v868 = vadd.f32 %v550, %v763
      %v869 = vadd.f32 %v551, %v764
      %v870 = vadd.f32 %v552, %v765
      %v871 = vadd.f32 %v553, %v766
      %v872 = vadd.f32 %v554, %v767
      %v873 = vadd.f32 %v555, %v768
      %v874 = vadd.f32 %v556, %v769
      %v875 = vadd.f32 %v557, %v770
      %v876 = vadd.f32 %v558, %v771
      %v877 = vadd.f32 %v559, %v772
      %v878 = vadd.f32 %v560, %v773
      %v879 = vadd.f32 %v561, %v774
      %v880 = vadd.f32 %v562, %v775
      %v881 = vadd.f32 %v563, %v776
      %s882 = sadd.s32 %s351, 2
      %s883 = sld [smem:[#allocation7 + %s882]]
      %v884 = vld [vmem:[%s0 + $0x2] sm:$0xff]
      %v885 = vld [vmem:[%s0 + $0xa] sm:$0xff]
      %v886 = vld [vmem:[%s0 + $0x12] sm:$0xff]
      %v887 = vld [vmem:[%s0 + $0x1a] sm:$0xff]
      %v888 = vld [vmem:[%s0 + $0x22] sm:$0xff]
      %v889 = vld [vmem:[%s0 + $0x2a] sm:$0xff]
      %v890 = vld [vmem:[%s0 + $0x32] sm:$0xff]
      %v891 = vld [vmem:[%s0 + $0x3a] sm:$0xff]
      %v892 = vld [vmem:[%s0 + $0x42] sm:$0xff]
      %v893 = vld [vmem:[%s0 + $0x4a] sm:$0xff]
      %v894 = vld [vmem:[%s0 + $0x52] sm:$0xff]
      %v895 = vld [vmem:[%s0 + $0x5a] sm:$0xff]
      %v896 = vld [vmem:[%s0 + $0x62] sm:$0xff]
      %v897 = vld [vmem:[%s0 + $0x6a] sm:$0xff]
      %v898 = vld [vmem:[%s0 + $0x72] sm:$0xff]
      %v899 = vld [vmem:[%s0 + $0x7a] sm:$0xff]
      %v900 = vld [vmem:[%s0 + $0x82] sm:$0xff]
      %v901 = vld [vmem:[%s0 + $0x8a] sm:$0xff]
      %v902 = vld [vmem:[%s0 + $0x92] sm:$0xff]
      %v903 = vld [vmem:[%s0 + $0x9a] sm:$0xff]
      %v904 = vld [vmem:[%s0 + $0xa2] sm:$0xff]
      %v905 = vld [vmem:[%s0 + $0xaa] sm:$0xff]
      %v906 = vld [vmem:[%s0 + $0xb2] sm:$0xff]
      %v907 = vld [vmem:[%s0 + $0xba] sm:$0xff]
      %v908 = vld [vmem:[%s0 + $0xc2] sm:$0xff]
      %v909 = vld [vmem:[%s0 + $0xca] sm:$0xff]
      %v910 = vld [vmem:[%s0 + $0xd2] sm:$0xff]
      %v911 = vld [vmem:[%s0 + $0xda] sm:$0xff]
      %v912 = vld [vmem:[%s0 + $0xe2] sm:$0xff]
      %v913 = vld [vmem:[%s0 + $0xea] sm:$0xff]
      %v914 = vld [vmem:[%s0 + $0xf2] sm:$0xff]
      %v915 = vld [vmem:[%s0 + $0xfa] sm:$0xff]
      %v916 = vld [vmem:[%s0 + $0x102] sm:$0xff]
      %v917 = vld [vmem:[%s0 + $0x10a] sm:$0xff]
      %v918 = vld [vmem:[%s0 + $0x112] sm:$0xff]
      %v919 = vld [vmem:[%s0 + $0x11a] sm:$0xff]
      %v920 = vld [vmem:[%s0 + $0x122] sm:$0xff]
      %v921 = vld [vmem:[%s0 + $0x12a] sm:$0xff]
      %v922 = vld [vmem:[%s0 + $0x132] sm:$0xff]
      %v923 = vld [vmem:[%s0 + $0x13a] sm:$0xff]
      %v924 = vld [vmem:[%s0 + $0x142] sm:$0xff]
      %v925 = vld [vmem:[%s0 + $0x14a] sm:$0xff]
      %v926 = vld [vmem:[%s0 + $0x152] sm:$0xff]
      %v927 = vld [vmem:[%s0 + $0x15a] sm:$0xff]
      %v928 = vld [vmem:[%s0 + $0x162] sm:$0xff]
      %v929 = vld [vmem:[%s0 + $0x16a] sm:$0xff]
      %v930 = vld [vmem:[%s0 + $0x172] sm:$0xff]
      %v931 = vld [vmem:[%s0 + $0x17a] sm:$0xff]
      %v932 = vld [vmem:[%s0 + $0x182] sm:$0xff]
      %v933 = vld [vmem:[%s0 + $0x18a] sm:$0xff]
      %v934 = vld [vmem:[%s0 + $0x192] sm:$0xff]
      %v935 = vld [vmem:[%s0 + $0x19a] sm:$0xff]
      %v936 = vld [vmem:[%s0 + $0x1a2] sm:$0xff]
      %v937 = vld [vmem:[%s0 + $0x1aa] sm:$0xff]
      %v938 = vld [vmem:[%s0 + $0x1b2] sm:$0xff]
      %v939 = vld [vmem:[%s0 + $0x1ba] sm:$0xff]
      %v940 = vld [vmem:[%s0 + $0x1c2] sm:$0xff]
      %v941 = vld [vmem:[%s0 + $0x1ca] sm:$0xff]
      %v942 = vld [vmem:[%s0 + $0x1d2] sm:$0xff]
      %v943 = vld [vmem:[%s0 + $0x1da] sm:$0xff]
      %v944 = vld [vmem:[%s0 + $0x1e2] sm:$0xff]
      %v945 = vld [vmem:[%s0 + $0x1ea] sm:$0xff]
      %v946 = vld [vmem:[%s0 + $0x1f2] sm:$0xff]
      %v947 = vld [vmem:[%s0 + $0x1fa] sm:$0xff]
      %v948 = vld [vmem:[%s0 + $0x202] sm:$0xff]
      %v949 = vld [vmem:[%s0 + $0x20a] sm:$0xff]
      %v950 = vld [vmem:[%s0 + $0x212] sm:$0xff]
      %v951 = vld [vmem:[%s0 + $0x21a] sm:$0xff]
      %v952 = vld [vmem:[%s0 + $0x222] sm:$0xff]
      %v953 = vld [vmem:[%s0 + $0x22a] sm:$0xff]
      %v954 = vld [vmem:[%s0 + $0x232] sm:$0xff]
      %v955 = vld [vmem:[%s0 + $0x23a] sm:$0xff]
      %v956 = vld [vmem:[%s0 + $0x242] sm:$0xff]
      %v957 = vld [vmem:[%s0 + $0x24a] sm:$0xff]
      %v958 = vld [vmem:[%s0 + $0x252] sm:$0xff]
      %v959 = vld [vmem:[%s0 + $0x25a] sm:$0xff]
      %v960 = vld [vmem:[%s0 + $0x262] sm:$0xff]
      %v961 = vld [vmem:[%s0 + $0x26a] sm:$0xff]
      %v962 = vld [vmem:[%s0 + $0x272] sm:$0xff]
      %v963 = vld [vmem:[%s0 + $0x27a] sm:$0xff]
      %v964 = vld [vmem:[%s0 + $0x282] sm:$0xff]
      %v965 = vld [vmem:[%s0 + $0x28a] sm:$0xff]
      %v966 = vld [vmem:[%s0 + $0x292] sm:$0xff]
      %v967 = vld [vmem:[%s0 + $0x29a] sm:$0xff]
      %v968 = vld [vmem:[%s0 + $0x2a2] sm:$0xff]
      %v969 = vld [vmem:[%s0 + $0x2aa] sm:$0xff]
      %v970 = vld [vmem:[%s0 + $0x2b2] sm:$0xff]
      %v971 = vld [vmem:[%s0 + $0x2ba] sm:$0xff]
      %v972 = vld [vmem:[%s0 + $0x2c2] sm:$0xff]
      %v973 = vld [vmem:[%s0 + $0x2ca] sm:$0xff]
      %v974 = vld [vmem:[%s0 + $0x2d2] sm:$0xff]
      %v975 = vld [vmem:[%s0 + $0x2da] sm:$0xff]
      %v976 = vld [vmem:[%s0 + $0x2e2] sm:$0xff]
      %v977 = vld [vmem:[%s0 + $0x2ea] sm:$0xff]
      %v978 = vld [vmem:[%s0 + $0x2f2] sm:$0xff]
      %v979 = vld [vmem:[%s0 + $0x2fa] sm:$0xff]
      %v980 = vld [vmem:[%s0 + $0x302] sm:$0xff]
      %v981 = vld [vmem:[%s0 + $0x30a] sm:$0xff]
      %v982 = vld [vmem:[%s0 + $0x312] sm:$0xff]
      %v983 = vld [vmem:[%s0 + $0x31a] sm:$0xff]
      %v984 = vld [vmem:[%s0 + $0x322] sm:$0xff]
      %v985 = vld [vmem:[%s0 + $0x32a] sm:$0xff]
      %v986 = vld [vmem:[%s0 + $0x332] sm:$0xff]
      %v987 = vld [vmem:[%s0 + $0x33a] sm:$0xff]
      %v988 = vld [vmem:[%s0 + $0x342] sm:$0x3f]
      %v989 = vstv %s883
      %v990 = vmul.f32 %v989, %v884
      %v991 = vmul.f32 %v989, %v885
      %v992 = vmul.f32 %v989, %v886
      %v993 = vmul.f32 %v989, %v887
      %v994 = vmul.f32 %v989, %v888
      %v995 = vmul.f32 %v989, %v889
      %v996 = vmul.f32 %v989, %v890
      %v997 = vmul.f32 %v989, %v891
      %v998 = vmul.f32 %v989, %v892
      %v999 = vmul.f32 %v989, %v893
      %v1000 = vmul.f32 %v989, %v894
      %v1001 = vmul.f32 %v989, %v895
      %v1002 = vmul.f32 %v989, %v896
      %v1003 = vmul.f32 %v989, %v897
      %v1004 = vmul.f32 %v989, %v898
      %v1005 = vmul.f32 %v989, %v899
      %v1006 = vmul.f32 %v989, %v900
      %v1007 = vmul.f32 %v989, %v901
      %v1008 = vmul.f32 %v989, %v902
      %v1009 = vmul.f32 %v989, %v903
      %v1010 = vmul.f32 %v989, %v904
      %v1011 = vmul.f32 %v989, %v905
      %v1012 = vmul.f32 %v989, %v906
      %v1013 = vmul.f32 %v989, %v907
      %v1014 = vmul.f32 %v989, %v908
      %v1015 = vmul.f32 %v989, %v909
      %v1016 = vmul.f32 %v989, %v910
      %v1017 = vmul.f32 %v989, %v911
      %v1018 = vmul.f32 %v989, %v912
      %v1019 = vmul.f32 %v989, %v913
      %v1020 = vmul.f32 %v989, %v914
      %v1021 = vmul.f32 %v989, %v915
      %v1022 = vmul.f32 %v989, %v916
      %v1023 = vmul.f32 %v989, %v917
      %v1024 = vmul.f32 %v989, %v918
      %v1025 = vmul.f32 %v989, %v919
      %v1026 = vmul.f32 %v989, %v920
      %v1027 = vmul.f32 %v989, %v921
      %v1028 = vmul.f32 %v989, %v922
      %v1029 = vmul.f32 %v989, %v923
      %v1030 = vmul.f32 %v989, %v924
      %v1031 = vmul.f32 %v989, %v925
      %v1032 = vmul.f32 %v989, %v926
      %v1033 = vmul.f32 %v989, %v927
      %v1034 = vmul.f32 %v989, %v928
      %v1035 = vmul.f32 %v989, %v929
      %v1036 = vmul.f32 %v989, %v930
      %v1037 = vmul.f32 %v989, %v931
      %v1038 = vmul.f32 %v989, %v932
      %v1039 = vmul.f32 %v989, %v933
      %v1040 = vmul.f32 %v989, %v934
      %v1041 = vmul.f32 %v989, %v935
      %v1042 = vmul.f32 %v989, %v936
      %v1043 = vmul.f32 %v989, %v937
      %v1044 = vmul.f32 %v989, %v938
      %v1045 = vmul.f32 %v989, %v939
      %v1046 = vmul.f32 %v989, %v940
      %v1047 = vmul.f32 %v989, %v941
      %v1048 = vmul.f32 %v989, %v942
      %v1049 = vmul.f32 %v989, %v943
      %v1050 = vmul.f32 %v989, %v944
      %v1051 = vmul.f32 %v989, %v945
      %v1052 = vmul.f32 %v989, %v946
      %v1053 = vmul.f32 %v989, %v947
      %v1054 = vmul.f32 %v989, %v948
      %v1055 = vmul.f32 %v989, %v949
      %v1056 = vmul.f32 %v989, %v950
      %v1057 = vmul.f32 %v989, %v951
      %v1058 = vmul.f32 %v989, %v952
      %v1059 = vmul.f32 %v989, %v953
      %v1060 = vmul.f32 %v989, %v954
      %v1061 = vmul.f32 %v989, %v955
      %v1062 = vmul.f32 %v989, %v956
      %v1063 = vmul.f32 %v989, %v957
      %v1064 = vmul.f32 %v989, %v958
      %v1065 = vmul.f32 %v989, %v959
      %v1066 = vmul.f32 %v989, %v960
      %v1067 = vmul.f32 %v989, %v961
      %v1068 = vmul.f32 %v989, %v962
      %v1069 = vmul.f32 %v989, %v963
      %v1070 = vmul.f32 %v989, %v964
      %v1071 = vmul.f32 %v989, %v965
      %v1072 = vmul.f32 %v989, %v966
      %v1073 = vmul.f32 %v989, %v967
      %v1074 = vmul.f32 %v989, %v968
      %v1075 = vmul.f32 %v989, %v969
      %v1076 = vmul.f32 %v989, %v970
      %v1077 = vmul.f32 %v989, %v971
      %v1078 = vmul.f32 %v989, %v972
      %v1079 = vmul.f32 %v989, %v973
      %v1080 = vmul.f32 %v989, %v974
      %v1081 = vmul.f32 %v989, %v975
      %v1082 = vmul.f32 %v989, %v976
      %v1083 = vmul.f32 %v989, %v977
      %v1084 = vmul.f32 %v989, %v978
      %v1085 = vmul.f32 %v989, %v979
      %v1086 = vmul.f32 %v989, %v980
      %v1087 = vmul.f32 %v989, %v981
      %v1088 = vmul.f32 %v989, %v982
      %v1089 = vmul.f32 %v989, %v983
      %v1090 = vmul.f32 %v989, %v984
      %v1091 = vmul.f32 %v989, %v985
      %v1092 = vmul.f32 %v989, %v986
      %v1093 = vmul.f32 %v989, %v987
      %v1094 = vmul.f32 %v989, %v988
      %v1095 = vadd.f32 %v777, %v990
      %v1096 = vadd.f32 %v778, %v991
      %v1097 = vadd.f32 %v779, %v992
      %v1098 = vadd.f32 %v780, %v993
      %v1099 = vadd.f32 %v781, %v994
      %v1100 = vadd.f32 %v782, %v995
      %v1101 = vadd.f32 %v783, %v996
      %v1102 = vadd.f32 %v784, %v997
      %v1103 = vadd.f32 %v785, %v998
      %v1104 = vadd.f32 %v786, %v999
      %v1105 = vadd.f32 %v787, %v1000
      %v1106 = vadd.f32 %v788, %v1001
      %v1107 = vadd.f32 %v789, %v1002
      %v1108 = vadd.f32 %v790, %v1003
      %v1109 = vadd.f32 %v791, %v1004
      %v1110 = vadd.f32 %v792, %v1005
      %v1111 = vadd.f32 %v793, %v1006
      %v1112 = vadd.f32 %v794, %v1007
      %v1113 = vadd.f32 %v795, %v1008
      %v1114 = vadd.f32 %v796, %v1009
      %v1115 = vadd.f32 %v797, %v1010
      %v1116 = vadd.f32 %v798, %v1011
      %v1117 = vadd.f32 %v799, %v1012
      %v1118 = vadd.f32 %v800, %v1013
      %v1119 = vadd.f32 %v801, %v1014
      %v1120 = vadd.f32 %v802, %v1015
      %v1121 = vadd.f32 %v803, %v1016
      %v1122 = vadd.f32 %v804, %v1017
      %v1123 = vadd.f32 %v805, %v1018
      %v1124 = vadd.f32 %v806, %v1019
      %v1125 = vadd.f32 %v807, %v1020
      %v1126 = vadd.f32 %v808, %v1021
      %v1127 = vadd.f32 %v809, %v1022
      %v1128 = vadd.f32 %v810, %v1023
      %v1129 = vadd.f32 %v811, %v1024
      %v1130 = vadd.f32 %v812, %v1025
      %v1131 = vadd.f32 %v813, %v1026
      %v1132 = vadd.f32 %v814, %v1027
      %v1133 = vadd.f32 %v815, %v1028
      %v1134 = vadd.f32 %v816, %v1029
      %v1135 = vadd.f32 %v817, %v1030
      %v1136 = vadd.f32 %v818, %v1031
      %v1137 = vadd.f32 %v819, %v1032
      %v1138 = vadd.f32 %v820, %v1033
      %v1139 = vadd.f32 %v821, %v1034
      %v1140 = vadd.f32 %v822, %v1035
      %v1141 = vadd.f32 %v823, %v1036
      %v1142 = vadd.f32 %v824, %v1037
      %v1143 = vadd.f32 %v825, %v1038
      %v1144 = vadd.f32 %v826, %v1039
      %v1145 = vadd.f32 %v827, %v1040
      %v1146 = vadd.f32 %v828, %v1041
      %v1147 = vadd.f32 %v829, %v1042
      %v1148 = vadd.f32 %v830, %v1043
      %v1149 = vadd.f32 %v831, %v1044
      %v1150 = vadd.f32 %v832, %v1045
      %v1151 = vadd.f32 %v833, %v1046
      %v1152 = vadd.f32 %v834, %v1047
      %v1153 = vadd.f32 %v835, %v1048
      %v1154 = vadd.f32 %v836, %v1049
      %v1155 = vadd.f32 %v837, %v1050
      %v1156 = vadd.f32 %v838, %v1051
      %v1157 = vadd.f32 %v839, %v1052
      %v1158 = vadd.f32 %v840, %v1053
      %v1159 = vadd.f32 %v841, %v1054
      %v1160 = vadd.f32 %v842, %v1055
      %v1161 = vadd.f32 %v843, %v1056
      %v1162 = vadd.f32 %v844, %v1057
      %v1163 = vadd.f32 %v845, %v1058
      %v1164 = vadd.f32 %v846, %v1059
      %v1165 = vadd.f32 %v847, %v1060
      %v1166 = vadd.f32 %v848, %v1061
      %v1167 = vadd.f32 %v849, %v1062
      %v1168 = vadd.f32 %v850, %v1063
      %v1169 = vadd.f32 %v851, %v1064
      %v1170 = vadd.f32 %v852, %v1065
      %v1171 = vadd.f32 %v853, %v1066
      %v1172 = vadd.f32 %v854, %v1067
      %v1173 = vadd.f32 %v855, %v1068
      %v1174 = vadd.f32 %v856, %v1069
      %v1175 = vadd.f32 %v857, %v1070
      %v1176 = vadd.f32 %v858, %v1071
      %v1177 = vadd.f32 %v859, %v1072
      %v1178 = vadd.f32 %v860, %v1073
      %v1179 = vadd.f32 %v861, %v1074
      %v1180 = vadd.f32 %v862, %v1075
      %v1181 = vadd.f32 %v863, %v1076
      %v1182 = vadd.f32 %v864, %v1077
      %v1183 = vadd.f32 %v865, %v1078
      %v1184 = vadd.f32 %v866, %v1079
      %v1185 = vadd.f32 %v867, %v1080
      %v1186 = vadd.f32 %v868, %v1081
      %v1187 = vadd.f32 %v869, %v1082
      %v1188 = vadd.f32 %v870, %v1083
      %v1189 = vadd.f32 %v871, %v1084
      %v1190 = vadd.f32 %v872, %v1085
      %v1191 = vadd.f32 %v873, %v1086
      %v1192 = vadd.f32 %v874, %v1087
      %v1193 = vadd.f32 %v875, %v1088
      %v1194 = vadd.f32 %v876, %v1089
      %v1195 = vadd.f32 %v877, %v1090
      %v1196 = vadd.f32 %v878, %v1091
      %v1197 = vadd.f32 %v879, %v1092
      %v1198 = vadd.f32 %v880, %v1093
      %v1199 = vadd.f32 %v881, %v1094
      %s1200 = sadd.s32 %s351, 3
      %s1201 = sld [smem:[#allocation7 + %s1200]]
      %v1202 = vld [vmem:[%s0 + $0x1e] sm:$0xff]
      %v1203 = vld [vmem:[%s0 + $0x26] sm:$0xff]
      %v1204 = vld [vmem:[%s0 + $0x2e] sm:$0xff]
      %v1205 = vld [vmem:[%s0 + $0x36] sm:$0xff]
      %v1206 = vld [vmem:[%s0 + $0x3e] sm:$0xff]
      %v1207 = vld [vmem:[%s0 + $0x46] sm:$0xff]
      %v1208 = vld [vmem:[%s0 + $0x4e] sm:$0xff]
      %v1209 = vld [vmem:[%s0 + $0x56] sm:$0xff]
      %v1210 = vld [vmem:[%s0 + $0x5e] sm:$0xff]
      %v1211 = vld [vmem:[%s0 + $0x66] sm:$0xff]
      %v1212 = vld [vmem:[%s0 + $0x6e] sm:$0xff]
      %v1213 = vld [vmem:[%s0 + $0x76] sm:$0xff]
      %v1214 = vld [vmem:[%s0 + $0x7e] sm:$0xff]
      %v1215 = vld [vmem:[%s0 + $0x86] sm:$0xff]
      %v1216 = vld [vmem:[%s0 + $0x8e] sm:$0xff]
      %v1217 = vld [vmem:[%s0 + $0x96] sm:$0xff]
      %v1218 = vld [vmem:[%s0 + $0x9e] sm:$0xff]
      %v1219 = vld [vmem:[%s0 + $0xa6] sm:$0xff]
      %v1220 = vld [vmem:[%s0 + $0xae] sm:$0xff]
      %v1221 = vld [vmem:[%s0 + $0xb6] sm:$0xff]
      %v1222 = vld [vmem:[%s0 + $0xbe] sm:$0xff]
      %v1223 = vld [vmem:[%s0 + $0xc6] sm:$0xff]
      %v1224 = vld [vmem:[%s0 + $0xce] sm:$0xff]
      %v1225 = vld [vmem:[%s0 + $0xd6] sm:$0xff]
      %v1226 = vld [vmem:[%s0 + $0xde] sm:$0xff]
      %v1227 = vld [vmem:[%s0 + $0xe6] sm:$0xff]
      %v1228 = vld [vmem:[%s0 + $0xee] sm:$0xff]
      %v1229 = vld [vmem:[%s0 + $0xf6] sm:$0xff]
      %v1230 = vld [vmem:[%s0 + $0xfe] sm:$0xff]
      %v1231 = vld [vmem:[%s0 + $0x106] sm:$0xff]
      %v1232 = vld [vmem:[%s0 + $0x10e] sm:$0xff]
      %v1233 = vld [vmem:[%s0 + $0x116] sm:$0xff]
      %v1234 = vld [vmem:[%s0 + $0x11e] sm:$0xff]
      %v1235 = vld [vmem:[%s0 + $0x126] sm:$0xff]
      %v1236 = vld [vmem:[%s0 + $0x12e] sm:$0xff]
      %v1237 = vld [vmem:[%s0 + $0x136] sm:$0xff]
      %v1238 = vld [vmem:[%s0 + $0x13e] sm:$0xff]
      %v1239 = vld [vmem:[%s0 + $0x146] sm:$0xff]
      %v1240 = vld [vmem:[%s0 + $0x14e] sm:$0xff]
      %v1241 = vld [vmem:[%s0 + $0x156] sm:$0xff]
      %v1242 = vld [vmem:[%s0 + $0x15e] sm:$0xff]
      %v1243 = vld [vmem:[%s0 + $0x166] sm:$0xff]
      %v1244 = vld [vmem:[%s0 + $0x16e] sm:$0xff]
      %v1245 = vld [vmem:[%s0 + $0x176] sm:$0xff]
      %v1246 = vld [vmem:[%s0 + $0x17e] sm:$0xff]
      %v1247 = vld [vmem:[%s0 + $0x186] sm:$0xff]
      %v1248 = vld [vmem:[%s0 + $0x18e] sm:$0xff]
      %v1249 = vld [vmem:[%s0 + $0x196] sm:$0xff]
      %v1250 = vld [vmem:[%s0 + $0x19e] sm:$0xff]
      %v1251 = vld [vmem:[%s0 + $0x1a6] sm:$0xff]
      %v1252 = vld [vmem:[%s0 + $0x1ae] sm:$0xff]
      %v1253 = vld [vmem:[%s0 + $0x1b6] sm:$0xff]
      %v1254 = vld [vmem:[%s0 + $0x1be] sm:$0xff]
      %v1255 = vld [vmem:[%s0 + $0x1c6] sm:$0xff]
      %v1256 = vld [vmem:[%s0 + $0x1ce] sm:$0xff]
      %v1257 = vld [vmem:[%s0 + $0x1d6] sm:$0xff]
      %v1258 = vld [vmem:[%s0 + $0x1de] sm:$0xff]
      %v1259 = vld [vmem:[%s0 + $0x1e6] sm:$0xff]
      %v1260 = vld [vmem:[%s0 + $0x1ee] sm:$0xff]
      %v1261 = vld [vmem:[%s0 + $0x1f6] sm:$0xff]
      %v1262 = vld [vmem:[%s0 + $0x1fe] sm:$0xff]
      %v1263 = vld [vmem:[%s0 + $0x206] sm:$0xff]
      %v1264 = vld [vmem:[%s0 + $0x20e] sm:$0xff]
      %v1265 = vld [vmem:[%s0 + $0x216] sm:$0xff]
      %v1266 = vld [vmem:[%s0 + $0x21e] sm:$0xff]
      %v1267 = vld [vmem:[%s0 + $0x226] sm:$0xff]
      %v1268 = vld [vmem:[%s0 + $0x22e] sm:$0xff]
      %v1269 = vld [vmem:[%s0 + $0x236] sm:$0xff]
      %v1270 = vld [vmem:[%s0 + $0x23e] sm:$0xff]
      %v1271 = vld [vmem:[%s0 + $0x246] sm:$0xff]
      %v1272 = vld [vmem:[%s0 + $0x24e] sm:$0xff]
      %v1273 = vld [vmem:[%s0 + $0x256] sm:$0xff]
      %v1274 = vld [vmem:[%s0 + $0x25e] sm:$0xff]
      %v1275 = vld [vmem:[%s0 + $0x266] sm:$0xff]
      %v1276 = vld [vmem:[%s0 + $0x26e] sm:$0xff]
      %v1277 = vld [vmem:[%s0 + $0x276] sm:$0xff]
      %v1278 = vld [vmem:[%s0 + $0x27e] sm:$0xff]
      %v1279 = vld [vmem:[%s0 + $0x286] sm:$0xff]
      %v1280 = vld [vmem:[%s0 + $0x28e] sm:$0xff]
      %v1281 = vld [vmem:[%s0 + $0x296] sm:$0xff]
      %v1282 = vld [vmem:[%s0 + $0x29e] sm:$0xff]
      %v1283 = vld [vmem:[%s0 + $0x2a6] sm:$0xff]
      %v1284 = vld [vmem:[%s0 + $0x2ae] sm:$0xff]
      %v1285 = vld [vmem:[%s0 + $0x2b6] sm:$0xff]
      %v1286 = vld [vmem:[%s0 + $0x2be] sm:$0xff]
      %v1287 = vld [vmem:[%s0 + $0x2c6] sm:$0xff]
      %v1288 = vld [vmem:[%s0 + $0x2ce] sm:$0xff]
      %v1289 = vld [vmem:[%s0 + $0x2d6] sm:$0xff]
      %v1290 = vld [vmem:[%s0 + $0x2de] sm:$0xff]
      %v1291 = vld [vmem:[%s0 + $0x2e6] sm:$0xff]
      %v1292 = vld [vmem:[%s0 + $0x2ee] sm:$0xff]
      %v1293 = vld [vmem:[%s0 + $0x2f6] sm:$0xff]
      %v1294 = vld [vmem:[%s0 + $0x2fe] sm:$0xff]
      %v1295 = vld [vmem:[%s0 + $0x306] sm:$0xff]
      %v1296 = vld [vmem:[%s0 + $0x30e] sm:$0xff]
      %v1297 = vld [vmem:[%s0 + $0x316] sm:$0xff]
      %v1298 = vld [vmem:[%s0 + $0x31e] sm:$0xff]
      %v1299 = vld [vmem:[%s0 + $0x326] sm:$0xff]
      %v1300 = vld [vmem:[%s0 + $0x32e] sm:$0xff]
      %v1301 = vld [vmem:[%s0 + $0x336] sm:$0xff]
      %v1302 = vld [vmem:[%s0 + $0x33e] sm:$0xff]
      %v1303 = vld [vmem:[%s0 + $0x346] sm:$0xff]
      %v1304 = vld [vmem:[%s0 + $0x34e] sm:$0xff]
      %v1305 = vld [vmem:[%s0 + $0x356] sm:$0xff]
      %v1306 = vld [vmem:[%s0 + $0x35e] sm:$0x3f]
      %v1307 = vstv %s1201
      %v1308 = vmul.f32 %v1307, %v1202
      %v1309 = vmul.f32 %v1307, %v1203
      %v1310 = vmul.f32 %v1307, %v1204
      %v1311 = vmul.f32 %v1307, %v1205
      %v1312 = vmul.f32 %v1307, %v1206
      %v1313 = vmul.f32 %v1307, %v1207
      %v1314 = vmul.f32 %v1307, %v1208
      %v1315 = vmul.f32 %v1307, %v1209
      %v1316 = vmul.f32 %v1307, %v1210
      %v1317 = vmul.f32 %v1307, %v1211
      %v1318 = vmul.f32 %v1307, %v1212
      %v1319 = vmul.f32 %v1307, %v1213
      %v1320 = vmul.f32 %v1307, %v1214
      %v1321 = vmul.f32 %v1307, %v1215
      %v1322 = vmul.f32 %v1307, %v1216
      %v1323 = vmul.f32 %v1307, %v1217
      %v1324 = vmul.f32 %v1307, %v1218
      %v1325 = vmul.f32 %v1307, %v1219
      %v1326 = vmul.f32 %v1307, %v1220
      %v1327 = vmul.f32 %v1307, %v1221
      %v1328 = vmul.f32 %v1307, %v1222
      %v1329 = vmul.f32 %v1307, %v1223
      %v1330 = vmul.f32 %v1307, %v1224
      %v1331 = vmul.f32 %v1307, %v1225
      %v1332 = vmul.f32 %v1307, %v1226
      %v1333 = vmul.f32 %v1307, %v1227
      %v1334 = vmul.f32 %v1307, %v1228
      %v1335 = vmul.f32 %v1307, %v1229
      %v1336 = vmul.f32 %v1307, %v1230
      %v1337 = vmul.f32 %v1307, %v1231
      %v1338 = vmul.f32 %v1307, %v1232
      %v1339 = vmul.f32 %v1307, %v1233
      %v1340 = vmul.f32 %v1307, %v1234
      %v1341 = vmul.f32 %v1307, %v1235
      %v1342 = vmul.f32 %v1307, %v1236
      %v1343 = vmul.f32 %v1307, %v1237
      %v1344 = vmul.f32 %v1307, %v1238
      %v1345 = vmul.f32 %v1307, %v1239
      %v1346 = vmul.f32 %v1307, %v1240
      %v1347 = vmul.f32 %v1307, %v1241
      %v1348 = vmul.f32 %v1307, %v1242
      %v1349 = vmul.f32 %v1307, %v1243
      %v1350 = vmul.f32 %v1307, %v1244
      %v1351 = vmul.f32 %v1307, %v1245
      %v1352 = vmul.f32 %v1307, %v1246
      %v1353 = vmul.f32 %v1307, %v1247
      %v1354 = vmul.f32 %v1307, %v1248
      %v1355 = vmul.f32 %v1307, %v1249
      %v1356 = vmul.f32 %v1307, %v1250
      %v1357 = vmul.f32 %v1307, %v1251
      %v1358 = vmul.f32 %v1307, %v1252
      %v1359 = vmul.f32 %v1307, %v1253
      %v1360 = vmul.f32 %v1307, %v1254
      %v1361 = vmul.f32 %v1307, %v1255
      %v1362 = vmul.f32 %v1307, %v1256
      %v1363 = vmul.f32 %v1307, %v1257
      %v1364 = vmul.f32 %v1307, %v1258
      %v1365 = vmul.f32 %v1307, %v1259
      %v1366 = vmul.f32 %v1307, %v1260
      %v1367 = vmul.f32 %v1307, %v1261
      %v1368 = vmul.f32 %v1307, %v1262
      %v1369 = vmul.f32 %v1307, %v1263
      %v1370 = vmul.f32 %v1307, %v1264
      %v1371 = vmul.f32 %v1307, %v1265
      %v1372 = vmul.f32 %v1307, %v1266
      %v1373 = vmul.f32 %v1307, %v1267
      %v1374 = vmul.f32 %v1307, %v1268
      %v1375 = vmul.f32 %v1307, %v1269
      %v1376 = vmul.f32 %v1307, %v1270
      %v1377 = vmul.f32 %v1307, %v1271
      %v1378 = vmul.f32 %v1307, %v1272
      %v1379 = vmul.f32 %v1307, %v1273
      %v1380 = vmul.f32 %v1307, %v1274
      %v1381 = vmul.f32 %v1307, %v1275
      %v1382 = vmul.f32 %v1307, %v1276
      %v1383 = vmul.f32 %v1307, %v1277
      %v1384 = vmul.f32 %v1307, %v1278
      %v1385 = vmul.f32 %v1307, %v1279
      %v1386 = vmul.f32 %v1307, %v1280
      %v1387 = vmul.f32 %v1307, %v1281
      %v1388 = vmul.f32 %v1307, %v1282
      %v1389 = vmul.f32 %v1307, %v1283
      %v1390 = vmul.f32 %v1307, %v1284
      %v1391 = vmul.f32 %v1307, %v1285
      %v1392 = vmul.f32 %v1307, %v1286
      %v1393 = vmul.f32 %v1307, %v1287
      %v1394 = vmul.f32 %v1307, %v1288
      %v1395 = vmul.f32 %v1307, %v1289
      %v1396 = vmul.f32 %v1307, %v1290
      %v1397 = vmul.f32 %v1307, %v1291
      %v1398 = vmul.f32 %v1307, %v1292
      %v1399 = vmul.f32 %v1307, %v1293
      %v1400 = vmul.f32 %v1307, %v1294
      %v1401 = vmul.f32 %v1307, %v1295
      %v1402 = vmul.f32 %v1307, %v1296
      %v1403 = vmul.f32 %v1307, %v1297
      %v1404 = vmul.f32 %v1307, %v1298
      %v1405 = vmul.f32 %v1307, %v1299
      %v1406 = vmul.f32 %v1307, %v1300
      %v1407 = vmul.f32 %v1307, %v1301
      %v1408 = vmul.f32 %v1307, %v1302
      %v1409 = vmul.f32 %v1307, %v1303
      %v1410 = vmul.f32 %v1307, %v1304
      %v1411 = vmul.f32 %v1307, %v1305
      %v1412 = vmul.f32 %v1307, %v1306
      %v1413 = vadd.f32 %v1095, %v1308
      %v1414 = vadd.f32 %v1096, %v1309
      %v1415 = vadd.f32 %v1097, %v1310
      %v1416 = vadd.f32 %v1098, %v1311
      %v1417 = vadd.f32 %v1099, %v1312
      %v1418 = vadd.f32 %v1100, %v1313
      %v1419 = vadd.f32 %v1101, %v1314
      %v1420 = vadd.f32 %v1102, %v1315
      %v1421 = vadd.f32 %v1103, %v1316
      %v1422 = vadd.f32 %v1104, %v1317
      %v1423 = vadd.f32 %v1105, %v1318
      %v1424 = vadd.f32 %v1106, %v1319
      %v1425 = vadd.f32 %v1107, %v1320
      %v1426 = vadd.f32 %v1108, %v1321
      %v1427 = vadd.f32 %v1109, %v1322
      %v1428 = vadd.f32 %v1110, %v1323
      %v1429 = vadd.f32 %v1111, %v1324
      %v1430 = vadd.f32 %v1112, %v1325
      %v1431 = vadd.f32 %v1113, %v1326
      %v1432 = vadd.f32 %v1114, %v1327
      %v1433 = vadd.f32 %v1115, %v1328
      %v1434 = vadd.f32 %v1116, %v1329
      %v1435 = vadd.f32 %v1117, %v1330
      %v1436 = vadd.f32 %v1118, %v1331
      %v1437 = vadd.f32 %v1119, %v1332
      %v1438 = vadd.f32 %v1120, %v1333
      %v1439 = vadd.f32 %v1121, %v1334
      %v1440 = vadd.f32 %v1122, %v1335
      %v1441 = vadd.f32 %v1123, %v1336
      %v1442 = vadd.f32 %v1124, %v1337
      %v1443 = vadd.f32 %v1125, %v1338
      %v1444 = vadd.f32 %v1126, %v1339
      %v1445 = vadd.f32 %v1127, %v1340
      %v1446 = vadd.f32 %v1128, %v1341
      %v1447 = vadd.f32 %v1129, %v1342
      %v1448 = vadd.f32 %v1130, %v1343
      %v1449 = vadd.f32 %v1131, %v1344
      %v1450 = vadd.f32 %v1132, %v1345
      %v1451 = vadd.f32 %v1133, %v1346
      %v1452 = vadd.f32 %v1134, %v1347
      %v1453 = vadd.f32 %v1135, %v1348
      %v1454 = vadd.f32 %v1136, %v1349
      %v1455 = vadd.f32 %v1137, %v1350
      %v1456 = vadd.f32 %v1138, %v1351
      %v1457 = vadd.f32 %v1139, %v1352
      %v1458 = vadd.f32 %v1140, %v1353
      %v1459 = vadd.f32 %v1141, %v1354
      %v1460 = vadd.f32 %v1142, %v1355
      %v1461 = vadd.f32 %v1143, %v1356
      %v1462 = vadd.f32 %v1144, %v1357
      %v1463 = vadd.f32 %v1145, %v1358
      %v1464 = vadd.f32 %v1146, %v1359
      %v1465 = vadd.f32 %v1147, %v1360
      %v1466 = vadd.f32 %v1148, %v1361
      %v1467 = vadd.f32 %v1149, %v1362
      %v1468 = vadd.f32 %v1150, %v1363
      %v1469 = vadd.f32 %v1151, %v1364
      %v1470 = vadd.f32 %v1152, %v1365
      %v1471 = vadd.f32 %v1153, %v1366
      %v1472 = vadd.f32 %v1154, %v1367
      %v1473 = vadd.f32 %v1155, %v1368
      %v1474 = vadd.f32 %v1156, %v1369
      %v1475 = vadd.f32 %v1157, %v1370
      %v1476 = vadd.f32 %v1158, %v1371
      %v1477 = vadd.f32 %v1159, %v1372
      %v1478 = vadd.f32 %v1160, %v1373
      %v1479 = vadd.f32 %v1161, %v1374
      %v1480 = vadd.f32 %v1162, %v1375
      %v1481 = vadd.f32 %v1163, %v1376
      %v1482 = vadd.f32 %v1164, %v1377
      %v1483 = vadd.f32 %v1165, %v1378
      %v1484 = vadd.f32 %v1166, %v1379
      %v1485 = vadd.f32 %v1167, %v1380
      %v1486 = vadd.f32 %v1168, %v1381
      %v1487 = vadd.f32 %v1169, %v1382
      %v1488 = vadd.f32 %v1170, %v1383
      %v1489 = vadd.f32 %v1171, %v1384
      %v1490 = vadd.f32 %v1172, %v1385
      %v1491 = vadd.f32 %v1173, %v1386
      %v1492 = vadd.f32 %v1174, %v1387
      %v1493 = vadd.f32 %v1175, %v1388
      %v1494 = vadd.f32 %v1176, %v1389
      %v1495 = vadd.f32 %v1177, %v1390
      %v1496 = vadd.f32 %v1178, %v1391
      %v1497 = vadd.f32 %v1179, %v1392
      %v1498 = vadd.f32 %v1180, %v1393
      %v1499 = vadd.f32 %v1181, %v1394
      %v1500 = vadd.f32 %v1182, %v1395
      %v1501 = vadd.f32 %v1183, %v1396
      %v1502 = vadd.f32 %v1184, %v1397
      %v1503 = vadd.f32 %v1185, %v1398
      %v1504 = vadd.f32 %v1186, %v1399
      %v1505 = vadd.f32 %v1187, %v1400
      %v1506 = vadd.f32 %v1188, %v1401
      %v1507 = vadd.f32 %v1189, %v1402
      %v1508 = vadd.f32 %v1190, %v1403
      %v1509 = vadd.f32 %v1191, %v1404
      %v1510 = vadd.f32 %v1192, %v1405
      %v1511 = vadd.f32 %v1193, %v1406
      %v1512 = vadd.f32 %v1194, %v1407
      %v1513 = vadd.f32 %v1195, %v1408
      %v1514 = vadd.f32 %v1196, %v1409
      %v1515 = vadd.f32 %v1197, %v1410
      %v1516 = vadd.f32 %v1198, %v1411
      %v1517 = vadd.f32 %v1199, %v1412
      %s1518 = sadd.s32 %s351, 4
      %s1519 = sld [smem:[#allocation7 + %s1518]]
      %v1520 = vld [vmem:[%s0 + $0x1f] sm:$0xff]
      %v1521 = vld [vmem:[%s0 + $0x27] sm:$0xff]
      %v1522 = vld [vmem:[%s0 + $0x2f] sm:$0xff]
      %v1523 = vld [vmem:[%s0 + $0x37] sm:$0xff]
      %v1524 = vld [vmem:[%s0 + $0x3f] sm:$0xff]
      %v1525 = vld [vmem:[%s0 + $0x47] sm:$0xff]
      %v1526 = vld [vmem:[%s0 + $0x4f] sm:$0xff]
      %v1527 = vld [vmem:[%s0 + $0x57] sm:$0xff]
      %v1528 = vld [vmem:[%s0 + $0x5f] sm:$0xff]
      %v1529 = vld [vmem:[%s0 + $0x67] sm:$0xff]
      %v1530 = vld [vmem:[%s0 + $0x6f] sm:$0xff]
      %v1531 = vld [vmem:[%s0 + $0x77] sm:$0xff]
      %v1532 = vld [vmem:[%s0 + $0x7f] sm:$0xff]
      %v1533 = vld [vmem:[%s0 + $0x87] sm:$0xff]
      %v1534 = vld [vmem:[%s0 + $0x8f] sm:$0xff]
      %v1535 = vld [vmem:[%s0 + $0x97] sm:$0xff]
      %v1536 = vld [vmem:[%s0 + $0x9f] sm:$0xff]
      %v1537 = vld [vmem:[%s0 + $0xa7] sm:$0xff]
      %v1538 = vld [vmem:[%s0 + $0xaf] sm:$0xff]
      %v1539 = vld [vmem:[%s0 + $0xb7] sm:$0xff]
      %v1540 = vld [vmem:[%s0 + $0xbf] sm:$0xff]
      %v1541 = vld [vmem:[%s0 + $0xc7] sm:$0xff]
      %v1542 = vld [vmem:[%s0 + $0xcf] sm:$0xff]
      %v1543 = vld [vmem:[%s0 + $0xd7] sm:$0xff]
      %v1544 = vld [vmem:[%s0 + $0xdf] sm:$0xff]
      %v1545 = vld [vmem:[%s0 + $0xe7] sm:$0xff]
      %v1546 = vld [vmem:[%s0 + $0xef] sm:$0xff]
      %v1547 = vld [vmem:[%s0 + $0xf7] sm:$0xff]
      %v1548 = vld [vmem:[%s0 + $0xff] sm:$0xff]
      %v1549 = vld [vmem:[%s0 + $0x107] sm:$0xff]
      %v1550 = vld [vmem:[%s0 + $0x10f] sm:$0xff]
      %v1551 = vld [vmem:[%s0 + $0x117] sm:$0xff]
      %v1552 = vld [vmem:[%s0 + $0x11f] sm:$0xff]
      %v1553 = vld [vmem:[%s0 + $0x127] sm:$0xff]
      %v1554 = vld [vmem:[%s0 + $0x12f] sm:$0xff]
      %v1555 = vld [vmem:[%s0 + $0x137] sm:$0xff]
      %v1556 = vld [vmem:[%s0 + $0x13f] sm:$0xff]
      %v1557 = vld [vmem:[%s0 + $0x147] sm:$0xff]
      %v1558 = vld [vmem:[%s0 + $0x14f] sm:$0xff]
      %v1559 = vld [vmem:[%s0 + $0x157] sm:$0xff]
      %v1560 = vld [vmem:[%s0 + $0x15f] sm:$0xff]
      %v1561 = vld [vmem:[%s0 + $0x167] sm:$0xff]
      %v1562 = vld [vmem:[%s0 + $0x16f] sm:$0xff]
      %v1563 = vld [vmem:[%s0 + $0x177] sm:$0xff]
      %v1564 = vld [vmem:[%s0 + $0x17f] sm:$0xff]
      %v1565 = vld [vmem:[%s0 + $0x187] sm:$0xff]
      %v1566 = vld [vmem:[%s0 + $0x18f] sm:$0xff]
      %v1567 = vld [vmem:[%s0 + $0x197] sm:$0xff]
      %v1568 = vld [vmem:[%s0 + $0x19f] sm:$0xff]
      %v1569 = vld [vmem:[%s0 + $0x1a7] sm:$0xff]
      %v1570 = vld [vmem:[%s0 + $0x1af] sm:$0xff]
      %v1571 = vld [vmem:[%s0 + $0x1b7] sm:$0xff]
      %v1572 = vld [vmem:[%s0 + $0x1bf] sm:$0xff]
      %v1573 = vld [vmem:[%s0 + $0x1c7] sm:$0xff]
      %v1574 = vld [vmem:[%s0 + $0x1cf] sm:$0xff]
      %v1575 = vld [vmem:[%s0 + $0x1d7] sm:$0xff]
      %v1576 = vld [vmem:[%s0 + $0x1df] sm:$0xff]
      %v1577 = vld [vmem:[%s0 + $0x1e7] sm:$0xff]
      %v1578 = vld [vmem:[%s0 + $0x1ef] sm:$0xff]
      %v1579 = vld [vmem:[%s0 + $0x1f7] sm:$0xff]
      %v1580 = vld [vmem:[%s0 + $0x1ff] sm:$0xff]
      %v1581 = vld [vmem:[%s0 + $0x207] sm:$0xff]
      %v1582 = vld [vmem:[%s0 + $0x20f] sm:$0xff]
      %v1583 = vld [vmem:[%s0 + $0x217] sm:$0xff]
      %v1584 = vld [vmem:[%s0 + $0x21f] sm:$0xff]
      %v1585 = vld [vmem:[%s0 + $0x227] sm:$0xff]
      %v1586 = vld [vmem:[%s0 + $0x22f] sm:$0xff]
      %v1587 = vld [vmem:[%s0 + $0x237] sm:$0xff]
      %v1588 = vld [vmem:[%s0 + $0x23f] sm:$0xff]
      %v1589 = vld [vmem:[%s0 + $0x247] sm:$0xff]
      %v1590 = vld [vmem:[%s0 + $0x24f] sm:$0xff]
      %v1591 = vld [vmem:[%s0 + $0x257] sm:$0xff]
      %v1592 = vld [vmem:[%s0 + $0x25f] sm:$0xff]
      %v1593 = vld [vmem:[%s0 + $0x267] sm:$0xff]
      %v1594 = vld [vmem:[%s0 + $0x26f] sm:$0xff]
      %v1595 = vld [vmem:[%s0 + $0x277] sm:$0xff]
      %v1596 = vld [vmem:[%s0 + $0x27f] sm:$0xff]
      %v1597 = vld [vmem:[%s0 + $0x287] sm:$0xff]
      %v1598 = vld [vmem:[%s0 + $0x28f] sm:$0xff]
      %v1599 = vld [vmem:[%s0 + $0x297] sm:$0xff]
      %v1600 = vld [vmem:[%s0 + $0x29f] sm:$0xff]
      %v1601 = vld [vmem:[%s0 + $0x2a7] sm:$0xff]
      %v1602 = vld [vmem:[%s0 + $0x2af] sm:$0xff]
      %v1603 = vld [vmem:[%s0 + $0x2b7] sm:$0xff]
      %v1604 = vld [vmem:[%s0 + $0x2bf] sm:$0xff]
      %v1605 = vld [vmem:[%s0 + $0x2c7] sm:$0xff]
      %v1606 = vld [vmem:[%s0 + $0x2cf] sm:$0xff]
      %v1607 = vld [vmem:[%s0 + $0x2d7] sm:$0xff]
      %v1608 = vld [vmem:[%s0 + $0x2df] sm:$0xff]
      %v1609 = vld [vmem:[%s0 + $0x2e7] sm:$0xff]
      %v1610 = vld [vmem:[%s0 + $0x2ef] sm:$0xff]
      %v1611 = vld [vmem:[%s0 + $0x2f7] sm:$0xff]
      %v1612 = vld [vmem:[%s0 + $0x2ff] sm:$0xff]
      %v1613 = vld [vmem:[%s0 + $0x307] sm:$0xff]
      %v1614 = vld [vmem:[%s0 + $0x30f] sm:$0xff]
      %v1615 = vld [vmem:[%s0 + $0x317] sm:$0xff]
      %v1616 = vld [vmem:[%s0 + $0x31f] sm:$0xff]
      %v1617 = vld [vmem:[%s0 + $0x327] sm:$0xff]
      %v1618 = vld [vmem:[%s0 + $0x32f] sm:$0xff]
      %v1619 = vld [vmem:[%s0 + $0x337] sm:$0xff]
      %v1620 = vld [vmem:[%s0 + $0x33f] sm:$0xff]
      %v1621 = vld [vmem:[%s0 + $0x347] sm:$0xff]
      %v1622 = vld [vmem:[%s0 + $0x34f] sm:$0xff]
      %v1623 = vld [vmem:[%s0 + $0x357] sm:$0xff]
      %v1624 = vld [vmem:[%s0 + $0x35f] sm:$0x3f]
      %v1625 = vstv %s1519
      %v1626 = vmul.f32 %v1625, %v1520
      %v1627 = vmul.f32 %v1625, %v1521
      %v1628 = vmul.f32 %v1625, %v1522
      %v1629 = vmul.f32 %v1625, %v1523
      %v1630 = vmul.f32 %v1625, %v1524
      %v1631 = vmul.f32 %v1625, %v1525
      %v1632 = vmul.f32 %v1625, %v1526
      %v1633 = vmul.f32 %v1625, %v1527
      %v1634 = vmul.f32 %v1625, %v1528
      %v1635 = vmul.f32 %v1625, %v1529
      %v1636 = vmul.f32 %v1625, %v1530
      %v1637 = vmul.f32 %v1625, %v1531
      %v1638 = vmul.f32 %v1625, %v1532
      %v1639 = vmul.f32 %v1625, %v1533
      %v1640 = vmul.f32 %v1625, %v1534
      %v1641 = vmul.f32 %v1625, %v1535
      %v1642 = vmul.f32 %v1625, %v1536
      %v1643 = vmul.f32 %v1625, %v1537
      %v1644 = vmul.f32 %v1625, %v1538
      %v1645 = vmul.f32 %v1625, %v1539
      %v1646 = vmul.f32 %v1625, %v1540
      %v1647 = vmul.f32 %v1625, %v1541
      %v1648 = vmul.f32 %v1625, %v1542
      %v1649 = vmul.f32 %v1625, %v1543
      %v1650 = vmul.f32 %v1625, %v1544
      %v1651 = vmul.f32 %v1625, %v1545
      %v1652 = vmul.f32 %v1625, %v1546
      %v1653 = vmul.f32 %v1625, %v1547
      %v1654 = vmul.f32 %v1625, %v1548
      %v1655 = vmul.f32 %v1625, %v1549
      %v1656 = vmul.f32 %v1625, %v1550
      %v1657 = vmul.f32 %v1625, %v1551
      %v1658 = vmul.f32 %v1625, %v1552
      %v1659 = vmul.f32 %v1625, %v1553
      %v1660 = vmul.f32 %v1625, %v1554
      %v1661 = vmul.f32 %v1625, %v1555
      %v1662 = vmul.f32 %v1625, %v1556
      %v1663 = vmul.f32 %v1625, %v1557
      %v1664 = vmul.f32 %v1625, %v1558
      %v1665 = vmul.f32 %v1625, %v1559
      %v1666 = vmul.f32 %v1625, %v1560
      %v1667 = vmul.f32 %v1625, %v1561
      %v1668 = vmul.f32 %v1625, %v1562
      %v1669 = vmul.f32 %v1625, %v1563
      %v1670 = vmul.f32 %v1625, %v1564
      %v1671 = vmul.f32 %v1625, %v1565
      %v1672 = vmul.f32 %v1625, %v1566
      %v1673 = vmul.f32 %v1625, %v1567
      %v1674 = vmul.f32 %v1625, %v1568
      %v1675 = vmul.f32 %v1625, %v1569
      %v1676 = vmul.f32 %v1625, %v1570
      %v1677 = vmul.f32 %v1625, %v1571
      %v1678 = vmul.f32 %v1625, %v1572
      %v1679 = vmul.f32 %v1625, %v1573
      %v1680 = vmul.f32 %v1625, %v1574
      %v1681 = vmul.f32 %v1625, %v1575
      %v1682 = vmul.f32 %v1625, %v1576
      %v1683 = vmul.f32 %v1625, %v1577
      %v1684 = vmul.f32 %v1625, %v1578
      %v1685 = vmul.f32 %v1625, %v1579
      %v1686 = vmul.f32 %v1625, %v1580
      %v1687 = vmul.f32 %v1625, %v1581
      %v1688 = vmul.f32 %v1625, %v1582
      %v1689 = vmul.f32 %v1625, %v1583
      %v1690 = vmul.f32 %v1625, %v1584
      %v1691 = vmul.f32 %v1625, %v1585
      %v1692 = vmul.f32 %v1625, %v1586
      %v1693 = vmul.f32 %v1625, %v1587
      %v1694 = vmul.f32 %v1625, %v1588
      %v1695 = vmul.f32 %v1625, %v1589
      %v1696 = vmul.f32 %v1625, %v1590
      %v1697 = vmul.f32 %v1625, %v1591
      %v1698 = vmul.f32 %v1625, %v1592
      %v1699 = vmul.f32 %v1625, %v1593
      %v1700 = vmul.f32 %v1625, %v1594
      %v1701 = vmul.f32 %v1625, %v1595
      %v1702 = vmul.f32 %v1625, %v1596
      %v1703 = vmul.f32 %v1625, %v1597
      %v1704 = vmul.f32 %v1625, %v1598
      %v1705 = vmul.f32 %v1625, %v1599
      %v1706 = vmul.f32 %v1625, %v1600
      %v1707 = vmul.f32 %v1625, %v1601
      %v1708 = vmul.f32 %v1625, %v1602
      %v1709 = vmul.f32 %v1625, %v1603
      %v1710 = vmul.f32 %v1625, %v1604
      %v1711 = vmul.f32 %v1625, %v1605
      %v1712 = vmul.f32 %v1625, %v1606
      %v1713 = vmul.f32 %v1625, %v1607
      %v1714 = vmul.f32 %v1625, %v1608
      %v1715 = vmul.f32 %v1625, %v1609
      %v1716 = vmul.f32 %v1625, %v1610
      %v1717 = vmul.f32 %v1625, %v1611
      %v1718 = vmul.f32 %v1625, %v1612
      %v1719 = vmul.f32 %v1625, %v1613
      %v1720 = vmul.f32 %v1625, %v1614
      %v1721 = vmul.f32 %v1625, %v1615
      %v1722 = vmul.f32 %v1625, %v1616
      %v1723 = vmul.f32 %v1625, %v1617
      %v1724 = vmul.f32 %v1625, %v1618
      %v1725 = vmul.f32 %v1625, %v1619
      %v1726 = vmul.f32 %v1625, %v1620
      %v1727 = vmul.f32 %v1625, %v1621
      %v1728 = vmul.f32 %v1625, %v1622
      %v1729 = vmul.f32 %v1625, %v1623
      %v1730 = vmul.f32 %v1625, %v1624
      %v1731 = vadd.f32 %v1413, %v1626
      %v1732 = vadd.f32 %v1414, %v1627
      %v1733 = vadd.f32 %v1415, %v1628
      %v1734 = vadd.f32 %v1416, %v1629
      %v1735 = vadd.f32 %v1417, %v1630
      %v1736 = vadd.f32 %v1418, %v1631
      %v1737 = vadd.f32 %v1419, %v1632
      %v1738 = vadd.f32 %v1420, %v1633
      %v1739 = vadd.f32 %v1421, %v1634
      %v1740 = vadd.f32 %v1422, %v1635
      %v1741 = vadd.f32 %v1423, %v1636
      %v1742 = vadd.f32 %v1424, %v1637
      %v1743 = vadd.f32 %v1425, %v1638
      %v1744 = vadd.f32 %v1426, %v1639
      %v1745 = vadd.f32 %v1427, %v1640
      %v1746 = vadd.f32 %v1428, %v1641
      %v1747 = vadd.f32 %v1429, %v1642
      %v1748 = vadd.f32 %v1430, %v1643
      %v1749 = vadd.f32 %v1431, %v1644
      %v1750 = vadd.f32 %v1432, %v1645
      %v1751 = vadd.f32 %v1433, %v1646
      %v1752 = vadd.f32 %v1434, %v1647
      %v1753 = vadd.f32 %v1435, %v1648
      %v1754 = vadd.f32 %v1436, %v1649
      %v1755 = vadd.f32 %v1437, %v1650
      %v1756 = vadd.f32 %v1438, %v1651
      %v1757 = vadd.f32 %v1439, %v1652
      %v1758 = vadd.f32 %v1440, %v1653
      %v1759 = vadd.f32 %v1441, %v1654
      %v1760 = vadd.f32 %v1442, %v1655
      %v1761 = vadd.f32 %v1443, %v1656
      %v1762 = vadd.f32 %v1444, %v1657
      %v1763 = vadd.f32 %v1445, %v1658
      %v1764 = vadd.f32 %v1446, %v1659
      %v1765 = vadd.f32 %v1447, %v1660
      %v1766 = vadd.f32 %v1448, %v1661
      %v1767 = vadd.f32 %v1449, %v1662
      %v1768 = vadd.f32 %v1450, %v1663
      %v1769 = vadd.f32 %v1451, %v1664
      %v1770 = vadd.f32 %v1452, %v1665
      %v1771 = vadd.f32 %v1453, %v1666
      %v1772 = vadd.f32 %v1454, %v1667
      %v1773 = vadd.f32 %v1455, %v1668
      %v1774 = vadd.f32 %v1456, %v1669
      %v1775 = vadd.f32 %v1457, %v1670
      %v1776 = vadd.f32 %v1458, %v1671
      %v1777 = vadd.f32 %v1459, %v1672
      %v1778 = vadd.f32 %v1460, %v1673
      %v1779 = vadd.f32 %v1461, %v1674
      %v1780 = vadd.f32 %v1462, %v1675
      %v1781 = vadd.f32 %v1463, %v1676
      %v1782 = vadd.f32 %v1464, %v1677
      %v1783 = vadd.f32 %v1465, %v1678
      %v1784 = vadd.f32 %v1466, %v1679
      %v1785 = vadd.f32 %v1467, %v1680
      %v1786 = vadd.f32 %v1468, %v1681
      %v1787 = vadd.f32 %v1469, %v1682
      %v1788 = vadd.f32 %v1470, %v1683
      %v1789 = vadd.f32 %v1471, %v1684
      %v1790 = vadd.f32 %v1472, %v1685
      %v1791 = vadd.f32 %v1473, %v1686
      %v1792 = vadd.f32 %v1474, %v1687
      %v1793 = vadd.f32 %v1475, %v1688
      %v1794 = vadd.f32 %v1476, %v1689
      %v1795 = vadd.f32 %v1477, %v1690
      %v1796 = vadd.f32 %v1478, %v1691
      %v1797 = vadd.f32 %v1479, %v1692
      %v1798 = vadd.f32 %v1480, %v1693
      %v1799 = vadd.f32 %v1481, %v1694
      %v1800 = vadd.f32 %v1482, %v1695
      %v1801 = vadd.f32 %v1483, %v1696
      %v1802 = vadd.f32 %v1484, %v1697
      %v1803 = vadd.f32 %v1485, %v1698
      %v1804 = vadd.f32 %v1486, %v1699
      %v1805 = vadd.f32 %v1487, %v1700
      %v1806 = vadd.f32 %v1488, %v1701
      %v1807 = vadd.f32 %v1489, %v1702
      %v1808 = vadd.f32 %v1490, %v1703
      %v1809 = vadd.f32 %v1491, %v1704
      %v1810 = vadd.f32 %v1492, %v1705
      %v1811 = vadd.f32 %v1493, %v1706
      %v1812 = vadd.f32 %v1494, %v1707
      %v1813 = vadd.f32 %v1495, %v1708
      %v1814 = vadd.f32 %v1496, %v1709
      %v1815 = vadd.f32 %v1497, %v1710
      %v1816 = vadd.f32 %v1498, %v1711
      %v1817 = vadd.f32 %v1499, %v1712
      %v1818 = vadd.f32 %v1500, %v1713
      %v1819 = vadd.f32 %v1501, %v1714
      %v1820 = vadd.f32 %v1502, %v1715
      %v1821 = vadd.f32 %v1503, %v1716
      %v1822 = vadd.f32 %v1504, %v1717
      %v1823 = vadd.f32 %v1505, %v1718
      %v1824 = vadd.f32 %v1506, %v1719
      %v1825 = vadd.f32 %v1507, %v1720
      %v1826 = vadd.f32 %v1508, %v1721
      %v1827 = vadd.f32 %v1509, %v1722
      %v1828 = vadd.f32 %v1510, %v1723
      %v1829 = vadd.f32 %v1511, %v1724
      %v1830 = vadd.f32 %v1512, %v1725
      %v1831 = vadd.f32 %v1513, %v1726
      %v1832 = vadd.f32 %v1514, %v1727
      %v1833 = vadd.f32 %v1515, %v1728
      %v1834 = vadd.f32 %v1516, %v1729
      %v1835 = vadd.f32 %v1517, %v1730
      %s1836 = sadd.s32 %s351, 5
      %s1837 = sld [smem:[#allocation7 + %s1836]]
      %v1838 = vld [vmem:[%s0 + $0x20] sm:$0xff]
      %v1839 = vld [vmem:[%s0 + $0x28] sm:$0xff]
      %v1840 = vld [vmem:[%s0 + $0x30] sm:$0xff]
      %v1841 = vld [vmem:[%s0 + $0x38] sm:$0xff]
      %v1842 = vld [vmem:[%s0 + $0x40] sm:$0xff]
      %v1843 = vld [vmem:[%s0 + $0x48] sm:$0xff]
      %v1844 = vld [vmem:[%s0 + $0x50] sm:$0xff]
      %v1845 = vld [vmem:[%s0 + $0x58] sm:$0xff]
      %v1846 = vld [vmem:[%s0 + $0x60] sm:$0xff]
      %v1847 = vld [vmem:[%s0 + $0x68] sm:$0xff]
      %v1848 = vld [vmem:[%s0 + $0x70] sm:$0xff]
      %v1849 = vld [vmem:[%s0 + $0x78] sm:$0xff]
      %v1850 = vld [vmem:[%s0 + $0x80] sm:$0xff]
      %v1851 = vld [vmem:[%s0 + $0x88] sm:$0xff]
      %v1852 = vld [vmem:[%s0 + $0x90] sm:$0xff]
      %v1853 = vld [vmem:[%s0 + $0x98] sm:$0xff]
      %v1854 = vld [vmem:[%s0 + $0xa0] sm:$0xff]
      %v1855 = vld [vmem:[%s0 + $0xa8] sm:$0xff]
      %v1856 = vld [vmem:[%s0 + $0xb0] sm:$0xff]
      %v1857 = vld [vmem:[%s0 + $0xb8] sm:$0xff]
      %v1858 = vld [vmem:[%s0 + $0xc0] sm:$0xff]
      %v1859 = vld [vmem:[%s0 + $0xc8] sm:$0xff]
      %v1860 = vld [vmem:[%s0 + $0xd0] sm:$0xff]
      %v1861 = vld [vmem:[%s0 + $0xd8] sm:$0xff]
      %v1862 = vld [vmem:[%s0 + $0xe0] sm:$0xff]
      %v1863 = vld [vmem:[%s0 + $0xe8] sm:$0xff]
      %v1864 = vld [vmem:[%s0 + $0xf0] sm:$0xff]
      %v1865 = vld [vmem:[%s0 + $0xf8] sm:$0xff]
      %v1866 = vld [vmem:[%s0 + $0x100] sm:$0xff]
      %v1867 = vld [vmem:[%s0 + $0x108] sm:$0xff]
      %v1868 = vld [vmem:[%s0 + $0x110] sm:$0xff]
      %v1869 = vld [vmem:[%s0 + $0x118] sm:$0xff]
      %v1870 = vld [vmem:[%s0 + $0x120] sm:$0xff]
      %v1871 = vld [vmem:[%s0 + $0x128] sm:$0xff]
      %v1872 = vld [vmem:[%s0 + $0x130] sm:$0xff]
      %v1873 = vld [vmem:[%s0 + $0x138] sm:$0xff]
      %v1874 = vld [vmem:[%s0 + $0x140] sm:$0xff]
      %v1875 = vld [vmem:[%s0 + $0x148] sm:$0xff]
      %v1876 = vld [vmem:[%s0 + $0x150] sm:$0xff]
      %v1877 = vld [vmem:[%s0 + $0x158] sm:$0xff]
      %v1878 = vld [vmem:[%s0 + $0x160] sm:$0xff]
      %v1879 = vld [vmem:[%s0 + $0x168] sm:$0xff]
      %v1880 = vld [vmem:[%s0 + $0x170] sm:$0xff]
      %v1881 = vld [vmem:[%s0 + $0x178] sm:$0xff]
      %v1882 = vld [vmem:[%s0 + $0x180] sm:$0xff]
      %v1883 = vld [vmem:[%s0 + $0x188] sm:$0xff]
      %v1884 = vld [vmem:[%s0 + $0x190] sm:$0xff]
      %v1885 = vld [vmem:[%s0 + $0x198] sm:$0xff]
      %v1886 = vld [vmem:[%s0 + $0x1a0] sm:$0xff]
      %v1887 = vld [vmem:[%s0 + $0x1a8] sm:$0xff]
      %v1888 = vld [vmem:[%s0 + $0x1b0] sm:$0xff]
      %v1889 = vld [vmem:[%s0 + $0x1b8] sm:$0xff]
      %v1890 = vld [vmem:[%s0 + $0x1c0] sm:$0xff]
      %v1891 = vld [vmem:[%s0 + $0x1c8] sm:$0xff]
      %v1892 = vld [vmem:[%s0 + $0x1d0] sm:$0xff]
      %v1893 = vld [vmem:[%s0 + $0x1d8] sm:$0xff]
      %v1894 = vld [vmem:[%s0 + $0x1e0] sm:$0xff]
      %v1895 = vld [vmem:[%s0 + $0x1e8] sm:$0xff]
      %v1896 = vld [vmem:[%s0 + $0x1f0] sm:$0xff]
      %v1897 = vld [vmem:[%s0 + $0x1f8] sm:$0xff]
      %v1898 = vld [vmem:[%s0 + $0x200] sm:$0xff]
      %v1899 = vld [vmem:[%s0 + $0x208] sm:$0xff]
      %v1900 = vld [vmem:[%s0 + $0x210] sm:$0xff]
      %v1901 = vld [vmem:[%s0 + $0x218] sm:$0xff]
      %v1902 = vld [vmem:[%s0 + $0x220] sm:$0xff]
      %v1903 = vld [vmem:[%s0 + $0x228] sm:$0xff]
      %v1904 = vld [vmem:[%s0 + $0x230] sm:$0xff]
      %v1905 = vld [vmem:[%s0 + $0x238] sm:$0xff]
      %v1906 = vld [vmem:[%s0 + $0x240] sm:$0xff]
      %v1907 = vld [vmem:[%s0 + $0x248] sm:$0xff]
      %v1908 = vld [vmem:[%s0 + $0x250] sm:$0xff]
      %v1909 = vld [vmem:[%s0 + $0x258] sm:$0xff]
      %v1910 = vld [vmem:[%s0 + $0x260] sm:$0xff]
      %v1911 = vld [vmem:[%s0 + $0x268] sm:$0xff]
      %v1912 = vld [vmem:[%s0 + $0x270] sm:$0xff]
      %v1913 = vld [vmem:[%s0 + $0x278] sm:$0xff]
      %v1914 = vld [vmem:[%s0 + $0x280] sm:$0xff]
      %v1915 = vld [vmem:[%s0 + $0x288] sm:$0xff]
      %v1916 = vld [vmem:[%s0 + $0x290] sm:$0xff]
      %v1917 = vld [vmem:[%s0 + $0x298] sm:$0xff]
      %v1918 = vld [vmem:[%s0 + $0x2a0] sm:$0xff]
      %v1919 = vld [vmem:[%s0 + $0x2a8] sm:$0xff]
      %v1920 = vld [vmem:[%s0 + $0x2b0] sm:$0xff]
      %v1921 = vld [vmem:[%s0 + $0x2b8] sm:$0xff]
      %v1922 = vld [vmem:[%s0 + $0x2c0] sm:$0xff]
      %v1923 = vld [vmem:[%s0 + $0x2c8] sm:$0xff]
      %v1924 = vld [vmem:[%s0 + $0x2d0] sm:$0xff]
      %v1925 = vld [vmem:[%s0 + $0x2d8] sm:$0xff]
      %v1926 = vld [vmem:[%s0 + $0x2e0] sm:$0xff]
      %v1927 = vld [vmem:[%s0 + $0x2e8] sm:$0xff]
      %v1928 = vld [vmem:[%s0 + $0x2f0] sm:$0xff]
      %v1929 = vld [vmem:[%s0 + $0x2f8] sm:$0xff]
      %v1930 = vld [vmem:[%s0 + $0x300] sm:$0xff]
      %v1931 = vld [vmem:[%s0 + $0x308] sm:$0xff]
      %v1932 = vld [vmem:[%s0 + $0x310] sm:$0xff]
      %v1933 = vld [vmem:[%s0 + $0x318] sm:$0xff]
      %v1934 = vld [vmem:[%s0 + $0x320] sm:$0xff]
      %v1935 = vld [vmem:[%s0 + $0x328] sm:$0xff]
      %v1936 = vld [vmem:[%s0 + $0x330] sm:$0xff]
      %v1937 = vld [vmem:[%s0 + $0x338] sm:$0xff]
      %v1938 = vld [vmem:[%s0 + $0x340] sm:$0xff]
      %v1939 = vld [vmem:[%s0 + $0x348] sm:$0xff]
      %v1940 = vld [vmem:[%s0 + $0x350] sm:$0xff]
      %v1941 = vld [vmem:[%s0 + $0x358] sm:$0xff]
      %v1942 = vld [vmem:[%s0 + $0x360] sm:$0x3f]
      %v1943 = vstv %s1837
      %v1944 = vmul.f32 %v1943, %v1838
      %v1945 = vmul.f32 %v1943, %v1839
      %v1946 = vmul.f32 %v1943, %v1840
      %v1947 = vmul.f32 %v1943, %v1841
      %v1948 = vmul.f32 %v1943, %v1842
      %v1949 = vmul.f32 %v1943, %v1843
      %v1950 = vmul.f32 %v1943, %v1844
      %v1951 = vmul.f32 %v1943, %v1845
      %v1952 = vmul.f32 %v1943, %v1846
      %v1953 = vmul.f32 %v1943, %v1847
      %v1954 = vmul.f32 %v1943, %v1848
      %v1955 = vmul.f32 %v1943, %v1849
      %v1956 = vmul.f32 %v1943, %v1850
      %v1957 = vmul.f32 %v1943, %v1851
      %v1958 = vmul.f32 %v1943, %v1852
      %v1959 = vmul.f32 %v1943, %v1853
      %v1960 = vmul.f32 %v1943, %v1854
      %v1961 = vmul.f32 %v1943, %v1855
      %v1962 = vmul.f32 %v1943, %v1856
      %v1963 = vmul.f32 %v1943, %v1857
      %v1964 = vmul.f32 %v1943, %v1858
      %v1965 = vmul.f32 %v1943, %v1859
      %v1966 = vmul.f32 %v1943, %v1860
      %v1967 = vmul.f32 %v1943, %v1861
      %v1968 = vmul.f32 %v1943, %v1862
      %v1969 = vmul.f32 %v1943, %v1863
      %v1970 = vmul.f32 %v1943, %v1864
      %v1971 = vmul.f32 %v1943, %v1865
      %v1972 = vmul.f32 %v1943, %v1866
      %v1973 = vmul.f32 %v1943, %v1867
      %v1974 = vmul.f32 %v1943, %v1868
      %v1975 = vmul.f32 %v1943, %v1869
      %v1976 = vmul.f32 %v1943, %v1870
      %v1977 = vmul.f32 %v1943, %v1871
      %v1978 = vmul.f32 %v1943, %v1872
      %v1979 = vmul.f32 %v1943, %v1873
      %v1980 = vmul.f32 %v1943, %v1874
      %v1981 = vmul.f32 %v1943, %v1875
      %v1982 = vmul.f32 %v1943, %v1876
      %v1983 = vmul.f32 %v1943, %v1877
      %v1984 = vmul.f32 %v1943, %v1878
      %v1985 = vmul.f32 %v1943, %v1879
      %v1986 = vmul.f32 %v1943, %v1880
      %v1987 = vmul.f32 %v1943, %v1881
      %v1988 = vmul.f32 %v1943, %v1882
      %v1989 = vmul.f32 %v1943, %v1883
      %v1990 = vmul.f32 %v1943, %v1884
      %v1991 = vmul.f32 %v1943, %v1885
      %v1992 = vmul.f32 %v1943, %v1886
      %v1993 = vmul.f32 %v1943, %v1887
      %v1994 = vmul.f32 %v1943, %v1888
      %v1995 = vmul.f32 %v1943, %v1889
      %v1996 = vmul.f32 %v1943, %v1890
      %v1997 = vmul.f32 %v1943, %v1891
      %v1998 = vmul.f32 %v1943, %v1892
      %v1999 = vmul.f32 %v1943, %v1893
      %v2000 = vmul.f32 %v1943, %v1894
      %v2001 = vmul.f32 %v1943, %v1895
      %v2002 = vmul.f32 %v1943, %v1896
      %v2003 = vmul.f32 %v1943, %v1897
      %v2004 = vmul.f32 %v1943, %v1898
      %v2005 = vmul.f32 %v1943, %v1899
      %v2006 = vmul.f32 %v1943, %v1900
      %v2007 = vmul.f32 %v1943, %v1901
      %v2008 = vmul.f32 %v1943, %v1902
      %v2009 = vmul.f32 %v1943, %v1903
      %v2010 = vmul.f32 %v1943, %v1904
      %v2011 = vmul.f32 %v1943, %v1905
      %v2012 = vmul.f32 %v1943, %v1906
      %v2013 = vmul.f32 %v1943, %v1907
      %v2014 = vmul.f32 %v1943, %v1908
      %v2015 = vmul.f32 %v1943, %v1909
      %v2016 = vmul.f32 %v1943, %v1910
      %v2017 = vmul.f32 %v1943, %v1911
      %v2018 = vmul.f32 %v1943, %v1912
      %v2019 = vmul.f32 %v1943, %v1913
      %v2020 = vmul.f32 %v1943, %v1914
      %v2021 = vmul.f32 %v1943, %v1915
      %v2022 = vmul.f32 %v1943, %v1916
      %v2023 = vmul.f32 %v1943, %v1917
      %v2024 = vmul.f32 %v1943, %v1918
      %v2025 = vmul.f32 %v1943, %v1919
      %v2026 = vmul.f32 %v1943, %v1920
      %v2027 = vmul.f32 %v1943, %v1921
      %v2028 = vmul.f32 %v1943, %v1922
      %v2029 = vmul.f32 %v1943, %v1923
      %v2030 = vmul.f32 %v1943, %v1924
      %v2031 = vmul.f32 %v1943, %v1925
      %v2032 = vmul.f32 %v1943, %v1926
      %v2033 = vmul.f32 %v1943, %v1927
      %v2034 = vmul.f32 %v1943, %v1928
      %v2035 = vmul.f32 %v1943, %v1929
      %v2036 = vmul.f32 %v1943, %v1930
      %v2037 = vmul.f32 %v1943, %v1931
      %v2038 = vmul.f32 %v1943, %v1932
      %v2039 = vmul.f32 %v1943, %v1933
      %v2040 = vmul.f32 %v1943, %v1934
      %v2041 = vmul.f32 %v1943, %v1935
      %v2042 = vmul.f32 %v1943, %v1936
      %v2043 = vmul.f32 %v1943, %v1937
      %v2044 = vmul.f32 %v1943, %v1938
      %v2045 = vmul.f32 %v1943, %v1939
      %v2046 = vmul.f32 %v1943, %v1940
      %v2047 = vmul.f32 %v1943, %v1941
      %v2048 = vmul.f32 %v1943, %v1942
      %v2049 = vadd.f32 %v1731, %v1944
      %v2050 = vadd.f32 %v1732, %v1945
      %v2051 = vadd.f32 %v1733, %v1946
      %v2052 = vadd.f32 %v1734, %v1947
      %v2053 = vadd.f32 %v1735, %v1948
      %v2054 = vadd.f32 %v1736, %v1949
      %v2055 = vadd.f32 %v1737, %v1950
      %v2056 = vadd.f32 %v1738, %v1951
      %v2057 = vadd.f32 %v1739, %v1952
      %v2058 = vadd.f32 %v1740, %v1953
      %v2059 = vadd.f32 %v1741, %v1954
      %v2060 = vadd.f32 %v1742, %v1955
      %v2061 = vadd.f32 %v1743, %v1956
      %v2062 = vadd.f32 %v1744, %v1957
      %v2063 = vadd.f32 %v1745, %v1958
      %v2064 = vadd.f32 %v1746, %v1959
      %v2065 = vadd.f32 %v1747, %v1960
      %v2066 = vadd.f32 %v1748, %v1961
      %v2067 = vadd.f32 %v1749, %v1962
      %v2068 = vadd.f32 %v1750, %v1963
      %v2069 = vadd.f32 %v1751, %v1964
      %v2070 = vadd.f32 %v1752, %v1965
      %v2071 = vadd.f32 %v1753, %v1966
      %v2072 = vadd.f32 %v1754, %v1967
      %v2073 = vadd.f32 %v1755, %v1968
      %v2074 = vadd.f32 %v1756, %v1969
      %v2075 = vadd.f32 %v1757, %v1970
      %v2076 = vadd.f32 %v1758, %v1971
      %v2077 = vadd.f32 %v1759, %v1972
      %v2078 = vadd.f32 %v1760, %v1973
      %v2079 = vadd.f32 %v1761, %v1974
      %v2080 = vadd.f32 %v1762, %v1975
      %v2081 = vadd.f32 %v1763, %v1976
      %v2082 = vadd.f32 %v1764, %v1977
      %v2083 = vadd.f32 %v1765, %v1978
      %v2084 = vadd.f32 %v1766, %v1979
      %v2085 = vadd.f32 %v1767, %v1980
      %v2086 = vadd.f32 %v1768, %v1981
      %v2087 = vadd.f32 %v1769, %v1982
      %v2088 = vadd.f32 %v1770, %v1983
      %v2089 = vadd.f32 %v1771, %v1984
      %v2090 = vadd.f32 %v1772, %v1985
      %v2091 = vadd.f32 %v1773, %v1986
      %v2092 = vadd.f32 %v1774, %v1987
      %v2093 = vadd.f32 %v1775, %v1988
      %v2094 = vadd.f32 %v1776, %v1989
      %v2095 = vadd.f32 %v1777, %v1990
      %v2096 = vadd.f32 %v1778, %v1991
      %v2097 = vadd.f32 %v1779, %v1992
      %v2098 = vadd.f32 %v1780, %v1993
      %v2099 = vadd.f32 %v1781, %v1994
      %v2100 = vadd.f32 %v1782, %v1995
      %v2101 = vadd.f32 %v1783, %v1996
      %v2102 = vadd.f32 %v1784, %v1997
      %v2103 = vadd.f32 %v1785, %v1998
      %v2104 = vadd.f32 %v1786, %v1999
      %v2105 = vadd.f32 %v1787, %v2000
      %v2106 = vadd.f32 %v1788, %v2001
      %v2107 = vadd.f32 %v1789, %v2002
      %v2108 = vadd.f32 %v1790, %v2003
      %v2109 = vadd.f32 %v1791, %v2004
      %v2110 = vadd.f32 %v1792, %v2005
      %v2111 = vadd.f32 %v1793, %v2006
      %v2112 = vadd.f32 %v1794, %v2007
      %v2113 = vadd.f32 %v1795, %v2008
      %v2114 = vadd.f32 %v1796, %v2009
      %v2115 = vadd.f32 %v1797, %v2010
      %v2116 = vadd.f32 %v1798, %v2011
      %v2117 = vadd.f32 %v1799, %v2012
      %v2118 = vadd.f32 %v1800, %v2013
      %v2119 = vadd.f32 %v1801, %v2014
      %v2120 = vadd.f32 %v1802, %v2015
      %v2121 = vadd.f32 %v1803, %v2016
      %v2122 = vadd.f32 %v1804, %v2017
      %v2123 = vadd.f32 %v1805, %v2018
      %v2124 = vadd.f32 %v1806, %v2019
      %v2125 = vadd.f32 %v1807, %v2020
      %v2126 = vadd.f32 %v1808, %v2021
      %v2127 = vadd.f32 %v1809, %v2022
      %v2128 = vadd.f32 %v1810, %v2023
      %v2129 = vadd.f32 %v1811, %v2024
      %v2130 = vadd.f32 %v1812, %v2025
      %v2131 = vadd.f32 %v1813, %v2026
      %v2132 = vadd.f32 %v1814, %v2027
      %v2133 = vadd.f32 %v1815, %v2028
      %v2134 = vadd.f32 %v1816, %v2029
      %v2135 = vadd.f32 %v1817, %v2030
      %v2136 = vadd.f32 %v1818, %v2031
      %v2137 = vadd.f32 %v1819, %v2032
      %v2138 = vadd.f32 %v1820, %v2033
      %v2139 = vadd.f32 %v1821, %v2034
      %v2140 = vadd.f32 %v1822, %v2035
      %v2141 = vadd.f32 %v1823, %v2036
      %v2142 = vadd.f32 %v1824, %v2037
      %v2143 = vadd.f32 %v1825, %v2038
      %v2144 = vadd.f32 %v1826, %v2039
      %v2145 = vadd.f32 %v1827, %v2040
      %v2146 = vadd.f32 %v1828, %v2041
      %v2147 = vadd.f32 %v1829, %v2042
      %v2148 = vadd.f32 %v1830, %v2043
      %v2149 = vadd.f32 %v1831, %v2044
      %v2150 = vadd.f32 %v1832, %v2045
      %v2151 = vadd.f32 %v1833, %v2046
      %v2152 = vadd.f32 %v1834, %v2047
      %v2153 = vadd.f32 %v1835, %v2048
      %s2154 = sadd.s32 %s351, 6
      %s2155 = sld [smem:[#allocation7 + %s2154]]
      %v2156 = vld [vmem:[%s0 + $0x3c] sm:$0xff]
      %v2157 = vld [vmem:[%s0 + $0x44] sm:$0xff]
      %v2158 = vld [vmem:[%s0 + $0x4c] sm:$0xff]
      %v2159 = vld [vmem:[%s0 + $0x54] sm:$0xff]
      %v2160 = vld [vmem:[%s0 + $0x5c] sm:$0xff]
      %v2161 = vld [vmem:[%s0 + $0x64] sm:$0xff]
      %v2162 = vld [vmem:[%s0 + $0x6c] sm:$0xff]
      %v2163 = vld [vmem:[%s0 + $0x74] sm:$0xff]
      %v2164 = vld [vmem:[%s0 + $0x7c] sm:$0xff]
      %v2165 = vld [vmem:[%s0 + $0x84] sm:$0xff]
      %v2166 = vld [vmem:[%s0 + $0x8c] sm:$0xff]
      %v2167 = vld [vmem:[%s0 + $0x94] sm:$0xff]
      %v2168 = vld [vmem:[%s0 + $0x9c] sm:$0xff]
      %v2169 = vld [vmem:[%s0 + $0xa4] sm:$0xff]
      %v2170 = vld [vmem:[%s0 + $0xac] sm:$0xff]
      %v2171 = vld [vmem:[%s0 + $0xb4] sm:$0xff]
      %v2172 = vld [vmem:[%s0 + $0xbc] sm:$0xff]
      %v2173 = vld [vmem:[%s0 + $0xc4] sm:$0xff]
      %v2174 = vld [vmem:[%s0 + $0xcc] sm:$0xff]
      %v2175 = vld [vmem:[%s0 + $0xd4] sm:$0xff]
      %v2176 = vld [vmem:[%s0 + $0xdc] sm:$0xff]
      %v2177 = vld [vmem:[%s0 + $0xe4] sm:$0xff]
      %v2178 = vld [vmem:[%s0 + $0xec] sm:$0xff]
      %v2179 = vld [vmem:[%s0 + $0xf4] sm:$0xff]
      %v2180 = vld [vmem:[%s0 + $0xfc] sm:$0xff]
      %v2181 = vld [vmem:[%s0 + $0x104] sm:$0xff]
      %v2182 = vld [vmem:[%s0 + $0x10c] sm:$0xff]
      %v2183 = vld [vmem:[%s0 + $0x114] sm:$0xff]
      %v2184 = vld [vmem:[%s0 + $0x11c] sm:$0xff]
      %v2185 = vld [vmem:[%s0 + $0x124] sm:$0xff]
      %v2186 = vld [vmem:[%s0 + $0x12c] sm:$0xff]
      %v2187 = vld [vmem:[%s0 + $0x134] sm:$0xff]
      %v2188 = vld [vmem:[%s0 + $0x13c] sm:$0xff]
      %v2189 = vld [vmem:[%s0 + $0x144] sm:$0xff]
      %v2190 = vld [vmem:[%s0 + $0x14c] sm:$0xff]
      %v2191 = vld [vmem:[%s0 + $0x154] sm:$0xff]
      %v2192 = vld [vmem:[%s0 + $0x15c] sm:$0xff]
      %v2193 = vld [vmem:[%s0 + $0x164] sm:$0xff]
      %v2194 = vld [vmem:[%s0 + $0x16c] sm:$0xff]
      %v2195 = vld [vmem:[%s0 + $0x174] sm:$0xff]
      %v2196 = vld [vmem:[%s0 + $0x17c] sm:$0xff]
      %v2197 = vld [vmem:[%s0 + $0x184] sm:$0xff]
      %v2198 = vld [vmem:[%s0 + $0x18c] sm:$0xff]
      %v2199 = vld [vmem:[%s0 + $0x194] sm:$0xff]
      %v2200 = vld [vmem:[%s0 + $0x19c] sm:$0xff]
      %v2201 = vld [vmem:[%s0 + $0x1a4] sm:$0xff]
      %v2202 = vld [vmem:[%s0 + $0x1ac] sm:$0xff]
      %v2203 = vld [vmem:[%s0 + $0x1b4] sm:$0xff]
      %v2204 = vld [vmem:[%s0 + $0x1bc] sm:$0xff]
      %v2205 = vld [vmem:[%s0 + $0x1c4] sm:$0xff]
      %v2206 = vld [vmem:[%s0 + $0x1cc] sm:$0xff]
      %v2207 = vld [vmem:[%s0 + $0x1d4] sm:$0xff]
      %v2208 = vld [vmem:[%s0 + $0x1dc] sm:$0xff]
      %v2209 = vld [vmem:[%s0 + $0x1e4] sm:$0xff]
      %v2210 = vld [vmem:[%s0 + $0x1ec] sm:$0xff]
      %v2211 = vld [vmem:[%s0 + $0x1f4] sm:$0xff]
      %v2212 = vld [vmem:[%s0 + $0x1fc] sm:$0xff]
      %v2213 = vld [vmem:[%s0 + $0x204] sm:$0xff]
      %v2214 = vld [vmem:[%s0 + $0x20c] sm:$0xff]
      %v2215 = vld [vmem:[%s0 + $0x214] sm:$0xff]
      %v2216 = vld [vmem:[%s0 + $0x21c] sm:$0xff]
      %v2217 = vld [vmem:[%s0 + $0x224] sm:$0xff]
      %v2218 = vld [vmem:[%s0 + $0x22c] sm:$0xff]
      %v2219 = vld [vmem:[%s0 + $0x234] sm:$0xff]
      %v2220 = vld [vmem:[%s0 + $0x23c] sm:$0xff]
      %v2221 = vld [vmem:[%s0 + $0x244] sm:$0xff]
      %v2222 = vld [vmem:[%s0 + $0x24c] sm:$0xff]
      %v2223 = vld [vmem:[%s0 + $0x254] sm:$0xff]
      %v2224 = vld [vmem:[%s0 + $0x25c] sm:$0xff]
      %v2225 = vld [vmem:[%s0 + $0x264] sm:$0xff]
      %v2226 = vld [vmem:[%s0 + $0x26c] sm:$0xff]
      %v2227 = vld [vmem:[%s0 + $0x274] sm:$0xff]
      %v2228 = vld [vmem:[%s0 + $0x27c] sm:$0xff]
      %v2229 = vld [vmem:[%s0 + $0x284] sm:$0xff]
      %v2230 = vld [vmem:[%s0 + $0x28c] sm:$0xff]
      %v2231 = vld [vmem:[%s0 + $0x294] sm:$0xff]
      %v2232 = vld [vmem:[%s0 + $0x29c] sm:$0xff]
      %v2233 = vld [vmem:[%s0 + $0x2a4] sm:$0xff]
      %v2234 = vld [vmem:[%s0 + $0x2ac] sm:$0xff]
      %v2235 = vld [vmem:[%s0 + $0x2b4] sm:$0xff]
      %v2236 = vld [vmem:[%s0 + $0x2bc] sm:$0xff]
      %v2237 = vld [vmem:[%s0 + $0x2c4] sm:$0xff]
      %v2238 = vld [vmem:[%s0 + $0x2cc] sm:$0xff]
      %v2239 = vld [vmem:[%s0 + $0x2d4] sm:$0xff]
      %v2240 = vld [vmem:[%s0 + $0x2dc] sm:$0xff]
      %v2241 = vld [vmem:[%s0 + $0x2e4] sm:$0xff]
      %v2242 = vld [vmem:[%s0 + $0x2ec] sm:$0xff]
      %v2243 = vld [vmem:[%s0 + $0x2f4] sm:$0xff]
      %v2244 = vld [vmem:[%s0 + $0x2fc] sm:$0xff]
      %v2245 = vld [vmem:[%s0 + $0x304] sm:$0xff]
      %v2246 = vld [vmem:[%s0 + $0x30c] sm:$0xff]
      %v2247 = vld [vmem:[%s0 + $0x314] sm:$0xff]
      %v2248 = vld [vmem:[%s0 + $0x31c] sm:$0xff]
      %v2249 = vld [vmem:[%s0 + $0x324] sm:$0xff]
      %v2250 = vld [vmem:[%s0 + $0x32c] sm:$0xff]
      %v2251 = vld [vmem:[%s0 + $0x334] sm:$0xff]
      %v2252 = vld [vmem:[%s0 + $0x33c] sm:$0xff]
      %v2253 = vld [vmem:[%s0 + $0x344] sm:$0xff]
      %v2254 = vld [vmem:[%s0 + $0x34c] sm:$0xff]
      %v2255 = vld [vmem:[%s0 + $0x354] sm:$0xff]
      %v2256 = vld [vmem:[%s0 + $0x35c] sm:$0xff]
      %v2257 = vld [vmem:[%s0 + $0x364] sm:$0xff]
      %v2258 = vld [vmem:[%s0 + $0x36c] sm:$0xff]
      %v2259 = vld [vmem:[%s0 + $0x374] sm:$0xff]
      %v2260 = vld [vmem:[%s0 + $0x37c] sm:$0x3f]
      %v2261 = vstv %s2155
      %v2262 = vmul.f32 %v2261, %v2156
      %v2263 = vmul.f32 %v2261, %v2157
      %v2264 = vmul.f32 %v2261, %v2158
      %v2265 = vmul.f32 %v2261, %v2159
      %v2266 = vmul.f32 %v2261, %v2160
      %v2267 = vmul.f32 %v2261, %v2161
      %v2268 = vmul.f32 %v2261, %v2162
      %v2269 = vmul.f32 %v2261, %v2163
      %v2270 = vmul.f32 %v2261, %v2164
      %v2271 = vmul.f32 %v2261, %v2165
      %v2272 = vmul.f32 %v2261, %v2166
      %v2273 = vmul.f32 %v2261, %v2167
      %v2274 = vmul.f32 %v2261, %v2168
      %v2275 = vmul.f32 %v2261, %v2169
      %v2276 = vmul.f32 %v2261, %v2170
      %v2277 = vmul.f32 %v2261, %v2171
      %v2278 = vmul.f32 %v2261, %v2172
      %v2279 = vmul.f32 %v2261, %v2173
      %v2280 = vmul.f32 %v2261, %v2174
      %v2281 = vmul.f32 %v2261, %v2175
      %v2282 = vmul.f32 %v2261, %v2176
      %v2283 = vmul.f32 %v2261, %v2177
      %v2284 = vmul.f32 %v2261, %v2178
      %v2285 = vmul.f32 %v2261, %v2179
      %v2286 = vmul.f32 %v2261, %v2180
      %v2287 = vmul.f32 %v2261, %v2181
      %v2288 = vmul.f32 %v2261, %v2182
      %v2289 = vmul.f32 %v2261, %v2183
      %v2290 = vmul.f32 %v2261, %v2184
      %v2291 = vmul.f32 %v2261, %v2185
      %v2292 = vmul.f32 %v2261, %v2186
      %v2293 = vmul.f32 %v2261, %v2187
      %v2294 = vmul.f32 %v2261, %v2188
      %v2295 = vmul.f32 %v2261, %v2189
      %v2296 = vmul.f32 %v2261, %v2190
      %v2297 = vmul.f32 %v2261, %v2191
      %v2298 = vmul.f32 %v2261, %v2192
      %v2299 = vmul.f32 %v2261, %v2193
      %v2300 = vmul.f32 %v2261, %v2194
      %v2301 = vmul.f32 %v2261, %v2195
      %v2302 = vmul.f32 %v2261, %v2196
      %v2303 = vmul.f32 %v2261, %v2197
      %v2304 = vmul.f32 %v2261, %v2198
      %v2305 = vmul.f32 %v2261, %v2199
      %v2306 = vmul.f32 %v2261, %v2200
      %v2307 = vmul.f32 %v2261, %v2201
      %v2308 = vmul.f32 %v2261, %v2202
      %v2309 = vmul.f32 %v2261, %v2203
      %v2310 = vmul.f32 %v2261, %v2204
      %v2311 = vmul.f32 %v2261, %v2205
      %v2312 = vmul.f32 %v2261, %v2206
      %v2313 = vmul.f32 %v2261, %v2207
      %v2314 = vmul.f32 %v2261, %v2208
      %v2315 = vmul.f32 %v2261, %v2209
      %v2316 = vmul.f32 %v2261, %v2210
      %v2317 = vmul.f32 %v2261, %v2211
      %v2318 = vmul.f32 %v2261, %v2212
      %v2319 = vmul.f32 %v2261, %v2213
      %v2320 = vmul.f32 %v2261, %v2214
      %v2321 = vmul.f32 %v2261, %v2215
      %v2322 = vmul.f32 %v2261, %v2216
      %v2323 = vmul.f32 %v2261, %v2217
      %v2324 = vmul.f32 %v2261, %v2218
      %v2325 = vmul.f32 %v2261, %v2219
      %v2326 = vmul.f32 %v2261, %v2220
      %v2327 = vmul.f32 %v2261, %v2221
      %v2328 = vmul.f32 %v2261, %v2222
      %v2329 = vmul.f32 %v2261, %v2223
      %v2330 = vmul.f32 %v2261, %v2224
      %v2331 = vmul.f32 %v2261, %v2225
      %v2332 = vmul.f32 %v2261, %v2226
      %v2333 = vmul.f32 %v2261, %v2227
      %v2334 = vmul.f32 %v2261, %v2228
      %v2335 = vmul.f32 %v2261, %v2229
      %v2336 = vmul.f32 %v2261, %v2230
      %v2337 = vmul.f32 %v2261, %v2231
      %v2338 = vmul.f32 %v2261, %v2232
      %v2339 = vmul.f32 %v2261, %v2233
      %v2340 = vmul.f32 %v2261, %v2234
      %v2341 = vmul.f32 %v2261, %v2235
      %v2342 = vmul.f32 %v2261, %v2236
      %v2343 = vmul.f32 %v2261, %v2237
      %v2344 = vmul.f32 %v2261, %v2238
      %v2345 = vmul.f32 %v2261, %v2239
      %v2346 = vmul.f32 %v2261, %v2240
      %v2347 = vmul.f32 %v2261, %v2241
      %v2348 = vmul.f32 %v2261, %v2242
      %v2349 = vmul.f32 %v2261, %v2243
      %v2350 = vmul.f32 %v2261, %v2244
      %v2351 = vmul.f32 %v2261, %v2245
      %v2352 = vmul.f32 %v2261, %v2246
      %v2353 = vmul.f32 %v2261, %v2247
      %v2354 = vmul.f32 %v2261, %v2248
      %v2355 = vmul.f32 %v2261, %v2249
      %v2356 = vmul.f32 %v2261, %v2250
      %v2357 = vmul.f32 %v2261, %v2251
      %v2358 = vmul.f32 %v2261, %v2252
      %v2359 = vmul.f32 %v2261, %v2253
      %v2360 = vmul.f32 %v2261, %v2254
      %v2361 = vmul.f32 %v2261, %v2255
      %v2362 = vmul.f32 %v2261, %v2256
      %v2363 = vmul.f32 %v2261, %v2257
      %v2364 = vmul.f32 %v2261, %v2258
      %v2365 = vmul.f32 %v2261, %v2259
      %v2366 = vmul.f32 %v2261, %v2260
      %v2367 = vadd.f32 %v2049, %v2262
      %v2368 = vadd.f32 %v2050, %v2263
      %v2369 = vadd.f32 %v2051, %v2264
      %v2370 = vadd.f32 %v2052, %v2265
      %v2371 = vadd.f32 %v2053, %v2266
      %v2372 = vadd.f32 %v2054, %v2267
      %v2373 = vadd.f32 %v2055, %v2268
      %v2374 = vadd.f32 %v2056, %v2269
      %v2375 = vadd.f32 %v2057, %v2270
      %v2376 = vadd.f32 %v2058, %v2271
      %v2377 = vadd.f32 %v2059, %v2272
      %v2378 = vadd.f32 %v2060, %v2273
      %v2379 = vadd.f32 %v2061, %v2274
      %v2380 = vadd.f32 %v2062, %v2275
      %v2381 = vadd.f32 %v2063, %v2276
      %v2382 = vadd.f32 %v2064, %v2277
      %v2383 = vadd.f32 %v2065, %v2278
      %v2384 = vadd.f32 %v2066, %v2279
      %v2385 = vadd.f32 %v2067, %v2280
      %v2386 = vadd.f32 %v2068, %v2281
      %v2387 = vadd.f32 %v2069, %v2282
      %v2388 = vadd.f32 %v2070, %v2283
      %v2389 = vadd.f32 %v2071, %v2284
      %v2390 = vadd.f32 %v2072, %v2285
      %v2391 = vadd.f32 %v2073, %v2286
      %v2392 = vadd.f32 %v2074, %v2287
      %v2393 = vadd.f32 %v2075, %v2288
      %v2394 = vadd.f32 %v2076, %v2289
      %v2395 = vadd.f32 %v2077, %v2290
      %v2396 = vadd.f32 %v2078, %v2291
      %v2397 = vadd.f32 %v2079, %v2292
      %v2398 = vadd.f32 %v2080, %v2293
      %v2399 = vadd.f32 %v2081, %v2294
      %v2400 = vadd.f32 %v2082, %v2295
      %v2401 = vadd.f32 %v2083, %v2296
      %v2402 = vadd.f32 %v2084, %v2297
      %v2403 = vadd.f32 %v2085, %v2298
      %v2404 = vadd.f32 %v2086, %v2299
      %v2405 = vadd.f32 %v2087, %v2300
      %v2406 = vadd.f32 %v2088, %v2301
      %v2407 = vadd.f32 %v2089, %v2302
      %v2408 = vadd.f32 %v2090, %v2303
      %v2409 = vadd.f32 %v2091, %v2304
      %v2410 = vadd.f32 %v2092, %v2305
      %v2411 = vadd.f32 %v2093, %v2306
      %v2412 = vadd.f32 %v2094, %v2307
      %v2413 = vadd.f32 %v2095, %v2308
      %v2414 = vadd.f32 %v2096, %v2309
      %v2415 = vadd.f32 %v2097, %v2310
      %v2416 = vadd.f32 %v2098, %v2311
      %v2417 = vadd.f32 %v2099, %v2312
      %v2418 = vadd.f32 %v2100, %v2313
      %v2419 = vadd.f32 %v2101, %v2314
      %v2420 = vadd.f32 %v2102, %v2315
      %v2421 = vadd.f32 %v2103, %v2316
      %v2422 = vadd.f32 %v2104, %v2317
      %v2423 = vadd.f32 %v2105, %v2318
      %v2424 = vadd.f32 %v2106, %v2319
      %v2425 = vadd.f32 %v2107, %v2320
      %v2426 = vadd.f32 %v2108, %v2321
      %v2427 = vadd.f32 %v2109, %v2322
      %v2428 = vadd.f32 %v2110, %v2323
      %v2429 = vadd.f32 %v2111, %v2324
      %v2430 = vadd.f32 %v2112, %v2325
      %v2431 = vadd.f32 %v2113, %v2326
      %v2432 = vadd.f32 %v2114, %v2327
      %v2433 = vadd.f32 %v2115, %v2328
      %v2434 = vadd.f32 %v2116, %v2329
      %v2435 = vadd.f32 %v2117, %v2330
      %v2436 = vadd.f32 %v2118, %v2331
      %v2437 = vadd.f32 %v2119, %v2332
      %v2438 = vadd.f32 %v2120, %v2333
      %v2439 = vadd.f32 %v2121, %v2334
      %v2440 = vadd.f32 %v2122, %v2335
      %v2441 = vadd.f32 %v2123, %v2336
      %v2442 = vadd.f32 %v2124, %v2337
      %v2443 = vadd.f32 %v2125, %v2338
      %v2444 = vadd.f32 %v2126, %v2339
      %v2445 = vadd.f32 %v2127, %v2340
      %v2446 = vadd.f32 %v2128, %v2341
      %v2447 = vadd.f32 %v2129, %v2342
      %v2448 = vadd.f32 %v2130, %v2343
      %v2449 = vadd.f32 %v2131, %v2344
      %v2450 = vadd.f32 %v2132, %v2345
      %v2451 = vadd.f32 %v2133, %v2346
      %v2452 = vadd.f32 %v2134, %v2347
      %v2453 = vadd.f32 %v2135, %v2348
      %v2454 = vadd.f32 %v2136, %v2349
      %v2455 = vadd.f32 %v2137, %v2350
      %v2456 = vadd.f32 %v2138, %v2351
      %v2457 = vadd.f32 %v2139, %v2352
      %v2458 = vadd.f32 %v2140, %v2353
      %v2459 = vadd.f32 %v2141, %v2354
      %v2460 = vadd.f32 %v2142, %v2355
      %v2461 = vadd.f32 %v2143, %v2356
      %v2462 = vadd.f32 %v2144, %v2357
      %v2463 = vadd.f32 %v2145, %v2358
      %v2464 = vadd.f32 %v2146, %v2359
      %v2465 = vadd.f32 %v2147, %v2360
      %v2466 = vadd.f32 %v2148, %v2361
      %v2467 = vadd.f32 %v2149, %v2362
      %v2468 = vadd.f32 %v2150, %v2363
      %v2469 = vadd.f32 %v2151, %v2364
      %v2470 = vadd.f32 %v2152, %v2365
      %v2471 = vadd.f32 %v2153, %v2366
      %s2472 = sadd.s32 %s351, 7
      %s2473 = sld [smem:[#allocation7 + %s2472]]
      %v2474 = vld [vmem:[%s0 + $0x3d] sm:$0xff]
      %v2475 = vld [vmem:[%s0 + $0x45] sm:$0xff]
      %v2476 = vld [vmem:[%s0 + $0x4d] sm:$0xff]
      %v2477 = vld [vmem:[%s0 + $0x55] sm:$0xff]
      %v2478 = vld [vmem:[%s0 + $0x5d] sm:$0xff]
      %v2479 = vld [vmem:[%s0 + $0x65] sm:$0xff]
      %v2480 = vld [vmem:[%s0 + $0x6d] sm:$0xff]
      %v2481 = vld [vmem:[%s0 + $0x75] sm:$0xff]
      %v2482 = vld [vmem:[%s0 + $0x7d] sm:$0xff]
      %v2483 = vld [vmem:[%s0 + $0x85] sm:$0xff]
      %v2484 = vld [vmem:[%s0 + $0x8d] sm:$0xff]
      %v2485 = vld [vmem:[%s0 + $0x95] sm:$0xff]
      %v2486 = vld [vmem:[%s0 + $0x9d] sm:$0xff]
      %v2487 = vld [vmem:[%s0 + $0xa5] sm:$0xff]
      %v2488 = vld [vmem:[%s0 + $0xad] sm:$0xff]
      %v2489 = vld [vmem:[%s0 + $0xb5] sm:$0xff]
      %v2490 = vld [vmem:[%s0 + $0xbd] sm:$0xff]
      %v2491 = vld [vmem:[%s0 + $0xc5] sm:$0xff]
      %v2492 = vld [vmem:[%s0 + $0xcd] sm:$0xff]
      %v2493 = vld [vmem:[%s0 + $0xd5] sm:$0xff]
      %v2494 = vld [vmem:[%s0 + $0xdd] sm:$0xff]
      %v2495 = vld [vmem:[%s0 + $0xe5] sm:$0xff]
      %v2496 = vld [vmem:[%s0 + $0xed] sm:$0xff]
      %v2497 = vld [vmem:[%s0 + $0xf5] sm:$0xff]
      %v2498 = vld [vmem:[%s0 + $0xfd] sm:$0xff]
      %v2499 = vld [vmem:[%s0 + $0x105] sm:$0xff]
      %v2500 = vld [vmem:[%s0 + $0x10d] sm:$0xff]
      %v2501 = vld [vmem:[%s0 + $0x115] sm:$0xff]
      %v2502 = vld [vmem:[%s0 + $0x11d] sm:$0xff]
      %v2503 = vld [vmem:[%s0 + $0x125] sm:$0xff]
      %v2504 = vld [vmem:[%s0 + $0x12d] sm:$0xff]
      %v2505 = vld [vmem:[%s0 + $0x135] sm:$0xff]
      %v2506 = vld [vmem:[%s0 + $0x13d] sm:$0xff]
      %v2507 = vld [vmem:[%s0 + $0x145] sm:$0xff]
      %v2508 = vld [vmem:[%s0 + $0x14d] sm:$0xff]
      %v2509 = vld [vmem:[%s0 + $0x155] sm:$0xff]
      %v2510 = vld [vmem:[%s0 + $0x15d] sm:$0xff]
      %v2511 = vld [vmem:[%s0 + $0x165] sm:$0xff]
      %v2512 = vld [vmem:[%s0 + $0x16d] sm:$0xff]
      %v2513 = vld [vmem:[%s0 + $0x175] sm:$0xff]
      %v2514 = vld [vmem:[%s0 + $0x17d] sm:$0xff]
      %v2515 = vld [vmem:[%s0 + $0x185] sm:$0xff]
      %v2516 = vld [vmem:[%s0 + $0x18d] sm:$0xff]
      %v2517 = vld [vmem:[%s0 + $0x195] sm:$0xff]
      %v2518 = vld [vmem:[%s0 + $0x19d] sm:$0xff]
      %v2519 = vld [vmem:[%s0 + $0x1a5] sm:$0xff]
      %v2520 = vld [vmem:[%s0 + $0x1ad] sm:$0xff]
      %v2521 = vld [vmem:[%s0 + $0x1b5] sm:$0xff]
      %v2522 = vld [vmem:[%s0 + $0x1bd] sm:$0xff]
      %v2523 = vld [vmem:[%s0 + $0x1c5] sm:$0xff]
      %v2524 = vld [vmem:[%s0 + $0x1cd] sm:$0xff]
      %v2525 = vld [vmem:[%s0 + $0x1d5] sm:$0xff]
      %v2526 = vld [vmem:[%s0 + $0x1dd] sm:$0xff]
      %v2527 = vld [vmem:[%s0 + $0x1e5] sm:$0xff]
      %v2528 = vld [vmem:[%s0 + $0x1ed] sm:$0xff]
      %v2529 = vld [vmem:[%s0 + $0x1f5] sm:$0xff]
      %v2530 = vld [vmem:[%s0 + $0x1fd] sm:$0xff]
      %v2531 = vld [vmem:[%s0 + $0x205] sm:$0xff]
      %v2532 = vld [vmem:[%s0 + $0x20d] sm:$0xff]
      %v2533 = vld [vmem:[%s0 + $0x215] sm:$0xff]
      %v2534 = vld [vmem:[%s0 + $0x21d] sm:$0xff]
      %v2535 = vld [vmem:[%s0 + $0x225] sm:$0xff]
      %v2536 = vld [vmem:[%s0 + $0x22d] sm:$0xff]
      %v2537 = vld [vmem:[%s0 + $0x235] sm:$0xff]
      %v2538 = vld [vmem:[%s0 + $0x23d] sm:$0xff]
      %v2539 = vld [vmem:[%s0 + $0x245] sm:$0xff]
      %v2540 = vld [vmem:[%s0 + $0x24d] sm:$0xff]
      %v2541 = vld [vmem:[%s0 + $0x255] sm:$0xff]
      %v2542 = vld [vmem:[%s0 + $0x25d] sm:$0xff]
      %v2543 = vld [vmem:[%s0 + $0x265] sm:$0xff]
      %v2544 = vld [vmem:[%s0 + $0x26d] sm:$0xff]
      %v2545 = vld [vmem:[%s0 + $0x275] sm:$0xff]
      %v2546 = vld [vmem:[%s0 + $0x27d] sm:$0xff]
      %v2547 = vld [vmem:[%s0 + $0x285] sm:$0xff]
      %v2548 = vld [vmem:[%s0 + $0x28d] sm:$0xff]
      %v2549 = vld [vmem:[%s0 + $0x295] sm:$0xff]
      %v2550 = vld [vmem:[%s0 + $0x29d] sm:$0xff]
      %v2551 = vld [vmem:[%s0 + $0x2a5] sm:$0xff]
      %v2552 = vld [vmem:[%s0 + $0x2ad] sm:$0xff]
      %v2553 = vld [vmem:[%s0 + $0x2b5] sm:$0xff]
      %v2554 = vld [vmem:[%s0 + $0x2bd] sm:$0xff]
      %v2555 = vld [vmem:[%s0 + $0x2c5] sm:$0xff]
      %v2556 = vld [vmem:[%s0 + $0x2cd] sm:$0xff]
      %v2557 = vld [vmem:[%s0 + $0x2d5] sm:$0xff]
      %v2558 = vld [vmem:[%s0 + $0x2dd] sm:$0xff]
      %v2559 = vld [vmem:[%s0 + $0x2e5] sm:$0xff]
      %v2560 = vld [vmem:[%s0 + $0x2ed] sm:$0xff]
      %v2561 = vld [vmem:[%s0 + $0x2f5] sm:$0xff]
      %v2562 = vld [vmem:[%s0 + $0x2fd] sm:$0xff]
      %v2563 = vld [vmem:[%s0 + $0x305] sm:$0xff]
      %v2564 = vld [vmem:[%s0 + $0x30d] sm:$0xff]
      %v2565 = vld [vmem:[%s0 + $0x315] sm:$0xff]
      %v2566 = vld [vmem:[%s0 + $0x31d] sm:$0xff]
      %v2567 = vld [vmem:[%s0 + $0x325] sm:$0xff]
      %v2568 = vld [vmem:[%s0 + $0x32d] sm:$0xff]
      %v2569 = vld [vmem:[%s0 + $0x335] sm:$0xff]
      %v2570 = vld [vmem:[%s0 + $0x33d] sm:$0xff]
      %v2571 = vld [vmem:[%s0 + $0x345] sm:$0xff]
      %v2572 = vld [vmem:[%s0 + $0x34d] sm:$0xff]
      %v2573 = vld [vmem:[%s0 + $0x355] sm:$0xff]
      %v2574 = vld [vmem:[%s0 + $0x35d] sm:$0xff]
      %v2575 = vld [vmem:[%s0 + $0x365] sm:$0xff]
      %v2576 = vld [vmem:[%s0 + $0x36d] sm:$0xff]
      %v2577 = vld [vmem:[%s0 + $0x375] sm:$0xff]
      %v2578 = vld [vmem:[%s0 + $0x37d] sm:$0x3f]
      %v2579 = vstv %s2473
      %v2580 = vmul.f32 %v2579, %v2474
      %v2581 = vmul.f32 %v2579, %v2475
      %v2582 = vmul.f32 %v2579, %v2476
      %v2583 = vmul.f32 %v2579, %v2477
      %v2584 = vmul.f32 %v2579, %v2478
      %v2585 = vmul.f32 %v2579, %v2479
      %v2586 = vmul.f32 %v2579, %v2480
      %v2587 = vmul.f32 %v2579, %v2481
      %v2588 = vmul.f32 %v2579, %v2482
      %v2589 = vmul.f32 %v2579, %v2483
      %v2590 = vmul.f32 %v2579, %v2484
      %v2591 = vmul.f32 %v2579, %v2485
      %v2592 = vmul.f32 %v2579, %v2486
      %v2593 = vmul.f32 %v2579, %v2487
      %v2594 = vmul.f32 %v2579, %v2488
      %v2595 = vmul.f32 %v2579, %v2489
      %v2596 = vmul.f32 %v2579, %v2490
      %v2597 = vmul.f32 %v2579, %v2491
      %v2598 = vmul.f32 %v2579, %v2492
      %v2599 = vmul.f32 %v2579, %v2493
      %v2600 = vmul.f32 %v2579, %v2494
      %v2601 = vmul.f32 %v2579, %v2495
      %v2602 = vmul.f32 %v2579, %v2496
      %v2603 = vmul.f32 %v2579, %v2497
      %v2604 = vmul.f32 %v2579, %v2498
      %v2605 = vmul.f32 %v2579, %v2499
      %v2606 = vmul.f32 %v2579, %v2500
      %v2607 = vmul.f32 %v2579, %v2501
      %v2608 = vmul.f32 %v2579, %v2502
      %v2609 = vmul.f32 %v2579, %v2503
      %v2610 = vmul.f32 %v2579, %v2504
      %v2611 = vmul.f32 %v2579, %v2505
      %v2612 = vmul.f32 %v2579, %v2506
      %v2613 = vmul.f32 %v2579, %v2507
      %v2614 = vmul.f32 %v2579, %v2508
      %v2615 = vmul.f32 %v2579, %v2509
      %v2616 = vmul.f32 %v2579, %v2510
      %v2617 = vmul.f32 %v2579, %v2511
      %v2618 = vmul.f32 %v2579, %v2512
      %v2619 = vmul.f32 %v2579, %v2513
      %v2620 = vmul.f32 %v2579, %v2514
      %v2621 = vmul.f32 %v2579, %v2515
      %v2622 = vmul.f32 %v2579, %v2516
      %v2623 = vmul.f32 %v2579, %v2517
      %v2624 = vmul.f32 %v2579, %v2518
      %v2625 = vmul.f32 %v2579, %v2519
      %v2626 = vmul.f32 %v2579, %v2520
      %v2627 = vmul.f32 %v2579, %v2521
      %v2628 = vmul.f32 %v2579, %v2522
      %v2629 = vmul.f32 %v2579, %v2523
      %v2630 = vmul.f32 %v2579, %v2524
      %v2631 = vmul.f32 %v2579, %v2525
      %v2632 = vmul.f32 %v2579, %v2526
      %v2633 = vmul.f32 %v2579, %v2527
      %v2634 = vmul.f32 %v2579, %v2528
      %v2635 = vmul.f32 %v2579, %v2529
      %v2636 = vmul.f32 %v2579, %v2530
      %v2637 = vmul.f32 %v2579, %v2531
      %v2638 = vmul.f32 %v2579, %v2532
      %v2639 = vmul.f32 %v2579, %v2533
      %v2640 = vmul.f32 %v2579, %v2534
      %v2641 = vmul.f32 %v2579, %v2535
      %v2642 = vmul.f32 %v2579, %v2536
      %v2643 = vmul.f32 %v2579, %v2537
      %v2644 = vmul.f32 %v2579, %v2538
      %v2645 = vmul.f32 %v2579, %v2539
      %v2646 = vmul.f32 %v2579, %v2540
      %v2647 = vmul.f32 %v2579, %v2541
      %v2648 = vmul.f32 %v2579, %v2542
      %v2649 = vmul.f32 %v2579, %v2543
      %v2650 = vmul.f32 %v2579, %v2544
      %v2651 = vmul.f32 %v2579, %v2545
      %v2652 = vmul.f32 %v2579, %v2546
      %v2653 = vmul.f32 %v2579, %v2547
      %v2654 = vmul.f32 %v2579, %v2548
      %v2655 = vmul.f32 %v2579, %v2549
      %v2656 = vmul.f32 %v2579, %v2550
      %v2657 = vmul.f32 %v2579, %v2551
      %v2658 = vmul.f32 %v2579, %v2552
      %v2659 = vmul.f32 %v2579, %v2553
      %v2660 = vmul.f32 %v2579, %v2554
      %v2661 = vmul.f32 %v2579, %v2555
      %v2662 = vmul.f32 %v2579, %v2556
      %v2663 = vmul.f32 %v2579, %v2557
      %v2664 = vmul.f32 %v2579, %v2558
      %v2665 = vmul.f32 %v2579, %v2559
      %v2666 = vmul.f32 %v2579, %v2560
      %v2667 = vmul.f32 %v2579, %v2561
      %v2668 = vmul.f32 %v2579, %v2562
      %v2669 = vmul.f32 %v2579, %v2563
      %v2670 = vmul.f32 %v2579, %v2564
      %v2671 = vmul.f32 %v2579, %v2565
      %v2672 = vmul.f32 %v2579, %v2566
      %v2673 = vmul.f32 %v2579, %v2567
      %v2674 = vmul.f32 %v2579, %v2568
      %v2675 = vmul.f32 %v2579, %v2569
      %v2676 = vmul.f32 %v2579, %v2570
      %v2677 = vmul.f32 %v2579, %v2571
      %v2678 = vmul.f32 %v2579, %v2572
      %v2679 = vmul.f32 %v2579, %v2573
      %v2680 = vmul.f32 %v2579, %v2574
      %v2681 = vmul.f32 %v2579, %v2575
      %v2682 = vmul.f32 %v2579, %v2576
      %v2683 = vmul.f32 %v2579, %v2577
      %v2684 = vmul.f32 %v2579, %v2578
      %v2685 = vadd.f32 %v2367, %v2580
      %v2686 = vadd.f32 %v2368, %v2581
      %v2687 = vadd.f32 %v2369, %v2582
      %v2688 = vadd.f32 %v2370, %v2583
      %v2689 = vadd.f32 %v2371, %v2584
      %v2690 = vadd.f32 %v2372, %v2585
      %v2691 = vadd.f32 %v2373, %v2586
      %v2692 = vadd.f32 %v2374, %v2587
      %v2693 = vadd.f32 %v2375, %v2588
      %v2694 = vadd.f32 %v2376, %v2589
      %v2695 = vadd.f32 %v2377, %v2590
      %v2696 = vadd.f32 %v2378, %v2591
      %v2697 = vadd.f32 %v2379, %v2592
      %v2698 = vadd.f32 %v2380, %v2593
      %v2699 = vadd.f32 %v2381, %v2594
      %v2700 = vadd.f32 %v2382, %v2595
      %v2701 = vadd.f32 %v2383, %v2596
      %v2702 = vadd.f32 %v2384, %v2597
      %v2703 = vadd.f32 %v2385, %v2598
      %v2704 = vadd.f32 %v2386, %v2599
      %v2705 = vadd.f32 %v2387, %v2600
      %v2706 = vadd.f32 %v2388, %v2601
      %v2707 = vadd.f32 %v2389, %v2602
      %v2708 = vadd.f32 %v2390, %v2603
      %v2709 = vadd.f32 %v2391, %v2604
      %v2710 = vadd.f32 %v2392, %v2605
      %v2711 = vadd.f32 %v2393, %v2606
      %v2712 = vadd.f32 %v2394, %v2607
      %v2713 = vadd.f32 %v2395, %v2608
      %v2714 = vadd.f32 %v2396, %v2609
      %v2715 = vadd.f32 %v2397, %v2610
      %v2716 = vadd.f32 %v2398, %v2611
      %v2717 = vadd.f32 %v2399, %v2612
      %v2718 = vadd.f32 %v2400, %v2613
      %v2719 = vadd.f32 %v2401, %v2614
      %v2720 = vadd.f32 %v2402, %v2615
      %v2721 = vadd.f32 %v2403, %v2616
      %v2722 = vadd.f32 %v2404, %v2617
      %v2723 = vadd.f32 %v2405, %v2618
      %v2724 = vadd.f32 %v2406, %v2619
      %v2725 = vadd.f32 %v2407, %v2620
      %v2726 = vadd.f32 %v2408, %v2621
      %v2727 = vadd.f32 %v2409, %v2622
      %v2728 = vadd.f32 %v2410, %v2623
      %v2729 = vadd.f32 %v2411, %v2624
      %v2730 = vadd.f32 %v2412, %v2625
      %v2731 = vadd.f32 %v2413, %v2626
      %v2732 = vadd.f32 %v2414, %v2627
      %v2733 = vadd.f32 %v2415, %v2628
      %v2734 = vadd.f32 %v2416, %v2629
      %v2735 = vadd.f32 %v2417, %v2630
      %v2736 = vadd.f32 %v2418, %v2631
      %v2737 = vadd.f32 %v2419, %v2632
      %v2738 = vadd.f32 %v2420, %v2633
      %v2739 = vadd.f32 %v2421, %v2634
      %v2740 = vadd.f32 %v2422, %v2635
      %v2741 = vadd.f32 %v2423, %v2636
      %v2742 = vadd.f32 %v2424, %v2637
      %v2743 = vadd.f32 %v2425, %v2638
      %v2744 = vadd.f32 %v2426, %v2639
      %v2745 = vadd.f32 %v2427, %v2640
      %v2746 = vadd.f32 %v2428, %v2641
      %v2747 = vadd.f32 %v2429, %v2642
      %v2748 = vadd.f32 %v2430, %v2643
      %v2749 = vadd.f32 %v2431, %v2644
      %v2750 = vadd.f32 %v2432, %v2645
      %v2751 = vadd.f32 %v2433, %v2646
      %v2752 = vadd.f32 %v2434, %v2647
      %v2753 = vadd.f32 %v2435, %v2648
      %v2754 = vadd.f32 %v2436, %v2649
      %v2755 = vadd.f32 %v2437, %v2650
      %v2756 = vadd.f32 %v2438, %v2651
      %v2757 = vadd.f32 %v2439, %v2652
      %v2758 = vadd.f32 %v2440, %v2653
      %v2759 = vadd.f32 %v2441, %v2654
      %v2760 = vadd.f32 %v2442, %v2655
      %v2761 = vadd.f32 %v2443, %v2656
      %v2762 = vadd.f32 %v2444, %v2657
      %v2763 = vadd.f32 %v2445, %v2658
      %v2764 = vadd.f32 %v2446, %v2659
      %v2765 = vadd.f32 %v2447, %v2660
      %v2766 = vadd.f32 %v2448, %v2661
      %v2767 = vadd.f32 %v2449, %v2662
      %v2768 = vadd.f32 %v2450, %v2663
      %v2769 = vadd.f32 %v2451, %v2664
      %v2770 = vadd.f32 %v2452, %v2665
      %v2771 = vadd.f32 %v2453, %v2666
      %v2772 = vadd.f32 %v2454, %v2667
      %v2773 = vadd.f32 %v2455, %v2668
      %v2774 = vadd.f32 %v2456, %v2669
      %v2775 = vadd.f32 %v2457, %v2670
      %v2776 = vadd.f32 %v2458, %v2671
      %v2777 = vadd.f32 %v2459, %v2672
      %v2778 = vadd.f32 %v2460, %v2673
      %v2779 = vadd.f32 %v2461, %v2674
      %v2780 = vadd.f32 %v2462, %v2675
      %v2781 = vadd.f32 %v2463, %v2676
      %v2782 = vadd.f32 %v2464, %v2677
      %v2783 = vadd.f32 %v2465, %v2678
      %v2784 = vadd.f32 %v2466, %v2679
      %v2785 = vadd.f32 %v2467, %v2680
      %v2786 = vadd.f32 %v2468, %v2681
      %v2787 = vadd.f32 %v2469, %v2682
      %v2788 = vadd.f32 %v2470, %v2683
      %v2789 = vadd.f32 %v2471, %v2684
      %s2790 = sadd.s32 %s351, 8
      %s2791 = sld [smem:[#allocation7 + %s2790]]
      %v2792 = vld [vmem:[%s0 + $0x3e] sm:$0xff]
      %v2793 = vld [vmem:[%s0 + $0x46] sm:$0xff]
      %v2794 = vld [vmem:[%s0 + $0x4e] sm:$0xff]
      %v2795 = vld [vmem:[%s0 + $0x56] sm:$0xff]
      %v2796 = vld [vmem:[%s0 + $0x5e] sm:$0xff]
      %v2797 = vld [vmem:[%s0 + $0x66] sm:$0xff]
      %v2798 = vld [vmem:[%s0 + $0x6e] sm:$0xff]
      %v2799 = vld [vmem:[%s0 + $0x76] sm:$0xff]
      %v2800 = vld [vmem:[%s0 + $0x7e] sm:$0xff]
      %v2801 = vld [vmem:[%s0 + $0x86] sm:$0xff]
      %v2802 = vld [vmem:[%s0 + $0x8e] sm:$0xff]
      %v2803 = vld [vmem:[%s0 + $0x96] sm:$0xff]
      %v2804 = vld [vmem:[%s0 + $0x9e] sm:$0xff]
      %v2805 = vld [vmem:[%s0 + $0xa6] sm:$0xff]
      %v2806 = vld [vmem:[%s0 + $0xae] sm:$0xff]
      %v2807 = vld [vmem:[%s0 + $0xb6] sm:$0xff]
      %v2808 = vld [vmem:[%s0 + $0xbe] sm:$0xff]
      %v2809 = vld [vmem:[%s0 + $0xc6] sm:$0xff]
      %v2810 = vld [vmem:[%s0 + $0xce] sm:$0xff]
      %v2811 = vld [vmem:[%s0 + $0xd6] sm:$0xff]
      %v2812 = vld [vmem:[%s0 + $0xde] sm:$0xff]
      %v2813 = vld [vmem:[%s0 + $0xe6] sm:$0xff]
      %v2814 = vld [vmem:[%s0 + $0xee] sm:$0xff]
      %v2815 = vld [vmem:[%s0 + $0xf6] sm:$0xff]
      %v2816 = vld [vmem:[%s0 + $0xfe] sm:$0xff]
      %v2817 = vld [vmem:[%s0 + $0x106] sm:$0xff]
      %v2818 = vld [vmem:[%s0 + $0x10e] sm:$0xff]
      %v2819 = vld [vmem:[%s0 + $0x116] sm:$0xff]
      %v2820 = vld [vmem:[%s0 + $0x11e] sm:$0xff]
      %v2821 = vld [vmem:[%s0 + $0x126] sm:$0xff]
      %v2822 = vld [vmem:[%s0 + $0x12e] sm:$0xff]
      %v2823 = vld [vmem:[%s0 + $0x136] sm:$0xff]
      %v2824 = vld [vmem:[%s0 + $0x13e] sm:$0xff]
      %v2825 = vld [vmem:[%s0 + $0x146] sm:$0xff]
      %v2826 = vld [vmem:[%s0 + $0x14e] sm:$0xff]
      %v2827 = vld [vmem:[%s0 + $0x156] sm:$0xff]
      %v2828 = vld [vmem:[%s0 + $0x15e] sm:$0xff]
      %v2829 = vld [vmem:[%s0 + $0x166] sm:$0xff]
      %v2830 = vld [vmem:[%s0 + $0x16e] sm:$0xff]
      %v2831 = vld [vmem:[%s0 + $0x176] sm:$0xff]
      %v2832 = vld [vmem:[%s0 + $0x17e] sm:$0xff]
      %v2833 = vld [vmem:[%s0 + $0x186] sm:$0xff]
      %v2834 = vld [vmem:[%s0 + $0x18e] sm:$0xff]
      %v2835 = vld [vmem:[%s0 + $0x196] sm:$0xff]
      %v2836 = vld [vmem:[%s0 + $0x19e] sm:$0xff]
      %v2837 = vld [vmem:[%s0 + $0x1a6] sm:$0xff]
      %v2838 = vld [vmem:[%s0 + $0x1ae] sm:$0xff]
      %v2839 = vld [vmem:[%s0 + $0x1b6] sm:$0xff]
      %v2840 = vld [vmem:[%s0 + $0x1be] sm:$0xff]
      %v2841 = vld [vmem:[%s0 + $0x1c6] sm:$0xff]
      %v2842 = vld [vmem:[%s0 + $0x1ce] sm:$0xff]
      %v2843 = vld [vmem:[%s0 + $0x1d6] sm:$0xff]
      %v2844 = vld [vmem:[%s0 + $0x1de] sm:$0xff]
      %v2845 = vld [vmem:[%s0 + $0x1e6] sm:$0xff]
      %v2846 = vld [vmem:[%s0 + $0x1ee] sm:$0xff]
      %v2847 = vld [vmem:[%s0 + $0x1f6] sm:$0xff]
      %v2848 = vld [vmem:[%s0 + $0x1fe] sm:$0xff]
      %v2849 = vld [vmem:[%s0 + $0x206] sm:$0xff]
      %v2850 = vld [vmem:[%s0 + $0x20e] sm:$0xff]
      %v2851 = vld [vmem:[%s0 + $0x216] sm:$0xff]
      %v2852 = vld [vmem:[%s0 + $0x21e] sm:$0xff]
      %v2853 = vld [vmem:[%s0 + $0x226] sm:$0xff]
      %v2854 = vld [vmem:[%s0 + $0x22e] sm:$0xff]
      %v2855 = vld [vmem:[%s0 + $0x236] sm:$0xff]
      %v2856 = vld [vmem:[%s0 + $0x23e] sm:$0xff]
      %v2857 = vld [vmem:[%s0 + $0x246] sm:$0xff]
      %v2858 = vld [vmem:[%s0 + $0x24e] sm:$0xff]
      %v2859 = vld [vmem:[%s0 + $0x256] sm:$0xff]
      %v2860 = vld [vmem:[%s0 + $0x25e] sm:$0xff]
      %v2861 = vld [vmem:[%s0 + $0x266] sm:$0xff]
      %v2862 = vld [vmem:[%s0 + $0x26e] sm:$0xff]
      %v2863 = vld [vmem:[%s0 + $0x276] sm:$0xff]
      %v2864 = vld [vmem:[%s0 + $0x27e] sm:$0xff]
      %v2865 = vld [vmem:[%s0 + $0x286] sm:$0xff]
      %v2866 = vld [vmem:[%s0 + $0x28e] sm:$0xff]
      %v2867 = vld [vmem:[%s0 + $0x296] sm:$0xff]
      %v2868 = vld [vmem:[%s0 + $0x29e] sm:$0xff]
      %v2869 = vld [vmem:[%s0 + $0x2a6] sm:$0xff]
      %v2870 = vld [vmem:[%s0 + $0x2ae] sm:$0xff]
      %v2871 = vld [vmem:[%s0 + $0x2b6] sm:$0xff]
      %v2872 = vld [vmem:[%s0 + $0x2be] sm:$0xff]
      %v2873 = vld [vmem:[%s0 + $0x2c6] sm:$0xff]
      %v2874 = vld [vmem:[%s0 + $0x2ce] sm:$0xff]
      %v2875 = vld [vmem:[%s0 + $0x2d6] sm:$0xff]
      %v2876 = vld [vmem:[%s0 + $0x2de] sm:$0xff]
      %v2877 = vld [vmem:[%s0 + $0x2e6] sm:$0xff]
      %v2878 = vld [vmem:[%s0 + $0x2ee] sm:$0xff]
      %v2879 = vld [vmem:[%s0 + $0x2f6] sm:$0xff]
      %v2880 = vld [vmem:[%s0 + $0x2fe] sm:$0xff]
      %v2881 = vld [vmem:[%s0 + $0x306] sm:$0xff]
      %v2882 = vld [vmem:[%s0 + $0x30e] sm:$0xff]
      %v2883 = vld [vmem:[%s0 + $0x316] sm:$0xff]
      %v2884 = vld [vmem:[%s0 + $0x31e] sm:$0xff]
      %v2885 = vld [vmem:[%s0 + $0x326] sm:$0xff]
      %v2886 = vld [vmem:[%s0 + $0x32e] sm:$0xff]
      %v2887 = vld [vmem:[%s0 + $0x336] sm:$0xff]
      %v2888 = vld [vmem:[%s0 + $0x33e] sm:$0xff]
      %v2889 = vld [vmem:[%s0 + $0x346] sm:$0xff]
      %v2890 = vld [vmem:[%s0 + $0x34e] sm:$0xff]
      %v2891 = vld [vmem:[%s0 + $0x356] sm:$0xff]
      %v2892 = vld [vmem:[%s0 + $0x35e] sm:$0xff]
      %v2893 = vld [vmem:[%s0 + $0x366] sm:$0xff]
      %v2894 = vld [vmem:[%s0 + $0x36e] sm:$0xff]
      %v2895 = vld [vmem:[%s0 + $0x376] sm:$0xff]
      %v2896 = vld [vmem:[%s0 + $0x37e] sm:$0x3f]
      %v2897 = vstv %s2791
      %v2898 = vmul.f32 %v2897, %v2792
      %v2899 = vmul.f32 %v2897, %v2793
      %v2900 = vmul.f32 %v2897, %v2794
      %v2901 = vmul.f32 %v2897, %v2795
      %v2902 = vmul.f32 %v2897, %v2796
      %v2903 = vmul.f32 %v2897, %v2797
      %v2904 = vmul.f32 %v2897, %v2798
      %v2905 = vmul.f32 %v2897, %v2799
      %v2906 = vmul.f32 %v2897, %v2800
      %v2907 = vmul.f32 %v2897, %v2801
      %v2908 = vmul.f32 %v2897, %v2802
      %v2909 = vmul.f32 %v2897, %v2803
      %v2910 = vmul.f32 %v2897, %v2804
      %v2911 = vmul.f32 %v2897, %v2805
      %v2912 = vmul.f32 %v2897, %v2806
      %v2913 = vmul.f32 %v2897, %v2807
      %v2914 = vmul.f32 %v2897, %v2808
      %v2915 = vmul.f32 %v2897, %v2809
      %v2916 = vmul.f32 %v2897, %v2810
      %v2917 = vmul.f32 %v2897, %v2811
      %v2918 = vmul.f32 %v2897, %v2812
      %v2919 = vmul.f32 %v2897, %v2813
      %v2920 = vmul.f32 %v2897, %v2814
      %v2921 = vmul.f32 %v2897, %v2815
      %v2922 = vmul.f32 %v2897, %v2816
      %v2923 = vmul.f32 %v2897, %v2817
      %v2924 = vmul.f32 %v2897, %v2818
      %v2925 = vmul.f32 %v2897, %v2819
      %v2926 = vmul.f32 %v2897, %v2820
      %v2927 = vmul.f32 %v2897, %v2821
      %v2928 = vmul.f32 %v2897, %v2822
      %v2929 = vmul.f32 %v2897, %v2823
      %v2930 = vmul.f32 %v2897, %v2824
      %v2931 = vmul.f32 %v2897, %v2825
      %v2932 = vmul.f32 %v2897, %v2826
      %v2933 = vmul.f32 %v2897, %v2827
      %v2934 = vmul.f32 %v2897, %v2828
      %v2935 = vmul.f32 %v2897, %v2829
      %v2936 = vmul.f32 %v2897, %v2830
      %v2937 = vmul.f32 %v2897, %v2831
      %v2938 = vmul.f32 %v2897, %v2832
      %v2939 = vmul.f32 %v2897, %v2833
      %v2940 = vmul.f32 %v2897, %v2834
      %v2941 = vmul.f32 %v2897, %v2835
      %v2942 = vmul.f32 %v2897, %v2836
      %v2943 = vmul.f32 %v2897, %v2837
      %v2944 = vmul.f32 %v2897, %v2838
      %v2945 = vmul.f32 %v2897, %v2839
      %v2946 = vmul.f32 %v2897, %v2840
      %v2947 = vmul.f32 %v2897, %v2841
      %v2948 = vmul.f32 %v2897, %v2842
      %v2949 = vmul.f32 %v2897, %v2843
      %v2950 = vmul.f32 %v2897, %v2844
      %v2951 = vmul.f32 %v2897, %v2845
      %v2952 = vmul.f32 %v2897, %v2846
      %v2953 = vmul.f32 %v2897, %v2847
      %v2954 = vmul.f32 %v2897, %v2848
      %v2955 = vmul.f32 %v2897, %v2849
      %v2956 = vmul.f32 %v2897, %v2850
      %v2957 = vmul.f32 %v2897, %v2851
      %v2958 = vmul.f32 %v2897, %v2852
      %v2959 = vmul.f32 %v2897, %v2853
      %v2960 = vmul.f32 %v2897, %v2854
      %v2961 = vmul.f32 %v2897, %v2855
      %v2962 = vmul.f32 %v2897, %v2856
      %v2963 = vmul.f32 %v2897, %v2857
      %v2964 = vmul.f32 %v2897, %v2858
      %v2965 = vmul.f32 %v2897, %v2859
      %v2966 = vmul.f32 %v2897, %v2860
      %v2967 = vmul.f32 %v2897, %v2861
      %v2968 = vmul.f32 %v2897, %v2862
      %v2969 = vmul.f32 %v2897, %v2863
      %v2970 = vmul.f32 %v2897, %v2864
      %v2971 = vmul.f32 %v2897, %v2865
      %v2972 = vmul.f32 %v2897, %v2866
      %v2973 = vmul.f32 %v2897, %v2867
      %v2974 = vmul.f32 %v2897, %v2868
      %v2975 = vmul.f32 %v2897, %v2869
      %v2976 = vmul.f32 %v2897, %v2870
      %v2977 = vmul.f32 %v2897, %v2871
      %v2978 = vmul.f32 %v2897, %v2872
      %v2979 = vmul.f32 %v2897, %v2873
      %v2980 = vmul.f32 %v2897, %v2874
      %v2981 = vmul.f32 %v2897, %v2875
      %v2982 = vmul.f32 %v2897, %v2876
      %v2983 = vmul.f32 %v2897, %v2877
      %v2984 = vmul.f32 %v2897, %v2878
      %v2985 = vmul.f32 %v2897, %v2879
      %v2986 = vmul.f32 %v2897, %v2880
      %v2987 = vmul.f32 %v2897, %v2881
      %v2988 = vmul.f32 %v2897, %v2882
      %v2989 = vmul.f32 %v2897, %v2883
      %v2990 = vmul.f32 %v2897, %v2884
      %v2991 = vmul.f32 %v2897, %v2885
      %v2992 = vmul.f32 %v2897, %v2886
      %v2993 = vmul.f32 %v2897, %v2887
      %v2994 = vmul.f32 %v2897, %v2888
      %v2995 = vmul.f32 %v2897, %v2889
      %v2996 = vmul.f32 %v2897, %v2890
      %v2997 = vmul.f32 %v2897, %v2891
      %v2998 = vmul.f32 %v2897, %v2892
      %v2999 = vmul.f32 %v2897, %v2893
      %v3000 = vmul.f32 %v2897, %v2894
      %v3001 = vmul.f32 %v2897, %v2895
      %v3002 = vmul.f32 %v2897, %v2896
      %v3003 = vadd.f32 %v2685, %v2898
      %v3004 = vadd.f32 %v2686, %v2899
      %v3005 = vadd.f32 %v2687, %v2900
      %v3006 = vadd.f32 %v2688, %v2901
      %v3007 = vadd.f32 %v2689, %v2902
      %v3008 = vadd.f32 %v2690, %v2903
      %v3009 = vadd.f32 %v2691, %v2904
      %v3010 = vadd.f32 %v2692, %v2905
      %v3011 = vadd.f32 %v2693, %v2906
      %v3012 = vadd.f32 %v2694, %v2907
      %v3013 = vadd.f32 %v2695, %v2908
      %v3014 = vadd.f32 %v2696, %v2909
      %v3015 = vadd.f32 %v2697, %v2910
      %v3016 = vadd.f32 %v2698, %v2911
      %v3017 = vadd.f32 %v2699, %v2912
      %v3018 = vadd.f32 %v2700, %v2913
      %v3019 = vadd.f32 %v2701, %v2914
      %v3020 = vadd.f32 %v2702, %v2915
      %v3021 = vadd.f32 %v2703, %v2916
      %v3022 = vadd.f32 %v2704, %v2917
      %v3023 = vadd.f32 %v2705, %v2918
      %v3024 = vadd.f32 %v2706, %v2919
      %v3025 = vadd.f32 %v2707, %v2920
      %v3026 = vadd.f32 %v2708, %v2921
      %v3027 = vadd.f32 %v2709, %v2922
      %v3028 = vadd.f32 %v2710, %v2923
      %v3029 = vadd.f32 %v2711, %v2924
      %v3030 = vadd.f32 %v2712, %v2925
      %v3031 = vadd.f32 %v2713, %v2926
      %v3032 = vadd.f32 %v2714, %v2927
      %v3033 = vadd.f32 %v2715, %v2928
      %v3034 = vadd.f32 %v2716, %v2929
      %v3035 = vadd.f32 %v2717, %v2930
      %v3036 = vadd.f32 %v2718, %v2931
      %v3037 = vadd.f32 %v2719, %v2932
      %v3038 = vadd.f32 %v2720, %v2933
      %v3039 = vadd.f32 %v2721, %v2934
      %v3040 = vadd.f32 %v2722, %v2935
      %v3041 = vadd.f32 %v2723, %v2936
      %v3042 = vadd.f32 %v2724, %v2937
      %v3043 = vadd.f32 %v2725, %v2938
      %v3044 = vadd.f32 %v2726, %v2939
      %v3045 = vadd.f32 %v2727, %v2940
      %v3046 = vadd.f32 %v2728, %v2941
      %v3047 = vadd.f32 %v2729, %v2942
      %v3048 = vadd.f32 %v2730, %v2943
      %v3049 = vadd.f32 %v2731, %v2944
      %v3050 = vadd.f32 %v2732, %v2945
      %v3051 = vadd.f32 %v2733, %v2946
      %v3052 = vadd.f32 %v2734, %v2947
      %v3053 = vadd.f32 %v2735, %v2948
      %v3054 = vadd.f32 %v2736, %v2949
      %v3055 = vadd.f32 %v2737, %v2950
      %v3056 = vadd.f32 %v2738, %v2951
      %v3057 = vadd.f32 %v2739, %v2952
      %v3058 = vadd.f32 %v2740, %v2953
      %v3059 = vadd.f32 %v2741, %v2954
      %v3060 = vadd.f32 %v2742, %v2955
      %v3061 = vadd.f32 %v2743, %v2956
      %v3062 = vadd.f32 %v2744, %v2957
      %v3063 = vadd.f32 %v2745, %v2958
      %v3064 = vadd.f32 %v2746, %v2959
      %v3065 = vadd.f32 %v2747, %v2960
      %v3066 = vadd.f32 %v2748, %v2961
      %v3067 = vadd.f32 %v2749, %v2962
      %v3068 = vadd.f32 %v2750, %v2963
      %v3069 = vadd.f32 %v2751, %v2964
      %v3070 = vadd.f32 %v2752, %v2965
      %v3071 = vadd.f32 %v2753, %v2966
      %v3072 = vadd.f32 %v2754, %v2967
      %v3073 = vadd.f32 %v2755, %v2968
      %v3074 = vadd.f32 %v2756, %v2969
      %v3075 = vadd.f32 %v2757, %v2970
      %v3076 = vadd.f32 %v2758, %v2971
      %v3077 = vadd.f32 %v2759, %v2972
      %v3078 = vadd.f32 %v2760, %v2973
      %v3079 = vadd.f32 %v2761, %v2974
      %v3080 = vadd.f32 %v2762, %v2975
      %v3081 = vadd.f32 %v2763, %v2976
      %v3082 = vadd.f32 %v2764, %v2977
      %v3083 = vadd.f32 %v2765, %v2978
      %v3084 = vadd.f32 %v2766, %v2979
      %v3085 = vadd.f32 %v2767, %v2980
      %v3086 = vadd.f32 %v2768, %v2981
      %v3087 = vadd.f32 %v2769, %v2982
      %v3088 = vadd.f32 %v2770, %v2983
      %v3089 = vadd.f32 %v2771, %v2984
      %v3090 = vadd.f32 %v2772, %v2985
      %v3091 = vadd.f32 %v2773, %v2986
      %v3092 = vadd.f32 %v2774, %v2987
      %v3093 = vadd.f32 %v2775, %v2988
      %v3094 = vadd.f32 %v2776, %v2989
      %v3095 = vadd.f32 %v2777, %v2990
      %v3096 = vadd.f32 %v2778, %v2991
      %v3097 = vadd.f32 %v2779, %v2992
      %v3098 = vadd.f32 %v2780, %v2993
      %v3099 = vadd.f32 %v2781, %v2994
      %v3100 = vadd.f32 %v2782, %v2995
      %v3101 = vadd.f32 %v2783, %v2996
      %v3102 = vadd.f32 %v2784, %v2997
      %v3103 = vadd.f32 %v2785, %v2998
      %v3104 = vadd.f32 %v2786, %v2999
      %v3105 = vadd.f32 %v2787, %v3000
      %v3106 = vadd.f32 %v2788, %v3001
      %v3107 = vadd.f32 %v2789, %v3002
      %3108 = vst [vmem:[#allocation2] sm:$0xff] %v3003
      %3109 = vst [vmem:[#allocation2 + $0x8] sm:$0xff] %v3004
      %3110 = vst [vmem:[#allocation2 + $0x10] sm:$0xff] %v3005
      %3111 = vst [vmem:[#allocation2 + $0x18] sm:$0xff] %v3006
      %3112 = vst [vmem:[#allocation2 + $0x20] sm:$0xff] %v3007
      %3113 = vst [vmem:[#allocation2 + $0x28] sm:$0xff] %v3008
      %3114 = vst [vmem:[#allocation2 + $0x30] sm:$0xff] %v3009
      %3115 = vst [vmem:[#allocation2 + $0x38] sm:$0xff] %v3010
      %3116 = vst [vmem:[#allocation2 + $0x40] sm:$0xff] %v3011
      %3117 = vst [vmem:[#allocation2 + $0x48] sm:$0xff] %v3012
      %3118 = vst [vmem:[#allocation2 + $0x50] sm:$0xff] %v3013
      %3119 = vst [vmem:[#allocation2 + $0x58] sm:$0xff] %v3014
      %3120 = vst [vmem:[#allocation2 + $0x60] sm:$0xff] %v3015
      %3121 = vst [vmem:[#allocation2 + $0x68] sm:$0xff] %v3016
      %3122 = vst [vmem:[#allocation2 + $0x70] sm:$0xff] %v3017
      %3123 = vst [vmem:[#allocation2 + $0x78] sm:$0xff] %v3018
      %3124 = vst [vmem:[#allocation2 + $0x80] sm:$0xff] %v3019
      %3125 = vst [vmem:[#allocation2 + $0x88] sm:$0xff] %v3020
      %3126 = vst [vmem:[#allocation2 + $0x90] sm:$0xff] %v3021
      %3127 = vst [vmem:[#allocation2 + $0x98] sm:$0xff] %v3022
      %3128 = vst [vmem:[#allocation2 + $0xa0] sm:$0xff] %v3023
      %3129 = vst [vmem:[#allocation2 + $0xa8] sm:$0xff] %v3024
      %3130 = vst [vmem:[#allocation2 + $0xb0] sm:$0xff] %v3025
      %3131 = vst [vmem:[#allocation2 + $0xb8] sm:$0xff] %v3026
      %3132 = vst [vmem:[#allocation2 + $0xc0] sm:$0xff] %v3027
      %3133 = vst [vmem:[#allocation2 + $0xc8] sm:$0xff] %v3028
      %3134 = vst [vmem:[#allocation2 + $0xd0] sm:$0xff] %v3029
      %3135 = vst [vmem:[#allocation2 + $0xd8] sm:$0xff] %v3030
      %3136 = vst [vmem:[#allocation2 + $0xe0] sm:$0xff] %v3031
      %3137 = vst [vmem:[#allocation2 + $0xe8] sm:$0xff] %v3032
      %3138 = vst [vmem:[#allocation2 + $0xf0] sm:$0xff] %v3033
      %3139 = vst [vmem:[#allocation2 + $0xf8] sm:$0xff] %v3034
      %3140 = vst [vmem:[#allocation2 + $0x100] sm:$0xff] %v3035
      %3141 = vst [vmem:[#allocation2 + $0x108] sm:$0xff] %v3036
      %3142 = vst [vmem:[#allocation2 + $0x110] sm:$0xff] %v3037
      %3143 = vst [vmem:[#allocation2 + $0x118] sm:$0xff] %v3038
      %3144 = vst [vmem:[#allocation2 + $0x120] sm:$0xff] %v3039
      %3145 = vst [vmem:[#allocation2 + $0x128] sm:$0xff] %v3040
      %3146 = vst [vmem:[#allocation2 + $0x130] sm:$0xff] %v3041
      %3147 = vst [vmem:[#allocation2 + $0x138] sm:$0xff] %v3042
      %3148 = vst [vmem:[#allocation2 + $0x140] sm:$0xff] %v3043
      %3149 = vst [vmem:[#allocation2 + $0x148] sm:$0xff] %v3044
      %3150 = vst [vmem:[#allocation2 + $0x150] sm:$0xff] %v3045
      %3151 = vst [vmem:[#allocation2 + $0x158] sm:$0xff] %v3046
      %3152 = vst [vmem:[#allocation2 + $0x160] sm:$0xff] %v3047
      %3153 = vst [vmem:[#allocation2 + $0x168] sm:$0xff] %v3048
      %3154 = vst [vmem:[#allocation2 + $0x170] sm:$0xff] %v3049
      %3155 = vst [vmem:[#allocation2 + $0x178] sm:$0xff] %v3050
      %3156 = vst [vmem:[#allocation2 + $0x180] sm:$0xff] %v3051
      %3157 = vst [vmem:[#allocation2 + $0x188] sm:$0xff] %v3052
      %3158 = vst [vmem:[#allocation2 + $0x190] sm:$0xff] %v3053
      %3159 = vst [vmem:[#allocation2 + $0x198] sm:$0xff] %v3054
      %3160 = vst [vmem:[#allocation2 + $0x1a0] sm:$0xff] %v3055
      %3161 = vst [vmem:[#allocation2 + $0x1a8] sm:$0xff] %v3056
      %3162 = vst [vmem:[#allocation2 + $0x1b0] sm:$0xff] %v3057
      %3163 = vst [vmem:[#allocation2 + $0x1b8] sm:$0xff] %v3058
      %3164 = vst [vmem:[#allocation2 + $0x1c0] sm:$0xff] %v3059
      %3165 = vst [vmem:[#allocation2 + $0x1c8] sm:$0xff] %v3060
      %3166 = vst [vmem:[#allocation2 + $0x1d0] sm:$0xff] %v3061
      %3167 = vst [vmem:[#allocation2 + $0x1d8] sm:$0xff] %v3062
      %3168 = vst [vmem:[#allocation2 + $0x1e0] sm:$0xff] %v3063
      %3169 = vst [vmem:[#allocation2 + $0x1e8] sm:$0xff] %v3064
      %3170 = vst [vmem:[#allocation2 + $0x1f0] sm:$0xff] %v3065
      %3171 = vst [vmem:[#allocation2 + $0x1f8] sm:$0xff] %v3066
      %3172 = vst [vmem:[#allocation2 + $0x200] sm:$0xff] %v3067
      %3173 = vst [vmem:[#allocation2 + $0x208] sm:$0xff] %v3068
      %3174 = vst [vmem:[#allocation2 + $0x210] sm:$0xff] %v3069
      %3175 = vst [vmem:[#allocation2 + $0x218] sm:$0xff] %v3070
      %3176 = vst [vmem:[#allocation2 + $0x220] sm:$0xff] %v3071
      %3177 = vst [vmem:[#allocation2 + $0x228] sm:$0xff] %v3072
      %3178 = vst [vmem:[#allocation2 + $0x230] sm:$0xff] %v3073
      %3179 = vst [vmem:[#allocation2 + $0x238] sm:$0xff] %v3074
      %3180 = vst [vmem:[#allocation2 + $0x240] sm:$0xff] %v3075
      %3181 = vst [vmem:[#allocation2 + $0x248] sm:$0xff] %v3076
      %3182 = vst [vmem:[#allocation2 + $0x250] sm:$0xff] %v3077
      %3183 = vst [vmem:[#allocation2 + $0x258] sm:$0xff] %v3078
      %3184 = vst [vmem:[#allocation2 + $0x260] sm:$0xff] %v3079
      %3185 = vst [vmem:[#allocation2 + $0x268] sm:$0xff] %v3080
      %3186 = vst [vmem:[#allocation2 + $0x270] sm:$0xff] %v3081
      %3187 = vst [vmem:[#allocation2 + $0x278] sm:$0xff] %v3082
      %3188 = vst [vmem:[#allocation2 + $0x280] sm:$0xff] %v3083
      %3189 = vst [vmem:[#allocation2 + $0x288] sm:$0xff] %v3084
      %3190 = vst [vmem:[#allocation2 + $0x290] sm:$0xff] %v3085
      %3191 = vst [vmem:[#allocation2 + $0x298] sm:$0xff] %v3086
      %3192 = vst [vmem:[#allocation2 + $0x2a0] sm:$0xff] %v3087
      %3193 = vst [vmem:[#allocation2 + $0x2a8] sm:$0xff] %v3088
      %3194 = vst [vmem:[#allocation2 + $0x2b0] sm:$0xff] %v3089
      %3195 = vst [vmem:[#allocation2 + $0x2b8] sm:$0xff] %v3090
      %3196 = vst [vmem:[#allocation2 + $0x2c0] sm:$0xff] %v3091
      %3197 = vst [vmem:[#allocation2 + $0x2c8] sm:$0xff] %v3092
      %3198 = vst [vmem:[#allocation2 + $0x2d0] sm:$0xff] %v3093
      %3199 = vst [vmem:[#allocation2 + $0x2d8] sm:$0xff] %v3094
      %3200 = vst [vmem:[#allocation2 + $0x2e0] sm:$0xff] %v3095
      %3201 = vst [vmem:[#allocation2 + $0x2e8] sm:$0xff] %v3096
      %3202 = vst [vmem:[#allocation2 + $0x2f0] sm:$0xff] %v3097
      %3203 = vst [vmem:[#allocation2 + $0x2f8] sm:$0xff] %v3098
      %3204 = vst [vmem:[#allocation2 + $0x300] sm:$0xff] %v3099
      %3205 = vst [vmem:[#allocation2 + $0x308] sm:$0xff] %v3100
      %3206 = vst [vmem:[#allocation2 + $0x310] sm:$0xff] %v3101
      %3207 = vst [vmem:[#allocation2 + $0x318] sm:$0xff] %v3102
      %3208 = vst [vmem:[#allocation2 + $0x320] sm:$0xff] %v3103
      %3209 = vst [vmem:[#allocation2 + $0x328] sm:$0xff] %v3104
      %3210 = vst [vmem:[#allocation2 + $0x330] sm:$0xff] %v3105
      %3211 = vst [vmem:[#allocation2 + $0x338] sm:$0xff] %v3106
      %3212 = vst [vmem:[#allocation2 + $0x340] sm:$0x3f] %v3107
      %s3213 = sld [smem:[#allocation9 + %s346]]
      %v3214 = vld [vmem:[#allocation2] ss:$2 sm:$0xff]
      %s3215 = scalar_lea.vmem [#allocation2], 16
      %v3216 = vld [vmem:[%s3215] ss:$2 sm:$0x3f]
      %s3217 = scalar_lea.vmem [#allocation2], 1
      %v3218 = vld [vmem:[%s3217] ss:$2 sm:$0xff]
      %s3219 = scalar_lea.vmem [#allocation2], 17
      %v3220 = vld [vmem:[%s3219] ss:$2 sm:$0x3f]
      %v3221 = vmax.f32 %v3214, %v3218
      %v3222 = vmax.f32 %v3216, %v3220
      %s3223 = scalar_lea.vmem [#allocation2], 30
      %v3224 = vld [vmem:[%s3223] ss:$2 sm:$0xff]
      %s3225 = scalar_lea.vmem [#allocation2], 46
      %v3226 = vld [vmem:[%s3225] ss:$2 sm:$0x3f]
      %s3227 = scalar_lea.vmem [#allocation2], 31
      %v3228 = vld [vmem:[%s3227] ss:$2 sm:$0xff]
      %s3229 = scalar_lea.vmem [#allocation2], 47
      %v3230 = vld [vmem:[%s3229] ss:$2 sm:$0x3f]
      %v3231 = vmax.f32 %v3224, %v3228
      %v3232 = vmax.f32 %v3226, %v3230
      %v3233 = vmax.f32 %v3221, %v3231
      %v3234 = vmax.f32 %v3222, %v3232
      %v3235 = vstv %s3213
      %v3236 = vadd.f32 %v3233, %v3235
      %v3237 = vadd.f32 %v3234, %v3235
      %v3238 = vmax.f32 %v3236, 0.0
      %v3239 = vmax.f32 %v3237, 0.0
      %s3240 = smul.u32 %s346, 224
      %s3241 = scalar_lea.vmem [#allocation3], %s3240
      %3242 = vst [vmem:[%s3241] sm:$0xff] %v3238
      %3243 = vst [vmem:[%s3241 + $0x8] sm:$0x3f] %v3239
      %s3244 = scalar_lea.vmem [#allocation2], 60
      %v3245 = vld [vmem:[%s3244] ss:$2 sm:$0xff]
      %s3246 = scalar_lea.vmem [#allocation2], 76
      %v3247 = vld [vmem:[%s3246] ss:$2 sm:$0x3f]
      %s3248 = scalar_lea.vmem [#allocation2], 61
      %v3249 = vld [vmem:[%s3248] ss:$2 sm:$0xff]
      %s3250 = scalar_lea.vmem [#allocation2], 77
      %v3251 = vld [vmem:[%s3250] ss:$2 sm:$0x3f]
      %v3252 = vmax.f32 %v3245, %v3249
      %v3253 = vmax.f32 %v3247, %v3251
      %s3254 = scalar_lea.vmem [#allocation2], 90
      %v3255 = vld [vmem:[%s3254] ss:$2 sm:$0xff]
      %s3256 = scalar_lea.vmem [#allocation2], 106
      %v3257 = vld [vmem:[%s3256] ss:$2 sm:$0x3f]
      %s3258 = scalar_lea.vmem [#allocation2], 91
      %v3259 = vld [vmem:[%s3258] ss:$2 sm:$0xff]
      %s3260 = scalar_lea.vmem [#allocation2], 107
      %v3261 = vld [vmem:[%s3260] ss:$2 sm:$0x3f]
      %v3262 = vmax.f32 %v3255, %v3259
      %v3263 = vmax.f32 %v3257, %v3261
      %v3264 = vmax.f32 %v3252, %v3262
      %v3265 = vmax.f32 %v3253, %v3263
      %v3266 = vadd.f32 %v3264, %v3235
      %v3267 = vadd.f32 %v3265, %v3235
      %v3268 = vmax.f32 %v3266, 0.0
      %v3269 = vmax.f32 %v3267, 0.0
      %3270 = vst [vmem:[%s3241 + $0x10] sm:$0xff] %v3268
      %3271 = vst [vmem:[%s3241 + $0x18] sm:$0x3f] %v3269
      %s3272 = scalar_lea.vmem [#allocation2], 120
      %v3273 = vld [vmem:[%s3272] ss:$2 sm:$0xff]
      %s3274 = scalar_lea.vmem [#allocation2], 136
      %v3275 = vld [vmem:[%s3274] ss:$2 sm:$0x3f]
      %s3276 = scalar_lea.vmem [#allocation2], 121
      %v3277 = vld [vmem:[%s3276] ss:$2 sm:$0xff]
      %s3278 = scalar_lea.vmem [#allocation2], 137
      %v3279 = vld [vmem:[%s3278] ss:$2 sm:$0x3f]
      %v3280 = vmax.f32 %v3273, %v3277
      %v3281 = vmax.f32 %v3275, %v3279
      %s3282 = scalar_lea.vmem [#allocation2], 150
      %v3283 = vld [vmem:[%s3282] ss:$2 sm:$0xff]
      %s3284 = scalar_lea.vmem [#allocation2], 166
      %v3285 = vld [vmem:[%s3284] ss:$2 sm:$0x3f]
      %s3286 = scalar_lea.vmem [#allocation2], 151
      %v3287 = vld [vmem:[%s3286] ss:$2 sm:$0xff]
      %s3288 = scalar_lea.vmem [#allocation2], 167
      %v3289 = vld [vmem:[%s3288] ss:$2 sm:$0x3f]
      %v3290 = vmax.f32 %v3283, %v3287
      %v3291 = vmax.f32 %v3285, %v3289
      %v3292 = vmax.f32 %v3280, %v3290
      %v3293 = vmax.f32 %v3281, %v3291
      %v3294 = vadd.f32 %v3292, %v3235
      %v3295 = vadd.f32 %v3293, %v3235
      %v3296 = vmax.f32 %v3294, 0.0
      %v3297 = vmax.f32 %v3295, 0.0
      %3298 = vst [vmem:[%s3241 + $0x20] sm:$0xff] %v3296
      %3299 = vst [vmem:[%s3241 + $0x28] sm:$0x3f] %v3297
      %s3300 = scalar_lea.vmem [#allocation2], 180
      %v3301 = vld [vmem:[%s3300] ss:$2 sm:$0xff]
      %s3302 = scalar_lea.vmem [#allocation2], 196
      %v3303 = vld [vmem:[%s3302] ss:$2 sm:$0x3f]
      %s3304 = scalar_lea.vmem [#allocation2], 181
      %v3305 = vld [vmem:[%s3304] ss:$2 sm:$0xff]
      %s3306 = scalar_lea.vmem [#allocation2], 197
      %v3307 = vld [vmem:[%s3306] ss:$2 sm:$0x3f]
      %v3308 = vmax.f32 %v3301, %v3305
      %v3309 = vmax.f32 %v3303, %v3307
      %s3310 = scalar_lea.vmem [#allocation2], 210
      %v3311 = vld [vmem:[%s3310] ss:$2 sm:$0xff]
      %s3312 = scalar_lea.vmem [#allocation2], 226
      %v3313 = vld [vmem:[%s3312] ss:$2 sm:$0x3f]
      %s3314 = scalar_lea.vmem [#allocation2], 211
      %v3315 = vld [vmem:[%s3314] ss:$2 sm:$0xff]
      %s3316 = scalar_lea.vmem [#allocation2], 227
      %v3317 = vld [vmem:[%s3316] ss:$2 sm:$0x3f]
      %v3318 = vmax.f32 %v3311, %v3315
      %v3319 = vmax.f32 %v3313, %v3317
      %v3320 = vmax.f32 %v3308, %v3318
      %v3321 = vmax.f32 %v3309, %v3319
      %v3322 = vadd.f32 %v3320, %v3235
      %v3323 = vadd.f32 %v3321, %v3235
      %v3324 = vmax.f32 %v3322, 0.0
      %v3325 = vmax.f32 %v3323, 0.0
      %3326 = vst [vmem:[%s3241 + $0x30] sm:$0xff] %v3324
      %3327 = vst [vmem:[%s3241 + $0x38] sm:$0x3f] %v3325
      %s3328 = scalar_lea.vmem [#allocation2], 240
      %v3329 = vld [vmem:[%s3328] ss:$2 sm:$0xff]
      %s3330 = scalar_lea.vmem [#allocation2], 256
      %v3331 = vld [vmem:[%s3330] ss:$2 sm:$0x3f]
      %s3332 = scalar_lea.vmem [#allocation2], 241
      %v3333 = vld [vmem:[%s3332] ss:$2 sm:$0xff]
      %s3334 = scalar_lea.vmem [#allocation2], 257
      %v3335 = vld [vmem:[%s3334] ss:$2 sm:$0x3f]
      %v3336 = vmax.f32 %v3329, %v3333
      %v3337 = vmax.f32 %v3331, %v3335
      %s3338 = scalar_lea.vmem [#allocation2], 270
      %v3339 = vld [vmem:[%s3338] ss:$2 sm:$0xff]
      %s3340 = scalar_lea.vmem [#allocation2], 286
      %v3341 = vld [vmem:[%s3340] ss:$2 sm:$0x3f]
      %s3342 = scalar_lea.vmem [#allocation2], 271
      %v3343 = vld [vmem:[%s3342] ss:$2 sm:$0xff]
      %s3344 = scalar_lea.vmem [#allocation2], 287
      %v3345 = vld [vmem:[%s3344] ss:$2 sm:$0x3f]
      %v3346 = vmax.f32 %v3339, %v3343
      %v3347 = vmax.f32 %v3341, %v3345
      %v3348 = vmax.f32 %v3336, %v3346
      %v3349 = vmax.f32 %v3337, %v3347
      %v3350 = vadd.f32 %v3348, %v3235
      %v3351 = vadd.f32 %v3349, %v3235
      %v3352 = vmax.f32 %v3350, 0.0
      %v3353 = vmax.f32 %v3351, 0.0
      %3354 = vst [vmem:[%s3241 + $0x40] sm:$0xff] %v3352
      %3355 = vst [vmem:[%s3241 + $0x48] sm:$0x3f] %v3353
      %s3356 = scalar_lea.vmem [#allocation2], 300
      %v3357 = vld [vmem:[%s3356] ss:$2 sm:$0xff]
      %s3358 = scalar_lea.vmem [#allocation2], 316
      %v3359 = vld [vmem:[%s3358] ss:$2 sm:$0x3f]
      %s3360 = scalar_lea.vmem [#allocation2], 301
      %v3361 = vld [vmem:[%s3360] ss:$2 sm:$0xff]
      %s3362 = scalar_lea.vmem [#allocation2], 317
      %v3363 = vld [vmem:[%s3362] ss:$2 sm:$0x3f]
      %v3364 = vmax.f32 %v3357, %v3361
      %v3365 = vmax.f32 %v3359, %v3363
      %s3366 = scalar_lea.vmem [#allocation2], 330
      %v3367 = vld [vmem:[%s3366] ss:$2 sm:$0xff]
      %s3368 = scalar_lea.vmem [#allocation2], 346
      %v3369 = vld [vmem:[%s3368] ss:$2 sm:$0x3f]
      %s3370 = scalar_lea.vmem [#allocation2], 331
      %v3371 = vld [vmem:[%s3370] ss:$2 sm:$0xff]
      %s3372 = scalar_lea.vmem [#allocation2], 347
      %v3373 = vld [vmem:[%s3372] ss:$2 sm:$0x3f]
      %v3374 = vmax.f32 %v3367, %v3371
      %v3375 = vmax.f32 %v3369, %v3373
      %v3376 = vmax.f32 %v3364, %v3374
      %v3377 = vmax.f32 %v3365, %v3375
      %v3378 = vadd.f32 %v3376, %v3235
      %v3379 = vadd.f32 %v3377, %v3235
      %v3380 = vmax.f32 %v3378, 0.0
      %v3381 = vmax.f32 %v3379, 0.0
      %3382 = vst [vmem:[%s3241 + $0x50] sm:$0xff] %v3380
      %3383 = vst [vmem:[%s3241 + $0x58] sm:$0x3f] %v3381
      %s3384 = scalar_lea.vmem [#allocation2], 360
      %v3385 = vld [vmem:[%s3384] ss:$2 sm:$0xff]
      %s3386 = scalar_lea.vmem [#allocation2], 376
      %v3387 = vld [vmem:[%s3386] ss:$2 sm:$0x3f]
      %s3388 = scalar_lea.vmem [#allocation2], 361
      %v3389 = vld [vmem:[%s3388] ss:$2 sm:$0xff]
      %s3390 = scalar_lea.vmem [#allocation2], 377
      %v3391 = vld [vmem:[%s3390] ss:$2 sm:$0x3f]
      %v3392 = vmax.f32 %v3385, %v3389
      %v3393 = vmax.f32 %v3387, %v3391
      %s3394 = scalar_lea.vmem [#allocation2], 390
      %v3395 = vld [vmem:[%s3394] ss:$2 sm:$0xff]
      %s3396 = scalar_lea.vmem [#allocation2], 406
      %v3397 = vld [vmem:[%s3396] ss:$2 sm:$0x3f]
      %s3398 = scalar_lea.vmem [#allocation2], 391
      %v3399 = vld [vmem:[%s3398] ss:$2 sm:$0xff]
      %s3400 = scalar_lea.vmem [#allocation2], 407
      %v3401 = vld [vmem:[%s3400] ss:$2 sm:$0x3f]
      %v3402 = vmax.f32 %v3395, %v3399
      %v3403 = vmax.f32 %v3397, %v3401
      %v3404 = vmax.f32 %v3392, %v3402
      %v3405 = vmax.f32 %v3393, %v3403
      %v3406 = vadd.f32 %v3404, %v3235
      %v3407 = vadd.f32 %v3405, %v3235
      %v3408 = vmax.f32 %v3406, 0.0
      %v3409 = vmax.f32 %v3407, 0.0
      %3410 = vst [vmem:[%s3241 + $0x60] sm:$0xff] %v3408
      %3411 = vst [vmem:[%s3241 + $0x68] sm:$0x3f] %v3409
      %s3412 = scalar_lea.vmem [#allocation2], 420
      %v3413 = vld [vmem:[%s3412] ss:$2 sm:$0xff]
      %s3414 = scalar_lea.vmem [#allocation2], 436
      %v3415 = vld [vmem:[%s3414] ss:$2 sm:$0x3f]
      %s3416 = scalar_lea.vmem [#allocation2], 421
      %v3417 = vld [vmem:[%s3416] ss:$2 sm:$0xff]
      %s3418 = scalar_lea.vmem [#allocation2], 437
      %v3419 = vld [vmem:[%s3418] ss:$2 sm:$0x3f]
      %v3420 = vmax.f32 %v3413, %v3417
      %v3421 = vmax.f32 %v3415, %v3419
      %s3422 = scalar_lea.vmem [#allocation2], 450
      %v3423 = vld [vmem:[%s3422] ss:$2 sm:$0xff]
      %s3424 = scalar_lea.vmem [#allocation2], 466
      %v3425 = vld [vmem:[%s3424] ss:$2 sm:$0x3f]
      %s3426 = scalar_lea.vmem [#allocation2], 451
      %v3427 = vld [vmem:[%s3426] ss:$2 sm:$0xff]
      %s3428 = scalar_lea.vmem [#allocation2], 467
      %v3429 = vld [vmem:[%s3428] ss:$2 sm:$0x3f]
      %v3430 = vmax.f32 %v3423, %v3427
      %v3431 = vmax.f32 %v3425, %v3429
      %v3432 = vmax.f32 %v3420, %v3430
      %v3433 = vmax.f32 %v3421, %v3431
      %v3434 = vadd.f32 %v3432, %v3235
      %v3435 = vadd.f32 %v3433, %v3235
      %v3436 = vmax.f32 %v3434, 0.0
      %v3437 = vmax.f32 %v3435, 0.0
      %3438 = vst [vmem:[%s3241 + $0x70] sm:$0xff] %v3436
      %3439 = vst [vmem:[%s3241 + $0x78] sm:$0x3f] %v3437
      %s3440 = scalar_lea.vmem [#allocation2], 480
      %v3441 = vld [vmem:[%s3440] ss:$2 sm:$0xff]
      %s3442 = scalar_lea.vmem [#allocation2], 496
      %v3443 = vld [vmem:[%s3442] ss:$2 sm:$0x3f]
      %s3444 = scalar_lea.vmem [#allocation2], 481
      %v3445 = vld [vmem:[%s3444] ss:$2 sm:$0xff]
      %s3446 = scalar_lea.vmem [#allocation2], 497
      %v3447 = vld [vmem:[%s3446] ss:$2 sm:$0x3f]
      %v3448 = vmax.f32 %v3441, %v3445
      %v3449 = vmax.f32 %v3443, %v3447
      %s3450 = scalar_lea.vmem [#allocation2], 510
      %v3451 = vld [vmem:[%s3450] ss:$2 sm:$0xff]
      %s3452 = scalar_lea.vmem [#allocation2], 526
      %v3453 = vld [vmem:[%s3452] ss:$2 sm:$0x3f]
      %s3454 = scalar_lea.vmem [#allocation2], 511
      %v3455 = vld [vmem:[%s3454] ss:$2 sm:$0xff]
      %s3456 = scalar_lea.vmem [#allocation2], 527
      %v3457 = vld [vmem:[%s3456] ss:$2 sm:$0x3f]
      %v3458 = vmax.f32 %v3451, %v3455
      %v3459 = vmax.f32 %v3453, %v3457
      %v3460 = vmax.f32 %v3448, %v3458
      %v3461 = vmax.f32 %v3449, %v3459
      %v3462 = vadd.f32 %v3460, %v3235
      %v3463 = vadd.f32 %v3461, %v3235
      %v3464 = vmax.f32 %v3462, 0.0
      %v3465 = vmax.f32 %v3463, 0.0
      %3466 = vst [vmem:[%s3241 + $0x80] sm:$0xff] %v3464
      %3467 = vst [vmem:[%s3241 + $0x88] sm:$0x3f] %v3465
      %s3468 = scalar_lea.vmem [#allocation2], 540
      %v3469 = vld [vmem:[%s3468] ss:$2 sm:$0xff]
      %s3470 = scalar_lea.vmem [#allocation2], 556
      %v3471 = vld [vmem:[%s3470] ss:$2 sm:$0x3f]
      %s3472 = scalar_lea.vmem [#allocation2], 541
      %v3473 = vld [vmem:[%s3472] ss:$2 sm:$0xff]
      %s3474 = scalar_lea.vmem [#allocation2], 557
      %v3475 = vld [vmem:[%s3474] ss:$2 sm:$0x3f]
      %v3476 = vmax.f32 %v3469, %v3473
      %v3477 = vmax.f32 %v3471, %v3475
      %s3478 = scalar_lea.vmem [#allocation2], 570
      %v3479 = vld [vmem:[%s3478] ss:$2 sm:$0xff]
      %s3480 = scalar_lea.vmem [#allocation2], 586
      %v3481 = vld [vmem:[%s3480] ss:$2 sm:$0x3f]
      %s3482 = scalar_lea.vmem [#allocation2], 571
      %v3483 = vld [vmem:[%s3482] ss:$2 sm:$0xff]
      %s3484 = scalar_lea.vmem [#allocation2], 587
      %v3485 = vld [vmem:[%s3484] ss:$2 sm:$0x3f]
      %v3486 = vmax.f32 %v3479, %v3483
      %v3487 = vmax.f32 %v3481, %v3485
      %v3488 = vmax.f32 %v3476, %v3486
      %v3489 = vmax.f32 %v3477, %v3487
      %v3490 = vadd.f32 %v3488, %v3235
      %v3491 = vadd.f32 %v3489, %v3235
      %v3492 = vmax.f32 %v3490, 0.0
      %v3493 = vmax.f32 %v3491, 0.0
      %3494 = vst [vmem:[%s3241 + $0x90] sm:$0xff] %v3492
      %3495 = vst [vmem:[%s3241 + $0x98] sm:$0x3f] %v3493
      %s3496 = scalar_lea.vmem [#allocation2], 600
      %v3497 = vld [vmem:[%s3496] ss:$2 sm:$0xff]
      %s3498 = scalar_lea.vmem [#allocation2], 616
      %v3499 = vld [vmem:[%s3498] ss:$2 sm:$0x3f]
      %s3500 = scalar_lea.vmem [#allocation2], 601
      %v3501 = vld [vmem:[%s3500] ss:$2 sm:$0xff]
      %s3502 = scalar_lea.vmem [#allocation2], 617
      %v3503 = vld [vmem:[%s3502] ss:$2 sm:$0x3f]
      %v3504 = vmax.f32 %v3497, %v3501
      %v3505 = vmax.f32 %v3499, %v3503
      %s3506 = scalar_lea.vmem [#allocation2], 630
      %v3507 = vld [vmem:[%s3506] ss:$2 sm:$0xff]
      %s3508 = scalar_lea.vmem [#allocation2], 646
      %v3509 = vld [vmem:[%s3508] ss:$2 sm:$0x3f]
      %s3510 = scalar_lea.vmem [#allocation2], 631
      %v3511 = vld [vmem:[%s3510] ss:$2 sm:$0xff]
      %s3512 = scalar_lea.vmem [#allocation2], 647
      %v3513 = vld [vmem:[%s3512] ss:$2 sm:$0x3f]
      %v3514 = vmax.f32 %v3507, %v3511
      %v3515 = vmax.f32 %v3509, %v3513
      %v3516 = vmax.f32 %v3504, %v3514
      %v3517 = vmax.f32 %v3505, %v3515
      %v3518 = vadd.f32 %v3516, %v3235
      %v3519 = vadd.f32 %v3517, %v3235
      %v3520 = vmax.f32 %v3518, 0.0
      %v3521 = vmax.f32 %v3519, 0.0
      %3522 = vst [vmem:[%s3241 + $0xa0] sm:$0xff] %v3520
      %3523 = vst [vmem:[%s3241 + $0xa8] sm:$0x3f] %v3521
      %s3524 = scalar_lea.vmem [#allocation2], 660
      %v3525 = vld [vmem:[%s3524] ss:$2 sm:$0xff]
      %s3526 = scalar_lea.vmem [#allocation2], 676
      %v3527 = vld [vmem:[%s3526] ss:$2 sm:$0x3f]
      %s3528 = scalar_lea.vmem [#allocation2], 661
      %v3529 = vld [vmem:[%s3528] ss:$2 sm:$0xff]
      %s3530 = scalar_lea.vmem [#allocation2], 677
      %v3531 = vld [vmem:[%s3530] ss:$2 sm:$0x3f]
      %v3532 = vmax.f32 %v3525, %v3529
      %v3533 = vmax.f32 %v3527, %v3531
      %s3534 = scalar_lea.vmem [#allocation2], 690
      %v3535 = vld [vmem:[%s3534] ss:$2 sm:$0xff]
      %s3536 = scalar_lea.vmem [#allocation2], 706
      %v3537 = vld [vmem:[%s3536] ss:$2 sm:$0x3f]
      %s3538 = scalar_lea.vmem [#allocation2], 691
      %v3539 = vld [vmem:[%s3538] ss:$2 sm:$0xff]
      %s3540 = scalar_lea.vmem [#allocation2], 707
      %v3541 = vld [vmem:[%s3540] ss:$2 sm:$0x3f]
      %v3542 = vmax.f32 %v3535, %v3539
      %v3543 = vmax.f32 %v3537, %v3541
      %v3544 = vmax.f32 %v3532, %v3542
      %v3545 = vmax.f32 %v3533, %v3543
      %v3546 = vadd.f32 %v3544, %v3235
      %v3547 = vadd.f32 %v3545, %v3235
      %v3548 = vmax.f32 %v3546, 0.0
      %v3549 = vmax.f32 %v3547, 0.0
      %3550 = vst [vmem:[%s3241 + $0xb0] sm:$0xff] %v3548
      %3551 = vst [vmem:[%s3241 + $0xb8] sm:$0x3f] %v3549
      %s3552 = scalar_lea.vmem [#allocation2], 720
      %v3553 = vld [vmem:[%s3552] ss:$2 sm:$0xff]
      %s3554 = scalar_lea.vmem [#allocation2], 736
      %v3555 = vld [vmem:[%s3554] ss:$2 sm:$0x3f]
      %s3556 = scalar_lea.vmem [#allocation2], 721
      %v3557 = vld [vmem:[%s3556] ss:$2 sm:$0xff]
      %s3558 = scalar_lea.vmem [#allocation2], 737
      %v3559 = vld [vmem:[%s3558] ss:$2 sm:$0x3f]
      %v3560 = vmax.f32 %v3553, %v3557
      %v3561 = vmax.f32 %v3555, %v3559
      %s3562 = scalar_lea.vmem [#allocation2], 750
      %v3563 = vld [vmem:[%s3562] ss:$2 sm:$0xff]
      %s3564 = scalar_lea.vmem [#allocation2], 766
      %v3565 = vld [vmem:[%s3564] ss:$2 sm:$0x3f]
      %s3566 = scalar_lea.vmem [#allocation2], 751
      %v3567 = vld [vmem:[%s3566] ss:$2 sm:$0xff]
      %s3568 = scalar_lea.vmem [#allocation2], 767
      %v3569 = vld [vmem:[%s3568] ss:$2 sm:$0x3f]
      %v3570 = vmax.f32 %v3563, %v3567
      %v3571 = vmax.f32 %v3565, %v3569
      %v3572 = vmax.f32 %v3560, %v3570
      %v3573 = vmax.f32 %v3561, %v3571
      %v3574 = vadd.f32 %v3572, %v3235
      %v3575 = vadd.f32 %v3573, %v3235
      %v3576 = vmax.f32 %v3574, 0.0
      %v3577 = vmax.f32 %v3575, 0.0
      %3578 = vst [vmem:[%s3241 + $0xc0] sm:$0xff] %v3576
      %3579 = vst [vmem:[%s3241 + $0xc8] sm:$0x3f] %v3577
      %s3580 = scalar_lea.vmem [#allocation2], 780
      %v3581 = vld [vmem:[%s3580] ss:$2 sm:$0xff]
      %s3582 = scalar_lea.vmem [#allocation2], 796
      %v3583 = vld [vmem:[%s3582] ss:$2 sm:$0x3f]
      %s3584 = scalar_lea.vmem [#allocation2], 781
      %v3585 = vld [vmem:[%s3584] ss:$2 sm:$0xff]
      %s3586 = scalar_lea.vmem [#allocation2], 797
      %v3587 = vld [vmem:[%s3586] ss:$2 sm:$0x3f]
      %v3588 = vmax.f32 %v3581, %v3585
      %v3589 = vmax.f32 %v3583, %v3587
      %s3590 = scalar_lea.vmem [#allocation2], 810
      %v3591 = vld [vmem:[%s3590] ss:$2 sm:$0xff]
      %s3592 = scalar_lea.vmem [#allocation2], 826
      %v3593 = vld [vmem:[%s3592] ss:$2 sm:$0x3f]
      %s3594 = scalar_lea.vmem [#allocation2], 811
      %v3595 = vld [vmem:[%s3594] ss:$2 sm:$0xff]
      %s3596 = scalar_lea.vmem [#allocation2], 827
      %v3597 = vld [vmem:[%s3596] ss:$2 sm:$0x3f]
      %v3598 = vmax.f32 %v3591, %v3595
      %v3599 = vmax.f32 %v3593, %v3597
      %v3600 = vmax.f32 %v3588, %v3598
      %v3601 = vmax.f32 %v3589, %v3599
      %v3602 = vadd.f32 %v3600, %v3235
      %v3603 = vadd.f32 %v3601, %v3235
      %v3604 = vmax.f32 %v3602, 0.0
      %v3605 = vmax.f32 %v3603, 0.0
      %3606 = vst [vmem:[%s3241 + $0xd0] sm:$0xff] %v3604
      %3607 = vst [vmem:[%s3241 + $0xd8] sm:$0x3f] %v3605
    $region66: #{network_forward.1} parent=1 // loop_footer
      %s350 = sadd.s32 1, %s346
    $region67: #{network_forward.1} parent=1 // loop_footer_branch
      %345 = sbr.rel target = $region63
    $region68: #{network_forward.1} parent=1 // loop_exit
      _
    loop: start=0, step=1, limit=16
    $region69: #{network_forward.1} parent=1 // loop_pre_header
      _
    $region70: #{network_forward.1} parent=1 // loop_header
      %s3609 = sphi 0, %s3613
      %p3610 = scmp.ge.s32.totalorder %s3609, 16
    $region71: #{network_forward.1} parent=1 // loop_header_branch
      %3612 = sbr.rel (%p3610) target = $region75
    $region72: #{network_forward.1} parent=1 // loop_body
      %3614 = vst [vmem:[#allocation4] sm:$0xff] 0.0
      %3615 = vst [vmem:[#allocation4 + $0x8] sm:$0xff] 0.0
      %3616 = vst [vmem:[#allocation4 + $0x10] sm:$0xff] 0.0
      %3617 = vst [vmem:[#allocation4 + $0x18] sm:$0xff] 0.0
      %3618 = vst [vmem:[#allocation4 + $0x20] sm:$0xff] 0.0
      %3619 = vst [vmem:[#allocation4 + $0x28] sm:$0xff] 0.0
      %3620 = vst [vmem:[#allocation4 + $0x30] sm:$0xff] 0.0
      %3621 = vst [vmem:[#allocation4 + $0x38] sm:$0xff] 0.0
      %3622 = vst [vmem:[#allocation4 + $0x40] sm:$0xff] 0.0
      %3623 = vst [vmem:[#allocation4 + $0x48] sm:$0xff] 0.0
      %3624 = vst [vmem:[#allocation4 + $0x50] sm:$0xff] 0.0
      %3625 = vst [vmem:[#allocation4 + $0x58] sm:$0xff] 0.0
      %3626 = vst [vmem:[#allocation4 + $0x60] sm:$0xff] 0.0
      %3627 = vst [vmem:[#allocation4 + $0x68] sm:$0xff] 0.0
      %3628 = vst [vmem:[#allocation4 + $0x70] sm:$0xff] 0.0
      %3629 = vst [vmem:[#allocation4 + $0x78] sm:$0xff] 0.0
      %3630 = vst [vmem:[#allocation4 + $0x80] sm:$0xff] 0.0
      %3631 = vst [vmem:[#allocation4 + $0x88] sm:$0xff] 0.0
      %3632 = vst [vmem:[#allocation4 + $0x90] sm:$0xff] 0.0
      %3633 = vst [vmem:[#allocation4 + $0x98] sm:$0xff] 0.0
      %3634 = vst [vmem:[#allocation4 + $0xa0] sm:$0xff] 0.0
      %3635 = vst [vmem:[#allocation4 + $0xa8] sm:$0xff] 0.0
      %3636 = vst [vmem:[#allocation4 + $0xb0] sm:$0xff] 0.0
      %3637 = vst [vmem:[#allocation4 + $0xb8] sm:$0xf] 0.0
      loop: start=0, step=1, limit=8
      $region76: #{network_forward.1} parent=72 // loop_pre_header
        _
      $region77: #{network_forward.1} parent=72 // loop_header
        %s3639 = sphi 0, %s3643
        %p3640 = scmp.ge.s32.totalorder %s3639, 8
      $region78: #{network_forward.1} parent=72 // loop_header_branch
        %3642 = sbr.rel (%p3640) target = $region82
      $region79: #{network_forward.1} parent=72 // loop_body
        %s3644 = smul.u32 %s3639, 9
        %s3645 = sshra.s32 %s3644, 7
        %s3646 = sand.u32 %s3644, 127
        %s3647 = sadd.s32 %s3645, %s3609
        %s3648 = smul.u32 %s3647, 128
        %s3649 = sshra.s32 %s3644, 7
        %s3650 = sand.u32 %s3644, 127
        %s3651 = sadd.s32 %s3648, %s3650
        %s3652 = sld [smem:[#allocation11 + %s3651]]
        %s3653 = smul.u32 %s3639, 224
        %s3654 = scalar_lea.vmem [#allocation3], %s3653
        %v3655 = vld [vmem:[%s3654] sm:$0xff]
        %v3656 = vld [vmem:[%s3654 + $0x8] sm:$0xff]
        %v3657 = vld [vmem:[%s3654 + $0x10] sm:$0xff]
        %v3658 = vld [vmem:[%s3654 + $0x18] sm:$0xff]
        %v3659 = vld [vmem:[%s3654 + $0x20] sm:$0xff]
        %v3660 = vld [vmem:[%s3654 + $0x28] sm:$0xff]
        %v3661 = vld [vmem:[%s3654 + $0x30] sm:$0xff]
        %v3662 = vld [vmem:[%s3654 + $0x38] sm:$0xff]
        %v3663 = vld [vmem:[%s3654 + $0x40] sm:$0xff]
        %v3664 = vld [vmem:[%s3654 + $0x48] sm:$0xff]
        %v3665 = vld [vmem:[%s3654 + $0x50] sm:$0xff]
        %v3666 = vld [vmem:[%s3654 + $0x58] sm:$0xff]
        %v3667 = vld [vmem:[%s3654 + $0x60] sm:$0xff]
        %v3668 = vld [vmem:[%s3654 + $0x68] sm:$0xff]
        %v3669 = vld [vmem:[%s3654 + $0x70] sm:$0xff]
        %v3670 = vld [vmem:[%s3654 + $0x78] sm:$0xff]
        %v3671 = vld [vmem:[%s3654 + $0x80] sm:$0xff]
        %v3672 = vld [vmem:[%s3654 + $0x88] sm:$0xff]
        %v3673 = vld [vmem:[%s3654 + $0x90] sm:$0xff]
        %v3674 = vld [vmem:[%s3654 + $0x98] sm:$0xff]
        %v3675 = vld [vmem:[%s3654 + $0xa0] sm:$0xff]
        %v3676 = vld [vmem:[%s3654 + $0xa8] sm:$0xff]
        %v3677 = vld [vmem:[%s3654 + $0xb0] sm:$0xff]
        %v3678 = vld [vmem:[%s3654 + $0xb8] sm:$0xf]
        %v3679 = vstv %s3652
        %v3680 = vmul.f32 %v3679, %v3655
        %v3681 = vmul.f32 %v3679, %v3656
        %v3682 = vmul.f32 %v3679, %v3657
        %v3683 = vmul.f32 %v3679, %v3658
        %v3684 = vmul.f32 %v3679, %v3659
        %v3685 = vmul.f32 %v3679, %v3660
        %v3686 = vmul.f32 %v3679, %v3661
        %v3687 = vmul.f32 %v3679, %v3662
        %v3688 = vmul.f32 %v3679, %v3663
        %v3689 = vmul.f32 %v3679, %v3664
        %v3690 = vmul.f32 %v3679, %v3665
        %v3691 = vmul.f32 %v3679, %v3666
        %v3692 = vmul.f32 %v3679, %v3667
        %v3693 = vmul.f32 %v3679, %v3668
        %v3694 = vmul.f32 %v3679, %v3669
        %v3695 = vmul.f32 %v3679, %v3670
        %v3696 = vmul.f32 %v3679, %v3671
        %v3697 = vmul.f32 %v3679, %v3672
        %v3698 = vmul.f32 %v3679, %v3673
        %v3699 = vmul.f32 %v3679, %v3674
        %v3700 = vmul.f32 %v3679, %v3675
        %v3701 = vmul.f32 %v3679, %v3676
        %v3702 = vmul.f32 %v3679, %v3677
        %v3703 = vmul.f32 %v3679, %v3678
        %s3704 = sadd.s32 %s3644, 1
        %s3705 = sshra.s32 %s3704, 7
        %s3706 = sand.u32 %s3704, 127
        %s3707 = sadd.s32 %s3705, %s3609
        %s3708 = smul.u32 %s3707, 128
        %s3709 = sshra.s32 %s3704, 7
        %s3710 = sand.u32 %s3704, 127
        %s3711 = sadd.s32 %s3708, %s3710
        %s3712 = sld [smem:[#allocation11 + %s3711]]
        %v3713 = vld [vmem:[%s3654 + $0x1] sm:$0xff]
        %v3714 = vld [vmem:[%s3654 + $0x9] sm:$0xff]
        %v3715 = vld [vmem:[%s3654 + $0x11] sm:$0xff]
        %v3716 = vld [vmem:[%s3654 + $0x19] sm:$0xff]
        %v3717 = vld [vmem:[%s3654 + $0x21] sm:$0xff]
        %v3718 = vld [vmem:[%s3654 + $0x29] sm:$0xff]
        %v3719 = vld [vmem:[%s3654 + $0x31] sm:$0xff]
        %v3720 = vld [vmem:[%s3654 + $0x39] sm:$0xff]
        %v3721 = vld [vmem:[%s3654 + $0x41] sm:$0xff]
        %v3722 = vld [vmem:[%s3654 + $0x49] sm:$0xff]
        %v3723 = vld [vmem:[%s3654 + $0x51] sm:$0xff]
        %v3724 = vld [vmem:[%s3654 + $0x59] sm:$0xff]
        %v3725 = vld [vmem:[%s3654 + $0x61] sm:$0xff]
        %v3726 = vld [vmem:[%s3654 + $0x69] sm:$0xff]
        %v3727 = vld [vmem:[%s3654 + $0x71] sm:$0xff]
        %v3728 = vld [vmem:[%s3654 + $0x79] sm:$0xff]
        %v3729 = vld [vmem:[%s3654 + $0x81] sm:$0xff]
        %v3730 = vld [vmem:[%s3654 + $0x89] sm:$0xff]
        %v3731 = vld [vmem:[%s3654 + $0x91] sm:$0xff]
        %v3732 = vld [vmem:[%s3654 + $0x99] sm:$0xff]
        %v3733 = vld [vmem:[%s3654 + $0xa1] sm:$0xff]
        %v3734 = vld [vmem:[%s3654 + $0xa9] sm:$0xff]
        %v3735 = vld [vmem:[%s3654 + $0xb1] sm:$0xff]
        %v3736 = vld [vmem:[%s3654 + $0xb9] sm:$0xf]
        %v3737 = vstv %s3712
        %v3738 = vmul.f32 %v3737, %v3713
        %v3739 = vmul.f32 %v3737, %v3714
        %v3740 = vmul.f32 %v3737, %v3715
        %v3741 = vmul.f32 %v3737, %v3716
        %v3742 = vmul.f32 %v3737, %v3717
        %v3743 = vmul.f32 %v3737, %v3718
        %v3744 = vmul.f32 %v3737, %v3719
        %v3745 = vmul.f32 %v3737, %v3720
        %v3746 = vmul.f32 %v3737, %v3721
        %v3747 = vmul.f32 %v3737, %v3722
        %v3748 = vmul.f32 %v3737, %v3723
        %v3749 = vmul.f32 %v3737, %v3724
        %v3750 = vmul.f32 %v3737, %v3725
        %v3751 = vmul.f32 %v3737, %v3726
        %v3752 = vmul.f32 %v3737, %v3727
        %v3753 = vmul.f32 %v3737, %v3728
        %v3754 = vmul.f32 %v3737, %v3729
        %v3755 = vmul.f32 %v3737, %v3730
        %v3756 = vmul.f32 %v3737, %v3731
        %v3757 = vmul.f32 %v3737, %v3732
        %v3758 = vmul.f32 %v3737, %v3733
        %v3759 = vmul.f32 %v3737, %v3734
        %v3760 = vmul.f32 %v3737, %v3735
        %v3761 = vmul.f32 %v3737, %v3736
        %v3762 = vadd.f32 %v3680, %v3738
        %v3763 = vadd.f32 %v3681, %v3739
        %v3764 = vadd.f32 %v3682, %v3740
        %v3765 = vadd.f32 %v3683, %v3741
        %v3766 = vadd.f32 %v3684, %v3742
        %v3767 = vadd.f32 %v3685, %v3743
        %v3768 = vadd.f32 %v3686, %v3744
        %v3769 = vadd.f32 %v3687, %v3745
        %v3770 = vadd.f32 %v3688, %v3746
        %v3771 = vadd.f32 %v3689, %v3747
        %v3772 = vadd.f32 %v3690, %v3748
        %v3773 = vadd.f32 %v3691, %v3749
        %v3774 = vadd.f32 %v3692, %v3750
        %v3775 = vadd.f32 %v3693, %v3751
        %v3776 = vadd.f32 %v3694, %v3752
        %v3777 = vadd.f32 %v3695, %v3753
        %v3778 = vadd.f32 %v3696, %v3754
        %v3779 = vadd.f32 %v3697, %v3755
        %v3780 = vadd.f32 %v3698, %v3756
        %v3781 = vadd.f32 %v3699, %v3757
        %v3782 = vadd.f32 %v3700, %v3758
        %v3783 = vadd.f32 %v3701, %v3759
        %v3784 = vadd.f32 %v3702, %v3760
        %v3785 = vadd.f32 %v3703, %v3761
        %s3786 = sadd.s32 %s3644, 2
        %s3787 = sshra.s32 %s3786, 7
        %s3788 = sand.u32 %s3786, 127
        %s3789 = sadd.s32 %s3787, %s3609
        %s3790 = smul.u32 %s3789, 128
        %s3791 = sshra.s32 %s3786, 7
        %s3792 = sand.u32 %s3786, 127
        %s3793 = sadd.s32 %s3790, %s3792
        %s3794 = sld [smem:[#allocation11 + %s3793]]
        %v3795 = vld [vmem:[%s3654 + $0x2] sm:$0xff]
        %v3796 = vld [vmem:[%s3654 + $0xa] sm:$0xff]
        %v3797 = vld [vmem:[%s3654 + $0x12] sm:$0xff]
        %v3798 = vld [vmem:[%s3654 + $0x1a] sm:$0xff]
        %v3799 = vld [vmem:[%s3654 + $0x22] sm:$0xff]
        %v3800 = vld [vmem:[%s3654 + $0x2a] sm:$0xff]
        %v3801 = vld [vmem:[%s3654 + $0x32] sm:$0xff]
        %v3802 = vld [vmem:[%s3654 + $0x3a] sm:$0xff]
        %v3803 = vld [vmem:[%s3654 + $0x42] sm:$0xff]
        %v3804 = vld [vmem:[%s3654 + $0x4a] sm:$0xff]
        %v3805 = vld [vmem:[%s3654 + $0x52] sm:$0xff]
        %v3806 = vld [vmem:[%s3654 + $0x5a] sm:$0xff]
        %v3807 = vld [vmem:[%s3654 + $0x62] sm:$0xff]
        %v3808 = vld [vmem:[%s3654 + $0x6a] sm:$0xff]
        %v3809 = vld [vmem:[%s3654 + $0x72] sm:$0xff]
        %v3810 = vld [vmem:[%s3654 + $0x7a] sm:$0xff]
        %v3811 = vld [vmem:[%s3654 + $0x82] sm:$0xff]
        %v3812 = vld [vmem:[%s3654 + $0x8a] sm:$0xff]
        %v3813 = vld [vmem:[%s3654 + $0x92] sm:$0xff]
        %v3814 = vld [vmem:[%s3654 + $0x9a] sm:$0xff]
        %v3815 = vld [vmem:[%s3654 + $0xa2] sm:$0xff]
        %v3816 = vld [vmem:[%s3654 + $0xaa] sm:$0xff]
        %v3817 = vld [vmem:[%s3654 + $0xb2] sm:$0xff]
        %v3818 = vld [vmem:[%s3654 + $0xba] sm:$0xf]
        %v3819 = vstv %s3794
        %v3820 = vmul.f32 %v3819, %v3795
        %v3821 = vmul.f32 %v3819, %v3796
        %v3822 = vmul.f32 %v3819, %v3797
        %v3823 = vmul.f32 %v3819, %v3798
        %v3824 = vmul.f32 %v3819, %v3799
        %v3825 = vmul.f32 %v3819, %v3800
        %v3826 = vmul.f32 %v3819, %v3801
        %v3827 = vmul.f32 %v3819, %v3802
        %v3828 = vmul.f32 %v3819, %v3803
        %v3829 = vmul.f32 %v3819, %v3804
        %v3830 = vmul.f32 %v3819, %v3805
        %v3831 = vmul.f32 %v3819, %v3806
        %v3832 = vmul.f32 %v3819, %v3807
        %v3833 = vmul.f32 %v3819, %v3808
        %v3834 = vmul.f32 %v3819, %v3809
        %v3835 = vmul.f32 %v3819, %v3810
        %v3836 = vmul.f32 %v3819, %v3811
        %v3837 = vmul.f32 %v3819, %v3812
        %v3838 = vmul.f32 %v3819, %v3813
        %v3839 = vmul.f32 %v3819, %v3814
        %v3840 = vmul.f32 %v3819, %v3815
        %v3841 = vmul.f32 %v3819, %v3816
        %v3842 = vmul.f32 %v3819, %v3817
        %v3843 = vmul.f32 %v3819, %v3818
        %v3844 = vadd.f32 %v3762, %v3820
        %v3845 = vadd.f32 %v3763, %v3821
        %v3846 = vadd.f32 %v3764, %v3822
        %v3847 = vadd.f32 %v3765, %v3823
        %v3848 = vadd.f32 %v3766, %v3824
        %v3849 = vadd.f32 %v3767, %v3825
        %v3850 = vadd.f32 %v3768, %v3826
        %v3851 = vadd.f32 %v3769, %v3827
        %v3852 = vadd.f32 %v3770, %v3828
        %v3853 = vadd.f32 %v3771, %v3829
        %v3854 = vadd.f32 %v3772, %v3830
        %v3855 = vadd.f32 %v3773, %v3831
        %v3856 = vadd.f32 %v3774, %v3832
        %v3857 = vadd.f32 %v3775, %v3833
        %v3858 = vadd.f32 %v3776, %v3834
        %v3859 = vadd.f32 %v3777, %v3835
        %v3860 = vadd.f32 %v3778, %v3836
        %v3861 = vadd.f32 %v3779, %v3837
        %v3862 = vadd.f32 %v3780, %v3838
        %v3863 = vadd.f32 %v3781, %v3839
        %v3864 = vadd.f32 %v3782, %v3840
        %v3865 = vadd.f32 %v3783, %v3841
        %v3866 = vadd.f32 %v3784, %v3842
        %v3867 = vadd.f32 %v3785, %v3843
        %s3868 = sadd.s32 %s3644, 3
        %s3869 = sshra.s32 %s3868, 7
        %s3870 = sand.u32 %s3868, 127
        %s3871 = sadd.s32 %s3869, %s3609
        %s3872 = smul.u32 %s3871, 128
        %s3873 = sshra.s32 %s3868, 7
        %s3874 = sand.u32 %s3868, 127
        %s3875 = sadd.s32 %s3872, %s3874
        %s3876 = sld [smem:[#allocation11 + %s3875]]
        %v3877 = vld [vmem:[%s3654 + $0x10] sm:$0xff]
        %v3878 = vld [vmem:[%s3654 + $0x18] sm:$0xff]
        %v3879 = vld [vmem:[%s3654 + $0x20] sm:$0xff]
        %v3880 = vld [vmem:[%s3654 + $0x28] sm:$0xff]
        %v3881 = vld [vmem:[%s3654 + $0x30] sm:$0xff]
        %v3882 = vld [vmem:[%s3654 + $0x38] sm:$0xff]
        %v3883 = vld [vmem:[%s3654 + $0x40] sm:$0xff]
        %v3884 = vld [vmem:[%s3654 + $0x48] sm:$0xff]
        %v3885 = vld [vmem:[%s3654 + $0x50] sm:$0xff]
        %v3886 = vld [vmem:[%s3654 + $0x58] sm:$0xff]
        %v3887 = vld [vmem:[%s3654 + $0x60] sm:$0xff]
        %v3888 = vld [vmem:[%s3654 + $0x68] sm:$0xff]
        %v3889 = vld [vmem:[%s3654 + $0x70] sm:$0xff]
        %v3890 = vld [vmem:[%s3654 + $0x78] sm:$0xff]
        %v3891 = vld [vmem:[%s3654 + $0x80] sm:$0xff]
        %v3892 = vld [vmem:[%s3654 + $0x88] sm:$0xff]
        %v3893 = vld [vmem:[%s3654 + $0x90] sm:$0xff]
        %v3894 = vld [vmem:[%s3654 + $0x98] sm:$0xff]
        %v3895 = vld [vmem:[%s3654 + $0xa0] sm:$0xff]
        %v3896 = vld [vmem:[%s3654 + $0xa8] sm:$0xff]
        %v3897 = vld [vmem:[%s3654 + $0xb0] sm:$0xff]
        %v3898 = vld [vmem:[%s3654 + $0xb8] sm:$0xff]
        %v3899 = vld [vmem:[%s3654 + $0xc0] sm:$0xff]
        %v3900 = vld [vmem:[%s3654 + $0xc8] sm:$0xf]
        %v3901 = vstv %s3876
        %v3902 = vmul.f32 %v3901, %v3877
        %v3903 = vmul.f32 %v3901, %v3878
        %v3904 = vmul.f32 %v3901, %v3879
        %v3905 = vmul.f32 %v3901, %v3880
        %v3906 = vmul.f32 %v3901, %v3881
        %v3907 = vmul.f32 %v3901, %v3882
        %v3908 = vmul.f32 %v3901, %v3883
        %v3909 = vmul.f32 %v3901, %v3884
        %v3910 = vmul.f32 %v3901, %v3885
        %v3911 = vmul.f32 %v3901, %v3886
        %v3912 = vmul.f32 %v3901, %v3887
        %v3913 = vmul.f32 %v3901, %v3888
        %v3914 = vmul.f32 %v3901, %v3889
        %v3915 = vmul.f32 %v3901, %v3890
        %v3916 = vmul.f32 %v3901, %v3891
        %v3917 = vmul.f32 %v3901, %v3892
        %v3918 = vmul.f32 %v3901, %v3893
        %v3919 = vmul.f32 %v3901, %v3894
        %v3920 = vmul.f32 %v3901, %v3895
        %v3921 = vmul.f32 %v3901, %v3896
        %v3922 = vmul.f32 %v3901, %v3897
        %v3923 = vmul.f32 %v3901, %v3898
        %v3924 = vmul.f32 %v3901, %v3899
        %v3925 = vmul.f32 %v3901, %v3900
        %v3926 = vadd.f32 %v3844, %v3902
        %v3927 = vadd.f32 %v3845, %v3903
        %v3928 = vadd.f32 %v3846, %v3904
        %v3929 = vadd.f32 %v3847, %v3905
        %v3930 = vadd.f32 %v3848, %v3906
        %v3931 = vadd.f32 %v3849, %v3907
        %v3932 = vadd.f32 %v3850, %v3908
        %v3933 = vadd.f32 %v3851, %v3909
        %v3934 = vadd.f32 %v3852, %v3910
        %v3935 = vadd.f32 %v3853, %v3911
        %v3936 = vadd.f32 %v3854, %v3912
        %v3937 = vadd.f32 %v3855, %v3913
        %v3938 = vadd.f32 %v3856, %v3914
        %v3939 = vadd.f32 %v3857, %v3915
        %v3940 = vadd.f32 %v3858, %v3916
        %v3941 = vadd.f32 %v3859, %v3917
        %v3942 = vadd.f32 %v3860, %v3918
        %v3943 = vadd.f32 %v3861, %v3919
        %v3944 = vadd.f32 %v3862, %v3920
        %v3945 = vadd.f32 %v3863, %v3921
        %v3946 = vadd.f32 %v3864, %v3922
        %v3947 = vadd.f32 %v3865, %v3923
        %v3948 = vadd.f32 %v3866, %v3924
        %v3949 = vadd.f32 %v3867, %v3925
        %s3950 = sadd.s32 %s3644, 4
        %s3951 = sshra.s32 %s3950, 7
        %s3952 = sand.u32 %s3950, 127
        %s3953 = sadd.s32 %s3951, %s3609
        %s3954 = smul.u32 %s3953, 128
        %s3955 = sshra.s32 %s3950, 7
        %s3956 = sand.u32 %s3950, 127
        %s3957 = sadd.s32 %s3954, %s3956
        %s3958 = sld [smem:[#allocation11 + %s3957]]
        %v3959 = vld [vmem:[%s3654 + $0x11] sm:$0xff]
        %v3960 = vld [vmem:[%s3654 + $0x19] sm:$0xff]
        %v3961 = vld [vmem:[%s3654 + $0x21] sm:$0xff]
        %v3962 = vld [vmem:[%s3654 + $0x29] sm:$0xff]
        %v3963 = vld [vmem:[%s3654 + $0x31] sm:$0xff]
        %v3964 = vld [vmem:[%s3654 + $0x39] sm:$0xff]
        %v3965 = vld [vmem:[%s3654 + $0x41] sm:$0xff]
        %v3966 = vld [vmem:[%s3654 + $0x49] sm:$0xff]
        %v3967 = vld [vmem:[%s3654 + $0x51] sm:$0xff]
        %v3968 = vld [vmem:[%s3654 + $0x59] sm:$0xff]
        %v3969 = vld [vmem:[%s3654 + $0x61] sm:$0xff]
        %v3970 = vld [vmem:[%s3654 + $0x69] sm:$0xff]
        %v3971 = vld [vmem:[%s3654 + $0x71] sm:$0xff]
        %v3972 = vld [vmem:[%s3654 + $0x79] sm:$0xff]
        %v3973 = vld [vmem:[%s3654 + $0x81] sm:$0xff]
        %v3974 = vld [vmem:[%s3654 + $0x89] sm:$0xff]
        %v3975 = vld [vmem:[%s3654 + $0x91] sm:$0xff]
        %v3976 = vld [vmem:[%s3654 + $0x99] sm:$0xff]
        %v3977 = vld [vmem:[%s3654 + $0xa1] sm:$0xff]
        %v3978 = vld [vmem:[%s3654 + $0xa9] sm:$0xff]
        %v3979 = vld [vmem:[%s3654 + $0xb1] sm:$0xff]
        %v3980 = vld [vmem:[%s3654 + $0xb9] sm:$0xff]
        %v3981 = vld [vmem:[%s3654 + $0xc1] sm:$0xff]
        %v3982 = vld [vmem:[%s3654 + $0xc9] sm:$0xf]
        %v3983 = vstv %s3958
        %v3984 = vmul.f32 %v3983, %v3959
        %v3985 = vmul.f32 %v3983, %v3960
        %v3986 = vmul.f32 %v3983, %v3961
        %v3987 = vmul.f32 %v3983, %v3962
        %v3988 = vmul.f32 %v3983, %v3963
        %v3989 = vmul.f32 %v3983, %v3964
        %v3990 = vmul.f32 %v3983, %v3965
        %v3991 = vmul.f32 %v3983, %v3966
        %v3992 = vmul.f32 %v3983, %v3967
        %v3993 = vmul.f32 %v3983, %v3968
        %v3994 = vmul.f32 %v3983, %v3969
        %v3995 = vmul.f32 %v3983, %v3970
        %v3996 = vmul.f32 %v3983, %v3971
        %v3997 = vmul.f32 %v3983, %v3972
        %v3998 = vmul.f32 %v3983, %v3973
        %v3999 = vmul.f32 %v3983, %v3974
        %v4000 = vmul.f32 %v3983, %v3975
        %v4001 = vmul.f32 %v3983, %v3976
        %v4002 = vmul.f32 %v3983, %v3977
        %v4003 = vmul.f32 %v3983, %v3978
        %v4004 = vmul.f32 %v3983, %v3979
        %v4005 = vmul.f32 %v3983, %v3980
        %v4006 = vmul.f32 %v3983, %v3981
        %v4007 = vmul.f32 %v3983, %v3982
        %v4008 = vadd.f32 %v3926, %v3984
        %v4009 = vadd.f32 %v3927, %v3985
        %v4010 = vadd.f32 %v3928, %v3986
        %v4011 = vadd.f32 %v3929, %v3987
        %v4012 = vadd.f32 %v3930, %v3988
        %v4013 = vadd.f32 %v3931, %v3989
        %v4014 = vadd.f32 %v3932, %v3990
        %v4015 = vadd.f32 %v3933, %v3991
        %v4016 = vadd.f32 %v3934, %v3992
        %v4017 = vadd.f32 %v3935, %v3993
        %v4018 = vadd.f32 %v3936, %v3994
        %v4019 = vadd.f32 %v3937, %v3995
        %v4020 = vadd.f32 %v3938, %v3996
        %v4021 = vadd.f32 %v3939, %v3997
        %v4022 = vadd.f32 %v3940, %v3998
        %v4023 = vadd.f32 %v3941, %v3999
        %v4024 = vadd.f32 %v3942, %v4000
        %v4025 = vadd.f32 %v3943, %v4001
        %v4026 = vadd.f32 %v3944, %v4002
        %v4027 = vadd.f32 %v3945, %v4003
        %v4028 = vadd.f32 %v3946, %v4004
        %v4029 = vadd.f32 %v3947, %v4005
        %v4030 = vadd.f32 %v3948, %v4006
        %v4031 = vadd.f32 %v3949, %v4007
        %s4032 = sadd.s32 %s3644, 5
        %s4033 = sshra.s32 %s4032, 7
        %s4034 = sand.u32 %s4032, 127
        %s4035 = sadd.s32 %s4033, %s3609
        %s4036 = smul.u32 %s4035, 128
        %s4037 = sshra.s32 %s4032, 7
        %s4038 = sand.u32 %s4032, 127
        %s4039 = sadd.s32 %s4036, %s4038
        %s4040 = sld [smem:[#allocation11 + %s4039]]
        %v4041 = vld [vmem:[%s3654 + $0x12] sm:$0xff]
        %v4042 = vld [vmem:[%s3654 + $0x1a] sm:$0xff]
        %v4043 = vld [vmem:[%s3654 + $0x22] sm:$0xff]
        %v4044 = vld [vmem:[%s3654 + $0x2a] sm:$0xff]
        %v4045 = vld [vmem:[%s3654 + $0x32] sm:$0xff]
        %v4046 = vld [vmem:[%s3654 + $0x3a] sm:$0xff]
        %v4047 = vld [vmem:[%s3654 + $0x42] sm:$0xff]
        %v4048 = vld [vmem:[%s3654 + $0x4a] sm:$0xff]
        %v4049 = vld [vmem:[%s3654 + $0x52] sm:$0xff]
        %v4050 = vld [vmem:[%s3654 + $0x5a] sm:$0xff]
        %v4051 = vld [vmem:[%s3654 + $0x62] sm:$0xff]
        %v4052 = vld [vmem:[%s3654 + $0x6a] sm:$0xff]
        %v4053 = vld [vmem:[%s3654 + $0x72] sm:$0xff]
        %v4054 = vld [vmem:[%s3654 + $0x7a] sm:$0xff]
        %v4055 = vld [vmem:[%s3654 + $0x82] sm:$0xff]
        %v4056 = vld [vmem:[%s3654 + $0x8a] sm:$0xff]
        %v4057 = vld [vmem:[%s3654 + $0x92] sm:$0xff]
        %v4058 = vld [vmem:[%s3654 + $0x9a] sm:$0xff]
        %v4059 = vld [vmem:[%s3654 + $0xa2] sm:$0xff]
        %v4060 = vld [vmem:[%s3654 + $0xaa] sm:$0xff]
        %v4061 = vld [vmem:[%s3654 + $0xb2] sm:$0xff]
        %v4062 = vld [vmem:[%s3654 + $0xba] sm:$0xff]
        %v4063 = vld [vmem:[%s3654 + $0xc2] sm:$0xff]
        %v4064 = vld [vmem:[%s3654 + $0xca] sm:$0xf]
        %v4065 = vstv %s4040
        %v4066 = vmul.f32 %v4065, %v4041
        %v4067 = vmul.f32 %v4065, %v4042
        %v4068 = vmul.f32 %v4065, %v4043
        %v4069 = vmul.f32 %v4065, %v4044
        %v4070 = vmul.f32 %v4065, %v4045
        %v4071 = vmul.f32 %v4065, %v4046
        %v4072 = vmul.f32 %v4065, %v4047
        %v4073 = vmul.f32 %v4065, %v4048
        %v4074 = vmul.f32 %v4065, %v4049
        %v4075 = vmul.f32 %v4065, %v4050
        %v4076 = vmul.f32 %v4065, %v4051
        %v4077 = vmul.f32 %v4065, %v4052
        %v4078 = vmul.f32 %v4065, %v4053
        %v4079 = vmul.f32 %v4065, %v4054
        %v4080 = vmul.f32 %v4065, %v4055
        %v4081 = vmul.f32 %v4065, %v4056
        %v4082 = vmul.f32 %v4065, %v4057
        %v4083 = vmul.f32 %v4065, %v4058
        %v4084 = vmul.f32 %v4065, %v4059
        %v4085 = vmul.f32 %v4065, %v4060
        %v4086 = vmul.f32 %v4065, %v4061
        %v4087 = vmul.f32 %v4065, %v4062
        %v4088 = vmul.f32 %v4065, %v4063
        %v4089 = vmul.f32 %v4065, %v4064
        %v4090 = vadd.f32 %v4008, %v4066
        %v4091 = vadd.f32 %v4009, %v4067
        %v4092 = vadd.f32 %v4010, %v4068
        %v4093 = vadd.f32 %v4011, %v4069
        %v4094 = vadd.f32 %v4012, %v4070
        %v4095 = vadd.f32 %v4013, %v4071
        %v4096 = vadd.f32 %v4014, %v4072
        %v4097 = vadd.f32 %v4015, %v4073
        %v4098 = vadd.f32 %v4016, %v4074
        %v4099 = vadd.f32 %v4017, %v4075
        %v4100 = vadd.f32 %v4018, %v4076
        %v4101 = vadd.f32 %v4019, %v4077
        %v4102 = vadd.f32 %v4020, %v4078
        %v4103 = vadd.f32 %v4021, %v4079
        %v4104 = vadd.f32 %v4022, %v4080
        %v4105 = vadd.f32 %v4023, %v4081
        %v4106 = vadd.f32 %v4024, %v4082
        %v4107 = vadd.f32 %v4025, %v4083
        %v4108 = vadd.f32 %v4026, %v4084
        %v4109 = vadd.f32 %v4027, %v4085
        %v4110 = vadd.f32 %v4028, %v4086
        %v4111 = vadd.f32 %v4029, %v4087
        %v4112 = vadd.f32 %v4030, %v4088
        %v4113 = vadd.f32 %v4031, %v4089
        %s4114 = sadd.s32 %s3644, 6
        %s4115 = sshra.s32 %s4114, 7
        %s4116 = sand.u32 %s4114, 127
        %s4117 = sadd.s32 %s4115, %s3609
        %s4118 = smul.u32 %s4117, 128
        %s4119 = sshra.s32 %s4114, 7
        %s4120 = sand.u32 %s4114, 127
        %s4121 = sadd.s32 %s4118, %s4120
        %s4122 = sld [smem:[#allocation11 + %s4121]]
        %v4123 = vld [vmem:[%s3654 + $0x20] sm:$0xff]
        %v4124 = vld [vmem:[%s3654 + $0x28] sm:$0xff]
        %v4125 = vld [vmem:[%s3654 + $0x30] sm:$0xff]
        %v4126 = vld [vmem:[%s3654 + $0x38] sm:$0xff]
        %v4127 = vld [vmem:[%s3654 + $0x40] sm:$0xff]
        %v4128 = vld [vmem:[%s3654 + $0x48] sm:$0xff]
        %v4129 = vld [vmem:[%s3654 + $0x50] sm:$0xff]
        %v4130 = vld [vmem:[%s3654 + $0x58] sm:$0xff]
        %v4131 = vld [vmem:[%s3654 + $0x60] sm:$0xff]
        %v4132 = vld [vmem:[%s3654 + $0x68] sm:$0xff]
        %v4133 = vld [vmem:[%s3654 + $0x70] sm:$0xff]
        %v4134 = vld [vmem:[%s3654 + $0x78] sm:$0xff]
        %v4135 = vld [vmem:[%s3654 + $0x80] sm:$0xff]
        %v4136 = vld [vmem:[%s3654 + $0x88] sm:$0xff]
        %v4137 = vld [vmem:[%s3654 + $0x90] sm:$0xff]
        %v4138 = vld [vmem:[%s3654 + $0x98] sm:$0xff]
        %v4139 = vld [vmem:[%s3654 + $0xa0] sm:$0xff]
        %v4140 = vld [vmem:[%s3654 + $0xa8] sm:$0xff]
        %v4141 = vld [vmem:[%s3654 + $0xb0] sm:$0xff]
        %v4142 = vld [vmem:[%s3654 + $0xb8] sm:$0xff]
        %v4143 = vld [vmem:[%s3654 + $0xc0] sm:$0xff]
        %v4144 = vld [vmem:[%s3654 + $0xc8] sm:$0xff]
        %v4145 = vld [vmem:[%s3654 + $0xd0] sm:$0xff]
        %v4146 = vld [vmem:[%s3654 + $0xd8] sm:$0xf]
        %v4147 = vstv %s4122
        %v4148 = vmul.f32 %v4147, %v4123
        %v4149 = vmul.f32 %v4147, %v4124
        %v4150 = vmul.f32 %v4147, %v4125
        %v4151 = vmul.f32 %v4147, %v4126
        %v4152 = vmul.f32 %v4147, %v4127
        %v4153 = vmul.f32 %v4147, %v4128
        %v4154 = vmul.f32 %v4147, %v4129
        %v4155 = vmul.f32 %v4147, %v4130
        %v4156 = vmul.f32 %v4147, %v4131
        %v4157 = vmul.f32 %v4147, %v4132
        %v4158 = vmul.f32 %v4147, %v4133
        %v4159 = vmul.f32 %v4147, %v4134
        %v4160 = vmul.f32 %v4147, %v4135
        %v4161 = vmul.f32 %v4147, %v4136
        %v4162 = vmul.f32 %v4147, %v4137
        %v4163 = vmul.f32 %v4147, %v4138
        %v4164 = vmul.f32 %v4147, %v4139
        %v4165 = vmul.f32 %v4147, %v4140
        %v4166 = vmul.f32 %v4147, %v4141
        %v4167 = vmul.f32 %v4147, %v4142
        %v4168 = vmul.f32 %v4147, %v4143
        %v4169 = vmul.f32 %v4147, %v4144
        %v4170 = vmul.f32 %v4147, %v4145
        %v4171 = vmul.f32 %v4147, %v4146
        %v4172 = vadd.f32 %v4090, %v4148
        %v4173 = vadd.f32 %v4091, %v4149
        %v4174 = vadd.f32 %v4092, %v4150
        %v4175 = vadd.f32 %v4093, %v4151
        %v4176 = vadd.f32 %v4094, %v4152
        %v4177 = vadd.f32 %v4095, %v4153
        %v4178 = vadd.f32 %v4096, %v4154
        %v4179 = vadd.f32 %v4097, %v4155
        %v4180 = vadd.f32 %v4098, %v4156
        %v4181 = vadd.f32 %v4099, %v4157
        %v4182 = vadd.f32 %v4100, %v4158
        %v4183 = vadd.f32 %v4101, %v4159
        %v4184 = vadd.f32 %v4102, %v4160
        %v4185 = vadd.f32 %v4103, %v4161
        %v4186 = vadd.f32 %v4104, %v4162
        %v4187 = vadd.f32 %v4105, %v4163
        %v4188 = vadd.f32 %v4106, %v4164
        %v4189 = vadd.f32 %v4107, %v4165
        %v4190 = vadd.f32 %v4108, %v4166
        %v4191 = vadd.f32 %v4109, %v4167
        %v4192 = vadd.f32 %v4110, %v4168
        %v4193 = vadd.f32 %v4111, %v4169
        %v4194 = vadd.f32 %v4112, %v4170
        %v4195 = vadd.f32 %v4113, %v4171
        %s4196 = sadd.s32 %s3644, 7
        %s4197 = sshra.s32 %s4196, 7
        %s4198 = sand.u32 %s4196, 127
        %s4199 = sadd.s32 %s4197, %s3609
        %s4200 = smul.u32 %s4199, 128
        %s4201 = sshra.s32 %s4196, 7
        %s4202 = sand.u32 %s4196, 127
        %s4203 = sadd.s32 %s4200, %s4202
        %s4204 = sld [smem:[#allocation11 + %s4203]]
        %v4205 = vld [vmem:[%s3654 + $0x21] sm:$0xff]
        %v4206 = vld [vmem:[%s3654 + $0x29] sm:$0xff]
        %v4207 = vld [vmem:[%s3654 + $0x31] sm:$0xff]
        %v4208 = vld [vmem:[%s3654 + $0x39] sm:$0xff]
        %v4209 = vld [vmem:[%s3654 + $0x41] sm:$0xff]
        %v4210 = vld [vmem:[%s3654 + $0x49] sm:$0xff]
        %v4211 = vld [vmem:[%s3654 + $0x51] sm:$0xff]
        %v4212 = vld [vmem:[%s3654 + $0x59] sm:$0xff]
        %v4213 = vld [vmem:[%s3654 + $0x61] sm:$0xff]
        %v4214 = vld [vmem:[%s3654 + $0x69] sm:$0xff]
        %v4215 = vld [vmem:[%s3654 + $0x71] sm:$0xff]
        %v4216 = vld [vmem:[%s3654 + $0x79] sm:$0xff]
        %v4217 = vld [vmem:[%s3654 + $0x81] sm:$0xff]
        %v4218 = vld [vmem:[%s3654 + $0x89] sm:$0xff]
        %v4219 = vld [vmem:[%s3654 + $0x91] sm:$0xff]
        %v4220 = vld [vmem:[%s3654 + $0x99] sm:$0xff]
        %v4221 = vld [vmem:[%s3654 + $0xa1] sm:$0xff]
        %v4222 = vld [vmem:[%s3654 + $0xa9] sm:$0xff]
        %v4223 = vld [vmem:[%s3654 + $0xb1] sm:$0xff]
        %v4224 = vld [vmem:[%s3654 + $0xb9] sm:$0xff]
        %v4225 = vld [vmem:[%s3654 + $0xc1] sm:$0xff]
        %v4226 = vld [vmem:[%s3654 + $0xc9] sm:$0xff]
        %v4227 = vld [vmem:[%s3654 + $0xd1] sm:$0xff]
        %v4228 = vld [vmem:[%s3654 + $0xd9] sm:$0xf]
        %v4229 = vstv %s4204
        %v4230 = vmul.f32 %v4229, %v4205
        %v4231 = vmul.f32 %v4229, %v4206
        %v4232 = vmul.f32 %v4229, %v4207
        %v4233 = vmul.f32 %v4229, %v4208
        %v4234 = vmul.f32 %v4229, %v4209
        %v4235 = vmul.f32 %v4229, %v4210
        %v4236 = vmul.f32 %v4229, %v4211
        %v4237 = vmul.f32 %v4229, %v4212
        %v4238 = vmul.f32 %v4229, %v4213
        %v4239 = vmul.f32 %v4229, %v4214
        %v4240 = vmul.f32 %v4229, %v4215
        %v4241 = vmul.f32 %v4229, %v4216
        %v4242 = vmul.f32 %v4229, %v4217
        %v4243 = vmul.f32 %v4229, %v4218
        %v4244 = vmul.f32 %v4229, %v4219
        %v4245 = vmul.f32 %v4229, %v4220
        %v4246 = vmul.f32 %v4229, %v4221
        %v4247 = vmul.f32 %v4229, %v4222
        %v4248 = vmul.f32 %v4229, %v4223
        %v4249 = vmul.f32 %v4229, %v4224
        %v4250 = vmul.f32 %v4229, %v4225
        %v4251 = vmul.f32 %v4229, %v4226
        %v4252 = vmul.f32 %v4229, %v4227
        %v4253 = vmul.f32 %v4229, %v4228
        %v4254 = vadd.f32 %v4172, %v4230
        %v4255 = vadd.f32 %v4173, %v4231
        %v4256 = vadd.f32 %v4174, %v4232
        %v4257 = vadd.f32 %v4175, %v4233
        %v4258 = vadd.f32 %v4176, %v4234
        %v4259 = vadd.f32 %v4177, %v4235
        %v4260 = vadd.f32 %v4178, %v4236
        %v4261 = vadd.f32 %v4179, %v4237
        %v4262 = vadd.f32 %v4180, %v4238
        %v4263 = vadd.f32 %v4181, %v4239
        %v4264 = vadd.f32 %v4182, %v4240
        %v4265 = vadd.f32 %v4183, %v4241
        %v4266 = vadd.f32 %v4184, %v4242
        %v4267 = vadd.f32 %v4185, %v4243
        %v4268 = vadd.f32 %v4186, %v4244
        %v4269 = vadd.f32 %v4187, %v4245
        %v4270 = vadd.f32 %v4188, %v4246
        %v4271 = vadd.f32 %v4189, %v4247
        %v4272 = vadd.f32 %v4190, %v4248
        %v4273 = vadd.f32 %v4191, %v4249
        %v4274 = vadd.f32 %v4192, %v4250
        %v4275 = vadd.f32 %v4193, %v4251
        %v4276 = vadd.f32 %v4194, %v4252
        %v4277 = vadd.f32 %v4195, %v4253
        %s4278 = sadd.s32 %s3644, 8
        %s4279 = sshra.s32 %s4278, 7
        %s4280 = sand.u32 %s4278, 127
        %s4281 = sadd.s32 %s4279, %s3609
        %s4282 = smul.u32 %s4281, 128
        %s4283 = sshra.s32 %s4278, 7
        %s4284 = sand.u32 %s4278, 127
        %s4285 = sadd.s32 %s4282, %s4284
        %s4286 = sld [smem:[#allocation11 + %s4285]]
        %v4287 = vld [vmem:[%s3654 + $0x22] sm:$0xff]
        %v4288 = vld [vmem:[%s3654 + $0x2a] sm:$0xff]
        %v4289 = vld [vmem:[%s3654 + $0x32] sm:$0xff]
        %v4290 = vld [vmem:[%s3654 + $0x3a] sm:$0xff]
        %v4291 = vld [vmem:[%s3654 + $0x42] sm:$0xff]
        %v4292 = vld [vmem:[%s3654 + $0x4a] sm:$0xff]
        %v4293 = vld [vmem:[%s3654 + $0x52] sm:$0xff]
        %v4294 = vld [vmem:[%s3654 + $0x5a] sm:$0xff]
        %v4295 = vld [vmem:[%s3654 + $0x62] sm:$0xff]
        %v4296 = vld [vmem:[%s3654 + $0x6a] sm:$0xff]
        %v4297 = vld [vmem:[%s3654 + $0x72] sm:$0xff]
        %v4298 = vld [vmem:[%s3654 + $0x7a] sm:$0xff]
        %v4299 = vld [vmem:[%s3654 + $0x82] sm:$0xff]
        %v4300 = vld [vmem:[%s3654 + $0x8a] sm:$0xff]
        %v4301 = vld [vmem:[%s3654 + $0x92] sm:$0xff]
        %v4302 = vld [vmem:[%s3654 + $0x9a] sm:$0xff]
        %v4303 = vld [vmem:[%s3654 + $0xa2] sm:$0xff]
        %v4304 = vld [vmem:[%s3654 + $0xaa] sm:$0xff]
        %v4305 = vld [vmem:[%s3654 + $0xb2] sm:$0xff]
        %v4306 = vld [vmem:[%s3654 + $0xba] sm:$0xff]
        %v4307 = vld [vmem:[%s3654 + $0xc2] sm:$0xff]
        %v4308 = vld [vmem:[%s3654 + $0xca] sm:$0xff]
        %v4309 = vld [vmem:[%s3654 + $0xd2] sm:$0xff]
        %v4310 = vld [vmem:[%s3654 + $0xda] sm:$0xf]
        %v4311 = vstv %s4286
        %v4312 = vmul.f32 %v4311, %v4287
        %v4313 = vmul.f32 %v4311, %v4288
        %v4314 = vmul.f32 %v4311, %v4289
        %v4315 = vmul.f32 %v4311, %v4290
        %v4316 = vmul.f32 %v4311, %v4291
        %v4317 = vmul.f32 %v4311, %v4292
        %v4318 = vmul.f32 %v4311, %v4293
        %v4319 = vmul.f32 %v4311, %v4294
        %v4320 = vmul.f32 %v4311, %v4295
        %v4321 = vmul.f32 %v4311, %v4296
        %v4322 = vmul.f32 %v4311, %v4297
        %v4323 = vmul.f32 %v4311, %v4298
        %v4324 = vmul.f32 %v4311, %v4299
        %v4325 = vmul.f32 %v4311, %v4300
        %v4326 = vmul.f32 %v4311, %v4301
        %v4327 = vmul.f32 %v4311, %v4302
        %v4328 = vmul.f32 %v4311, %v4303
        %v4329 = vmul.f32 %v4311, %v4304
        %v4330 = vmul.f32 %v4311, %v4305
        %v4331 = vmul.f32 %v4311, %v4306
        %v4332 = vmul.f32 %v4311, %v4307
        %v4333 = vmul.f32 %v4311, %v4308
        %v4334 = vmul.f32 %v4311, %v4309
        %v4335 = vmul.f32 %v4311, %v4310
        %v4336 = vadd.f32 %v4254, %v4312
        %v4337 = vadd.f32 %v4255, %v4313
        %v4338 = vadd.f32 %v4256, %v4314
        %v4339 = vadd.f32 %v4257, %v4315
        %v4340 = vadd.f32 %v4258, %v4316
        %v4341 = vadd.f32 %v4259, %v4317
        %v4342 = vadd.f32 %v4260, %v4318
        %v4343 = vadd.f32 %v4261, %v4319
        %v4344 = vadd.f32 %v4262, %v4320
        %v4345 = vadd.f32 %v4263, %v4321
        %v4346 = vadd.f32 %v4264, %v4322
        %v4347 = vadd.f32 %v4265, %v4323
        %v4348 = vadd.f32 %v4266, %v4324
        %v4349 = vadd.f32 %v4267, %v4325
        %v4350 = vadd.f32 %v4268, %v4326
        %v4351 = vadd.f32 %v4269, %v4327
        %v4352 = vadd.f32 %v4270, %v4328
        %v4353 = vadd.f32 %v4271, %v4329
        %v4354 = vadd.f32 %v4272, %v4330
        %v4355 = vadd.f32 %v4273, %v4331
        %v4356 = vadd.f32 %v4274, %v4332
        %v4357 = vadd.f32 %v4275, %v4333
        %v4358 = vadd.f32 %v4276, %v4334
        %v4359 = vadd.f32 %v4277, %v4335
        %v4360 = vld [vmem:[#allocation4] sm:$0xff]
        %v4361 = vld [vmem:[#allocation4 + $0x8] sm:$0xff]
        %v4362 = vld [vmem:[#allocation4 + $0x10] sm:$0xff]
        %v4363 = vld [vmem:[#allocation4 + $0x18] sm:$0xff]
        %v4364 = vld [vmem:[#allocation4 + $0x20] sm:$0xff]
        %v4365 = vld [vmem:[#allocation4 + $0x28] sm:$0xff]
        %v4366 = vld [vmem:[#allocation4 + $0x30] sm:$0xff]
        %v4367 = vld [vmem:[#allocation4 + $0x38] sm:$0xff]
        %v4368 = vld [vmem:[#allocation4 + $0x40] sm:$0xff]
        %v4369 = vld [vmem:[#allocation4 + $0x48] sm:$0xff]
        %v4370 = vld [vmem:[#allocation4 + $0x50] sm:$0xff]
        %v4371 = vld [vmem:[#allocation4 + $0x58] sm:$0xff]
        %v4372 = vld [vmem:[#allocation4 + $0x60] sm:$0xff]
        %v4373 = vld [vmem:[#allocation4 + $0x68] sm:$0xff]
        %v4374 = vld [vmem:[#allocation4 + $0x70] sm:$0xff]
        %v4375 = vld [vmem:[#allocation4 + $0x78] sm:$0xff]
        %v4376 = vld [vmem:[#allocation4 + $0x80] sm:$0xff]
        %v4377 = vld [vmem:[#allocation4 + $0x88] sm:$0xff]
        %v4378 = vld [vmem:[#allocation4 + $0x90] sm:$0xff]
        %v4379 = vld [vmem:[#allocation4 + $0x98] sm:$0xff]
        %v4380 = vld [vmem:[#allocation4 + $0xa0] sm:$0xff]
        %v4381 = vld [vmem:[#allocation4 + $0xa8] sm:$0xff]
        %v4382 = vld [vmem:[#allocation4 + $0xb0] sm:$0xff]
        %v4383 = vld [vmem:[#allocation4 + $0xb8] sm:$0xf]
        %v4384 = vadd.f32 %v4360, %v4336
        %v4385 = vadd.f32 %v4361, %v4337
        %v4386 = vadd.f32 %v4362, %v4338
        %v4387 = vadd.f32 %v4363, %v4339
        %v4388 = vadd.f32 %v4364, %v4340
        %v4389 = vadd.f32 %v4365, %v4341
        %v4390 = vadd.f32 %v4366, %v4342
        %v4391 = vadd.f32 %v4367, %v4343
        %v4392 = vadd.f32 %v4368, %v4344
        %v4393 = vadd.f32 %v4369, %v4345
        %v4394 = vadd.f32 %v4370, %v4346
        %v4395 = vadd.f32 %v4371, %v4347
        %v4396 = vadd.f32 %v4372, %v4348
        %v4397 = vadd.f32 %v4373, %v4349
        %v4398 = vadd.f32 %v4374, %v4350
        %v4399 = vadd.f32 %v4375, %v4351
        %v4400 = vadd.f32 %v4376, %v4352
        %v4401 = vadd.f32 %v4377, %v4353
        %v4402 = vadd.f32 %v4378, %v4354
        %v4403 = vadd.f32 %v4379, %v4355
        %v4404 = vadd.f32 %v4380, %v4356
        %v4405 = vadd.f32 %v4381, %v4357
        %v4406 = vadd.f32 %v4382, %v4358
        %v4407 = vadd.f32 %v4383, %v4359
        %4408 = vst [vmem:[#allocation4] sm:$0xff] %v4384
        %4409 = vst [vmem:[#allocation4 + $0x8] sm:$0xff] %v4385
        %4410 = vst [vmem:[#allocation4 + $0x10] sm:$0xff] %v4386
        %4411 = vst [vmem:[#allocation4 + $0x18] sm:$0xff] %v4387
        %4412 = vst [vmem:[#allocation4 + $0x20] sm:$0xff] %v4388
        %4413 = vst [vmem:[#allocation4 + $0x28] sm:$0xff] %v4389
        %4414 = vst [vmem:[#allocation4 + $0x30] sm:$0xff] %v4390
        %4415 = vst [vmem:[#allocation4 + $0x38] sm:$0xff] %v4391
        %4416 = vst [vmem:[#allocation4 + $0x40] sm:$0xff] %v4392
        %4417 = vst [vmem:[#allocation4 + $0x48] sm:$0xff] %v4393
        %4418 = vst [vmem:[#allocation4 + $0x50] sm:$0xff] %v4394
        %4419 = vst [vmem:[#allocation4 + $0x58] sm:$0xff] %v4395
        %4420 = vst [vmem:[#allocation4 + $0x60] sm:$0xff] %v4396
        %4421 = vst [vmem:[#allocation4 + $0x68] sm:$0xff] %v4397
        %4422 = vst [vmem:[#allocation4 + $0x70] sm:$0xff] %v4398
        %4423 = vst [vmem:[#allocation4 + $0x78] sm:$0xff] %v4399
        %4424 = vst [vmem:[#allocation4 + $0x80] sm:$0xff] %v4400
        %4425 = vst [vmem:[#allocation4 + $0x88] sm:$0xff] %v4401
        %4426 = vst [vmem:[#allocation4 + $0x90] sm:$0xff] %v4402
        %4427 = vst [vmem:[#allocation4 + $0x98] sm:$0xff] %v4403
        %4428 = vst [vmem:[#allocation4 + $0xa0] sm:$0xff] %v4404
        %4429 = vst [vmem:[#allocation4 + $0xa8] sm:$0xff] %v4405
        %4430 = vst [vmem:[#allocation4 + $0xb0] sm:$0xff] %v4406
        %4431 = vst [vmem:[#allocation4 + $0xb8] sm:$0xf] %v4407
      $region80: #{network_forward.1} parent=72 // loop_footer
        %s3643 = sadd.s32 1, %s3639
      $region81: #{network_forward.1} parent=72 // loop_footer_branch
        %3638 = sbr.rel target = $region77
      $region82: #{network_forward.1} parent=72 // loop_exit
        _
      %s4432 = sld [smem:[#allocation12 + %s3609]]
      %v4433 = vld [vmem:[#allocation4] ss:$2 sm:$0x3f]
      %s4434 = scalar_lea.vmem [#allocation4], 1
      %v4435 = vld [vmem:[%s4434] ss:$2 sm:$0x3f]
      %v4436 = vmax.f32 %v4433, %v4435
      %s4437 = scalar_lea.vmem [#allocation4], 16
      %v4438 = vld [vmem:[%s4437] ss:$2 sm:$0x3f]
      %s4439 = scalar_lea.vmem [#allocation4], 17
      %v4440 = vld [vmem:[%s4439] ss:$2 sm:$0x3f]
      %v4441 = vmax.f32 %v4438, %v4440
      %v4442 = vmax.f32 %v4436, %v4441
      %v4443 = vstv %s4432
      %v4444 = vadd.f32 %v4442, %v4443
      %v4445 = vmax.f32 %v4444, 0.0
      %4446 = vst [vmem:[#allocation5] sm:$0x3f] %v4445
      %s4447 = scalar_lea.vmem [#allocation4], 32
      %v4448 = vld [vmem:[%s4447] ss:$2 sm:$0x3f]
      %s4449 = scalar_lea.vmem [#allocation4], 33
      %v4450 = vld [vmem:[%s4449] ss:$2 sm:$0x3f]
      %v4451 = vmax.f32 %v4448, %v4450
      %s4452 = scalar_lea.vmem [#allocation4], 48
      %v4453 = vld [vmem:[%s4452] ss:$2 sm:$0x3f]
      %s4454 = scalar_lea.vmem [#allocation4], 49
      %v4455 = vld [vmem:[%s4454] ss:$2 sm:$0x3f]
      %v4456 = vmax.f32 %v4453, %v4455
      %v4457 = vmax.f32 %v4451, %v4456
      %v4458 = vadd.f32 %v4457, %v4443
      %v4459 = vmax.f32 %v4458, 0.0
      %4460 = vst [vmem:[#allocation5 + $0x6] sm:$0x3f] %v4459
      %s4461 = scalar_lea.vmem [#allocation4], 64
      %v4462 = vld [vmem:[%s4461] ss:$2 sm:$0x3f]
      %s4463 = scalar_lea.vmem [#allocation4], 65
      %v4464 = vld [vmem:[%s4463] ss:$2 sm:$0x3f]
      %v4465 = vmax.f32 %v4462, %v4464
      %s4466 = scalar_lea.vmem [#allocation4], 80
      %v4467 = vld [vmem:[%s4466] ss:$2 sm:$0x3f]
      %s4468 = scalar_lea.vmem [#allocation4], 81
      %v4469 = vld [vmem:[%s4468] ss:$2 sm:$0x3f]
      %v4470 = vmax.f32 %v4467, %v4469
      %v4471 = vmax.f32 %v4465, %v4470
      %v4472 = vadd.f32 %v4471, %v4443
      %v4473 = vmax.f32 %v4472, 0.0
      %4474 = vst [vmem:[#allocation5 + $0xc] sm:$0x3f] %v4473
      %s4475 = scalar_lea.vmem [#allocation4], 96
      %v4476 = vld [vmem:[%s4475] ss:$2 sm:$0x3f]
      %s4477 = scalar_lea.vmem [#allocation4], 97
      %v4478 = vld [vmem:[%s4477] ss:$2 sm:$0x3f]
      %v4479 = vmax.f32 %v4476, %v4478
      %s4480 = scalar_lea.vmem [#allocation4], 112
      %v4481 = vld [vmem:[%s4480] ss:$2 sm:$0x3f]
      %s4482 = scalar_lea.vmem [#allocation4], 113
      %v4483 = vld [vmem:[%s4482] ss:$2 sm:$0x3f]
      %v4484 = vmax.f32 %v4481, %v4483
      %v4485 = vmax.f32 %v4479, %v4484
      %v4486 = vadd.f32 %v4485, %v4443
      %v4487 = vmax.f32 %v4486, 0.0
      %4488 = vst [vmem:[#allocation5 + $0x12] sm:$0x3f] %v4487
      %s4489 = scalar_lea.vmem [#allocation4], 128
      %v4490 = vld [vmem:[%s4489] ss:$2 sm:$0x3f]
      %s4491 = scalar_lea.vmem [#allocation4], 129
      %v4492 = vld [vmem:[%s4491] ss:$2 sm:$0x3f]
      %v4493 = vmax.f32 %v4490, %v4492
      %s4494 = scalar_lea.vmem [#allocation4], 144
      %v4495 = vld [vmem:[%s4494] ss:$2 sm:$0x3f]
      %s4496 = scalar_lea.vmem [#allocation4], 145
      %v4497 = vld [vmem:[%s4496] ss:$2 sm:$0x3f]
      %v4498 = vmax.f32 %v4495, %v4497
      %v4499 = vmax.f32 %v4493, %v4498
      %v4500 = vadd.f32 %v4499, %v4443
      %v4501 = vmax.f32 %v4500, 0.0
      %4502 = vst [vmem:[#allocation5 + $0x18] sm:$0x3f] %v4501
      %s4503 = scalar_lea.vmem [#allocation4], 160
      %v4504 = vld [vmem:[%s4503] ss:$2 sm:$0x3f]
      %s4505 = scalar_lea.vmem [#allocation4], 161
      %v4506 = vld [vmem:[%s4505] ss:$2 sm:$0x3f]
      %v4507 = vmax.f32 %v4504, %v4506
      %s4508 = scalar_lea.vmem [#allocation4], 176
      %v4509 = vld [vmem:[%s4508] ss:$2 sm:$0x3f]
      %s4510 = scalar_lea.vmem [#allocation4], 177
      %v4511 = vld [vmem:[%s4510] ss:$2 sm:$0x3f]
      %v4512 = vmax.f32 %v4509, %v4511
      %v4513 = vmax.f32 %v4507, %v4512
      %v4514 = vadd.f32 %v4513, %v4443
      %v4515 = vmax.f32 %v4514, 0.0
      %4516 = vst [vmem:[#allocation5 + $0x1e] sm:$0x3f] %v4515
      %v4517 = vld [vmem:[#allocation6] sm:$0xff]
      %v4518 = vld [vmem:[#allocation6 + $0x8] sm:$0xff]
      %v4519 = vld [vmem:[#allocation6 + $0x10] sm:$0xff]
      %v4520 = vld [vmem:[#allocation6 + $0x18] sm:$0xff]
      %v4521 = vld [vmem:[#allocation6 + $0x20] sm:$0xff]
      %v4522 = vld [vmem:[#allocation6 + $0x28] sm:$0xff]
      %v4523 = vld [vmem:[#allocation6 + $0x30] sm:$0xff]
      %v4524 = vld [vmem:[#allocation6 + $0x38] sm:$0xff]
      %v4525 = vld [vmem:[#allocation6 + $0x40] sm:$0xff]
      %v4526 = vld [vmem:[#allocation6 + $0x48] sm:$0xff]
      %v4527 = vld [vmem:[#allocation6 + $0x50] sm:$0xff]
      %v4528 = vld [vmem:[#allocation6 + $0x58] sm:$0xff]
      %v4529 = vld [vmem:[#allocation6 + $0x60] sm:$0xff]
      %v4530 = vld [vmem:[#allocation6 + $0x68] sm:$0xff]
      %v4531 = vld [vmem:[#allocation6 + $0x70] sm:$0xff]
      %v4532 = vld [vmem:[#allocation6 + $0x78] sm:$0xff]
      %v4533 = vld [vmem:[#allocation6 + $0x80] sm:$0xff]
      %v4534 = vld [vmem:[#allocation6 + $0x88] sm:$0xff]
      %v4535 = vld [vmem:[#allocation6 + $0x90] sm:$0xff]
      %v4536 = vld [vmem:[#allocation6 + $0x98] sm:$0xff]
      %v4537 = vld [vmem:[#allocation6 + $0xa0] sm:$0xff]
      %v4538 = vld [vmem:[#allocation6 + $0xa8] sm:$0xff]
      %v4539 = vld [vmem:[#allocation6 + $0xb0] sm:$0xff]
      %v4540 = vld [vmem:[#allocation6 + $0xb8] sm:$0xff]
      %v4541 = vld [vmem:[#allocation6 + $0xc0] sm:$0xff]
      %v4542 = vld [vmem:[#allocation6 + $0xc8] sm:$0xff]
      %v4543 = vld [vmem:[#allocation6 + $0xd0] sm:$0xff]
      %v4544 = vld [vmem:[#allocation6 + $0xd8] sm:$0xff]
      %v4545 = vld [vmem:[#allocation6 + $0xe0] sm:$0xff]
      %v4546 = vld [vmem:[#allocation6 + $0xe8] sm:$0xff]
      %v4547 = vld [vmem:[#allocation6 + $0xf0] sm:$0xff]
      %v4548 = vld [vmem:[#allocation6 + $0xf8] sm:$0xff]
      %s4549 = smul.u32 %s3609, 32
      %s4550 = smul.addr %s4549, 4
      %s4551 = scalar_lea.vmem %s5, %s4550
      %v4552 = vld [vmem:[%s4551] sm:$0xf]
      %v4553 = vld [vmem:[%s4551 + $0x4] sm:$0xf]
      %v4554 = vld [vmem:[%s4551 + $0x8] sm:$0xf]
      %v4555 = vld [vmem:[%s4551 + $0xc] sm:$0xf]
      %v4556 = vld [vmem:[%s4551 + $0x10] sm:$0xf]
      %v4557 = vld [vmem:[%s4551 + $0x14] sm:$0xf]
      %v4558 = vld [vmem:[%s4551 + $0x18] sm:$0xf]
      %v4559 = vld [vmem:[%s4551 + $0x1c] sm:$0xf]
      %v4560 = vld [vmem:[%s4551 + $0x20] sm:$0xf]
      %v4561 = vld [vmem:[%s4551 + $0x24] sm:$0xf]
      %v4562 = vld [vmem:[%s4551 + $0x28] sm:$0xf]
      %v4563 = vld [vmem:[%s4551 + $0x2c] sm:$0xf]
      %v4564 = vld [vmem:[%s4551 + $0x30] sm:$0xf]
      %v4565 = vld [vmem:[%s4551 + $0x34] sm:$0xf]
      %v4566 = vld [vmem:[%s4551 + $0x38] sm:$0xf]
      %v4567 = vld [vmem:[%s4551 + $0x3c] sm:$0xf]
      %v4568 = vld [vmem:[%s4551 + $0x40] sm:$0xf]
      %v4569 = vld [vmem:[%s4551 + $0x44] sm:$0xf]
      %v4570 = vld [vmem:[%s4551 + $0x48] sm:$0xf]
      %v4571 = vld [vmem:[%s4551 + $0x4c] sm:$0xf]
      %v4572 = vld [vmem:[%s4551 + $0x50] sm:$0xf]
      %v4573 = vld [vmem:[%s4551 + $0x54] sm:$0xf]
      %v4574 = vld [vmem:[%s4551 + $0x58] sm:$0xf]
      %v4575 = vld [vmem:[%s4551 + $0x5c] sm:$0xf]
      %v4576 = vld [vmem:[%s4551 + $0x60] sm:$0xf]
      %v4577 = vld [vmem:[%s4551 + $0x64] sm:$0xf]
      %v4578 = vld [vmem:[%s4551 + $0x68] sm:$0xf]
      %v4579 = vld [vmem:[%s4551 + $0x6c] sm:$0xf]
      %v4580 = vld [vmem:[%s4551 + $0x70] sm:$0xf]
      %v4581 = vld [vmem:[%s4551 + $0x74] sm:$0xf]
      %v4582 = vld [vmem:[%s4551 + $0x78] sm:$0xf]
      %v4583 = vld [vmem:[%s4551 + $0x7c] sm:$0xf]
      %v4584 = vld [vmem:[#allocation5] sm:$0xff]
      %v4585 = vld [vmem:[#allocation5 + $0x8] sm:$0xff]
      %v4586 = vld [vmem:[#allocation5 + $0x10] sm:$0xff]
      %v4587 = vld [vmem:[#allocation5 + $0x18] sm:$0xff]
      %v4588 = vld [vmem:[#allocation5 + $0x20] sm:$0xf]
      %v4589 = vpack.c.bf16 %v4585, %v4584
      %v4590 = vpack.c.bf16 %v4587, %v4586
      %v4591 = vpack.c.bf16 %v4588, %v4588
      %v4624 = vunpack.c.l.b16 %v4552
      %v4625 = vunpack.c.l.b16 %v4553
      %v4626 = vunpack.c.l.b16 %v4554
      %v4627 = vunpack.c.l.b16 %v4555
      %v4628 = vunpack.c.l.b16 %v4556
      %v4629 = vunpack.c.l.b16 %v4557
      %v4630 = vunpack.c.l.b16 %v4558
      %v4631 = vunpack.c.l.b16 %v4559
      %v4632 = vunpack.c.l.b16 %v4560
      %v4633 = vunpack.c.l.b16 %v4561
      %v4634 = vunpack.c.l.b16 %v4562
      %v4635 = vunpack.c.l.b16 %v4563
      %v4636 = vunpack.c.l.b16 %v4564
      %v4637 = vunpack.c.l.b16 %v4565
      %v4638 = vunpack.c.l.b16 %v4566
      %v4639 = vunpack.c.l.b16 %v4567
      %v4640 = vunpack.c.l.b16 %v4568
      %v4641 = vunpack.c.l.b16 %v4569
      %v4642 = vunpack.c.l.b16 %v4570
      %v4643 = vunpack.c.l.b16 %v4571
      %v4644 = vunpack.c.l.b16 %v4572
      %v4645 = vunpack.c.l.b16 %v4573
      %v4646 = vunpack.c.l.b16 %v4574
      %v4647 = vunpack.c.l.b16 %v4575
      %v4648 = vunpack.c.l.b16 %v4576
      %v4649 = vunpack.c.l.b16 %v4577
      %v4650 = vunpack.c.l.b16 %v4578
      %v4651 = vunpack.c.l.b16 %v4579
      %v4652 = vunpack.c.l.b16 %v4580
      %v4653 = vunpack.c.l.b16 %v4581
      %v4654 = vunpack.c.l.b16 %v4582
      %v4655 = vunpack.c.l.b16 %v4583
      %v4656 = vpack.c.b16 %v4625, %v4624
      %v4657 = vpack.c.b16 %v4627, %v4626
      %v4658 = vpack.c.b16 %v4629, %v4628
      %v4659 = vpack.c.b16 %v4631, %v4630
      %v4660 = vpack.c.b16 %v4633, %v4632
      %v4661 = vpack.c.b16 %v4635, %v4634
      %v4662 = vpack.c.b16 %v4637, %v4636
      %v4663 = vpack.c.b16 %v4639, %v4638
      %v4664 = vpack.c.b16 %v4641, %v4640
      %v4665 = vpack.c.b16 %v4643, %v4642
      %v4666 = vpack.c.b16 %v4645, %v4644
      %v4667 = vpack.c.b16 %v4647, %v4646
      %v4668 = vpack.c.b16 %v4649, %v4648
      %v4669 = vpack.c.b16 %v4651, %v4650
      %v4670 = vpack.c.b16 %v4653, %v4652
      %v4671 = vpack.c.b16 %v4655, %v4654
      %vm4672 = vcmask 293888
      %v4674 = vsel %vm4672, %v4656, 0
      %v4677 = vsel %vm4672, %v4657, 0
      %v4680 = vsel %vm4672, %v4658, 0
      %v4683 = vsel %vm4672, %v4659, 0
      %v4686 = vsel %vm4672, %v4660, 0
      %v4689 = vsel %vm4672, %v4661, 0
      %v4692 = vsel %vm4672, %v4662, 0
      %v4695 = vsel %vm4672, %v4663, 0
      %v4698 = vsel %vm4672, %v4664, 0
      %v4701 = vsel %vm4672, %v4665, 0
      %v4704 = vsel %vm4672, %v4666, 0
      %v4707 = vsel %vm4672, %v4667, 0
      %v4710 = vsel %vm4672, %v4668, 0
      %v4713 = vsel %vm4672, %v4669, 0
      %v4716 = vsel %vm4672, %v4670, 0
      %v4719 = vsel %vm4672, %v4671, 0
      %vm4721 = vcmask 1041408
      %v4723 = vsel %vm4721, %v4591, 0
      %4725 = vmatprep.subr.bf16.mxu0 0
      %4726 = vmatpush1.bf16.msra.mxu0 %v4589
      %4727 = vmatprep.subr.bf16.mxu0 0
      %4728 = vmatpush1.bf16.msra.mxu0 %v4590
      %4729 = vmatprep.subr.bf16.mxu0 0
      %4730 = vmatpush1.bf16.msra.mxu0 %v4723
      %4731 = vmatprep.subr.bf16.mxu0 0
      %4732 = vmatpush1.bf16.msra.mxu0 0
      %4733 = vmatprep.subr.bf16.mxu0 0
      %4734 = vmatpush1.bf16.msra.mxu0 0
      %4735 = vmatprep.subr.bf16.mxu0 0
      %4736 = vmatpush1.bf16.msra.mxu0 0
      %4737 = vmatprep.subr.bf16.mxu0 0
      %4738 = vmatpush1.bf16.msra.mxu0 0
      %4739 = vmatprep.subr.bf16.mxu0 0
      %4740 = vmatpush1.bf16.msra.mxu0 0
      %4741 = vmatprep.subr.bf16.mxu0 0
      %4742 = vmatpush1.bf16.msra.mxu0 0
      %4743 = vmatprep.subr.bf16.mxu0 0
      %4744 = vmatpush1.bf16.msra.mxu0 0
      %4745 = vmatprep.subr.bf16.mxu0 0
      %4746 = vmatpush1.bf16.msra.mxu0 0
      %4747 = vmatprep.subr.bf16.mxu0 0
      %4748 = vmatpush1.bf16.msra.mxu0 0
      %4749 = vmatprep.subr.bf16.mxu0 0
      %4750 = vmatpush1.bf16.msra.mxu0 0
      %4751 = vmatprep.subr.bf16.mxu0 0
      %4752 = vmatpush1.bf16.msra.mxu0 0
      %4753 = vmatprep.subr.bf16.mxu0 0
      %4754 = vmatpush1.bf16.msra.mxu0 0
      %4755 = vmatprep.subr.bf16.mxu0 0
      %4756 = vmatpush1.bf16.msra.mxu0 0
      %4757 = vmatprep.mubr.bf16.mxu0 0
      %4758 = vmatmul.mubr.bf16.gmra.mrb[0].mxu0 %v4674
      %v4759 = vpop.f32.mrb[0].mxu0
      %v4760 = vadd.f32 0.0, %v4759
      %v4761 = vpop.f32.mrb[0].mxu0
      %v4762 = vpop.f32.mrb[0].mxu0
      %v4763 = vadd.f32 0.0, %v4762
      %v4764 = vpop.f32.mrb[0].mxu0
      %4765 = vmatprep.mubr.bf16.mxu0 0
      %4766 = vmatmul.mubr.bf16.gmra.mrb[0].mxu0 %v4677
      %v4767 = vpop.f32.mrb[0].mxu0
      %v4768 = vadd.f32 0.0, %v4767
      %v4769 = vpop.f32.mrb[0].mxu0
      %v4770 = vpop.f32.mrb[0].mxu0
      %v4771 = vadd.f32 0.0, %v4770
      %v4772 = vpop.f32.mrb[0].mxu0
      %4773 = vmatprep.mubr.bf16.mxu0 0
      %4774 = vmatmul.mubr.bf16.gmra.mrb[0].mxu0 %v4680
      %v4775 = vpop.f32.mrb[0].mxu0
      %v4776 = vadd.f32 0.0, %v4775
      %v4777 = vpop.f32.mrb[0].mxu0
      %v4778 = vpop.f32.mrb[0].mxu0
      %v4779 = vadd.f32 0.0, %v4778
      %v4780 = vpop.f32.mrb[0].mxu0
      %4781 = vmatprep.mubr.bf16.mxu0 0
      %4782 = vmatmul.mubr.bf16.gmra.mrb[0].mxu0 %v4683
      %v4783 = vpop.f32.mrb[0].mxu0
      %v4784 = vadd.f32 0.0, %v4783
      %v4785 = vpop.f32.mrb[0].mxu0
      %v4786 = vpop.f32.mrb[0].mxu0
      %v4787 = vadd.f32 0.0, %v4786
      %v4788 = vpop.f32.mrb[0].mxu0
      %4789 = vmatprep.mubr.bf16.mxu0 0
      %4790 = vmatmul.mubr.bf16.gmra.mrb[0].mxu0 %v4686
      %v4791 = vpop.f32.mrb[0].mxu0
      %v4792 = vadd.f32 0.0, %v4791
      %v4793 = vpop.f32.mrb[0].mxu0
      %v4794 = vpop.f32.mrb[0].mxu0
      %v4795 = vadd.f32 0.0, %v4794
      %v4796 = vpop.f32.mrb[0].mxu0
      %4797 = vmatprep.mubr.bf16.mxu0 0
      %4798 = vmatmul.mubr.bf16.gmra.mrb[0].mxu0 %v4689
      %v4799 = vpop.f32.mrb[0].mxu0
      %v4800 = vadd.f32 0.0, %v4799
      %v4801 = vpop.f32.mrb[0].mxu0
      %v4802 = vpop.f32.mrb[0].mxu0
      %v4803 = vadd.f32 0.0, %v4802
      %v4804 = vpop.f32.mrb[0].mxu0
      %4805 = vmatprep.mubr.bf16.mxu0 0
      %4806 = vmatmul.mubr.bf16.gmra.mrb[0].mxu0 %v4692
      %v4807 = vpop.f32.mrb[0].mxu0
      %v4808 = vadd.f32 0.0, %v4807
      %v4809 = vpop.f32.mrb[0].mxu0
      %v4810 = vpop.f32.mrb[0].mxu0
      %v4811 = vadd.f32 0.0, %v4810
      %v4812 = vpop.f32.mrb[0].mxu0
      %4813 = vmatprep.mubr.bf16.mxu0 0
      %4814 = vmatmul.mubr.bf16.gmra.mrb[0].mxu0 %v4695
      %v4815 = vpop.f32.mrb[0].mxu0
      %v4816 = vadd.f32 0.0, %v4815
      %v4817 = vpop.f32.mrb[0].mxu0
      %v4818 = vpop.f32.mrb[0].mxu0
      %v4819 = vadd.f32 0.0, %v4818
      %v4820 = vpop.f32.mrb[0].mxu0
      %4821 = vmatprep.mubr.bf16.mxu0 0
      %4822 = vmatmul.mubr.bf16.gmra.mrb[0].mxu0 %v4698
      %v4823 = vpop.f32.mrb[0].mxu0
      %v4824 = vadd.f32 0.0, %v4823
      %v4825 = vpop.f32.mrb[0].mxu0
      %v4826 = vpop.f32.mrb[0].mxu0
      %v4827 = vadd.f32 0.0, %v4826
      %v4828 = vpop.f32.mrb[0].mxu0
      %4829 = vmatprep.mubr.bf16.mxu0 0
      %4830 = vmatmul.mubr.bf16.gmra.mrb[0].mxu0 %v4701
      %v4831 = vpop.f32.mrb[0].mxu0
      %v4832 = vadd.f32 0.0, %v4831
      %v4833 = vpop.f32.mrb[0].mxu0
      %v4834 = vpop.f32.mrb[0].mxu0
      %v4835 = vadd.f32 0.0, %v4834
      %v4836 = vpop.f32.mrb[0].mxu0
      %4837 = vmatprep.mubr.bf16.mxu0 0
      %4838 = vmatmul.mubr.bf16.gmra.mrb[0].mxu0 %v4704
      %v4839 = vpop.f32.mrb[0].mxu0
      %v4840 = vadd.f32 0.0, %v4839
      %v4841 = vpop.f32.mrb[0].mxu0
      %v4842 = vpop.f32.mrb[0].mxu0
      %v4843 = vadd.f32 0.0, %v4842
      %v4844 = vpop.f32.mrb[0].mxu0
      %4845 = vmatprep.mubr.bf16.mxu0 0
      %4846 = vmatmul.mubr.bf16.gmra.mrb[0].mxu0 %v4707
      %v4847 = vpop.f32.mrb[0].mxu0
      %v4848 = vadd.f32 0.0, %v4847
      %v4849 = vpop.f32.mrb[0].mxu0
      %v4850 = vpop.f32.mrb[0].mxu0
      %v4851 = vadd.f32 0.0, %v4850
      %v4852 = vpop.f32.mrb[0].mxu0
      %4853 = vmatprep.mubr.bf16.mxu0 0
      %4854 = vmatmul.mubr.bf16.gmra.mrb[0].mxu0 %v4710
      %v4855 = vpop.f32.mrb[0].mxu0
      %v4856 = vadd.f32 0.0, %v4855
      %v4857 = vpop.f32.mrb[0].mxu0
      %v4858 = vpop.f32.mrb[0].mxu0
      %v4859 = vadd.f32 0.0, %v4858
      %v4860 = vpop.f32.mrb[0].mxu0
      %4861 = vmatprep.mubr.bf16.mxu0 0
      %4862 = vmatmul.mubr.bf16.gmra.mrb[0].mxu0 %v4713
      %v4863 = vpop.f32.mrb[0].mxu0
      %v4864 = vadd.f32 0.0, %v4863
      %v4865 = vpop.f32.mrb[0].mxu0
      %v4866 = vpop.f32.mrb[0].mxu0
      %v4867 = vadd.f32 0.0, %v4866
      %v4868 = vpop.f32.mrb[0].mxu0
      %4869 = vmatprep.mubr.bf16.mxu0 0
      %4870 = vmatmul.mubr.bf16.gmra.mrb[0].mxu0 %v4716
      %v4871 = vpop.f32.mrb[0].mxu0
      %v4872 = vadd.f32 0.0, %v4871
      %v4873 = vpop.f32.mrb[0].mxu0
      %v4874 = vpop.f32.mrb[0].mxu0
      %v4875 = vadd.f32 0.0, %v4874
      %v4876 = vpop.f32.mrb[0].mxu0
      %4877 = vmatprep.mubr.bf16.mxu0 0
      %4878 = vmatmul.mubr.bf16.gmra.mrb[0].mxu0 %v4719
      %v4879 = vpop.f32.mrb[0].mxu0
      %v4880 = vadd.f32 0.0, %v4879
      %v4881 = vpop.f32.mrb[0].mxu0
      %v4882 = vpop.f32.mrb[0].mxu0
      %v4883 = vadd.f32 0.0, %v4882
      %v4884 = vpop.f32.mrb[0].mxu0
      %4885 = vdwg.mxu0
      %v4886 = vadd.f32 %v4517, %v4760
      %v4887 = vadd.f32 %v4518, %v4763
      %v4888 = vadd.f32 %v4519, %v4768
      %v4889 = vadd.f32 %v4520, %v4771
      %v4890 = vadd.f32 %v4521, %v4776
      %v4891 = vadd.f32 %v4522, %v4779
      %v4892 = vadd.f32 %v4523, %v4784
      %v4893 = vadd.f32 %v4524, %v4787
      %v4894 = vadd.f32 %v4525, %v4792
      %v4895 = vadd.f32 %v4526, %v4795
      %v4896 = vadd.f32 %v4527, %v4800
      %v4897 = vadd.f32 %v4528, %v4803
      %v4898 = vadd.f32 %v4529, %v4808
      %v4899 = vadd.f32 %v4530, %v4811
      %v4900 = vadd.f32 %v4531, %v4816
      %v4901 = vadd.f32 %v4532, %v4819
      %v4902 = vadd.f32 %v4533, %v4824
      %v4903 = vadd.f32 %v4534, %v4827
      %v4904 = vadd.f32 %v4535, %v4832
      %v4905 = vadd.f32 %v4536, %v4835
      %v4906 = vadd.f32 %v4537, %v4840
      %v4907 = vadd.f32 %v4538, %v4843
      %v4908 = vadd.f32 %v4539, %v4848
      %v4909 = vadd.f32 %v4540, %v4851
      %v4910 = vadd.f32 %v4541, %v4856
      %v4911 = vadd.f32 %v4542, %v4859
      %v4912 = vadd.f32 %v4543, %v4864
      %v4913 = vadd.f32 %v4544, %v4867
      %v4914 = vadd.f32 %v4545, %v4872
      %v4915 = vadd.f32 %v4546, %v4875
      %v4916 = vadd.f32 %v4547, %v4880
      %v4917 = vadd.f32 %v4548, %v4883
      %4918 = vst [vmem:[#allocation6] sm:$0xff] %v4886
      %4919 = vst [vmem:[#allocation6 + $0x8] sm:$0xff] %v4887
      %4920 = vst [vmem:[#allocation6 + $0x10] sm:$0xff] %v4888
      %4921 = vst [vmem:[#allocation6 + $0x18] sm:$0xff] %v4889
      %4922 = vst [vmem:[#allocation6 + $0x20] sm:$0xff] %v4890
      %4923 = vst [vmem:[#allocation6 + $0x28] sm:$0xff] %v4891
      %4924 = vst [vmem:[#allocation6 + $0x30] sm:$0xff] %v4892
      %4925 = vst [vmem:[#allocation6 + $0x38] sm:$0xff] %v4893
      %4926 = vst [vmem:[#allocation6 + $0x40] sm:$0xff] %v4894
      %4927 = vst [vmem:[#allocation6 + $0x48] sm:$0xff] %v4895
      %4928 = vst [vmem:[#allocation6 + $0x50] sm:$0xff] %v4896
      %4929 = vst [vmem:[#allocation6 + $0x58] sm:$0xff] %v4897
      %4930 = vst [vmem:[#allocation6 + $0x60] sm:$0xff] %v4898
      %4931 = vst [vmem:[#allocation6 + $0x68] sm:$0xff] %v4899
      %4932 = vst [vmem:[#allocation6 + $0x70] sm:$0xff] %v4900
      %4933 = vst [vmem:[#allocation6 + $0x78] sm:$0xff] %v4901
      %4934 = vst [vmem:[#allocation6 + $0x80] sm:$0xff] %v4902
      %4935 = vst [vmem:[#allocation6 + $0x88] sm:$0xff] %v4903
      %4936 = vst [vmem:[#allocation6 + $0x90] sm:$0xff] %v4904
      %4937 = vst [vmem:[#allocation6 + $0x98] sm:$0xff] %v4905
      %4938 = vst [vmem:[#allocation6 + $0xa0] sm:$0xff] %v4906
      %4939 = vst [vmem:[#allocation6 + $0xa8] sm:$0xff] %v4907
      %4940 = vst [vmem:[#allocation6 + $0xb0] sm:$0xff] %v4908
      %4941 = vst [vmem:[#allocation6 + $0xb8] sm:$0xff] %v4909
      %4942 = vst [vmem:[#allocation6 + $0xc0] sm:$0xff] %v4910
      %4943 = vst [vmem:[#allocation6 + $0xc8] sm:$0xff] %v4911
      %4944 = vst [vmem:[#allocation6 + $0xd0] sm:$0xff] %v4912
      %4945 = vst [vmem:[#allocation6 + $0xd8] sm:$0xff] %v4913
      %4946 = vst [vmem:[#allocation6 + $0xe0] sm:$0xff] %v4914
      %4947 = vst [vmem:[#allocation6 + $0xe8] sm:$0xff] %v4915
      %4948 = vst [vmem:[#allocation6 + $0xf0] sm:$0xff] %v4916
      %4949 = vst [vmem:[#allocation6 + $0xf8] sm:$0xff] %v4917
    $region73: #{network_forward.1} parent=1 // loop_footer
      %s3613 = sadd.s32 1, %s3609
    $region74: #{network_forward.1} parent=1 // loop_footer_branch
      %3608 = sbr.rel target = $region70
    $region75: #{network_forward.1} parent=1 // loop_exit
      _
    %v4950 = vld [vmem:[#allocation6] sm:$0xff]
    %v4951 = vld [vmem:[#allocation6 + $0x8] sm:$0xff]
    %v4952 = vld [vmem:[#allocation6 + $0x10] sm:$0xff]
    %v4953 = vld [vmem:[#allocation6 + $0x18] sm:$0xff]
    %v4954 = vld [vmem:[#allocation6 + $0x20] sm:$0xff]
    %v4955 = vld [vmem:[#allocation6 + $0x28] sm:$0xff]
    %v4956 = vld [vmem:[#allocation6 + $0x30] sm:$0xff]
    %v4957 = vld [vmem:[#allocation6 + $0x38] sm:$0xff]
    %v4958 = vld [vmem:[#allocation6 + $0x40] sm:$0xff]
    %v4959 = vld [vmem:[#allocation6 + $0x48] sm:$0xff]
    %v4960 = vld [vmem:[#allocation6 + $0x50] sm:$0xff]
    %v4961 = vld [vmem:[#allocation6 + $0x58] sm:$0xff]
    %v4962 = vld [vmem:[#allocation6 + $0x60] sm:$0xff]
    %v4963 = vld [vmem:[#allocation6 + $0x68] sm:$0xff]
    %v4964 = vld [vmem:[#allocation6 + $0x70] sm:$0xff]
    %v4965 = vld [vmem:[#allocation6 + $0x78] sm:$0xff]
    %v4966 = vld [vmem:[#allocation6 + $0x80] sm:$0xff]
    %v4967 = vld [vmem:[#allocation6 + $0x88] sm:$0xff]
    %v4968 = vld [vmem:[#allocation6 + $0x90] sm:$0xff]
    %v4969 = vld [vmem:[#allocation6 + $0x98] sm:$0xff]
    %v4970 = vld [vmem:[#allocation6 + $0xa0] sm:$0xff]
    %v4971 = vld [vmem:[#allocation6 + $0xa8] sm:$0xff]
    %v4972 = vld [vmem:[#allocation6 + $0xb0] sm:$0xff]
    %v4973 = vld [vmem:[#allocation6 + $0xb8] sm:$0xff]
    %v4974 = vld [vmem:[#allocation6 + $0xc0] sm:$0xff]
    %v4975 = vld [vmem:[#allocation6 + $0xc8] sm:$0xff]
    %v4976 = vld [vmem:[#allocation6 + $0xd0] sm:$0xff]
    %v4977 = vld [vmem:[#allocation6 + $0xd8] sm:$0xff]
    %v4978 = vld [vmem:[#allocation6 + $0xe0] sm:$0xff]
    %v4979 = vld [vmem:[#allocation6 + $0xe8] sm:$0xff]
    %v4980 = vld [vmem:[#allocation6 + $0xf0] sm:$0xff]
    %v4981 = vld [vmem:[#allocation6 + $0xf8] sm:$0xff]
    %v4982 = vld [vmem:[%s6] sm:$0xff]
    %v4983 = vld [vmem:[%s6 + $0x8] sm:$0xff]
    %v4984 = vld [vmem:[%s6 + $0x10] sm:$0xff]
    %v4985 = vld [vmem:[%s6 + $0x18] sm:$0xff]
    %v4986 = vld [vmem:[%s6 + $0x20] sm:$0xff]
    %v4987 = vld [vmem:[%s6 + $0x28] sm:$0xff]
    %v4988 = vld [vmem:[%s6 + $0x30] sm:$0xff]
    %v4989 = vld [vmem:[%s6 + $0x38] sm:$0xff]
    %v4990 = vld [vmem:[%s6 + $0x40] sm:$0xff]
    %v4991 = vld [vmem:[%s6 + $0x48] sm:$0xff]
    %v4992 = vld [vmem:[%s6 + $0x50] sm:$0xff]
    %v4993 = vld [vmem:[%s6 + $0x58] sm:$0xff]
    %v4994 = vld [vmem:[%s6 + $0x60] sm:$0xff]
    %v4995 = vld [vmem:[%s6 + $0x68] sm:$0xff]
    %v4996 = vld [vmem:[%s6 + $0x70] sm:$0xff]
    %v4997 = vld [vmem:[%s6 + $0x78] sm:$0xff]
    %v4998 = vld [vmem:[%s6 + $0x80] sm:$0xff]
    %v4999 = vld [vmem:[%s6 + $0x88] sm:$0xff]
    %v5000 = vld [vmem:[%s6 + $0x90] sm:$0xff]
    %v5001 = vld [vmem:[%s6 + $0x98] sm:$0xff]
    %v5002 = vld [vmem:[%s6 + $0xa0] sm:$0xff]
    %v5003 = vld [vmem:[%s6 + $0xa8] sm:$0xff]
    %v5004 = vld [vmem:[%s6 + $0xb0] sm:$0xff]
    %v5005 = vld [vmem:[%s6 + $0xb8] sm:$0xff]
    %v5006 = vld [vmem:[%s6 + $0xc0] sm:$0xff]
    %v5007 = vld [vmem:[%s6 + $0xc8] sm:$0xff]
    %v5008 = vld [vmem:[%s6 + $0xd0] sm:$0xff]
    %v5009 = vld [vmem:[%s6 + $0xd8] sm:$0xff]
    %v5010 = vld [vmem:[%s6 + $0xe0] sm:$0xff]
    %v5011 = vld [vmem:[%s6 + $0xe8] sm:$0xff]
    %v5012 = vld [vmem:[%s6 + $0xf0] sm:$0xff]
    %v5013 = vld [vmem:[%s6 + $0xf8] sm:$0xff]
    %5015 = vset.pattern.permute.xlu0 0
    %5016 = vperm.xlu0 %5015, %v4982
    %v5017 = vpop.permute.xlu0 %5016
    %5020 = vset.pattern.permute.xlu0 0
    %5021 = vperm.xlu0 %5020, %v4983
    %v5022 = vpop.permute.xlu0 %5021
    %5025 = vset.pattern.permute.xlu0 0
    %5026 = vperm.xlu0 %5025, %v4984
    %v5027 = vpop.permute.xlu0 %5026
    %5030 = vset.pattern.permute.xlu0 0
    %5031 = vperm.xlu0 %5030, %v4985
    %v5032 = vpop.permute.xlu0 %5031
    %5035 = vset.pattern.permute.xlu0 0
    %5036 = vperm.xlu0 %5035, %v4986
    %v5037 = vpop.permute.xlu0 %5036
    %5040 = vset.pattern.permute.xlu0 0
    %5041 = vperm.xlu0 %5040, %v4987
    %v5042 = vpop.permute.xlu0 %5041
    %5045 = vset.pattern.permute.xlu0 0
    %5046 = vperm.xlu0 %5045, %v4988
    %v5047 = vpop.permute.xlu0 %5046
    %5050 = vset.pattern.permute.xlu0 0
    %5051 = vperm.xlu0 %5050, %v4989
    %v5052 = vpop.permute.xlu0 %5051
    %5055 = vset.pattern.permute.xlu0 0
    %5056 = vperm.xlu0 %5055, %v4990
    %v5057 = vpop.permute.xlu0 %5056
    %5060 = vset.pattern.permute.xlu0 0
    %5061 = vperm.xlu0 %5060, %v4991
    %v5062 = vpop.permute.xlu0 %5061
    %5065 = vset.pattern.permute.xlu0 0
    %5066 = vperm.xlu0 %5065, %v4992
    %v5067 = vpop.permute.xlu0 %5066
    %5070 = vset.pattern.permute.xlu0 0
    %5071 = vperm.xlu0 %5070, %v4993
    %v5072 = vpop.permute.xlu0 %5071
    %5075 = vset.pattern.permute.xlu0 0
    %5076 = vperm.xlu0 %5075, %v4994
    %v5077 = vpop.permute.xlu0 %5076
    %5080 = vset.pattern.permute.xlu0 0
    %5081 = vperm.xlu0 %5080, %v4995
    %v5082 = vpop.permute.xlu0 %5081
    %5085 = vset.pattern.permute.xlu0 0
    %5086 = vperm.xlu0 %5085, %v4996
    %v5087 = vpop.permute.xlu0 %5086
    %5090 = vset.pattern.permute.xlu0 0
    %5091 = vperm.xlu0 %5090, %v4997
    %v5092 = vpop.permute.xlu0 %5091
    %5095 = vset.pattern.permute.xlu0 0
    %5096 = vperm.xlu0 %5095, %v4998
    %v5097 = vpop.permute.xlu0 %5096
    %5100 = vset.pattern.permute.xlu0 0
    %5101 = vperm.xlu0 %5100, %v4999
    %v5102 = vpop.permute.xlu0 %5101
    %5105 = vset.pattern.permute.xlu0 0
    %5106 = vperm.xlu0 %5105, %v5000
    %v5107 = vpop.permute.xlu0 %5106
    %5110 = vset.pattern.permute.xlu0 0
    %5111 = vperm.xlu0 %5110, %v5001
    %v5112 = vpop.permute.xlu0 %5111
    %5115 = vset.pattern.permute.xlu0 0
    %5116 = vperm.xlu0 %5115, %v5002
    %v5117 = vpop.permute.xlu0 %5116
    %5120 = vset.pattern.permute.xlu0 0
    %5121 = vperm.xlu0 %5120, %v5003
    %v5122 = vpop.permute.xlu0 %5121
    %5125 = vset.pattern.permute.xlu0 0
    %5126 = vperm.xlu0 %5125, %v5004
    %v5127 = vpop.permute.xlu0 %5126
    %5130 = vset.pattern.permute.xlu0 0
    %5131 = vperm.xlu0 %5130, %v5005
    %v5132 = vpop.permute.xlu0 %5131
    %5135 = vset.pattern.permute.xlu0 0
    %5136 = vperm.xlu0 %5135, %v5006
    %v5137 = vpop.permute.xlu0 %5136
    %5140 = vset.pattern.permute.xlu0 0
    %5141 = vperm.xlu0 %5140, %v5007
    %v5142 = vpop.permute.xlu0 %5141
    %5145 = vset.pattern.permute.xlu0 0
    %5146 = vperm.xlu0 %5145, %v5008
    %v5147 = vpop.permute.xlu0 %5146
    %5150 = vset.pattern.permute.xlu0 0
    %5151 = vperm.xlu0 %5150, %v5009
    %v5152 = vpop.permute.xlu0 %5151
    %5155 = vset.pattern.permute.xlu0 0
    %5156 = vperm.xlu0 %5155, %v5010
    %v5157 = vpop.permute.xlu0 %5156
    %5160 = vset.pattern.permute.xlu0 0
    %5161 = vperm.xlu0 %5160, %v5011
    %v5162 = vpop.permute.xlu0 %5161
    %5165 = vset.pattern.permute.xlu0 0
    %5166 = vperm.xlu0 %5165, %v5012
    %v5167 = vpop.permute.xlu0 %5166
    %5170 = vset.pattern.permute.xlu0 0
    %5171 = vperm.xlu0 %5170, %v5013
    %v5172 = vpop.permute.xlu0 %5171
    %v5174 = vadd.f32 %v4950, %v5017
    %v5175 = vadd.f32 %v4951, %v5022
    %v5176 = vadd.f32 %v4952, %v5027
    %v5177 = vadd.f32 %v4953, %v5032
    %v5178 = vadd.f32 %v4954, %v5037
    %v5179 = vadd.f32 %v4955, %v5042
    %v5180 = vadd.f32 %v4956, %v5047
    %v5181 = vadd.f32 %v4957, %v5052
    %v5182 = vadd.f32 %v4958, %v5057
    %v5183 = vadd.f32 %v4959, %v5062
    %v5184 = vadd.f32 %v4960, %v5067
    %v5185 = vadd.f32 %v4961, %v5072
    %v5186 = vadd.f32 %v4962, %v5077
    %v5187 = vadd.f32 %v4963, %v5082
    %v5188 = vadd.f32 %v4964, %v5087
    %v5189 = vadd.f32 %v4965, %v5092
    %v5190 = vadd.f32 %v4966, %v5097
    %v5191 = vadd.f32 %v4967, %v5102
    %v5192 = vadd.f32 %v4968, %v5107
    %v5193 = vadd.f32 %v4969, %v5112
    %v5194 = vadd.f32 %v4970, %v5117
    %v5195 = vadd.f32 %v4971, %v5122
    %v5196 = vadd.f32 %v4972, %v5127
    %v5197 = vadd.f32 %v4973, %v5132
    %v5198 = vadd.f32 %v4974, %v5137
    %v5199 = vadd.f32 %v4975, %v5142
    %v5200 = vadd.f32 %v4976, %v5147
    %v5201 = vadd.f32 %v4977, %v5152
    %v5202 = vadd.f32 %v4978, %v5157
    %v5203 = vadd.f32 %v4979, %v5162
    %v5204 = vadd.f32 %v4980, %v5167
    %v5205 = vadd.f32 %v4981, %v5172
    %v5206 = vmax.f32 %v5174, 0.0
    %v5207 = vmax.f32 %v5175, 0.0
    %v5208 = vmax.f32 %v5176, 0.0
    %v5209 = vmax.f32 %v5177, 0.0
    %v5210 = vmax.f32 %v5178, 0.0
    %v5211 = vmax.f32 %v5179, 0.0
    %v5212 = vmax.f32 %v5180, 0.0
    %v5213 = vmax.f32 %v5181, 0.0
    %v5214 = vmax.f32 %v5182, 0.0
    %v5215 = vmax.f32 %v5183, 0.0
    %v5216 = vmax.f32 %v5184, 0.0
    %v5217 = vmax.f32 %v5185, 0.0
    %v5218 = vmax.f32 %v5186, 0.0
    %v5219 = vmax.f32 %v5187, 0.0
    %v5220 = vmax.f32 %v5188, 0.0
    %v5221 = vmax.f32 %v5189, 0.0
    %v5222 = vmax.f32 %v5190, 0.0
    %v5223 = vmax.f32 %v5191, 0.0
    %v5224 = vmax.f32 %v5192, 0.0
    %v5225 = vmax.f32 %v5193, 0.0
    %v5226 = vmax.f32 %v5194, 0.0
    %v5227 = vmax.f32 %v5195, 0.0
    %v5228 = vmax.f32 %v5196, 0.0
    %v5229 = vmax.f32 %v5197, 0.0
    %v5230 = vmax.f32 %v5198, 0.0
    %v5231 = vmax.f32 %v5199, 0.0
    %v5232 = vmax.f32 %v5200, 0.0
    %v5233 = vmax.f32 %v5201, 0.0
    %v5234 = vmax.f32 %v5202, 0.0
    %v5235 = vmax.f32 %v5203, 0.0
    %v5236 = vmax.f32 %v5204, 0.0
    %v5237 = vmax.f32 %v5205, 0.0
    %v5238 = vpack.c.bf16 %v5207, %v5206
    %v5239 = vpack.c.bf16 %v5209, %v5208
    %v5240 = vpack.c.bf16 %v5211, %v5210
    %v5241 = vpack.c.bf16 %v5213, %v5212
    %v5242 = vpack.c.bf16 %v5215, %v5214
    %v5243 = vpack.c.bf16 %v5217, %v5216
    %v5244 = vpack.c.bf16 %v5219, %v5218
    %v5245 = vpack.c.bf16 %v5221, %v5220
    %v5246 = vpack.c.bf16 %v5223, %v5222
    %v5247 = vpack.c.bf16 %v5225, %v5224
    %v5248 = vpack.c.bf16 %v5227, %v5226
    %v5249 = vpack.c.bf16 %v5229, %v5228
    %v5250 = vpack.c.bf16 %v5231, %v5230
    %v5251 = vpack.c.bf16 %v5233, %v5232
    %v5252 = vpack.c.bf16 %v5235, %v5234
    %v5253 = vpack.c.bf16 %v5237, %v5236
    %v5254 = vld [vmem:[%s7] sm:$0xff]
    %v5255 = vld [vmem:[%s7 + $0x8] sm:$0xff]
    %v5256 = vld [vmem:[%s7 + $0x10] sm:$0xff]
    %v5257 = vld [vmem:[%s7 + $0x18] sm:$0xff]
    %v5258 = vld [vmem:[%s7 + $0x20] sm:$0xff]
    %v5259 = vld [vmem:[%s7 + $0x28] sm:$0xff]
    %v5260 = vld [vmem:[%s7 + $0x30] sm:$0xff]
    %v5261 = vld [vmem:[%s7 + $0x38] sm:$0xff]
    %v5262 = vld [vmem:[%s8] sm:$0xff]
    %v5263 = vld [vmem:[%s8 + $0x8] sm:$0xff]
    %v5264 = vld [vmem:[%s8 + $0x10] sm:$0xff]
    %v5265 = vld [vmem:[%s8 + $0x18] sm:$0xff]
    %v5266 = vld [vmem:[%s8 + $0x20] sm:$0xff]
    %v5267 = vld [vmem:[%s8 + $0x28] sm:$0xff]
    %v5268 = vld [vmem:[%s8 + $0x30] sm:$0xff]
    %v5269 = vld [vmem:[%s8 + $0x38] sm:$0xff]
    %5271 = vset.pattern.permute.xlu0 0
    %5272 = vperm.xlu0 %5271, %v5262
    %v5273 = vpop.permute.xlu0 %5272
    %5276 = vset.pattern.permute.xlu0 0
    %5277 = vperm.xlu0 %5276, %v5263
    %v5278 = vpop.permute.xlu0 %5277
    %5281 = vset.pattern.permute.xlu0 0
    %5282 = vperm.xlu0 %5281, %v5264
    %v5283 = vpop.permute.xlu0 %5282
    %5286 = vset.pattern.permute.xlu0 0
    %5287 = vperm.xlu0 %5286, %v5265
    %v5288 = vpop.permute.xlu0 %5287
    %5291 = vset.pattern.permute.xlu0 0
    %5292 = vperm.xlu0 %5291, %v5266
    %v5293 = vpop.permute.xlu0 %5292
    %5296 = vset.pattern.permute.xlu0 0
    %5297 = vperm.xlu0 %5296, %v5267
    %v5298 = vpop.permute.xlu0 %5297
    %5301 = vset.pattern.permute.xlu0 0
    %5302 = vperm.xlu0 %5301, %v5268
    %v5303 = vpop.permute.xlu0 %5302
    %5306 = vset.pattern.permute.xlu0 0
    %5307 = vperm.xlu0 %5306, %v5269
    %v5308 = vpop.permute.xlu0 %5307
    %v5318 = vunpack.c.l.b16 %v5254
    %v5319 = vunpack.c.h.b16 %v5254
    %v5320 = vunpack.c.l.b16 %v5255
    %v5321 = vunpack.c.h.b16 %v5255
    %v5322 = vunpack.c.l.b16 %v5256
    %v5323 = vunpack.c.h.b16 %v5256
    %v5324 = vunpack.c.l.b16 %v5257
    %v5325 = vunpack.c.h.b16 %v5257
    %v5326 = vunpack.c.l.b16 %v5258
    %v5327 = vunpack.c.h.b16 %v5258
    %v5328 = vunpack.c.l.b16 %v5259
    %v5329 = vunpack.c.h.b16 %v5259
    %v5330 = vunpack.c.l.b16 %v5260
    %v5331 = vunpack.c.h.b16 %v5260
    %v5332 = vunpack.c.l.b16 %v5261
    %v5333 = vunpack.c.h.b16 %v5261
    %v5334 = vpack.c.b16 %v5320, %v5318
    %v5335 = vpack.c.b16 %v5321, %v5319
    %v5336 = vpack.c.b16 %v5324, %v5322
    %v5337 = vpack.c.b16 %v5325, %v5323
    %v5338 = vpack.c.b16 %v5328, %v5326
    %v5339 = vpack.c.b16 %v5329, %v5327
    %v5340 = vpack.c.b16 %v5332, %v5330
    %v5341 = vpack.c.b16 %v5333, %v5331
    %5350 = vmatprep.subr.bf16.mxu0 0
    %5351 = vmatpush1.bf16.msra.mxu0 %v5238
    %5352 = vmatprep.subr.bf16.mxu0 0
    %5353 = vmatpush1.bf16.msra.mxu0 %v5239
    %5354 = vmatprep.subr.bf16.mxu0 0
    %5355 = vmatpush1.bf16.msra.mxu0 %v5240
    %5356 = vmatprep.subr.bf16.mxu0 0
    %5357 = vmatpush1.bf16.msra.mxu0 %v5241
    %5358 = vmatprep.subr.bf16.mxu0 0
    %5359 = vmatpush1.bf16.msra.mxu0 %v5242
    %5360 = vmatprep.subr.bf16.mxu0 0
    %5361 = vmatpush1.bf16.msra.mxu0 %v5243
    %5362 = vmatprep.subr.bf16.mxu0 0
    %5363 = vmatpush1.bf16.msra.mxu0 %v5244
    %5364 = vmatprep.subr.bf16.mxu0 0
    %5365 = vmatpush1.bf16.msra.mxu0 %v5245
    %5366 = vmatprep.subr.bf16.mxu0 0
    %5367 = vmatpush1.bf16.msra.mxu0 %v5246
    %5368 = vmatprep.subr.bf16.mxu0 0
    %5369 = vmatpush1.bf16.msra.mxu0 %v5247
    %5370 = vmatprep.subr.bf16.mxu0 0
    %5371 = vmatpush1.bf16.msra.mxu0 %v5248
    %5372 = vmatprep.subr.bf16.mxu0 0
    %5373 = vmatpush1.bf16.msra.mxu0 %v5249
    %5374 = vmatprep.subr.bf16.mxu0 0
    %5375 = vmatpush1.bf16.msra.mxu0 %v5250
    %5376 = vmatprep.subr.bf16.mxu0 0
    %5377 = vmatpush1.bf16.msra.mxu0 %v5251
    %5378 = vmatprep.subr.bf16.mxu0 0
    %5379 = vmatpush1.bf16.msra.mxu0 %v5252
    %5380 = vmatprep.subr.bf16.mxu0 0
    %5381 = vmatpush1.bf16.msra.mxu0 %v5253
    %5382 = vmatprep.mubr.bf16.mxu0 %v5335
    %5383 = vmatmul.mubr.bf16.gmra.mrb[0].mxu0 %v5334
    %v5384 = vpop.f32.mrb[0].mxu0
    %v5385 = vadd.f32 %v5273, %v5384
    %v5386 = vpop.f32.mrb[0].mxu0
    %v5387 = vpop.f32.mrb[0].mxu0
    %v5388 = vadd.f32 %v5278, %v5387
    %v5389 = vpop.f32.mrb[0].mxu0
    %5390 = vmatprep.mubr.bf16.mxu0 %v5337
    %5391 = vmatmul.mubr.bf16.gmra.mrb[0].mxu0 %v5336
    %v5392 = vpop.f32.mrb[0].mxu0
    %v5393 = vadd.f32 %v5283, %v5392
    %v5394 = vpop.f32.mrb[0].mxu0
    %v5395 = vpop.f32.mrb[0].mxu0
    %v5396 = vadd.f32 %v5288, %v5395
    %v5397 = vpop.f32.mrb[0].mxu0
    %5398 = vmatprep.mubr.bf16.mxu0 %v5339
    %5399 = vmatmul.mubr.bf16.gmra.mrb[0].mxu0 %v5338
    %v5400 = vpop.f32.mrb[0].mxu0
    %v5401 = vadd.f32 %v5293, %v5400
    %v5402 = vpop.f32.mrb[0].mxu0
    %v5403 = vpop.f32.mrb[0].mxu0
    %v5404 = vadd.f32 %v5298, %v5403
    %v5405 = vpop.f32.mrb[0].mxu0
    %5406 = vmatprep.mubr.bf16.mxu0 %v5341
    %5407 = vmatmul.mubr.bf16.gmra.mrb[0].mxu0 %v5340
    %v5408 = vpop.f32.mrb[0].mxu0
    %v5409 = vadd.f32 %v5303, %v5408
    %v5410 = vpop.f32.mrb[0].mxu0
    %v5411 = vpop.f32.mrb[0].mxu0
    %v5412 = vadd.f32 %v5308, %v5411
    %v5413 = vpop.f32.mrb[0].mxu0
    %5414 = vdwg.mxu0
    %v5415 = vmax.f32 %v5385, 0.0
    %v5416 = vmax.f32 %v5388, 0.0
    %v5417 = vmax.f32 %v5393, 0.0
    %v5418 = vmax.f32 %v5396, 0.0
    %v5419 = vmax.f32 %v5401, 0.0
    %v5420 = vmax.f32 %v5404, 0.0
    %v5421 = vmax.f32 %v5409, 0.0
    %v5422 = vmax.f32 %v5412, 0.0
    %v5423 = vpack.c.bf16 %v5416, %v5415
    %v5424 = vpack.c.bf16 %v5418, %v5417
    %v5425 = vpack.c.bf16 %v5420, %v5419
    %v5426 = vpack.c.bf16 %v5422, %v5421
    %v5427 = vld [vmem:[%s9] sm:$0xf]
    %v5428 = vld [vmem:[%s9 + $0x4] sm:$0xf]
    %v5429 = vld [vmem:[%s10] sm:$0xff]
    %v5430 = vld [vmem:[%s10 + $0x8] sm:$0xff]
    %5432 = vset.pattern.permute.xlu0 0
    %5433 = vperm.xlu0 %5432, %v5429
    %v5434 = vpop.permute.xlu0 %5433
    %5437 = vset.pattern.permute.xlu0 0
    %5438 = vperm.xlu0 %5437, %v5430
    %v5439 = vpop.permute.xlu0 %5438
    %v5443 = vunpack.c.l.b16 %v5427
    %v5444 = vunpack.c.l.b16 %v5428
    %v5445 = vpack.c.b16 %v5444, %v5443
    %vm5446 = vcmask 523264
    %v5448 = vsel %vm5446, %v5445, 0
    %5450 = vmatprep.subr.bf16.mxu0 0
    %5451 = vmatpush1.bf16.msra.mxu0 %v5423
    %5452 = vmatprep.subr.bf16.mxu0 0
    %5453 = vmatpush1.bf16.msra.mxu0 %v5424
    %5454 = vmatprep.subr.bf16.mxu0 0
    %5455 = vmatpush1.bf16.msra.mxu0 %v5425
    %5456 = vmatprep.subr.bf16.mxu0 0
    %5457 = vmatpush1.bf16.msra.mxu0 %v5426
    %5458 = vmatprep.subr.bf16.mxu0 0
    %5459 = vmatpush1.bf16.msra.mxu0 0
    %5460 = vmatprep.subr.bf16.mxu0 0
    %5461 = vmatpush1.bf16.msra.mxu0 0
    %5462 = vmatprep.subr.bf16.mxu0 0
    %5463 = vmatpush1.bf16.msra.mxu0 0
    %5464 = vmatprep.subr.bf16.mxu0 0
    %5465 = vmatpush1.bf16.msra.mxu0 0
    %5466 = vmatprep.subr.bf16.mxu0 0
    %5467 = vmatpush1.bf16.msra.mxu0 0
    %5468 = vmatprep.subr.bf16.mxu0 0
    %5469 = vmatpush1.bf16.msra.mxu0 0
    %5470 = vmatprep.subr.bf16.mxu0 0
    %5471 = vmatpush1.bf16.msra.mxu0 0
    %5472 = vmatprep.subr.bf16.mxu0 0
    %5473 = vmatpush1.bf16.msra.mxu0 0
    %5474 = vmatprep.subr.bf16.mxu0 0
    %5475 = vmatpush1.bf16.msra.mxu0 0
    %5476 = vmatprep.subr.bf16.mxu0 0
    %5477 = vmatpush1.bf16.msra.mxu0 0
    %5478 = vmatprep.subr.bf16.mxu0 0
    %5479 = vmatpush1.bf16.msra.mxu0 0
    %5480 = vmatprep.subr.bf16.mxu0 0
    %5481 = vmatpush1.bf16.msra.mxu0 0
    %5482 = vmatprep.mubr.bf16.mxu0 0
    %5483 = vmatmul.mubr.bf16.gmra.mrb[0].mxu0 %v5448
    %v5484 = vpop.f32.mrb[0].mxu0
    %v5485 = vadd.f32 %v5434, %v5484
    %v5486 = vpop.f32.mrb[0].mxu0
    %v5487 = vpop.f32.mrb[0].mxu0
    %v5488 = vadd.f32 %v5439, %v5487
    %v5489 = vpop.f32.mrb[0].mxu0
    %5490 = vdwg.mxu0
    %5491 = vst [vmem:[%s11] sm:$0xff] %v5485
    %5492 = vst [vmem:[%s11 + $0x8] sm:$0xff] %v5488
    // Predicated region
    $region83: #{network_forward.1} parent=1 // pred_check
      _
    $region84: #{network_forward.1} parent=1 // pred_check_branch
      %5494 = sbr.rel (0) target = $region86
    $region85: #{network_forward.1} parent=1 // pred_region
      _
    $region86: #{network_forward.1} parent=1 // pred_fallthru
      _
    // Predicated region
    $region87: #{network_forward.1} parent=1 // pred_check
      _
    $region88: #{network_forward.1} parent=1 // pred_check_branch
      %5496 = sbr.rel (0) target = $region90
    $region89: #{network_forward.1} parent=1 // pred_region
      _
    $region90: #{network_forward.1} parent=1 // pred_fallthru
      _
    %5497 = vsyncpa [#allocation8], 1
    %5498 = vsyncpa [#allocation10], 1
    %5499 = vsyncpa [#allocation13], 1

</llo_original>
